<compile_context>
chip_gen: v7x
topology: tpu7x:2x2x1
jax: 0.10.0
libtpu: 0.0.40
codegen_flags: <defaults>
</compile_context>

<pallas_src>
import functools

import jax
import jax.numpy as jnp
from jax.experimental import pallas as pl
from jax.experimental.pallas import tpu as pltpu


# --------------------------------------------------------------------------
# small helpers / hardware-dependent defaults
# --------------------------------------------------------------------------
_SLAB = 128                      # lane-dense slab width for cv1 outputs


def _round_up(x, m):
    return (x + m - 1) // m * m


def _silu(x):
    return x * jax.nn.sigmoid(x)                 # logistic -> EUP slot


def _tpu_kind():
    try:
        return jax.devices()[0].device_kind.lower()
    except Exception:
        return ""


_KIND = _tpu_kind()
_IS_V7 = ("v7" in _KIND) or ("tpu7" in _KIND)
# v7x has 2 TensorCores per chip: split row tiles / dw31 channel groups across
# them; on v5e/v6e a bigger single tile avoids sequential grid-step overhead.
_DEFAULT_TM = 256 if _IS_V7 else 512
_DW_GROUPS = 2 if _IS_V7 else 1


# --------------------------------------------------------------------------
# Pallas kernels
# --------------------------------------------------------------------------
def _cv1_kernel(x_ref, w_ref, b_ref, wi_ref, bi_ref, o_ref, *, c1, slab_cols):
    """cv1 (folded BN + SiLU) as one 32-wide matmul, split, in_conv matmul.

    Output is a single lane-dense slab [ok(c1) | idn(c2) | pre(d) | zeros]."""
    x = x_ref[...].astype(jnp.bfloat16)
    y = _silu(jnp.dot(x, w_ref[...], preferred_element_type=jnp.float32)
              + b_ref[...])                                   # (tm, dim)
    pre = (jnp.dot(y[:, :c1].astype(jnp.bfloat16), wi_ref[...],
                   preferred_element_type=jnp.float32) + bi_ref[...])
    pad_w = slab_cols - y.shape[1] - pre.shape[1]
    pieces = [y, pre]
    if pad_w > 0:
        pieces.append(jnp.zeros((y.shape[0], pad_w), jnp.float32))
    o_ref[...] = jnp.concatenate(pieces, axis=1).astype(o_ref.dtype)


def _att_kernel(p_ref, wf_ref, bf_ref, w1_ref, b1_ref, w2_ref, b2_ref,
                att_ref, cw_ref):
    """fac_conv + channel_attention MLP (1x1 -> ReLU -> 1x1 -> sigmoid). Tiny; f32."""
    att = (jnp.dot(p_ref[...], wf_ref[...], preferred_element_type=jnp.float32)
           + bf_ref[...])
    h = jnp.maximum(
        jnp.dot(att, w1_ref[...], preferred_element_type=jnp.float32) + b1_ref[...],
        0.0)
    cw = jax.nn.sigmoid(
        jnp.dot(h, w2_ref[...], preferred_element_type=jnp.float32) + b2_ref[...])
    att_ref[...] = att.astype(att_ref.dtype)
    cw_ref[...] = cw.astype(cw_ref.dtype)


def _sca_ffm_kernel(xsh_ref, wdw_ref, w1_ref, b1_ref, cw_ref,
                    wffm_ref, bffm_ref, sca_ref, x12_ref, *, H):
    """Lane-dense sca path for one image on (H, W*d) slabs.

    xsh_ref : (1, 5, H+4, W*d) — 5 W-pre-shifted copies of x_fca, padded along H.
    wdw_ref : (5, 5, W*d)      — folded 3x3->5x5 depthwise weights tiled across W.
    w1_ref  : (W*d, W*d) bf16  — kron(I_W, conv1x1 weight)  (exact block-diag 1x1).
    wffm_ref: (W*d, 2*W*d) bf16— kron(I_W, [Wm1 | Wm2]) for FFM's two 1x1 convs.
    """
    # depthwise 5x5 stencil (dy = sublane shift, dx = pre-shifted copy)
    acc = None
    for dx in range(5):
        xs = xsh_ref[0, dx]                                   # (H+4, W*d)
        for dy in range(5):
            term = xs[dy:dy + H, :] * wdw_ref[dy, dx:dx + 1, :]
            acc = term if acc is None else acc + term
    # 1x1 dense conv on the unshifted, unpadded slab via block-diagonal matmul
    x0 = xsh_ref[0, 2, 2:2 + H, :]                            # (H, W*d)
    dense = (jnp.dot(x0.astype(jnp.bfloat16), w1_ref[...],
                     preferred_element_type=jnp.float32) + b1_ref[...])
    sca = (dense + acc) * cw_ref[0]                           # * channel weights
    sca_ref[0] = sca.astype(sca_ref.dtype)
    # FFM's two 1x1 convs (interleaved [x1 | x2] per pixel), block-diagonal
    x12 = (jnp.dot(sca.astype(jnp.bfloat16), wffm_ref[...],
                   preferred_element_type=jnp.float32) + bffm_ref[...])
    x12_ref[0] = x12.astype(x12_ref.dtype)


def _dw31_kernel(x_ref, t_ref, o_ref):
    """Exact depthwise 31x31 conv (pad 15, dw_11 folded) as per-channel Toeplitz
    matmuls — all channels of this group in one grid step, T resident in VMEM."""
    for c in range(x_ref.shape[0]):
        o_ref[c] = jnp.dot(x_ref[c].astype(jnp.bfloat16), t_ref[c],
                           preferred_element_type=jnp.float32).astype(o_ref.dtype)


def _final_cv2_kernel(slab_ref, dw_ref, ffm_ref, sca_ref,
                      bdw_ref, alpha_ref, beta_ref,
                      wm_ref, wid_ref, b_ref, o_ref, *, c1, dim):
    """x + dw(out) + FFM(x_sca), ReLU, out_conv (folded) + split-K cv2 + SiLU."""
    slab = slab_ref[...]
    ok = slab[:, :c1]
    t = jnp.maximum(
        ok + dw_ref[...] + bdw_ref[...]
        + ffm_ref[...] * alpha_ref[...] + sca_ref[...] * beta_ref[...], 0.0)
    # wm = out_w @ cv2_wa (exact fold); wid = cv2 weight with its first c1 rows
    # zeroed so multiplying the whole [ok|idn] block reproduces idn @ cv2_wb.
    y = (jnp.dot(t.astype(jnp.bfloat16), wm_ref[...],
                 preferred_element_type=jnp.float32)
         + jnp.dot(slab[:, :dim].astype(jnp.bfloat16), wid_ref[...],
                   preferred_element_type=jnp.float32)
         + b_ref[...])
    o_ref[...] = _silu(y).astype(o_ref.dtype)


# --------------------------------------------------------------------------
# generic row-tiled pallas_call wrapper
# --------------------------------------------------------------------------
def _rows_call(kernel, row_ins, const_ins, out_cols, M, *, tm=None,
               dtype=jnp.float32):
    if tm is None:
        tm = _DEFAULT_TM
    tm = min(tm, _round_up(M, 8))
    mp = _round_up(M, tm)
    if mp != M:
        row_ins = [jnp.pad(a, ((0, mp - M), (0, 0))) for a in row_ins]
    grid = (mp // tm,)
    in_specs = [pl.BlockSpec((tm, a.shape[1]), lambda i: (i, 0)) for a in row_ins]
    in_specs += [pl.BlockSpec(tuple(c.shape), lambda i, nd=c.ndim: (0,) * nd)
                 for c in const_ins]
    out_specs = tuple(pl.BlockSpec((tm, c), lambda i: (i, 0)) for c in out_cols)
    out_shape = tuple(jax.ShapeDtypeStruct((mp, c), dtype) for c in out_cols)
    outs = pl.pallas_call(
        kernel, grid=grid, in_specs=in_specs, out_specs=out_specs,
        out_shape=out_shape,
        compiler_params=pltpu.CompilerParams(dimension_semantics=("parallel",)),
    )(*row_ins, *const_ins)
    return [o[:M] for o in outs]


# --------------------------------------------------------------------------
# Toeplitz matrix for a depthwise KxK conv (stride 1, pad K//2) — exact
# --------------------------------------------------------------------------
def _toeplitz_from_dw(w, H, W):
    """w: (K, K, C). Returns T (C, H*W, H*W) with
    dwconv(x)[n, i*W+j, c] == sum_pq x[n, p*W+q, c] * T[c, p*W+q, i*W+j]."""
    K = w.shape[0]
    pad = K // 2
    hi = jnp.arange(H)
    wi = jnp.arange(W)
    dh = hi[:, None] - hi[None, :] + pad              # (H, H): p - i + pad
    dv = wi[:, None] - wi[None, :] + pad              # (W, W): q - j + pad
    vh = (dh >= 0) & (dh < K)
    vw = (dv >= 0) & (dv < K)
    dhc = jnp.clip(dh, 0, K - 1)
    dvc = jnp.clip(dv, 0, K - 1)
    t = w[dhc[:, :, None, None], dvc[None, None, :, :], :]      # (H,H,W,W,C)
    mask = (vh[:, :, None, None] & vw[None, None, :, :])[..., None]
    t = jnp.where(mask, t, 0.0)
    t = jnp.transpose(t, (0, 2, 1, 3, 4)).reshape(H * W, H * W, -1)  # (pq, ij, C)
    return jnp.transpose(t, (2, 0, 1))                               # (C, pq, ij)


# --------------------------------------------------------------------------
# deterministic parameter construction (BN folded, weights pre-fused at init)
# --------------------------------------------------------------------------
def _fold_bn_pw(key, c_in, c_out):
    """1x1 conv (no bias) + BatchNorm (eval, eps=1e-3) -> (Cin,Cout), (Cout,)."""
    kw, kg, kb, km, kv = jax.random.split(key, 5)
    w = 0.1 * jax.random.normal(kw, (c_out, c_in), jnp.float32)
    gamma = 1.0 + 0.1 * jax.random.normal(kg, (c_out,), jnp.float32)
    beta = 0.1 * jax.random.normal(kb, (c_out,), jnp.float32)
    mean = 0.1 * jax.random.normal(km, (c_out,), jnp.float32)
    var = 0.5 + 0.5 * jax.random.uniform(kv, (c_out,), jnp.float32)
    s = gamma / jnp.sqrt(var + 1e-3)
    return (w * s[:, None]).T, beta - mean * s


def _conv_params(key, c_in, c_out, k=1, groups=1, scale=0.1):
    kw, kb = jax.random.split(key)
    w = scale * jax.random.normal(kw, (c_out, c_in // groups, k, k), jnp.float32)
    b = scale * jax.random.normal(kb, (c_out,), jnp.float32)
    return w, b


def init_mfff(key, dim, H, W, e=0.25):
    d = int(dim * e)
    c1 = round(dim * e)
    assert c1 == d, "module requires round(dim*e) == int(dim*e)"
    c2 = dim - c1
    assert dim + d <= _SLAB, "cv1 slab packing assumes dim + d <= 128"
    assert W * d == 128, "lane-dense sca path assumes W*d == 128"
    ks = jax.random.split(key, 16)

    Wcv1, bcv1 = _fold_bn_pw(ks[0], dim, dim)           # Conv(dim,dim,1)+BN+SiLU
    Wcv2, bcv2 = _fold_bn_pw(ks[1], dim, dim)
    wi, bi = _conv_params(ks[2], d, d, 1)               # in_conv
    wo, bo = _conv_params(ks[3], d, d, 1)               # out_conv
    w33, b33 = _conv_params(ks[4], d, d, 31, groups=d)  # dw_33
    w11, b11 = _conv_params(ks[5], d, d, 1, groups=d)   # dw_11
    w1x1, b1x1 = _conv_params(ks[6], d, d, 1)           # conv1x1 (dense)
    w3, b3 = _conv_params(ks[7], d, d, 3, groups=d)     # conv3x3 (dw)
    w5, b5 = _conv_params(ks[8], d, d, 5, groups=d)     # conv5x5 (dw)
    wf, bf = _conv_params(ks[9], d, d, 1)               # fac_conv
    d4 = max(d // 4, 1)
    wa1, ba1 = _conv_params(ks[10], d, d4, 1)           # channel_attention[0]
    wa2, ba2 = _conv_params(ks[11], d4, d, 1)           # channel_attention[2]
    wm1, bm1 = _conv_params(ks[12], d, d, 1)            # FFM.dwconv1 (dense 1x1)
    wm2, bm2 = _conv_params(ks[13], d, d, 1)            # FFM.dwconv2 (dense 1x1)
    # nn.Parameter inits are zeros/ones; small random values keep the smoke test
    # non-trivial (forward semantics unchanged).
    alpha = 0.1 * jax.random.normal(ks[14], (d,), jnp.float32)
    beta = 1.0 + 0.1 * jax.random.normal(ks[15], (d,), jnp.float32)

    def pw(w):          # (out,in,1,1) -> (in,out)
        return jnp.transpose(w[:, :, 0, 0])

    def dw(w):          # (c,1,k,k) -> (k,k,c)
        return jnp.transpose(w[:, 0], (1, 2, 0))

    row = lambda b: b.reshape(1, -1)
    b16 = lambda a: a.astype(jnp.bfloat16)

    # fold dw_11 into the centre tap of dw_33; fold conv3x3(dw) into conv5x5(dw)
    w31c = dw(w33)
    w31c = w31c.at[15, 15, :].add(w11[:, 0, 0, 0])
    w5c = dw(w5)
    w5c = w5c.at[1:4, 1:4, :].add(dw(w3))

    # zero-pad channel-attention hidden dim up to 8 (exact: padded rows of W2 are 0)
    hp = max(8, d4)
    w1p = jnp.zeros((d, hp), jnp.float32).at[:, :d4].set(pw(wa1))
    b1p = jnp.zeros((hp,), jnp.float32).at[:d4].set(ba1)
    w2p = jnp.zeros((hp, d), jnp.float32).at[:d4, :].set(pw(wa2))

    eyeW = jnp.eye(W, dtype=jnp.float32)

    # fold out_conv into cv2's m-half (both linear, nothing in between)
    wm_fold = pw(wo) @ Wcv2[:c1, :]                                  # (d, dim)
    wid = jnp.zeros((dim, dim), jnp.float32).at[c1:, :].set(Wcv2[c1:, :])
    b_final = bcv2 + bo @ Wcv2[:c1, :]

    return dict(
        dim=dim, d=d, c1=c1, c2=c2, H=H, W=W,
        cv1_w=b16(Wcv1), cv1_b=row(bcv1),
        in_w=b16(pw(wi)), in_b=row(bi),
        fac_w=pw(wf), fac_b=row(bf),
        att_w1=w1p, att_b1=row(b1p), att_w2=w2p, att_b2=row(ba2),
        # lane-dense sca path weights (block-diagonal 1x1s, W-tiled dw weights)
        sca_w1=b16(jnp.kron(eyeW, pw(w1x1))),
        sca_b1=row(jnp.tile(b1x1 + b3 + b5, W)),
        sca_wdw=jnp.tile(w5c[:, :, None, :], (1, 1, W, 1)).reshape(5, 5, W * d),
        ffm_w=b16(jnp.kron(eyeW, jnp.concatenate([pw(wm1), pw(wm2)], axis=1))),
        ffm_b=row(jnp.tile(jnp.concatenate([bm1, bm2]), W)),
        # depthwise 31x31 (+dw_11) Toeplitz, precomputed once, bf16
        dw31_T=b16(_toeplitz_from_dw(w31c, H, W)),
        dw31_b=row(b33 + b11),
        alpha=row(alpha), beta=row(beta),
        final_wm=b16(wm_fold), final_wid=b16(wid), final_b=row(b_final),
    )


# --------------------------------------------------------------------------
# MFFF forward (NCHW in / NCHW out)
# --------------------------------------------------------------------------
def mfff_forward(x_nchw, p):
    N, D, H, W = x_nchw.shape
    c1, d = p["c1"], p["d"]
    M = N * H * W
    P_ = H * W
    WD = W * d
    x2d = jnp.transpose(x_nchw, (0, 2, 3, 1)).reshape(M, D).astype(jnp.float32)

    # --- A: cv1 (+BN+SiLU) single matmul + split + in_conv -> packed 128-wide slab
    slab = _rows_call(
        functools.partial(_cv1_kernel, c1=c1, slab_cols=_SLAB),
        [x2d], [p["cv1_w"], p["cv1_b"], p["in_w"], p["in_b"]],
        [_SLAB], M)[0]

    # TODO(synk): exact erf-GELU has no Mosaic lowering; applied in XLA (16 KB tensor).
    out2d = jax.nn.gelu(slab[:, D:D + d], approximate=False)
    out = out2d.reshape(N, H, W, d)

    # --- B: fac_pool + fac_conv + channel_attention (tiny fused kernel) ------
    pooled = jnp.mean(out, axis=(1, 2))                  # AdaptiveAvgPool2d(1)
    x_att, cw = _rows_call(
        _att_kernel, [pooled],
        [p["fac_w"], p["fac_b"], p["att_w1"], p["att_b1"], p["att_w2"], p["att_b2"]],
        [d, d], N)

    # --- spectral scaling |ifft2(x_att * fft2(out))| --------------------------
    # TODO(synk): complex FFT / complex multiply / abs have no Pallas equivalent.
    x_fft = jnp.fft.fft2(out, axes=(1, 2), norm="backward")
    x_fca = jnp.abs(jnp.fft.ifft2(x_att[:, None, None, :] * x_fft,
                                  axes=(1, 2), norm="backward")).astype(jnp.float32)

    # --- C: lane-dense sca path + FFM 1x1 convs, one grid step per image -----
    xp = jnp.pad(x_fca, ((0, 0), (2, 2), (2, 2), (0, 0)))
    xsh = jnp.stack([xp[:, :, dx:dx + W, :].reshape(N, H + 4, WD)
                     for dx in range(5)], axis=1)        # (N, 5, H+4, W*d)
    cw_tile = jnp.tile(cw, (1, W)).reshape(N, 1, WD)     # (N, 1, W*d)
    x_sca, x12 = pl.pallas_call(
        functools.partial(_sca_ffm_kernel, H=H),
        grid=(N,),
        in_specs=[
            pl.BlockSpec((1, 5, H + 4, WD), lambda n: (n, 0, 0, 0)),
            pl.BlockSpec((5, 5, WD), lambda n: (0, 0, 0)),
            pl.BlockSpec((WD, WD), lambda n: (0, 0)),
            pl.BlockSpec((1, WD), lambda n: (0, 0)),
            pl.BlockSpec((1, 1, WD), lambda n: (n, 0, 0)),
            pl.BlockSpec((WD, 2 * WD), lambda n: (0, 0)),
            pl.BlockSpec((1, 2 * WD), lambda n: (0, 0)),
        ],
        out_specs=(pl.BlockSpec((1, H, WD), lambda n: (n, 0, 0)),
                   pl.BlockSpec((1, H, 2 * WD), lambda n: (n, 0, 0))),
        out_shape=(jax.ShapeDtypeStruct((N, H, WD), jnp.float32),
                   jax.ShapeDtypeStruct((N, H, 2 * WD), jnp.float32)),
        compiler_params=pltpu.CompilerParams(dimension_semantics=("parallel",)),
    )(xsh, p["sca_wdw"], p["sca_w1"], p["sca_b1"], cw_tile, p["ffm_w"], p["ffm_b"])

    # --- FFM spectral modulation (XLA FFT) ------------------------------------
    x12 = x12.reshape(N, H, W, 2 * d)
    x1, x2 = x12[..., :d], x12[..., d:]
    ffm_abs = jnp.abs(jnp.fft.ifft2(
        x1 * jnp.fft.fft2(x2, axes=(1, 2), norm="backward"),
        axes=(1, 2), norm="backward")).astype(jnp.float32)

    # --- D: depthwise 31x31 (+dw_11) via precomputed Toeplitz, single step ----
    xcm = jnp.transpose(out2d.reshape(N, P_, d), (2, 0, 1))     # (d, N, P) 16 KB
    g = _DW_GROUPS if (d % _DW_GROUPS == 0) else 1
    cg = d // g
    dwT = pl.pallas_call(
        _dw31_kernel,
        grid=(g,),
        in_specs=[pl.BlockSpec((cg, N, P_), lambda i: (i, 0, 0)),
                  pl.BlockSpec((cg, P_, P_), lambda i: (i, 0, 0))],
        out_specs=pl.BlockSpec((cg, N, P_), lambda i: (i, 0, 0)),
        out_shape=jax.ShapeDtypeStruct((d, N, P_), jnp.float32),
        compiler_params=pltpu.CompilerParams(dimension_semantics=("parallel",)),
    )(xcm, p["dw31_T"])
    dw2d = jnp.transpose(dwT, (1, 2, 0)).reshape(M, d)          # tiny XLA transpose

    # --- E: residual + ReLU + out_conv (folded) + split-K cv2 + SiLU ----------
    y2d = _rows_call(
        functools.partial(_final_cv2_kernel, c1=c1, dim=D),
        [slab, dw2d, ffm_abs.reshape(M, d), x_sca.reshape(M, d)],
        [p["dw31_b"], p["alpha"], p["beta"],
         p["final_wm"], p["final_wid"], p["final_b"]],
        [D], M)[0]
    return jnp.transpose(y2d.reshape(N, H, W, D), (0, 3, 1, 2))


# --------------------------------------------------------------------------
if __name__ == "__main__":
    key = jax.random.PRNGKey(0)
    kx, kp = jax.random.split(key)

    N, dim, H, W = 2, 32, 16, 16        # inner branch: int(32*0.25) = 8 channels
    x = jax.random.normal(kx, (N, dim, H, W), jnp.float32)      # NCHW like PyTorch
    params = init_mfff(kp, dim, H, W, e=0.25)

    fwd = jax.jit(lambda v: mfff_forward(v, params))
    out = jax.block_until_ready(fwd(x))

    assert out.shape == (N, dim, H, W), out.shape
    assert bool(jnp.all(jnp.isfinite(out)))
    print("KERNEL_OK")
</pallas_src>

<mosaic_0001>
module attributes {stable_mosaic.version = 11 : i64} {
  func.func @_cv1_kernel(%arg0: i32, %arg1: memref<512x32xf32, #tpu.memory_space<vmem>>, %arg2: memref<32x32xbf16, #tpu.memory_space<vmem>>, %arg3: memref<1x32xf32, #tpu.memory_space<vmem>>, %arg4: memref<8x8xbf16, #tpu.memory_space<vmem>>, %arg5: memref<1x8xf32, #tpu.memory_space<vmem>>, %arg6: memref<512x128xf32, #tpu.memory_space<vmem>>) attributes {dimension_semantics = [#tpu.dimension_semantics<parallel>], iteration_bounds = array<i64: 1>, scalar_prefetch = 0 : i64, scratch_operands = 0 : i64, tpu.core_type = #tpu.core_type<tc>, window_params = [{transform_indices = @transform_0, window_bounds = array<i64: 512, 32>}, {pipeline_mode = #tpu.pipeline_mode<synchronous>, transform_indices = @transform_1, window_bounds = array<i64: 32, 32>}, {pipeline_mode = #tpu.pipeline_mode<synchronous>, transform_indices = @transform_2, window_bounds = array<i64: 1, 32>}, {pipeline_mode = #tpu.pipeline_mode<synchronous>, transform_indices = @transform_3, window_bounds = array<i64: 8, 8>}, {pipeline_mode = #tpu.pipeline_mode<synchronous>, transform_indices = @transform_4, window_bounds = array<i64: 1, 8>}, {transform_indices = @transform_5, window_bounds = array<i64: 512, 128>}]} {
    %c0 = arith.constant 0 : index
    %c0_0 = arith.constant 0 : index
    %0 = vector.load %arg1[%c0, %c0_0] : memref<512x32xf32, #tpu.memory_space<vmem>>, vector<512x32xf32>
    %1 = arith.truncf %0 : vector<512x32xf32> to vector<512x32xbf16>
    %c0_1 = arith.constant 0 : index
    %c0_2 = arith.constant 0 : index
    %2 = vector.load %arg2[%c0_1, %c0_2] : memref<32x32xbf16, #tpu.memory_space<vmem>>, vector<32x32xbf16>
    %cst = arith.constant dense<0.000000e+00> : vector<512x32xf32>
    %3 = tpu.matmul %1, %2, %cst {dimension_numbers = #tpu.dot_dimension_numbers<[1], [0], [0], [1], [0, 0, 1, 1], [], []>} : vector<512x32xbf16>, vector<32x32xbf16>, vector<512x32xf32> -> vector<512x32xf32>
    %c0_3 = arith.constant 0 : index
    %c0_4 = arith.constant 0 : index
    %4 = vector.load %arg3[%c0_3, %c0_4] : memref<1x32xf32, #tpu.memory_space<vmem>>, vector<1x32xf32>
    %5 = vector.broadcast %4 : vector<1x32xf32> to vector<512x32xf32>
    %6 = arith.addf %3, %5 : vector<512x32xf32>
    %7 = arith.negf %6 : vector<512x32xf32>
    %8 = math.exp %7 : vector<512x32xf32>
    %cst_5 = arith.constant 1.000000e+00 : f32
    %9 = vector.broadcast %cst_5 : f32 to vector<512x32xf32>
    %10 = arith.addf %9, %8 : vector<512x32xf32>
    %11 = arith.divf %9, %10 : vector<512x32xf32>
    %12 = arith.mulf %6, %11 : vector<512x32xf32>
    %13 = vector.extract_strided_slice %12 {offsets = [0, 0], sizes = [512, 8], strides = [1, 1]} : vector<512x32xf32> to vector<512x8xf32>
    %14 = arith.truncf %13 : vector<512x8xf32> to vector<512x8xbf16>
    %c0_6 = arith.constant 0 : index
    %c0_7 = arith.constant 0 : index
    %15 = vector.load %arg4[%c0_6, %c0_7] : memref<8x8xbf16, #tpu.memory_space<vmem>>, vector<8x8xbf16>
    %cst_8 = arith.constant dense<0.000000e+00> : vector<512x8xf32>
    %16 = tpu.matmul %14, %15, %cst_8 {dimension_numbers = #tpu.dot_dimension_numbers<[1], [0], [0], [1], [0, 0, 1, 1], [], []>} : vector<512x8xbf16>, vector<8x8xbf16>, vector<512x8xf32> -> vector<512x8xf32>
    %c0_9 = arith.constant 0 : index
    %c0_10 = arith.constant 0 : index
    %17 = vector.load %arg5[%c0_9, %c0_10] : memref<1x8xf32, #tpu.memory_space<vmem>>, vector<1x8xf32>
    %18 = vector.broadcast %17 : vector<1x8xf32> to vector<512x8xf32>
    %19 = arith.addf %16, %18 : vector<512x8xf32>
    %cst_11 = arith.constant 0.000000e+00 : f32
    %20 = vector.broadcast %cst_11 : f32 to vector<512x88xf32>
    %21 = tpu.concatenate %12, %19, %20 in 1 : vector<512x32xf32>, vector<512x8xf32>, vector<512x88xf32> -> vector<512x128xf32>
    %c0_12 = arith.constant 0 : index
    %c0_13 = arith.constant 0 : index
    %22 = vector.load %arg6[%c0_12, %c0_13] : memref<512x128xf32, #tpu.memory_space<vmem>>, vector<512x128xf32>
    tpu.vector_store %arg6[%c0_12, %c0_13], %21 {strides = array<i32>} : memref<512x128xf32, #tpu.memory_space<vmem>>, vector<512x128xf32>,
    return
  }
  func.func @transform_0(%arg0: i32) -> (i32, i32) {
    %c0_i32 = arith.constant 0 : i32
    %c0_i32_0 = arith.constant 0 : i32
    return %arg0, %c0_i32 : i32, i32
  }
  func.func @transform_1(%arg0: i32) -> (i32, i32) {
    %c0_i32 = arith.constant 0 : i32
    %c0_i32_0 = arith.constant 0 : i32
    %c0_i32_1 = arith.constant 0 : i32
    return %c0_i32, %c0_i32_0 : i32, i32
  }
  func.func @transform_2(%arg0: i32) -> (i32, i32) {
    %c0_i32 = arith.constant 0 : i32
    %c0_i32_0 = arith.constant 0 : i32
    %c0_i32_1 = arith.constant 0 : i32
    return %c0_i32, %c0_i32_0 : i32, i32
  }
  func.func @transform_3(%arg0: i32) -> (i32, i32) {
    %c0_i32 = arith.constant 0 : i32
    %c0_i32_0 = arith.constant 0 : i32
    %c0_i32_1 = arith.constant 0 : i32
    return %c0_i32, %c0_i32_0 : i32, i32
  }
  func.func @transform_4(%arg0: i32) -> (i32, i32) {
    %c0_i32 = arith.constant 0 : i32
    %c0_i32_0 = arith.constant 0 : i32
    %c0_i32_1 = arith.constant 0 : i32
    return %c0_i32, %c0_i32_0 : i32, i32
  }
  func.func @transform_5(%arg0: i32) -> (i32, i32) {
    %c0_i32 = arith.constant 0 : i32
    %c0_i32_0 = arith.constant 0 : i32
    return %arg0, %c0_i32 : i32, i32
  }
}

module attributes {stable_mosaic.version = 11 : i64} {
  func.func @_dw31_kernel(%arg0: i32, %arg1: memref<8x2x256xf32, #tpu.memory_space<vmem>>, %arg2: memref<8x256x256xbf16, #tpu.memory_space<vmem>>, %arg3: memref<8x2x256xf32, #tpu.memory_space<vmem>>) attributes {dimension_semantics = [#tpu.dimension_semantics<parallel>], iteration_bounds = array<i64: 1>, scalar_prefetch = 0 : i64, scratch_operands = 0 : i64, tpu.core_type = #tpu.core_type<tc>, window_params = [{transform_indices = @transform_0, window_bounds = array<i64: 8, 2, 256>}, {transform_indices = @transform_1, window_bounds = array<i64: 8, 256, 256>}, {transform_indices = @transform_2, window_bounds = array<i64: 8, 2, 256>}]} {
    %c0 = arith.constant 0 : index
    %c0_0 = arith.constant 0 : index
    %c0_1 = arith.constant 0 : index
    %0 = vector.load %arg1[%c0, %c0_0, %c0_1] : memref<8x2x256xf32, #tpu.memory_space<vmem>>, vector<1x2x256xf32>
    %1 = vector.shape_cast %0 : vector<1x2x256xf32> to vector<2x256xf32>
    %2 = arith.truncf %1 : vector<2x256xf32> to vector<2x256xbf16>
    %c0_2 = arith.constant 0 : index
    %c0_3 = arith.constant 0 : index
    %c0_4 = arith.constant 0 : index
    %3 = vector.load %arg2[%c0_2, %c0_3, %c0_4] : memref<8x256x256xbf16, #tpu.memory_space<vmem>>, vector<1x256x256xbf16>
    %4 = vector.shape_cast %3 : vector<1x256x256xbf16> to vector<256x256xbf16>
    %cst = arith.constant dense<0.000000e+00> : vector<2x256xf32>
    %5 = tpu.matmul %2, %4, %cst {dimension_numbers = #tpu.dot_dimension_numbers<[1], [0], [0], [1], [0, 0, 1, 1], [], []>} : vector<2x256xbf16>, vector<256x256xbf16>, vector<2x256xf32> -> vector<2x256xf32>
    %c0_5 = arith.constant 0 : index
    %c0_6 = arith.constant 0 : index
    %c0_7 = arith.constant 0 : index
    %6 = vector.load %arg3[%c0_5, %c0_6, %c0_7] : memref<8x2x256xf32, #tpu.memory_space<vmem>>, vector<1x2x256xf32>
    %7 = vector.shape_cast %6 : vector<1x2x256xf32> to vector<2x256xf32>
    %8 = vector.shape_cast %5 : vector<2x256xf32> to vector<1x2x256xf32>
    tpu.vector_store %arg3[%c0_5, %c0_6, %c0_7], %8 {strides = array<i32>} : memref<8x2x256xf32, #tpu.memory_space<vmem>>, vector<1x2x256xf32>,
    %c1 = arith.constant 1 : index
    %c0_8 = arith.constant 0 : index
    %c0_9 = arith.constant 0 : index
    %9 = vector.load %arg1[%c1, %c0_8, %c0_9] : memref<8x2x256xf32, #tpu.memory_space<vmem>>, vector<1x2x256xf32>
    %10 = vector.shape_cast %9 : vector<1x2x256xf32> to vector<2x256xf32>
    %11 = arith.truncf %10 : vector<2x256xf32> to vector<2x256xbf16>
    %c1_10 = arith.constant 1 : index
    %c0_11 = arith.constant 0 : index
    %c0_12 = arith.constant 0 : index
    %12 = vector.load %arg2[%c1_10, %c0_11, %c0_12] : memref<8x256x256xbf16, #tpu.memory_space<vmem>>, vector<1x256x256xbf16>
    %13 = vector.shape_cast %12 : vector<1x256x256xbf16> to vector<256x256xbf16>
    %cst_13 = arith.constant dense<0.000000e+00> : vector<2x256xf32>
    %14 = tpu.matmul %11, %13, %cst_13 {dimension_numbers = #tpu.dot_dimension_numbers<[1], [0], [0], [1], [0, 0, 1, 1], [], []>} : vector<2x256xbf16>, vector<256x256xbf16>, vector<2x256xf32> -> vector<2x256xf32>
    %c1_14 = arith.constant 1 : index
    %c0_15 = arith.constant 0 : index
    %c0_16 = arith.constant 0 : index
    %15 = vector.load %arg3[%c1_14, %c0_15, %c0_16] : memref<8x2x256xf32, #tpu.memory_space<vmem>>, vector<1x2x256xf32>
    %16 = vector.shape_cast %15 : vector<1x2x256xf32> to vector<2x256xf32>
    %17 = vector.shape_cast %14 : vector<2x256xf32> to vector<1x2x256xf32>
    tpu.vector_store %arg3[%c1_14, %c0_15, %c0_16], %17 {strides = array<i32>} : memref<8x2x256xf32, #tpu.memory_space<vmem>>, vector<1x2x256xf32>,
    %c2 = arith.constant 2 : index
    %c0_17 = arith.constant 0 : index
    %c0_18 = arith.constant 0 : index
    %18 = vector.load %arg1[%c2, %c0_17, %c0_18] : memref<8x2x256xf32, #tpu.memory_space<vmem>>, vector<1x2x256xf32>
    %19 = vector.shape_cast %18 : vector<1x2x256xf32> to vector<2x256xf32>
    %20 = arith.truncf %19 : vector<2x256xf32> to vector<2x256xbf16>
    %c2_19 = arith.constant 2 : index
    %c0_20 = arith.constant 0 : index
    %c0_21 = arith.constant 0 : index
    %21 = vector.load %arg2[%c2_19, %c0_20, %c0_21] : memref<8x256x256xbf16, #tpu.memory_space<vmem>>, vector<1x256x256xbf16>
    %22 = vector.shape_cast %21 : vector<1x256x256xbf16> to vector<256x256xbf16>
    %cst_22 = arith.constant dense<0.000000e+00> : vector<2x256xf32>
    %23 = tpu.matmul %20, %22, %cst_22 {dimension_numbers = #tpu.dot_dimension_numbers<[1], [0], [0], [1], [0, 0, 1, 1], [], []>} : vector<2x256xbf16>, vector<256x256xbf16>, vector<2x256xf32> -> vector<2x256xf32>
    %c2_23 = arith.constant 2 : index
    %c0_24 = arith.constant 0 : index
    %c0_25 = arith.constant 0 : index
    %24 = vector.load %arg3[%c2_23, %c0_24, %c0_25] : memref<8x2x256xf32, #tpu.memory_space<vmem>>, vector<1x2x256xf32>
    %25 = vector.shape_cast %24 : vector<1x2x256xf32> to vector<2x256xf32>
    %26 = vector.shape_cast %23 : vector<2x256xf32> to vector<1x2x256xf32>
    tpu.vector_store %arg3[%c2_23, %c0_24, %c0_25], %26 {strides = array<i32>} : memref<8x2x256xf32, #tpu.memory_space<vmem>>, vector<1x2x256xf32>,
    %c3 = arith.constant 3 : index
    %c0_26 = arith.constant 0 : index
    %c0_27 = arith.constant 0 : index
    %27 = vector.load %arg1[%c3, %c0_26, %c0_27] : memref<8x2x256xf32, #tpu.memory_space<vmem>>, vector<1x2x256xf32>
    %28 = vector.shape_cast %27 : vector<1x2x256xf32> to vector<2x256xf32>
    %29 = arith.truncf %28 : vector<2x256xf32> to vector<2x256xbf16>
    %c3_28 = arith.constant 3 : index
    %c0_29 = arith.constant 0 : index
    %c0_30 = arith.constant 0 : index
    %30 = vector.load %arg2[%c3_28, %c0_29, %c0_30] : memref<8x256x256xbf16, #tpu.memory_space<vmem>>, vector<1x256x256xbf16>
    %31 = vector.shape_cast %30 : vector<1x256x256xbf16> to vector<256x256xbf16>
    %cst_31 = arith.constant dense<0.000000e+00> : vector<2x256xf32>
    %32 = tpu.matmul %29, %31, %cst_31 {dimension_numbers = #tpu.dot_dimension_numbers<[1], [0], [0], [1], [0, 0, 1, 1], [], []>} : vector<2x256xbf16>, vector<256x256xbf16>, vector<2x256xf32> -> vector<2x256xf32>
    %c3_32 = arith.constant 3 : index
    %c0_33 = arith.constant 0 : index
    %c0_34 = arith.constant 0 : index
    %33 = vector.load %arg3[%c3_32, %c0_33, %c0_34] : memref<8x2x256xf32, #tpu.memory_space<vmem>>, vector<1x2x256xf32>
    %34 = vector.shape_cast %33 : vector<1x2x256xf32> to vector<2x256xf32>
    %35 = vector.shape_cast %32 : vector<2x256xf32> to vector<1x2x256xf32>
    tpu.vector_store %arg3[%c3_32, %c0_33, %c0_34], %35 {strides = array<i32>} : memref<8x2x256xf32, #tpu.memory_space<vmem>>, vector<1x2x256xf32>,
    %c4 = arith.constant 4 : index
    %c0_35 = arith.constant 0 : index
    %c0_36 = arith.constant 0 : index
    %36 = vector.load %arg1[%c4, %c0_35, %c0_36] : memref<8x2x256xf32, #tpu.memory_space<vmem>>, vector<1x2x256xf32>
    %37 = vector.shape_cast %36 : vector<1x2x256xf32> to vector<2x256xf32>
    %38 = arith.truncf %37 : vector<2x256xf32> to vector<2x256xbf16>
    %c4_37 = arith.constant 4 : index
    %c0_38 = arith.constant 0 : index
    %c0_39 = arith.constant 0 : index
    %39 = vector.load %arg2[%c4_37, %c0_38, %c0_39] : memref<8x256x256xbf16, #tpu.memory_space<vmem>>, vector<1x256x256xbf16>
    %40 = vector.shape_cast %39 : vector<1x256x256xbf16> to vector<256x256xbf16>
    %cst_40 = arith.constant dense<0.000000e+00> : vector<2x256xf32>
    %41 = tpu.matmul %38, %40, %cst_40 {dimension_numbers = #tpu.dot_dimension_numbers<[1], [0], [0], [1], [0, 0, 1, 1], [], []>} : vector<2x256xbf16>, vector<256x256xbf16>, vector<2x256xf32> -> vector<2x256xf32>
    %c4_41 = arith.constant 4 : index
    %c0_42 = arith.constant 0 : index
    %c0_43 = arith.constant 0 : index
    %42 = vector.load %arg3[%c4_41, %c0_42, %c0_43] : memref<8x2x256xf32, #tpu.memory_space<vmem>>, vector<1x2x256xf32>
    %43 = vector.shape_cast %42 : vector<1x2x256xf32> to vector<2x256xf32>
    %44 = vector.shape_cast %41 : vector<2x256xf32> to vector<1x2x256xf32>
    tpu.vector_store %arg3[%c4_41, %c0_42, %c0_43], %44 {strides = array<i32>} : memref<8x2x256xf32, #tpu.memory_space<vmem>>, vector<1x2x256xf32>,
    %c5 = arith.constant 5 : index
    %c0_44 = arith.constant 0 : index
    %c0_45 = arith.constant 0 : index
    %45 = vector.load %arg1[%c5, %c0_44, %c0_45] : memref<8x2x256xf32, #tpu.memory_space<vmem>>, vector<1x2x256xf32>
    %46 = vector.shape_cast %45 : vector<1x2x256xf32> to vector<2x256xf32>
    %47 = arith.truncf %46 : vector<2x256xf32> to vector<2x256xbf16>
    %c5_46 = arith.constant 5 : index
    %c0_47 = arith.constant 0 : index
    %c0_48 = arith.constant 0 : index
    %48 = vector.load %arg2[%c5_46, %c0_47, %c0_48] : memref<8x256x256xbf16, #tpu.memory_space<vmem>>, vector<1x256x256xbf16>
    %49 = vector.shape_cast %48 : vector<1x256x256xbf16> to vector<256x256xbf16>
    %cst_49 = arith.constant dense<0.000000e+00> : vector<2x256xf32>
    %50 = tpu.matmul %47, %49, %cst_49 {dimension_numbers = #tpu.dot_dimension_numbers<[1], [0], [0], [1], [0, 0, 1, 1], [], []>} : vector<2x256xbf16>, vector<256x256xbf16>, vector<2x256xf32> -> vector<2x256xf32>
    %c5_50 = arith.constant 5 : index
    %c0_51 = arith.constant 0 : index
    %c0_52 = arith.constant 0 : index
    %51 = vector.load %arg3[%c5_50, %c0_51, %c0_52] : memref<8x2x256xf32, #tpu.memory_space<vmem>>, vector<1x2x256xf32>
    %52 = vector.shape_cast %51 : vector<1x2x256xf32> to vector<2x256xf32>
    %53 = vector.shape_cast %50 : vector<2x256xf32> to vector<1x2x256xf32>
    tpu.vector_store %arg3[%c5_50, %c0_51, %c0_52], %53 {strides = array<i32>} : memref<8x2x256xf32, #tpu.memory_space<vmem>>, vector<1x2x256xf32>,
    %c6 = arith.constant 6 : index
    %c0_53 = arith.constant 0 : index
    %c0_54 = arith.constant 0 : index
    %54 = vector.load %arg1[%c6, %c0_53, %c0_54] : memref<8x2x256xf32, #tpu.memory_space<vmem>>, vector<1x2x256xf32>
    %55 = vector.shape_cast %54 : vector<1x2x256xf32> to vector<2x256xf32>
    %56 = arith.truncf %55 : vector<2x256xf32> to vector<2x256xbf16>
    %c6_55 = arith.constant 6 : index
    %c0_56 = arith.constant 0 : index
    %c0_57 = arith.constant 0 : index
    %57 = vector.load %arg2[%c6_55, %c0_56, %c0_57] : memref<8x256x256xbf16, #tpu.memory_space<vmem>>, vector<1x256x256xbf16>
    %58 = vector.shape_cast %57 : vector<1x256x256xbf16> to vector<256x256xbf16>
    %cst_58 = arith.constant dense<0.000000e+00> : vector<2x256xf32>
    %59 = tpu.matmul %56, %58, %cst_58 {dimension_numbers = #tpu.dot_dimension_numbers<[1], [0], [0], [1], [0, 0, 1, 1], [], []>} : vector<2x256xbf16>, vector<256x256xbf16>, vector<2x256xf32> -> vector<2x256xf32>
    %c6_59 = arith.constant 6 : index
    %c0_60 = arith.constant 0 : index
    %c0_61 = arith.constant 0 : index
    %60 = vector.load %arg3[%c6_59, %c0_60, %c0_61] : memref<8x2x256xf32, #tpu.memory_space<vmem>>, vector<1x2x256xf32>
    %61 = vector.shape_cast %60 : vector<1x2x256xf32> to vector<2x256xf32>
    %62 = vector.shape_cast %59 : vector<2x256xf32> to vector<1x2x256xf32>
    tpu.vector_store %arg3[%c6_59, %c0_60, %c0_61], %62 {strides = array<i32>} : memref<8x2x256xf32, #tpu.memory_space<vmem>>, vector<1x2x256xf32>,
    %c7 = arith.constant 7 : index
    %c0_62 = arith.constant 0 : index
    %c0_63 = arith.constant 0 : index
    %63 = vector.load %arg1[%c7, %c0_62, %c0_63] : memref<8x2x256xf32, #tpu.memory_space<vmem>>, vector<1x2x256xf32>
    %64 = vector.shape_cast %63 : vector<1x2x256xf32> to vector<2x256xf32>
    %65 = arith.truncf %64 : vector<2x256xf32> to vector<2x256xbf16>
    %c7_64 = arith.constant 7 : index
    %c0_65 = arith.constant 0 : index
    %c0_66 = arith.constant 0 : index
    %66 = vector.load %arg2[%c7_64, %c0_65, %c0_66] : memref<8x256x256xbf16, #tpu.memory_space<vmem>>, vector<1x256x256xbf16>
    %67 = vector.shape_cast %66 : vector<1x256x256xbf16> to vector<256x256xbf16>
    %cst_67 = arith.constant dense<0.000000e+00> : vector<2x256xf32>
    %68 = tpu.matmul %65, %67, %cst_67 {dimension_numbers = #tpu.dot_dimension_numbers<[1], [0], [0], [1], [0, 0, 1, 1], [], []>} : vector<2x256xbf16>, vector<256x256xbf16>, vector<2x256xf32> -> vector<2x256xf32>
    %c7_68 = arith.constant 7 : index
    %c0_69 = arith.constant 0 : index
    %c0_70 = arith.constant 0 : index
    %69 = vector.load %arg3[%c7_68, %c0_69, %c0_70] : memref<8x2x256xf32, #tpu.memory_space<vmem>>, vector<1x2x256xf32>
    %70 = vector.shape_cast %69 : vector<1x2x256xf32> to vector<2x256xf32>
    %71 = vector.shape_cast %68 : vector<2x256xf32> to vector<1x2x256xf32>
    tpu.vector_store %arg3[%c7_68, %c0_69, %c0_70], %71 {strides = array<i32>} : memref<8x2x256xf32, #tpu.memory_space<vmem>>, vector<1x2x256xf32>,
    return
  }
  func.func @transform_0(%arg0: i32) -> (i32, i32, i32) {
    %c0_i32 = arith.constant 0 : i32
    %c0_i32_0 = arith.constant 0 : i32
    %c0_i32_1 = arith.constant 0 : i32
    return %arg0, %c0_i32, %c0_i32_0 : i32, i32, i32
  }
  func.func @transform_1(%arg0: i32) -> (i32, i32, i32) {
    %c0_i32 = arith.constant 0 : i32
    %c0_i32_0 = arith.constant 0 : i32
    %c0_i32_1 = arith.constant 0 : i32
    return %arg0, %c0_i32, %c0_i32_0 : i32, i32, i32
  }
  func.func @transform_2(%arg0: i32) -> (i32, i32, i32) {
    %c0_i32 = arith.constant 0 : i32
    %c0_i32_0 = arith.constant 0 : i32
    %c0_i32_1 = arith.constant 0 : i32
    return %arg0, %c0_i32, %c0_i32_0 : i32, i32, i32
  }
}

module attributes {stable_mosaic.version = 11 : i64} {
  func.func @_att_kernel(%arg0: i32, %arg1: memref<8x8xf32, #tpu.memory_space<vmem>>, %arg2: memref<8x8xf32, #tpu.memory_space<vmem>>, %arg3: memref<1x8xf32, #tpu.memory_space<vmem>>, %arg4: memref<8x8xf32, #tpu.memory_space<vmem>>, %arg5: memref<1x8xf32, #tpu.memory_space<vmem>>, %arg6: memref<8x8xf32, #tpu.memory_space<vmem>>, %arg7: memref<1x8xf32, #tpu.memory_space<vmem>>, %arg8: memref<8x8xf32, #tpu.memory_space<vmem>>, %arg9: memref<8x8xf32, #tpu.memory_space<vmem>>) attributes {dimension_semantics = [#tpu.dimension_semantics<parallel>], iteration_bounds = array<i64: 1>, scalar_prefetch = 0 : i64, scratch_operands = 0 : i64, tpu.core_type = #tpu.core_type<tc>, window_params = [{transform_indices = @transform_0, window_bounds = array<i64: 8, 8>}, {pipeline_mode = #tpu.pipeline_mode<synchronous>, transform_indices = @transform_1, window_bounds = array<i64: 8, 8>}, {pipeline_mode = #tpu.pipeline_mode<synchronous>, transform_indices = @transform_2, window_bounds = array<i64: 1, 8>}, {pipeline_mode = #tpu.pipeline_mode<synchronous>, transform_indices = @transform_3, window_bounds = array<i64: 8, 8>}, {pipeline_mode = #tpu.pipeline_mode<synchronous>, transform_indices = @transform_4, window_bounds = array<i64: 1, 8>}, {pipeline_mode = #tpu.pipeline_mode<synchronous>, transform_indices = @transform_5, window_bounds = array<i64: 8, 8>}, {pipeline_mode = #tpu.pipeline_mode<synchronous>, transform_indices = @transform_6, window_bounds = array<i64: 1, 8>}, {transform_indices = @transform_7, window_bounds = array<i64: 8, 8>}, {transform_indices = @transform_8, window_bounds = array<i64: 8, 8>}]} {
    %c0 = arith.constant 0 : index
    %c0_0 = arith.constant 0 : index
    %0 = vector.load %arg1[%c0, %c0_0] : memref<8x8xf32, #tpu.memory_space<vmem>>, vector<8x8xf32>
    %c0_1 = arith.constant 0 : index
    %c0_2 = arith.constant 0 : index
    %1 = vector.load %arg2[%c0_1, %c0_2] : memref<8x8xf32, #tpu.memory_space<vmem>>, vector<8x8xf32>
    %cst = arith.constant dense<0.000000e+00> : vector<8x8xf32>
    %2 = tpu.matmul %0, %1, %cst {dimension_numbers = #tpu.dot_dimension_numbers<[1], [0], [0], [1], [0, 0, 1, 1], [], []>} : vector<8x8xf32>, vector<8x8xf32>, vector<8x8xf32> -> vector<8x8xf32>
    %c0_3 = arith.constant 0 : index
    %c0_4 = arith.constant 0 : index
    %3 = vector.load %arg3[%c0_3, %c0_4] : memref<1x8xf32, #tpu.memory_space<vmem>>, vector<1x8xf32>
    %4 = vector.broadcast %3 : vector<1x8xf32> to vector<8x8xf32>
    %5 = arith.addf %2, %4 : vector<8x8xf32>
    %c0_5 = arith.constant 0 : index
    %c0_6 = arith.constant 0 : index
    %6 = vector.load %arg4[%c0_5, %c0_6] : memref<8x8xf32, #tpu.memory_space<vmem>>, vector<8x8xf32>
    %cst_7 = arith.constant dense<0.000000e+00> : vector<8x8xf32>
    %7 = tpu.matmul %5, %6, %cst_7 {dimension_numbers = #tpu.dot_dimension_numbers<[1], [0], [0], [1], [0, 0, 1, 1], [], []>} : vector<8x8xf32>, vector<8x8xf32>, vector<8x8xf32> -> vector<8x8xf32>
    %c0_8 = arith.constant 0 : index
    %c0_9 = arith.constant 0 : index
    %8 = vector.load %arg5[%c0_8, %c0_9] : memref<1x8xf32, #tpu.memory_space<vmem>>, vector<1x8xf32>
    %9 = vector.broadcast %8 : vector<1x8xf32> to vector<8x8xf32>
    %10 = arith.addf %7, %9 : vector<8x8xf32>
    %cst_10 = arith.constant 0.000000e+00 : f32
    %11 = vector.broadcast %cst_10 : f32 to vector<8x8xf32>
    %12 = arith.maximumf %10, %11 : vector<8x8xf32>
    %c0_11 = arith.constant 0 : index
    %c0_12 = arith.constant 0 : index
    %13 = vector.load %arg6[%c0_11, %c0_12] : memref<8x8xf32, #tpu.memory_space<vmem>>, vector<8x8xf32>
    %cst_13 = arith.constant dense<0.000000e+00> : vector<8x8xf32>
    %14 = tpu.matmul %12, %13, %cst_13 {dimension_numbers = #tpu.dot_dimension_numbers<[1], [0], [0], [1], [0, 0, 1, 1], [], []>} : vector<8x8xf32>, vector<8x8xf32>, vector<8x8xf32> -> vector<8x8xf32>
    %c0_14 = arith.constant 0 : index
    %c0_15 = arith.constant 0 : index
    %15 = vector.load %arg7[%c0_14, %c0_15] : memref<1x8xf32, #tpu.memory_space<vmem>>, vector<1x8xf32>
    %16 = vector.broadcast %15 : vector<1x8xf32> to vector<8x8xf32>
    %17 = arith.addf %14, %16 : vector<8x8xf32>
    %18 = arith.negf %17 : vector<8x8xf32>
    %19 = math.exp %18 : vector<8x8xf32>
    %cst_16 = arith.constant 1.000000e+00 : f32
    %20 = vector.broadcast %cst_16 : f32 to vector<8x8xf32>
    %21 = arith.addf %20, %19 : vector<8x8xf32>
    %22 = arith.divf %20, %21 : vector<8x8xf32>
    %c0_17 = arith.constant 0 : index
    %c0_18 = arith.constant 0 : index
    %23 = vector.load %arg8[%c0_17, %c0_18] : memref<8x8xf32, #tpu.memory_space<vmem>>, vector<8x8xf32>
    tpu.vector_store %arg8[%c0_17, %c0_18], %5 {strides = array<i32>} : memref<8x8xf32, #tpu.memory_space<vmem>>, vector<8x8xf32>,
    %c0_19 = arith.constant 0 : index
    %c0_20 = arith.constant 0 : index
    %24 = vector.load %arg9[%c0_19, %c0_20] : memref<8x8xf32, #tpu.memory_space<vmem>>, vector<8x8xf32>
    tpu.vector_store %arg9[%c0_19, %c0_20], %22 {strides = array<i32>} : memref<8x8xf32, #tpu.memory_space<vmem>>, vector<8x8xf32>,
    return
  }
  func.func @transform_0(%arg0: i32) -> (i32, i32) {
    %c0_i32 = arith.constant 0 : i32
    %c0_i32_0 = arith.constant 0 : i32
    return %arg0, %c0_i32 : i32, i32
  }
  func.func @transform_1(%arg0: i32) -> (i32, i32) {
    %c0_i32 = arith.constant 0 : i32
    %c0_i32_0 = arith.constant 0 : i32
    %c0_i32_1 = arith.constant 0 : i32
    return %c0_i32, %c0_i32_0 : i32, i32
  }
  func.func @transform_2(%arg0: i32) -> (i32, i32) {
    %c0_i32 = arith.constant 0 : i32
    %c0_i32_0 = arith.constant 0 : i32
    %c0_i32_1 = arith.constant 0 : i32
    return %c0_i32, %c0_i32_0 : i32, i32
  }
  func.func @transform_3(%arg0: i32) -> (i32, i32) {
    %c0_i32 = arith.constant 0 : i32
    %c0_i32_0 = arith.constant 0 : i32
    %c0_i32_1 = arith.constant 0 : i32
    return %c0_i32, %c0_i32_0 : i32, i32
  }
  func.func @transform_4(%arg0: i32) -> (i32, i32) {
    %c0_i32 = arith.constant 0 : i32
    %c0_i32_0 = arith.constant 0 : i32
    %c0_i32_1 = arith.constant 0 : i32
    return %c0_i32, %c0_i32_0 : i32, i32
  }
  func.func @transform_5(%arg0: i32) -> (i32, i32) {
    %c0_i32 = arith.constant 0 : i32
    %c0_i32_0 = arith.constant 0 : i32
    %c0_i32_1 = arith.constant 0 : i32
    return %c0_i32, %c0_i32_0 : i32, i32
  }
  func.func @transform_6(%arg0: i32) -> (i32, i32) {
    %c0_i32 = arith.constant 0 : i32
    %c0_i32_0 = arith.constant 0 : i32
    %c0_i32_1 = arith.constant 0 : i32
    return %c0_i32, %c0_i32_0 : i32, i32
  }
  func.func @transform_7(%arg0: i32) -> (i32, i32) {
    %c0_i32 = arith.constant 0 : i32
    %c0_i32_0 = arith.constant 0 : i32
    return %arg0, %c0_i32 : i32, i32
  }
  func.func @transform_8(%arg0: i32) -> (i32, i32) {
    %c0_i32 = arith.constant 0 : i32
    %c0_i32_0 = arith.constant 0 : i32
    return %arg0, %c0_i32 : i32, i32
  }
}

module attributes {stable_mosaic.version = 11 : i64} {
  func.func @_sca_ffm_kernel(%arg0: i32, %arg1: memref<1x5x20x128xf32, #tpu.memory_space<vmem>>, %arg2: memref<5x5x128xf32, #tpu.memory_space<vmem>>, %arg3: memref<128x128xbf16, #tpu.memory_space<vmem>>, %arg4: memref<1x128xf32, #tpu.memory_space<vmem>>, %arg5: memref<1x1x128xf32, #tpu.memory_space<vmem>>, %arg6: memref<128x256xbf16, #tpu.memory_space<vmem>>, %arg7: memref<1x256xf32, #tpu.memory_space<vmem>>, %arg8: memref<1x16x128xf32, #tpu.memory_space<vmem>>, %arg9: memref<1x16x256xf32, #tpu.memory_space<vmem>>) attributes {dimension_semantics = [#tpu.dimension_semantics<parallel>], iteration_bounds = array<i64: 2>, scalar_prefetch = 0 : i64, scratch_operands = 0 : i64, tpu.core_type = #tpu.core_type<tc>, window_params = [{transform_indices = @transform_0, window_bounds = array<i64: 1, 5, 20, 128>}, {pipeline_mode = #tpu.pipeline_mode<synchronous>, transform_indices = @transform_1, window_bounds = array<i64: 5, 5, 128>}, {pipeline_mode = #tpu.pipeline_mode<synchronous>, transform_indices = @transform_2, window_bounds = array<i64: 128, 128>}, {pipeline_mode = #tpu.pipeline_mode<synchronous>, transform_indices = @transform_3, window_bounds = array<i64: 1, 128>}, {transform_indices = @transform_4, window_bounds = array<i64: 1, 1, 128>}, {pipeline_mode = #tpu.pipeline_mode<synchronous>, transform_indices = @transform_5, window_bounds = array<i64: 128, 256>}, {pipeline_mode = #tpu.pipeline_mode<synchronous>, transform_indices = @transform_6, window_bounds = array<i64: 1, 256>}, {transform_indices = @transform_7, window_bounds = array<i64: 1, 16, 128>}, {transform_indices = @transform_8, window_bounds = array<i64: 1, 16, 256>}]} {
    %c0 = arith.constant 0 : index
    %c0_0 = arith.constant 0 : index
    %c0_1 = arith.constant 0 : index
    %c0_2 = arith.constant 0 : index
    %0 = vector.load %arg1[%c0, %c0_0, %c0_1, %c0_2] : memref<1x5x20x128xf32, #tpu.memory_space<vmem>>, vector<1x1x20x128xf32>
    %1 = vector.shape_cast %0 : vector<1x1x20x128xf32> to vector<20x128xf32>
    %2 = vector.extract_strided_slice %1 {offsets = [0, 0], sizes = [16, 128], strides = [1, 1]} : vector<20x128xf32> to vector<16x128xf32>
    %c0_3 = arith.constant 0 : index
    %c0_4 = arith.constant 0 : index
    %c0_5 = arith.constant 0 : index
    %3 = vector.load %arg2[%c0_3, %c0_4, %c0_5] : memref<5x5x128xf32, #tpu.memory_space<vmem>>, vector<1x1x128xf32>
    %4 = vector.shape_cast %3 : vector<1x1x128xf32> to vector<1x128xf32>
    %5 = vector.broadcast %4 : vector<1x128xf32> to vector<16x128xf32>
    %6 = arith.mulf %2, %5 : vector<16x128xf32>
    %7 = vector.extract_strided_slice %1 {offsets = [1, 0], sizes = [16, 128], strides = [1, 1]} : vector<20x128xf32> to vector<16x128xf32>
    %c1 = arith.constant 1 : index
    %c0_6 = arith.constant 0 : index
    %c0_7 = arith.constant 0 : index
    %8 = vector.load %arg2[%c1, %c0_6, %c0_7] : memref<5x5x128xf32, #tpu.memory_space<vmem>>, vector<1x1x128xf32>
    %9 = vector.shape_cast %8 : vector<1x1x128xf32> to vector<1x128xf32>
    %10 = vector.broadcast %9 : vector<1x128xf32> to vector<16x128xf32>
    %11 = arith.mulf %7, %10 : vector<16x128xf32>
    %12 = arith.addf %6, %11 : vector<16x128xf32>
    %13 = vector.extract_strided_slice %1 {offsets = [2, 0], sizes = [16, 128], strides = [1, 1]} : vector<20x128xf32> to vector<16x128xf32>
    %c2 = arith.constant 2 : index
    %c0_8 = arith.constant 0 : index
    %c0_9 = arith.constant 0 : index
    %14 = vector.load %arg2[%c2, %c0_8, %c0_9] : memref<5x5x128xf32, #tpu.memory_space<vmem>>, vector<1x1x128xf32>
    %15 = vector.shape_cast %14 : vector<1x1x128xf32> to vector<1x128xf32>
    %16 = vector.broadcast %15 : vector<1x128xf32> to vector<16x128xf32>
    %17 = arith.mulf %13, %16 : vector<16x128xf32>
    %18 = arith.addf %12, %17 : vector<16x128xf32>
    %19 = vector.extract_strided_slice %1 {offsets = [3, 0], sizes = [16, 128], strides = [1, 1]} : vector<20x128xf32> to vector<16x128xf32>
    %c3 = arith.constant 3 : index
    %c0_10 = arith.constant 0 : index
    %c0_11 = arith.constant 0 : index
    %20 = vector.load %arg2[%c3, %c0_10, %c0_11] : memref<5x5x128xf32, #tpu.memory_space<vmem>>, vector<1x1x128xf32>
    %21 = vector.shape_cast %20 : vector<1x1x128xf32> to vector<1x128xf32>
    %22 = vector.broadcast %21 : vector<1x128xf32> to vector<16x128xf32>
    %23 = arith.mulf %19, %22 : vector<16x128xf32>
    %24 = arith.addf %18, %23 : vector<16x128xf32>
    %25 = vector.extract_strided_slice %1 {offsets = [4, 0], sizes = [16, 128], strides = [1, 1]} : vector<20x128xf32> to vector<16x128xf32>
    %c4 = arith.constant 4 : index
    %c0_12 = arith.constant 0 : index
    %c0_13 = arith.constant 0 : index
    %26 = vector.load %arg2[%c4, %c0_12, %c0_13] : memref<5x5x128xf32, #tpu.memory_space<vmem>>, vector<1x1x128xf32>
    %27 = vector.shape_cast %26 : vector<1x1x128xf32> to vector<1x128xf32>
    %28 = vector.broadcast %27 : vector<1x128xf32> to vector<16x128xf32>
    %29 = arith.mulf %25, %28 : vector<16x128xf32>
    %30 = arith.addf %24, %29 : vector<16x128xf32>
    %c0_14 = arith.constant 0 : index
    %c1_15 = arith.constant 1 : index
    %c0_16 = arith.constant 0 : index
    %c0_17 = arith.constant 0 : index
    %31 = vector.load %arg1[%c0_14, %c1_15, %c0_16, %c0_17] : memref<1x5x20x128xf32, #tpu.memory_space<vmem>>, vector<1x1x20x128xf32>
    %32 = vector.shape_cast %31 : vector<1x1x20x128xf32> to vector<20x128xf32>
    %33 = vector.extract_strided_slice %32 {offsets = [0, 0], sizes = [16, 128], strides = [1, 1]} : vector<20x128xf32> to vector<16x128xf32>
    %c0_18 = arith.constant 0 : index
    %c1_19 = arith.constant 1 : index
    %c0_20 = arith.constant 0 : index
    %34 = vector.load %arg2[%c0_18, %c1_19, %c0_20] : memref<5x5x128xf32, #tpu.memory_space<vmem>>, vector<1x1x128xf32>
    %35 = vector.shape_cast %34 : vector<1x1x128xf32> to vector<1x128xf32>
    %36 = vector.broadcast %35 : vector<1x128xf32> to vector<16x128xf32>
    %37 = arith.mulf %33, %36 : vector<16x128xf32>
    %38 = arith.addf %30, %37 : vector<16x128xf32>
    %39 = vector.extract_strided_slice %32 {offsets = [1, 0], sizes = [16, 128], strides = [1, 1]} : vector<20x128xf32> to vector<16x128xf32>
    %c1_21 = arith.constant 1 : index
    %c1_22 = arith.constant 1 : index
    %c0_23 = arith.constant 0 : index
    %40 = vector.load %arg2[%c1_21, %c1_22, %c0_23] : memref<5x5x128xf32, #tpu.memory_space<vmem>>, vector<1x1x128xf32>
    %41 = vector.shape_cast %40 : vector<1x1x128xf32> to vector<1x128xf32>
    %42 = vector.broadcast %41 : vector<1x128xf32> to vector<16x128xf32>
    %43 = arith.mulf %39, %42 : vector<16x128xf32>
    %44 = arith.addf %38, %43 : vector<16x128xf32>
    %45 = vector.extract_strided_slice %32 {offsets = [2, 0], sizes = [16, 128], strides = [1, 1]} : vector<20x128xf32> to vector<16x128xf32>
    %c2_24 = arith.constant 2 : index
    %c1_25 = arith.constant 1 : index
    %c0_26 = arith.constant 0 : index
    %46 = vector.load %arg2[%c2_24, %c1_25, %c0_26] : memref<5x5x128xf32, #tpu.memory_space<vmem>>, vector<1x1x128xf32>
    %47 = vector.shape_cast %46 : vector<1x1x128xf32> to vector<1x128xf32>
    %48 = vector.broadcast %47 : vector<1x128xf32> to vector<16x128xf32>
    %49 = arith.mulf %45, %48 : vector<16x128xf32>
    %50 = arith.addf %44, %49 : vector<16x128xf32>
    %51 = vector.extract_strided_slice %32 {offsets = [3, 0], sizes = [16, 128], strides = [1, 1]} : vector<20x128xf32> to vector<16x128xf32>
    %c3_27 = arith.constant 3 : index
    %c1_28 = arith.constant 1 : index
    %c0_29 = arith.constant 0 : index
    %52 = vector.load %arg2[%c3_27, %c1_28, %c0_29] : memref<5x5x128xf32, #tpu.memory_space<vmem>>, vector<1x1x128xf32>
    %53 = vector.shape_cast %52 : vector<1x1x128xf32> to vector<1x128xf32>
    %54 = vector.broadcast %53 : vector<1x128xf32> to vector<16x128xf32>
    %55 = arith.mulf %51, %54 : vector<16x128xf32>
    %56 = arith.addf %50, %55 : vector<16x128xf32>
    %57 = vector.extract_strided_slice %32 {offsets = [4, 0], sizes = [16, 128], strides = [1, 1]} : vector<20x128xf32> to vector<16x128xf32>
    %c4_30 = arith.constant 4 : index
    %c1_31 = arith.constant 1 : index
    %c0_32 = arith.constant 0 : index
    %58 = vector.load %arg2[%c4_30, %c1_31, %c0_32] : memref<5x5x128xf32, #tpu.memory_space<vmem>>, vector<1x1x128xf32>
    %59 = vector.shape_cast %58 : vector<1x1x128xf32> to vector<1x128xf32>
    %60 = vector.broadcast %59 : vector<1x128xf32> to vector<16x128xf32>
    %61 = arith.mulf %57, %60 : vector<16x128xf32>
    %62 = arith.addf %56, %61 : vector<16x128xf32>
    %c0_33 = arith.constant 0 : index
    %c2_34 = arith.constant 2 : index
    %c0_35 = arith.constant 0 : index
    %c0_36 = arith.constant 0 : index
    %63 = vector.load %arg1[%c0_33, %c2_34, %c0_35, %c0_36] : memref<1x5x20x128xf32, #tpu.memory_space<vmem>>, vector<1x1x20x128xf32>
    %64 = vector.shape_cast %63 : vector<1x1x20x128xf32> to vector<20x128xf32>
    %65 = vector.extract_strided_slice %64 {offsets = [0, 0], sizes = [16, 128], strides = [1, 1]} : vector<20x128xf32> to vector<16x128xf32>
    %c0_37 = arith.constant 0 : index
    %c2_38 = arith.constant 2 : index
    %c0_39 = arith.constant 0 : index
    %66 = vector.load %arg2[%c0_37, %c2_38, %c0_39] : memref<5x5x128xf32, #tpu.memory_space<vmem>>, vector<1x1x128xf32>
    %67 = vector.shape_cast %66 : vector<1x1x128xf32> to vector<1x128xf32>
    %68 = vector.broadcast %67 : vector<1x128xf32> to vector<16x128xf32>
    %69 = arith.mulf %65, %68 : vector<16x128xf32>
    %70 = arith.addf %62, %69 : vector<16x128xf32>
    %71 = vector.extract_strided_slice %64 {offsets = [1, 0], sizes = [16, 128], strides = [1, 1]} : vector<20x128xf32> to vector<16x128xf32>
    %c1_40 = arith.constant 1 : index
    %c2_41 = arith.constant 2 : index
    %c0_42 = arith.constant 0 : index
    %72 = vector.load %arg2[%c1_40, %c2_41, %c0_42] : memref<5x5x128xf32, #tpu.memory_space<vmem>>, vector<1x1x128xf32>
    %73 = vector.shape_cast %72 : vector<1x1x128xf32> to vector<1x128xf32>
    %74 = vector.broadcast %73 : vector<1x128xf32> to vector<16x128xf32>
    %75 = arith.mulf %71, %74 : vector<16x128xf32>
    %76 = arith.addf %70, %75 : vector<16x128xf32>
    %77 = vector.extract_strided_slice %64 {offsets = [2, 0], sizes = [16, 128], strides = [1, 1]} : vector<20x128xf32> to vector<16x128xf32>
    %c2_43 = arith.constant 2 : index
    %c2_44 = arith.constant 2 : index
    %c0_45 = arith.constant 0 : index
    %78 = vector.load %arg2[%c2_43, %c2_44, %c0_45] : memref<5x5x128xf32, #tpu.memory_space<vmem>>, vector<1x1x128xf32>
    %79 = vector.shape_cast %78 : vector<1x1x128xf32> to vector<1x128xf32>
    %80 = vector.broadcast %79 : vector<1x128xf32> to vector<16x128xf32>
    %81 = arith.mulf %77, %80 : vector<16x128xf32>
    %82 = arith.addf %76, %81 : vector<16x128xf32>
    %83 = vector.extract_strided_slice %64 {offsets = [3, 0], sizes = [16, 128], strides = [1, 1]} : vector<20x128xf32> to vector<16x128xf32>
    %c3_46 = arith.constant 3 : index
    %c2_47 = arith.constant 2 : index
    %c0_48 = arith.constant 0 : index
    %84 = vector.load %arg2[%c3_46, %c2_47, %c0_48] : memref<5x5x128xf32, #tpu.memory_space<vmem>>, vector<1x1x128xf32>
    %85 = vector.shape_cast %84 : vector<1x1x128xf32> to vector<1x128xf32>
    %86 = vector.broadcast %85 : vector<1x128xf32> to vector<16x128xf32>
    %87 = arith.mulf %83, %86 : vector<16x128xf32>
    %88 = arith.addf %82, %87 : vector<16x128xf32>
    %89 = vector.extract_strided_slice %64 {offsets = [4, 0], sizes = [16, 128], strides = [1, 1]} : vector<20x128xf32> to vector<16x128xf32>
    %c4_49 = arith.constant 4 : index
    %c2_50 = arith.constant 2 : index
    %c0_51 = arith.constant 0 : index
    %90 = vector.load %arg2[%c4_49, %c2_50, %c0_51] : memref<5x5x128xf32, #tpu.memory_space<vmem>>, vector<1x1x128xf32>
    %91 = vector.shape_cast %90 : vector<1x1x128xf32> to vector<1x128xf32>
    %92 = vector.broadcast %91 : vector<1x128xf32> to vector<16x128xf32>
    %93 = arith.mulf %89, %92 : vector<16x128xf32>
    %94 = arith.addf %88, %93 : vector<16x128xf32>
    %c0_52 = arith.constant 0 : index
    %c3_53 = arith.constant 3 : index
    %c0_54 = arith.constant 0 : index
    %c0_55 = arith.constant 0 : index
    %95 = vector.load %arg1[%c0_52, %c3_53, %c0_54, %c0_55] : memref<1x5x20x128xf32, #tpu.memory_space<vmem>>, vector<1x1x20x128xf32>
    %96 = vector.shape_cast %95 : vector<1x1x20x128xf32> to vector<20x128xf32>
    %97 = vector.extract_strided_slice %96 {offsets = [0, 0], sizes = [16, 128], strides = [1, 1]} : vector<20x128xf32> to vector<16x128xf32>
    %c0_56 = arith.constant 0 : index
    %c3_57 = arith.constant 3 : index
    %c0_58 = arith.constant 0 : index
    %98 = vector.load %arg2[%c0_56, %c3_57, %c0_58] : memref<5x5x128xf32, #tpu.memory_space<vmem>>, vector<1x1x128xf32>
    %99 = vector.shape_cast %98 : vector<1x1x128xf32> to vector<1x128xf32>
    %100 = vector.broadcast %99 : vector<1x128xf32> to vector<16x128xf32>
    %101 = arith.mulf %97, %100 : vector<16x128xf32>
    %102 = arith.addf %94, %101 : vector<16x128xf32>
    %103 = vector.extract_strided_slice %96 {offsets = [1, 0], sizes = [16, 128], strides = [1, 1]} : vector<20x128xf32> to vector<16x128xf32>
    %c1_59 = arith.constant 1 : index
    %c3_60 = arith.constant 3 : index
    %c0_61 = arith.constant 0 : index
    %104 = vector.load %arg2[%c1_59, %c3_60, %c0_61] : memref<5x5x128xf32, #tpu.memory_space<vmem>>, vector<1x1x128xf32>
    %105 = vector.shape_cast %104 : vector<1x1x128xf32> to vector<1x128xf32>
    %106 = vector.broadcast %105 : vector<1x128xf32> to vector<16x128xf32>
    %107 = arith.mulf %103, %106 : vector<16x128xf32>
    %108 = arith.addf %102, %107 : vector<16x128xf32>
    %109 = vector.extract_strided_slice %96 {offsets = [2, 0], sizes = [16, 128], strides = [1, 1]} : vector<20x128xf32> to vector<16x128xf32>
    %c2_62 = arith.constant 2 : index
    %c3_63 = arith.constant 3 : index
    %c0_64 = arith.constant 0 : index
    %110 = vector.load %arg2[%c2_62, %c3_63, %c0_64] : memref<5x5x128xf32, #tpu.memory_space<vmem>>, vector<1x1x128xf32>
    %111 = vector.shape_cast %110 : vector<1x1x128xf32> to vector<1x128xf32>
    %112 = vector.broadcast %111 : vector<1x128xf32> to vector<16x128xf32>
    %113 = arith.mulf %109, %112 : vector<16x128xf32>
    %114 = arith.addf %108, %113 : vector<16x128xf32>
    %115 = vector.extract_strided_slice %96 {offsets = [3, 0], sizes = [16, 128], strides = [1, 1]} : vector<20x128xf32> to vector<16x128xf32>
    %c3_65 = arith.constant 3 : index
    %c3_66 = arith.constant 3 : index
    %c0_67 = arith.constant 0 : index
    %116 = vector.load %arg2[%c3_65, %c3_66, %c0_67] : memref<5x5x128xf32, #tpu.memory_space<vmem>>, vector<1x1x128xf32>
    %117 = vector.shape_cast %116 : vector<1x1x128xf32> to vector<1x128xf32>
    %118 = vector.broadcast %117 : vector<1x128xf32> to vector<16x128xf32>
    %119 = arith.mulf %115, %118 : vector<16x128xf32>
    %120 = arith.addf %114, %119 : vector<16x128xf32>
    %121 = vector.extract_strided_slice %96 {offsets = [4, 0], sizes = [16, 128], strides = [1, 1]} : vector<20x128xf32> to vector<16x128xf32>
    %c4_68 = arith.constant 4 : index
    %c3_69 = arith.constant 3 : index
    %c0_70 = arith.constant 0 : index
    %122 = vector.load %arg2[%c4_68, %c3_69, %c0_70] : memref<5x5x128xf32, #tpu.memory_space<vmem>>, vector<1x1x128xf32>
    %123 = vector.shape_cast %122 : vector<1x1x128xf32> to vector<1x128xf32>
    %124 = vector.broadcast %123 : vector<1x128xf32> to vector<16x128xf32>
    %125 = arith.mulf %121, %124 : vector<16x128xf32>
    %126 = arith.addf %120, %125 : vector<16x128xf32>
    %c0_71 = arith.constant 0 : index
    %c4_72 = arith.constant 4 : index
    %c0_73 = arith.constant 0 : index
    %c0_74 = arith.constant 0 : index
    %127 = vector.load %arg1[%c0_71, %c4_72, %c0_73, %c0_74] : memref<1x5x20x128xf32, #tpu.memory_space<vmem>>, vector<1x1x20x128xf32>
    %128 = vector.shape_cast %127 : vector<1x1x20x128xf32> to vector<20x128xf32>
    %129 = vector.extract_strided_slice %128 {offsets = [0, 0], sizes = [16, 128], strides = [1, 1]} : vector<20x128xf32> to vector<16x128xf32>
    %c0_75 = arith.constant 0 : index
    %c4_76 = arith.constant 4 : index
    %c0_77 = arith.constant 0 : index
    %130 = vector.load %arg2[%c0_75, %c4_76, %c0_77] : memref<5x5x128xf32, #tpu.memory_space<vmem>>, vector<1x1x128xf32>
    %131 = vector.shape_cast %130 : vector<1x1x128xf32> to vector<1x128xf32>
    %132 = vector.broadcast %131 : vector<1x128xf32> to vector<16x128xf32>
    %133 = arith.mulf %129, %132 : vector<16x128xf32>
    %134 = arith.addf %126, %133 : vector<16x128xf32>
    %135 = vector.extract_strided_slice %128 {offsets = [1, 0], sizes = [16, 128], strides = [1, 1]} : vector<20x128xf32> to vector<16x128xf32>
    %c1_78 = arith.constant 1 : index
    %c4_79 = arith.constant 4 : index
    %c0_80 = arith.constant 0 : index
    %136 = vector.load %arg2[%c1_78, %c4_79, %c0_80] : memref<5x5x128xf32, #tpu.memory_space<vmem>>, vector<1x1x128xf32>
    %137 = vector.shape_cast %136 : vector<1x1x128xf32> to vector<1x128xf32>
    %138 = vector.broadcast %137 : vector<1x128xf32> to vector<16x128xf32>
    %139 = arith.mulf %135, %138 : vector<16x128xf32>
    %140 = arith.addf %134, %139 : vector<16x128xf32>
    %141 = vector.extract_strided_slice %128 {offsets = [2, 0], sizes = [16, 128], strides = [1, 1]} : vector<20x128xf32> to vector<16x128xf32>
    %c2_81 = arith.constant 2 : index
    %c4_82 = arith.constant 4 : index
    %c0_83 = arith.constant 0 : index
    %142 = vector.load %arg2[%c2_81, %c4_82, %c0_83] : memref<5x5x128xf32, #tpu.memory_space<vmem>>, vector<1x1x128xf32>
    %143 = vector.shape_cast %142 : vector<1x1x128xf32> to vector<1x128xf32>
    %144 = vector.broadcast %143 : vector<1x128xf32> to vector<16x128xf32>
    %145 = arith.mulf %141, %144 : vector<16x128xf32>
    %146 = arith.addf %140, %145 : vector<16x128xf32>
    %147 = vector.extract_strided_slice %128 {offsets = [3, 0], sizes = [16, 128], strides = [1, 1]} : vector<20x128xf32> to vector<16x128xf32>
    %c3_84 = arith.constant 3 : index
    %c4_85 = arith.constant 4 : index
    %c0_86 = arith.constant 0 : index
    %148 = vector.load %arg2[%c3_84, %c4_85, %c0_86] : memref<5x5x128xf32, #tpu.memory_space<vmem>>, vector<1x1x128xf32>
    %149 = vector.shape_cast %148 : vector<1x1x128xf32> to vector<1x128xf32>
    %150 = vector.broadcast %149 : vector<1x128xf32> to vector<16x128xf32>
    %151 = arith.mulf %147, %150 : vector<16x128xf32>
    %152 = arith.addf %146, %151 : vector<16x128xf32>
    %153 = vector.extract_strided_slice %128 {offsets = [4, 0], sizes = [16, 128], strides = [1, 1]} : vector<20x128xf32> to vector<16x128xf32>
    %c4_87 = arith.constant 4 : index
    %c4_88 = arith.constant 4 : index
    %c0_89 = arith.constant 0 : index
    %154 = vector.load %arg2[%c4_87, %c4_88, %c0_89] : memref<5x5x128xf32, #tpu.memory_space<vmem>>, vector<1x1x128xf32>
    %155 = vector.shape_cast %154 : vector<1x1x128xf32> to vector<1x128xf32>
    %156 = vector.broadcast %155 : vector<1x128xf32> to vector<16x128xf32>
    %157 = arith.mulf %153, %156 : vector<16x128xf32>
    %158 = arith.addf %152, %157 : vector<16x128xf32>
    %c0_90 = arith.constant 0 : index
    %c2_91 = arith.constant 2 : index
    %c2_92 = arith.constant 2 : index
    %c0_93 = arith.constant 0 : index
    %159 = vector.load %arg1[%c0_90, %c2_91, %c2_92, %c0_93] : memref<1x5x20x128xf32, #tpu.memory_space<vmem>>, vector<1x1x16x128xf32>
    %160 = vector.shape_cast %159 : vector<1x1x16x128xf32> to vector<16x128xf32>
    %161 = arith.truncf %160 : vector<16x128xf32> to vector<16x128xbf16>
    %c0_94 = arith.constant 0 : index
    %c0_95 = arith.constant 0 : index
    %162 = vector.load %arg3[%c0_94, %c0_95] : memref<128x128xbf16, #tpu.memory_space<vmem>>, vector<128x128xbf16>
    %cst = arith.constant dense<0.000000e+00> : vector<16x128xf32>
    %163 = tpu.matmul %161, %162, %cst {dimension_numbers = #tpu.dot_dimension_numbers<[1], [0], [0], [1], [0, 0, 1, 1], [], []>} : vector<16x128xbf16>, vector<128x128xbf16>, vector<16x128xf32> -> vector<16x128xf32>
    %c0_96 = arith.constant 0 : index
    %c0_97 = arith.constant 0 : index
    %164 = vector.load %arg4[%c0_96, %c0_97] : memref<1x128xf32, #tpu.memory_space<vmem>>, vector<1x128xf32>
    %165 = vector.broadcast %164 : vector<1x128xf32> to vector<16x128xf32>
    %166 = arith.addf %163, %165 : vector<16x128xf32>
    %167 = arith.addf %166, %158 : vector<16x128xf32>
    %c0_98 = arith.constant 0 : index
    %c0_99 = arith.constant 0 : index
    %c0_100 = arith.constant 0 : index
    %168 = vector.load %arg5[%c0_98, %c0_99, %c0_100] : memref<1x1x128xf32, #tpu.memory_space<vmem>>, vector<1x1x128xf32>
    %169 = vector.shape_cast %168 : vector<1x1x128xf32> to vector<1x128xf32>
    %170 = vector.broadcast %169 : vector<1x128xf32> to vector<16x128xf32>
    %171 = arith.mulf %167, %170 : vector<16x128xf32>
    %c0_101 = arith.constant 0 : index
    %c0_102 = arith.constant 0 : index
    %c0_103 = arith.constant 0 : index
    %172 = vector.load %arg8[%c0_101, %c0_102, %c0_103] : memref<1x16x128xf32, #tpu.memory_space<vmem>>, vector<1x16x128xf32>
    %173 = vector.shape_cast %172 : vector<1x16x128xf32> to vector<16x128xf32>
    %174 = vector.shape_cast %171 : vector<16x128xf32> to vector<1x16x128xf32>
    tpu.vector_store %arg8[%c0_101, %c0_102, %c0_103], %174 {strides = array<i32>} : memref<1x16x128xf32, #tpu.memory_space<vmem>>, vector<1x16x128xf32>,
    %175 = arith.truncf %171 : vector<16x128xf32> to vector<16x128xbf16>
    %c0_104 = arith.constant 0 : index
    %c0_105 = arith.constant 0 : index
    %176 = vector.load %arg6[%c0_104, %c0_105] : memref<128x256xbf16, #tpu.memory_space<vmem>>, vector<128x256xbf16>
    %cst_106 = arith.constant dense<0.000000e+00> : vector<16x256xf32>
    %177 = tpu.matmul %175, %176, %cst_106 {dimension_numbers = #tpu.dot_dimension_numbers<[1], [0], [0], [1], [0, 0, 1, 1], [], []>} : vector<16x128xbf16>, vector<128x256xbf16>, vector<16x256xf32> -> vector<16x256xf32>
    %c0_107 = arith.constant 0 : index
    %c0_108 = arith.constant 0 : index
    %178 = vector.load %arg7[%c0_107, %c0_108] : memref<1x256xf32, #tpu.memory_space<vmem>>, vector<1x256xf32>
    %179 = vector.broadcast %178 : vector<1x256xf32> to vector<16x256xf32>
    %180 = arith.addf %177, %179 : vector<16x256xf32>
    %c0_109 = arith.constant 0 : index
    %c0_110 = arith.constant 0 : index
    %c0_111 = arith.constant 0 : index
    %181 = vector.load %arg9[%c0_109, %c0_110, %c0_111] : memref<1x16x256xf32, #tpu.memory_space<vmem>>, vector<1x16x256xf32>
    %182 = vector.shape_cast %181 : vector<1x16x256xf32> to vector<16x256xf32>
    %183 = vector.shape_cast %180 : vector<16x256xf32> to vector<1x16x256xf32>
    tpu.vector_store %arg9[%c0_109, %c0_110, %c0_111], %183 {strides = array<i32>} : memref<1x16x256xf32, #tpu.memory_space<vmem>>, vector<1x16x256xf32>,
    return
  }
  func.func @transform_0(%arg0: i32) -> (i32, i32, i32, i32) {
    %c0_i32 = arith.constant 0 : i32
    %c0_i32_0 = arith.constant 0 : i32
    %c0_i32_1 = arith.constant 0 : i32
    %c0_i32_2 = arith.constant 0 : i32
    return %arg0, %c0_i32, %c0_i32_0, %c0_i32_1 : i32, i32, i32, i32
  }
  func.func @transform_1(%arg0: i32) -> (i32, i32, i32) {
    %c0_i32 = arith.constant 0 : i32
    %c0_i32_0 = arith.constant 0 : i32
    %c0_i32_1 = arith.constant 0 : i32
    %c0_i32_2 = arith.constant 0 : i32
    return %c0_i32, %c0_i32_0, %c0_i32_1 : i32, i32, i32
  }
  func.func @transform_2(%arg0: i32) -> (i32, i32) {
    %c0_i32 = arith.constant 0 : i32
    %c0_i32_0 = arith.constant 0 : i32
    %c0_i32_1 = arith.constant 0 : i32
    return %c0_i32, %c0_i32_0 : i32, i32
  }
  func.func @transform_3(%arg0: i32) -> (i32, i32) {
    %c0_i32 = arith.constant 0 : i32
    %c0_i32_0 = arith.constant 0 : i32
    %c0_i32_1 = arith.constant 0 : i32
    return %c0_i32, %c0_i32_0 : i32, i32
  }
  func.func @transform_4(%arg0: i32) -> (i32, i32, i32) {
    %c0_i32 = arith.constant 0 : i32
    %c0_i32_0 = arith.constant 0 : i32
    %c0_i32_1 = arith.constant 0 : i32
    return %arg0, %c0_i32, %c0_i32_0 : i32, i32, i32
  }
  func.func @transform_5(%arg0: i32) -> (i32, i32) {
    %c0_i32 = arith.constant 0 : i32
    %c0_i32_0 = arith.constant 0 : i32
    %c0_i32_1 = arith.constant 0 : i32
    return %c0_i32, %c0_i32_0 : i32, i32
  }
  func.func @transform_6(%arg0: i32) -> (i32, i32) {
    %c0_i32 = arith.constant 0 : i32
    %c0_i32_0 = arith.constant 0 : i32
    %c0_i32_1 = arith.constant 0 : i32
    return %c0_i32, %c0_i32_0 : i32, i32
  }
  func.func @transform_7(%arg0: i32) -> (i32, i32, i32) {
    %c0_i32 = arith.constant 0 : i32
    %c0_i32_0 = arith.constant 0 : i32
    %c0_i32_1 = arith.constant 0 : i32
    return %arg0, %c0_i32, %c0_i32_0 : i32, i32, i32
  }
  func.func @transform_8(%arg0: i32) -> (i32, i32, i32) {
    %c0_i32 = arith.constant 0 : i32
    %c0_i32_0 = arith.constant 0 : i32
    %c0_i32_1 = arith.constant 0 : i32
    return %arg0, %c0_i32, %c0_i32_0 : i32, i32, i32
  }
}

module attributes {stable_mosaic.version = 11 : i64} {
  func.func @_final_cv2_kernel(%arg0: i32, %arg1: memref<512x128xf32, #tpu.memory_space<vmem>>, %arg2: memref<512x8xf32, #tpu.memory_space<vmem>>, %arg3: memref<512x8xf32, #tpu.memory_space<vmem>>, %arg4: memref<512x8xf32, #tpu.memory_space<vmem>>, %arg5: memref<1x8xf32, #tpu.memory_space<vmem>>, %arg6: memref<1x8xf32, #tpu.memory_space<vmem>>, %arg7: memref<1x8xf32, #tpu.memory_space<vmem>>, %arg8: memref<8x32xbf16, #tpu.memory_space<vmem>>, %arg9: memref<32x32xbf16, #tpu.memory_space<vmem>>, %arg10: memref<1x32xf32, #tpu.memory_space<vmem>>, %arg11: memref<512x32xf32, #tpu.memory_space<vmem>>) attributes {dimension_semantics = [#tpu.dimension_semantics<parallel>], iteration_bounds = array<i64: 1>, scalar_prefetch = 0 : i64, scratch_operands = 0 : i64, tpu.core_type = #tpu.core_type<tc>, window_params = [{transform_indices = @transform_0, window_bounds = array<i64: 512, 128>}, {transform_indices = @transform_1, window_bounds = array<i64: 512, 8>}, {transform_indices = @transform_2, window_bounds = array<i64: 512, 8>}, {transform_indices = @transform_3, window_bounds = array<i64: 512, 8>}, {pipeline_mode = #tpu.pipeline_mode<synchronous>, transform_indices = @transform_4, window_bounds = array<i64: 1, 8>}, {pipeline_mode = #tpu.pipeline_mode<synchronous>, transform_indices = @transform_5, window_bounds = array<i64: 1, 8>}, {pipeline_mode = #tpu.pipeline_mode<synchronous>, transform_indices = @transform_6, window_bounds = array<i64: 1, 8>}, {pipeline_mode = #tpu.pipeline_mode<synchronous>, transform_indices = @transform_7, window_bounds = array<i64: 8, 32>}, {pipeline_mode = #tpu.pipeline_mode<synchronous>, transform_indices = @transform_8, window_bounds = array<i64: 32, 32>}, {pipeline_mode = #tpu.pipeline_mode<synchronous>, transform_indices = @transform_9, window_bounds = array<i64: 1, 32>}, {transform_indices = @transform_10, window_bounds = array<i64: 512, 32>}]} {
    %c0 = arith.constant 0 : index
    %c0_0 = arith.constant 0 : index
    %0 = vector.load %arg1[%c0, %c0_0] : memref<512x128xf32, #tpu.memory_space<vmem>>, vector<512x128xf32>
    %1 = vector.extract_strided_slice %0 {offsets = [0, 0], sizes = [512, 8], strides = [1, 1]} : vector<512x128xf32> to vector<512x8xf32>
    %c0_1 = arith.constant 0 : index
    %c0_2 = arith.constant 0 : index
    %2 = vector.load %arg2[%c0_1, %c0_2] : memref<512x8xf32, #tpu.memory_space<vmem>>, vector<512x8xf32>
    %3 = arith.addf %1, %2 : vector<512x8xf32>
    %c0_3 = arith.constant 0 : index
    %c0_4 = arith.constant 0 : index
    %4 = vector.load %arg5[%c0_3, %c0_4] : memref<1x8xf32, #tpu.memory_space<vmem>>, vector<1x8xf32>
    %5 = vector.broadcast %4 : vector<1x8xf32> to vector<512x8xf32>
    %6 = arith.addf %3, %5 : vector<512x8xf32>
    %c0_5 = arith.constant 0 : index
    %c0_6 = arith.constant 0 : index
    %7 = vector.load %arg3[%c0_5, %c0_6] : memref<512x8xf32, #tpu.memory_space<vmem>>, vector<512x8xf32>
    %c0_7 = arith.constant 0 : index
    %c0_8 = arith.constant 0 : index
    %8 = vector.load %arg6[%c0_7, %c0_8] : memref<1x8xf32, #tpu.memory_space<vmem>>, vector<1x8xf32>
    %9 = vector.broadcast %8 : vector<1x8xf32> to vector<512x8xf32>
    %10 = arith.mulf %7, %9 : vector<512x8xf32>
    %11 = arith.addf %6, %10 : vector<512x8xf32>
    %c0_9 = arith.constant 0 : index
    %c0_10 = arith.constant 0 : index
    %12 = vector.load %arg4[%c0_9, %c0_10] : memref<512x8xf32, #tpu.memory_space<vmem>>, vector<512x8xf32>
    %c0_11 = arith.constant 0 : index
    %c0_12 = arith.constant 0 : index
    %13 = vector.load %arg7[%c0_11, %c0_12] : memref<1x8xf32, #tpu.memory_space<vmem>>, vector<1x8xf32>
    %14 = vector.broadcast %13 : vector<1x8xf32> to vector<512x8xf32>
    %15 = arith.mulf %12, %14 : vector<512x8xf32>
    %16 = arith.addf %11, %15 : vector<512x8xf32>
    %cst = arith.constant 0.000000e+00 : f32
    %17 = vector.broadcast %cst : f32 to vector<512x8xf32>
    %18 = arith.maximumf %16, %17 : vector<512x8xf32>
    %19 = arith.truncf %18 : vector<512x8xf32> to vector<512x8xbf16>
    %c0_13 = arith.constant 0 : index
    %c0_14 = arith.constant 0 : index
    %20 = vector.load %arg8[%c0_13, %c0_14] : memref<8x32xbf16, #tpu.memory_space<vmem>>, vector<8x32xbf16>
    %cst_15 = arith.constant dense<0.000000e+00> : vector<512x32xf32>
    %21 = tpu.matmul %19, %20, %cst_15 {dimension_numbers = #tpu.dot_dimension_numbers<[1], [0], [0], [1], [0, 0, 1, 1], [], []>} : vector<512x8xbf16>, vector<8x32xbf16>, vector<512x32xf32> -> vector<512x32xf32>
    %22 = vector.extract_strided_slice %0 {offsets = [0, 0], sizes = [512, 32], strides = [1, 1]} : vector<512x128xf32> to vector<512x32xf32>
    %23 = arith.truncf %22 : vector<512x32xf32> to vector<512x32xbf16>
    %c0_16 = arith.constant 0 : index
    %c0_17 = arith.constant 0 : index
    %24 = vector.load %arg9[%c0_16, %c0_17] : memref<32x32xbf16, #tpu.memory_space<vmem>>, vector<32x32xbf16>
    %cst_18 = arith.constant dense<0.000000e+00> : vector<512x32xf32>
    %25 = tpu.matmul %23, %24, %cst_18 {dimension_numbers = #tpu.dot_dimension_numbers<[1], [0], [0], [1], [0, 0, 1, 1], [], []>} : vector<512x32xbf16>, vector<32x32xbf16>, vector<512x32xf32> -> vector<512x32xf32>
    %26 = arith.addf %21, %25 : vector<512x32xf32>
    %c0_19 = arith.constant 0 : index
    %c0_20 = arith.constant 0 : index
    %27 = vector.load %arg10[%c0_19, %c0_20] : memref<1x32xf32, #tpu.memory_space<vmem>>, vector<1x32xf32>
    %28 = vector.broadcast %27 : vector<1x32xf32> to vector<512x32xf32>
    %29 = arith.addf %26, %28 : vector<512x32xf32>
    %30 = arith.negf %29 : vector<512x32xf32>
    %31 = math.exp %30 : vector<512x32xf32>
    %cst_21 = arith.constant 1.000000e+00 : f32
    %32 = vector.broadcast %cst_21 : f32 to vector<512x32xf32>
    %33 = arith.addf %32, %31 : vector<512x32xf32>
    %34 = arith.divf %32, %33 : vector<512x32xf32>
    %35 = arith.mulf %29, %34 : vector<512x32xf32>
    %c0_22 = arith.constant 0 : index
    %c0_23 = arith.constant 0 : index
    %36 = vector.load %arg11[%c0_22, %c0_23] : memref<512x32xf32, #tpu.memory_space<vmem>>, vector<512x32xf32>
    tpu.vector_store %arg11[%c0_22, %c0_23], %35 {strides = array<i32>} : memref<512x32xf32, #tpu.memory_space<vmem>>, vector<512x32xf32>,
    return
  }
  func.func @transform_0(%arg0: i32) -> (i32, i32) {
    %c0_i32 = arith.constant 0 : i32
    %c0_i32_0 = arith.constant 0 : i32
    return %arg0, %c0_i32 : i32, i32
  }
  func.func @transform_1(%arg0: i32) -> (i32, i32) {
    %c0_i32 = arith.constant 0 : i32
    %c0_i32_0 = arith.constant 0 : i32
    return %arg0, %c0_i32 : i32, i32
  }
  func.func @transform_2(%arg0: i32) -> (i32, i32) {
    %c0_i32 = arith.constant 0 : i32
    %c0_i32_0 = arith.constant 0 : i32
    return %arg0, %c0_i32 : i32, i32
  }
  func.func @transform_3(%arg0: i32) -> (i32, i32) {
    %c0_i32 = arith.constant 0 : i32
    %c0_i32_0 = arith.constant 0 : i32
    return %arg0, %c0_i32 : i32, i32
  }
  func.func @transform_4(%arg0: i32) -> (i32, i32) {
    %c0_i32 = arith.constant 0 : i32
    %c0_i32_0 = arith.constant 0 : i32
    %c0_i32_1 = arith.constant 0 : i32
    return %c0_i32, %c0_i32_0 : i32, i32
  }
  func.func @transform_5(%arg0: i32) -> (i32, i32) {
    %c0_i32 = arith.constant 0 : i32
    %c0_i32_0 = arith.constant 0 : i32
    %c0_i32_1 = arith.constant 0 : i32
    return %c0_i32, %c0_i32_0 : i32, i32
  }
  func.func @transform_6(%arg0: i32) -> (i32, i32) {
    %c0_i32 = arith.constant 0 : i32
    %c0_i32_0 = arith.constant 0 : i32
    %c0_i32_1 = arith.constant 0 : i32
    return %c0_i32, %c0_i32_0 : i32, i32
  }
  func.func @transform_7(%arg0: i32) -> (i32, i32) {
    %c0_i32 = arith.constant 0 : i32
    %c0_i32_0 = arith.constant 0 : i32
    %c0_i32_1 = arith.constant 0 : i32
    return %c0_i32, %c0_i32_0 : i32, i32
  }
  func.func @transform_8(%arg0: i32) -> (i32, i32) {
    %c0_i32 = arith.constant 0 : i32
    %c0_i32_0 = arith.constant 0 : i32
    %c0_i32_1 = arith.constant 0 : i32
    return %c0_i32, %c0_i32_0 : i32, i32
  }
  func.func @transform_9(%arg0: i32) -> (i32, i32) {
    %c0_i32 = arith.constant 0 : i32
    %c0_i32_0 = arith.constant 0 : i32
    %c0_i32_1 = arith.constant 0 : i32
    return %c0_i32, %c0_i32_0 : i32, i32
  }
  func.func @transform_10(%arg0: i32) -> (i32, i32) {
    %c0_i32 = arith.constant 0 : i32
    %c0_i32_0 = arith.constant 0 : i32
    return %arg0, %c0_i32 : i32, i32
  }
}

</mosaic_0001>

<llo_original>
// kernel: _lambda_.5
$region0: #{_lambda_.5}
  #allocation0 [shape = 'u32[]', space=smem, size = 0x4, offset = 0x4, fixed_abs, tag = 'smem constant byte address 0x4 - core index']
  #allocation1 [shape = 'u32[144,128]{1,0:T(1,128)}', space=vmem, size = 0x12000, scoped, tag = 'internal scratch']
  %s0 = inlined_call_operand.hbm [shape: f32[512,32], index: 0, kind: input, shape index: {}]
  %s1 = inlined_call_operand.vmem [shape: bf16[32,32], index: 1, kind: input, shape index: {}]
  %s2 = inlined_call_operand.vmem [shape: f32[1,32], index: 2, kind: input, shape index: {}]
  %s3 = inlined_call_operand.vmem [shape: bf16[8,8], index: 3, kind: input, shape index: {}]
  %s4 = inlined_call_operand.vmem [shape: f32[1,8], index: 4, kind: input, shape index: {}]
  %s5 = inlined_call_operand.vmem [shape: f32[512,128], index: 5, kind: output, shape index: {}]
  %s6 = sld [smem:[#allocation0]]
  $region34: #{_lambda_.5} parent=0
    _
  %s8 = ssub.s32 1, %s6
  %s9 = scalar_select 0, %s8, %s6
  $region1: #{_lambda_.5} parent=0
    #allocation2 [shape = 'u8[262144]{0}', space=vmem, size = 0x40000, scoped, tag = 'input window, operand 0, single buffered']
    #allocation3 [shape = 's32[1]{0}', space=sflag, size = 0x4, scoped, tag = 'scoped memory for _lambda_.5']
    %10 = vsyncpa [#allocation3], 0
    // Predicated region
    $region2: #{_lambda_.5} parent=1 // pred_check
      _
    $region3: #{_lambda_.5} parent=1 // pred_check_branch
      %12 = sbr.rel (0) target = $region5
    $region4: #{_lambda_.5} parent=1 // pred_region
      %s14 = ssub.s32 8192, 8192
      %15 = vsyncadd [#allocation3], %s14
      %s16 = sshll.u32 [#allocation2], 4
      %s17 = int_to_ptr.vmem [resolvable:$true] %s16
      %22 = dma.hbm_to_vmem [thread:$0]  %s0, 8192, %s17, [#allocation3], 128, 128, 8
    $region5: #{_lambda_.5} parent=1 // pred_fallthru
      _
    // Predicated region
    $region6: #{_lambda_.5} parent=1 // pred_check
      _
    $region7: #{_lambda_.5} parent=1 // pred_check_branch
      %24 = sbr.rel (0) target = $region9
    $region8: #{_lambda_.5} parent=1 // pred_region
      _
    $region9: #{_lambda_.5} parent=1 // pred_fallthru
      _
    // Predicated region
    $region10: #{_lambda_.5} parent=1 // pred_check
      _
    $region11: #{_lambda_.5} parent=1 // pred_check_branch
      %26 = sbr.rel (0) target = $region13
    $region12: #{_lambda_.5} parent=1 // pred_region
      _
    $region13: #{_lambda_.5} parent=1 // pred_fallthru
      _
    // Predicated region
    $region14: #{_lambda_.5} parent=1 // pred_check
      _
    $region15: #{_lambda_.5} parent=1 // pred_check_branch
      %28 = sbr.rel (0) target = $region17
    $region16: #{_lambda_.5} parent=1 // pred_region
      _
    $region17: #{_lambda_.5} parent=1 // pred_fallthru
      _
    // Predicated region
    $region18: #{_lambda_.5} parent=1 // pred_check
      _
    $region19: #{_lambda_.5} parent=1 // pred_check_branch
      %30 = sbr.rel (0) target = $region21
    $region20: #{_lambda_.5} parent=1 // pred_region
      _
    $region21: #{_lambda_.5} parent=1 // pred_fallthru
      _
    // Predicated region
    $region22: #{_lambda_.5} parent=1 // pred_check
      _
    $region23: #{_lambda_.5} parent=1 // pred_check_branch
      %32 = sbr.rel (0) target = $region25
    $region24: #{_lambda_.5} parent=1 // pred_region
      %33 = dma.done [#allocation3], 8192
    $region25: #{_lambda_.5} parent=1 // pred_fallthru
      _
    %v35 = vld [vmem:[#allocation2] sm:$0xff]
    %v36 = vld [vmem:[#allocation2 + $0x8] sm:$0xff]
    %v37 = vld [vmem:[#allocation2 + $0x10] sm:$0xff]
    %v38 = vld [vmem:[#allocation2 + $0x18] sm:$0xff]
    %v39 = vld [vmem:[#allocation2 + $0x20] sm:$0xff]
    %v40 = vld [vmem:[#allocation2 + $0x28] sm:$0xff]
    %v41 = vld [vmem:[#allocation2 + $0x30] sm:$0xff]
    %v42 = vld [vmem:[#allocation2 + $0x38] sm:$0xff]
    %v43 = vld [vmem:[#allocation2 + $0x40] sm:$0xff]
    %v44 = vld [vmem:[#allocation2 + $0x48] sm:$0xff]
    %v45 = vld [vmem:[#allocation2 + $0x50] sm:$0xff]
    %v46 = vld [vmem:[#allocation2 + $0x58] sm:$0xff]
    %v47 = vld [vmem:[#allocation2 + $0x60] sm:$0xff]
    %v48 = vld [vmem:[#allocation2 + $0x68] sm:$0xff]
    %v49 = vld [vmem:[#allocation2 + $0x70] sm:$0xff]
    %v50 = vld [vmem:[#allocation2 + $0x78] sm:$0xff]
    %v51 = vld [vmem:[#allocation2 + $0x80] sm:$0xff]
    %v52 = vld [vmem:[#allocation2 + $0x88] sm:$0xff]
    %v53 = vld [vmem:[#allocation2 + $0x90] sm:$0xff]
    %v54 = vld [vmem:[#allocation2 + $0x98] sm:$0xff]
    %v55 = vld [vmem:[#allocation2 + $0xa0] sm:$0xff]
    %v56 = vld [vmem:[#allocation2 + $0xa8] sm:$0xff]
    %v57 = vld [vmem:[#allocation2 + $0xb0] sm:$0xff]
    %v58 = vld [vmem:[#allocation2 + $0xb8] sm:$0xff]
    %v59 = vld [vmem:[#allocation2 + $0xc0] sm:$0xff]
    %v60 = vld [vmem:[#allocation2 + $0xc8] sm:$0xff]
    %v61 = vld [vmem:[#allocation2 + $0xd0] sm:$0xff]
    %v62 = vld [vmem:[#allocation2 + $0xd8] sm:$0xff]
    %v63 = vld [vmem:[#allocation2 + $0xe0] sm:$0xff]
    %v64 = vld [vmem:[#allocation2 + $0xe8] sm:$0xff]
    %v65 = vld [vmem:[#allocation2 + $0xf0] sm:$0xff]
    %v66 = vld [vmem:[#allocation2 + $0xf8] sm:$0xff]
    %v67 = vld [vmem:[#allocation2 + $0x100] sm:$0xff]
    %v68 = vld [vmem:[#allocation2 + $0x108] sm:$0xff]
    %v69 = vld [vmem:[#allocation2 + $0x110] sm:$0xff]
    %v70 = vld [vmem:[#allocation2 + $0x118] sm:$0xff]
    %v71 = vld [vmem:[#allocation2 + $0x120] sm:$0xff]
    %v72 = vld [vmem:[#allocation2 + $0x128] sm:$0xff]
    %v73 = vld [vmem:[#allocation2 + $0x130] sm:$0xff]
    %v74 = vld [vmem:[#allocation2 + $0x138] sm:$0xff]
    %v75 = vld [vmem:[#allocation2 + $0x140] sm:$0xff]
    %v76 = vld [vmem:[#allocation2 + $0x148] sm:$0xff]
    %v77 = vld [vmem:[#allocation2 + $0x150] sm:$0xff]
    %v78 = vld [vmem:[#allocation2 + $0x158] sm:$0xff]
    %v79 = vld [vmem:[#allocation2 + $0x160] sm:$0xff]
    %v80 = vld [vmem:[#allocation2 + $0x168] sm:$0xff]
    %v81 = vld [vmem:[#allocation2 + $0x170] sm:$0xff]
    %v82 = vld [vmem:[#allocation2 + $0x178] sm:$0xff]
    %v83 = vld [vmem:[#allocation2 + $0x180] sm:$0xff]
    %v84 = vld [vmem:[#allocation2 + $0x188] sm:$0xff]
    %v85 = vld [vmem:[#allocation2 + $0x190] sm:$0xff]
    %v86 = vld [vmem:[#allocation2 + $0x198] sm:$0xff]
    %v87 = vld [vmem:[#allocation2 + $0x1a0] sm:$0xff]
    %v88 = vld [vmem:[#allocation2 + $0x1a8] sm:$0xff]
    %v89 = vld [vmem:[#allocation2 + $0x1b0] sm:$0xff]
    %v90 = vld [vmem:[#allocation2 + $0x1b8] sm:$0xff]
    %v91 = vld [vmem:[#allocation2 + $0x1c0] sm:$0xff]
    %v92 = vld [vmem:[#allocation2 + $0x1c8] sm:$0xff]
    %v93 = vld [vmem:[#allocation2 + $0x1d0] sm:$0xff]
    %v94 = vld [vmem:[#allocation2 + $0x1d8] sm:$0xff]
    %v95 = vld [vmem:[#allocation2 + $0x1e0] sm:$0xff]
    %v96 = vld [vmem:[#allocation2 + $0x1e8] sm:$0xff]
    %v97 = vld [vmem:[#allocation2 + $0x1f0] sm:$0xff]
    %v98 = vld [vmem:[#allocation2 + $0x1f8] sm:$0xff]
    %v99 = vpack.c.bf16 %v36, %v35
    %v100 = vpack.c.bf16 %v38, %v37
    %v101 = vpack.c.bf16 %v40, %v39
    %v102 = vpack.c.bf16 %v42, %v41
    %v103 = vpack.c.bf16 %v44, %v43
    %v104 = vpack.c.bf16 %v46, %v45
    %v105 = vpack.c.bf16 %v48, %v47
    %v106 = vpack.c.bf16 %v50, %v49
    %v107 = vpack.c.bf16 %v52, %v51
    %v108 = vpack.c.bf16 %v54, %v53
    %v109 = vpack.c.bf16 %v56, %v55
    %v110 = vpack.c.bf16 %v58, %v57
    %v111 = vpack.c.bf16 %v60, %v59
    %v112 = vpack.c.bf16 %v62, %v61
    %v113 = vpack.c.bf16 %v64, %v63
    %v114 = vpack.c.bf16 %v66, %v65
    %v115 = vpack.c.bf16 %v68, %v67
    %v116 = vpack.c.bf16 %v70, %v69
    %v117 = vpack.c.bf16 %v72, %v71
    %v118 = vpack.c.bf16 %v74, %v73
    %v119 = vpack.c.bf16 %v76, %v75
    %v120 = vpack.c.bf16 %v78, %v77
    %v121 = vpack.c.bf16 %v80, %v79
    %v122 = vpack.c.bf16 %v82, %v81
    %v123 = vpack.c.bf16 %v84, %v83
    %v124 = vpack.c.bf16 %v86, %v85
    %v125 = vpack.c.bf16 %v88, %v87
    %v126 = vpack.c.bf16 %v90, %v89
    %v127 = vpack.c.bf16 %v92, %v91
    %v128 = vpack.c.bf16 %v94, %v93
    %v129 = vpack.c.bf16 %v96, %v95
    %v130 = vpack.c.bf16 %v98, %v97
    %v131 = vld [vmem:[%s1] sm:$0xf]
    %v132 = vld [vmem:[%s1 + $0x4] sm:$0xf]
    %v133 = vld [vmem:[%s1 + $0x8] sm:$0xf]
    %v134 = vld [vmem:[%s1 + $0xc] sm:$0xf]
    %v135 = vld [vmem:[%s2] sm:$0x1]
    %v137 = vlaneseq
    %v138 = vshrl.u32 %v137, 7
    %v139 = vsub.s32 0, %v138
    %v140 = vrot.slane %v135, %v139
    %v146 = vunpack.c.l.b16 %v131
    %v147 = vunpack.c.l.b16 %v132
    %v148 = vunpack.c.l.b16 %v133
    %v149 = vunpack.c.l.b16 %v134
    %v150 = vpack.c.b16 %v147, %v146
    %v151 = vpack.c.b16 %v149, %v148
    %vm154 = vcmask 261120
    %v156 = vsel %vm154, %v99, 0
    %v159 = vsel %vm154, %v100, 0
    %v162 = vsel %vm154, %v101, 0
    %v165 = vsel %vm154, %v102, 0
    %v168 = vsel %vm154, %v103, 0
    %v171 = vsel %vm154, %v104, 0
    %v174 = vsel %vm154, %v105, 0
    %v177 = vsel %vm154, %v106, 0
    %v180 = vsel %vm154, %v107, 0
    %v183 = vsel %vm154, %v108, 0
    %v186 = vsel %vm154, %v109, 0
    %v189 = vsel %vm154, %v110, 0
    %v192 = vsel %vm154, %v111, 0
    %v195 = vsel %vm154, %v112, 0
    %v198 = vsel %vm154, %v113, 0
    %v201 = vsel %vm154, %v114, 0
    %v204 = vsel %vm154, %v115, 0
    %v207 = vsel %vm154, %v116, 0
    %v210 = vsel %vm154, %v117, 0
    %v213 = vsel %vm154, %v118, 0
    %v216 = vsel %vm154, %v119, 0
    %v219 = vsel %vm154, %v120, 0
    %v222 = vsel %vm154, %v121, 0
    %v225 = vsel %vm154, %v122, 0
    %v228 = vsel %vm154, %v123, 0
    %v231 = vsel %vm154, %v124, 0
    %v234 = vsel %vm154, %v125, 0
    %v237 = vsel %vm154, %v126, 0
    %v240 = vsel %vm154, %v127, 0
    %v243 = vsel %vm154, %v128, 0
    %v246 = vsel %vm154, %v129, 0
    %v249 = vsel %vm154, %v130, 0
    %251 = vmatprep.subr.bf16.mxu0 0
    %252 = vmatpush1.bf16.msra.mxu0 %v150
    %253 = vmatprep.subr.bf16.mxu0 0
    %254 = vmatpush1.bf16.msra.mxu0 %v151
    %255 = vmatprep.subr.bf16.mxu0 0
    %256 = vmatpush1.bf16.msra.mxu0 0
    %257 = vmatprep.subr.bf16.mxu0 0
    %258 = vmatpush1.bf16.msra.mxu0 0
    %259 = vmatprep.subr.bf16.mxu0 0
    %260 = vmatpush1.bf16.msra.mxu0 0
    %261 = vmatprep.subr.bf16.mxu0 0
    %262 = vmatpush1.bf16.msra.mxu0 0
    %263 = vmatprep.subr.bf16.mxu0 0
    %264 = vmatpush1.bf16.msra.mxu0 0
    %265 = vmatprep.subr.bf16.mxu0 0
    %266 = vmatpush1.bf16.msra.mxu0 0
    %267 = vmatprep.subr.bf16.mxu0 0
    %268 = vmatpush1.bf16.msra.mxu0 0
    %269 = vmatprep.subr.bf16.mxu0 0
    %270 = vmatpush1.bf16.msra.mxu0 0
    %271 = vmatprep.subr.bf16.mxu0 0
    %272 = vmatpush1.bf16.msra.mxu0 0
    %273 = vmatprep.subr.bf16.mxu0 0
    %274 = vmatpush1.bf16.msra.mxu0 0
    %275 = vmatprep.subr.bf16.mxu0 0
    %276 = vmatpush1.bf16.msra.mxu0 0
    %277 = vmatprep.subr.bf16.mxu0 0
    %278 = vmatpush1.bf16.msra.mxu0 0
    %279 = vmatprep.subr.bf16.mxu0 0
    %280 = vmatpush1.bf16.msra.mxu0 0
    %281 = vmatprep.subr.bf16.mxu0 0
    %282 = vmatpush1.bf16.msra.mxu0 0
    %283 = vmatprep.mubr.bf16.mxu0 0
    %284 = vmatmul.mubr.bf16.gmra.mrb[0].mxu0 %v156
    %v285 = vpop.f32.mrb[0].mxu0
    %v286 = vadd.f32 %v140, %v285
    %v287 = vpop.f32.mrb[0].mxu0
    %v288 = vpop.f32.mrb[0].mxu0
    %v289 = vadd.f32 %v140, %v288
    %v290 = vpop.f32.mrb[0].mxu0
    %291 = vmatprep.mubr.bf16.mxu0 0
    %292 = vmatmul.mubr.bf16.gmra.mrb[0].mxu0 %v159
    %v293 = vpop.f32.mrb[0].mxu0
    %v294 = vadd.f32 %v140, %v293
    %v295 = vpop.f32.mrb[0].mxu0
    %v296 = vpop.f32.mrb[0].mxu0
    %v297 = vadd.f32 %v140, %v296
    %v298 = vpop.f32.mrb[0].mxu0
    %299 = vmatprep.mubr.bf16.mxu0 0
    %300 = vmatmul.mubr.bf16.gmra.mrb[0].mxu0 %v162
    %v301 = vpop.f32.mrb[0].mxu0
    %v302 = vadd.f32 %v140, %v301
    %v303 = vpop.f32.mrb[0].mxu0
    %v304 = vpop.f32.mrb[0].mxu0
    %v305 = vadd.f32 %v140, %v304
    %v306 = vpop.f32.mrb[0].mxu0
    %307 = vmatprep.mubr.bf16.mxu0 0
    %308 = vmatmul.mubr.bf16.gmra.mrb[0].mxu0 %v165
    %v309 = vpop.f32.mrb[0].mxu0
    %v310 = vadd.f32 %v140, %v309
    %v311 = vpop.f32.mrb[0].mxu0
    %v312 = vpop.f32.mrb[0].mxu0
    %v313 = vadd.f32 %v140, %v312
    %v314 = vpop.f32.mrb[0].mxu0
    %315 = vmatprep.mubr.bf16.mxu0 0
    %316 = vmatmul.mubr.bf16.gmra.mrb[0].mxu0 %v168
    %v317 = vpop.f32.mrb[0].mxu0
    %v318 = vadd.f32 %v140, %v317
    %v319 = vpop.f32.mrb[0].mxu0
    %v320 = vpop.f32.mrb[0].mxu0
    %v321 = vadd.f32 %v140, %v320
    %v322 = vpop.f32.mrb[0].mxu0
    %323 = vmatprep.mubr.bf16.mxu0 0
    %324 = vmatmul.mubr.bf16.gmra.mrb[0].mxu0 %v171
    %v325 = vpop.f32.mrb[0].mxu0
    %v326 = vadd.f32 %v140, %v325
    %v327 = vpop.f32.mrb[0].mxu0
    %v328 = vpop.f32.mrb[0].mxu0
    %v329 = vadd.f32 %v140, %v328
    %v330 = vpop.f32.mrb[0].mxu0
    %331 = vmatprep.mubr.bf16.mxu0 0
    %332 = vmatmul.mubr.bf16.gmra.mrb[0].mxu0 %v174
    %v333 = vpop.f32.mrb[0].mxu0
    %v334 = vadd.f32 %v140, %v333
    %v335 = vpop.f32.mrb[0].mxu0
    %v336 = vpop.f32.mrb[0].mxu0
    %v337 = vadd.f32 %v140, %v336
    %v338 = vpop.f32.mrb[0].mxu0
    %339 = vmatprep.mubr.bf16.mxu0 0
    %340 = vmatmul.mubr.bf16.gmra.mrb[0].mxu0 %v177
    %v341 = vpop.f32.mrb[0].mxu0
    %v342 = vadd.f32 %v140, %v341
    %v343 = vpop.f32.mrb[0].mxu0
    %v344 = vpop.f32.mrb[0].mxu0
    %v345 = vadd.f32 %v140, %v344
    %v346 = vpop.f32.mrb[0].mxu0
    %347 = vmatprep.mubr.bf16.mxu0 0
    %348 = vmatmul.mubr.bf16.gmra.mrb[0].mxu0 %v180
    %v349 = vpop.f32.mrb[0].mxu0
    %v350 = vadd.f32 %v140, %v349
    %v351 = vpop.f32.mrb[0].mxu0
    %v352 = vpop.f32.mrb[0].mxu0
    %v353 = vadd.f32 %v140, %v352
    %v354 = vpop.f32.mrb[0].mxu0
    %355 = vmatprep.mubr.bf16.mxu0 0
    %356 = vmatmul.mubr.bf16.gmra.mrb[0].mxu0 %v183
    %v357 = vpop.f32.mrb[0].mxu0
    %v358 = vadd.f32 %v140, %v357
    %v359 = vpop.f32.mrb[0].mxu0
    %v360 = vpop.f32.mrb[0].mxu0
    %v361 = vadd.f32 %v140, %v360
    %v362 = vpop.f32.mrb[0].mxu0
    %363 = vmatprep.mubr.bf16.mxu0 0
    %364 = vmatmul.mubr.bf16.gmra.mrb[0].mxu0 %v186
    %v365 = vpop.f32.mrb[0].mxu0
    %v366 = vadd.f32 %v140, %v365
    %v367 = vpop.f32.mrb[0].mxu0
    %v368 = vpop.f32.mrb[0].mxu0
    %v369 = vadd.f32 %v140, %v368
    %v370 = vpop.f32.mrb[0].mxu0
    %371 = vmatprep.mubr.bf16.mxu0 0
    %372 = vmatmul.mubr.bf16.gmra.mrb[0].mxu0 %v189
    %v373 = vpop.f32.mrb[0].mxu0
    %v374 = vadd.f32 %v140, %v373
    %v375 = vpop.f32.mrb[0].mxu0
    %v376 = vpop.f32.mrb[0].mxu0
    %v377 = vadd.f32 %v140, %v376
    %v378 = vpop.f32.mrb[0].mxu0
    %379 = vmatprep.mubr.bf16.mxu0 0
    %380 = vmatmul.mubr.bf16.gmra.mrb[0].mxu0 %v192
    %v381 = vpop.f32.mrb[0].mxu0
    %v382 = vadd.f32 %v140, %v381
    %v383 = vpop.f32.mrb[0].mxu0
    %v384 = vpop.f32.mrb[0].mxu0
    %v385 = vadd.f32 %v140, %v384
    %v386 = vpop.f32.mrb[0].mxu0
    %387 = vmatprep.mubr.bf16.mxu0 0
    %388 = vmatmul.mubr.bf16.gmra.mrb[0].mxu0 %v195
    %v389 = vpop.f32.mrb[0].mxu0
    %v390 = vadd.f32 %v140, %v389
    %v391 = vpop.f32.mrb[0].mxu0
    %v392 = vpop.f32.mrb[0].mxu0
    %v393 = vadd.f32 %v140, %v392
    %v394 = vpop.f32.mrb[0].mxu0
    %395 = vmatprep.mubr.bf16.mxu0 0
    %396 = vmatmul.mubr.bf16.gmra.mrb[0].mxu0 %v198
    %v397 = vpop.f32.mrb[0].mxu0
    %v398 = vadd.f32 %v140, %v397
    %v399 = vpop.f32.mrb[0].mxu0
    %v400 = vpop.f32.mrb[0].mxu0
    %v401 = vadd.f32 %v140, %v400
    %v402 = vpop.f32.mrb[0].mxu0
    %403 = vmatprep.mubr.bf16.mxu0 0
    %404 = vmatmul.mubr.bf16.gmra.mrb[0].mxu0 %v201
    %v405 = vpop.f32.mrb[0].mxu0
    %v406 = vadd.f32 %v140, %v405
    %v407 = vpop.f32.mrb[0].mxu0
    %v408 = vpop.f32.mrb[0].mxu0
    %v409 = vadd.f32 %v140, %v408
    %v410 = vpop.f32.mrb[0].mxu0
    %411 = vmatprep.mubr.bf16.mxu0 0
    %412 = vmatmul.mubr.bf16.gmra.mrb[0].mxu0 %v204
    %v413 = vpop.f32.mrb[0].mxu0
    %v414 = vadd.f32 %v140, %v413
    %v415 = vpop.f32.mrb[0].mxu0
    %v416 = vpop.f32.mrb[0].mxu0
    %v417 = vadd.f32 %v140, %v416
    %v418 = vpop.f32.mrb[0].mxu0
    %419 = vmatprep.mubr.bf16.mxu0 0
    %420 = vmatmul.mubr.bf16.gmra.mrb[0].mxu0 %v207
    %v421 = vpop.f32.mrb[0].mxu0
    %v422 = vadd.f32 %v140, %v421
    %v423 = vpop.f32.mrb[0].mxu0
    %v424 = vpop.f32.mrb[0].mxu0
    %v425 = vadd.f32 %v140, %v424
    %v426 = vpop.f32.mrb[0].mxu0
    %427 = vmatprep.mubr.bf16.mxu0 0
    %428 = vmatmul.mubr.bf16.gmra.mrb[0].mxu0 %v210
    %v429 = vpop.f32.mrb[0].mxu0
    %v430 = vadd.f32 %v140, %v429
    %v431 = vpop.f32.mrb[0].mxu0
    %v432 = vpop.f32.mrb[0].mxu0
    %v433 = vadd.f32 %v140, %v432
    %v434 = vpop.f32.mrb[0].mxu0
    %435 = vmatprep.mubr.bf16.mxu0 0
    %436 = vmatmul.mubr.bf16.gmra.mrb[0].mxu0 %v213
    %v437 = vpop.f32.mrb[0].mxu0
    %v438 = vadd.f32 %v140, %v437
    %v439 = vpop.f32.mrb[0].mxu0
    %v440 = vpop.f32.mrb[0].mxu0
    %v441 = vadd.f32 %v140, %v440
    %v442 = vpop.f32.mrb[0].mxu0
    %443 = vmatprep.mubr.bf16.mxu0 0
    %444 = vmatmul.mubr.bf16.gmra.mrb[0].mxu0 %v216
    %v445 = vpop.f32.mrb[0].mxu0
    %v446 = vadd.f32 %v140, %v445
    %v447 = vpop.f32.mrb[0].mxu0
    %v448 = vpop.f32.mrb[0].mxu0
    %v449 = vadd.f32 %v140, %v448
    %v450 = vpop.f32.mrb[0].mxu0
    %451 = vmatprep.mubr.bf16.mxu0 0
    %452 = vmatmul.mubr.bf16.gmra.mrb[0].mxu0 %v219
    %v453 = vpop.f32.mrb[0].mxu0
    %v454 = vadd.f32 %v140, %v453
    %v455 = vpop.f32.mrb[0].mxu0
    %v456 = vpop.f32.mrb[0].mxu0
    %v457 = vadd.f32 %v140, %v456
    %v458 = vpop.f32.mrb[0].mxu0
    %459 = vmatprep.mubr.bf16.mxu0 0
    %460 = vmatmul.mubr.bf16.gmra.mrb[0].mxu0 %v222
    %v461 = vpop.f32.mrb[0].mxu0
    %v462 = vadd.f32 %v140, %v461
    %v463 = vpop.f32.mrb[0].mxu0
    %v464 = vpop.f32.mrb[0].mxu0
    %v465 = vadd.f32 %v140, %v464
    %v466 = vpop.f32.mrb[0].mxu0
    %467 = vmatprep.mubr.bf16.mxu0 0
    %468 = vmatmul.mubr.bf16.gmra.mrb[0].mxu0 %v225
    %v469 = vpop.f32.mrb[0].mxu0
    %v470 = vadd.f32 %v140, %v469
    %v471 = vpop.f32.mrb[0].mxu0
    %v472 = vpop.f32.mrb[0].mxu0
    %v473 = vadd.f32 %v140, %v472
    %v474 = vpop.f32.mrb[0].mxu0
    %475 = vmatprep.mubr.bf16.mxu0 0
    %476 = vmatmul.mubr.bf16.gmra.mrb[0].mxu0 %v228
    %v477 = vpop.f32.mrb[0].mxu0
    %v478 = vadd.f32 %v140, %v477
    %v479 = vpop.f32.mrb[0].mxu0
    %v480 = vpop.f32.mrb[0].mxu0
    %v481 = vadd.f32 %v140, %v480
    %v482 = vpop.f32.mrb[0].mxu0
    %483 = vmatprep.mubr.bf16.mxu0 0
    %484 = vmatmul.mubr.bf16.gmra.mrb[0].mxu0 %v231
    %v485 = vpop.f32.mrb[0].mxu0
    %v486 = vadd.f32 %v140, %v485
    %v487 = vpop.f32.mrb[0].mxu0
    %v488 = vpop.f32.mrb[0].mxu0
    %v489 = vadd.f32 %v140, %v488
    %v490 = vpop.f32.mrb[0].mxu0
    %491 = vmatprep.mubr.bf16.mxu0 0
    %492 = vmatmul.mubr.bf16.gmra.mrb[0].mxu0 %v234
    %v493 = vpop.f32.mrb[0].mxu0
    %v494 = vadd.f32 %v140, %v493
    %v495 = vpop.f32.mrb[0].mxu0
    %v496 = vpop.f32.mrb[0].mxu0
    %v497 = vadd.f32 %v140, %v496
    %v498 = vpop.f32.mrb[0].mxu0
    %499 = vmatprep.mubr.bf16.mxu0 0
    %500 = vmatmul.mubr.bf16.gmra.mrb[0].mxu0 %v237
    %v501 = vpop.f32.mrb[0].mxu0
    %v502 = vadd.f32 %v140, %v501
    %v503 = vpop.f32.mrb[0].mxu0
    %v504 = vpop.f32.mrb[0].mxu0
    %v505 = vadd.f32 %v140, %v504
    %v506 = vpop.f32.mrb[0].mxu0
    %507 = vmatprep.mubr.bf16.mxu0 0
    %508 = vmatmul.mubr.bf16.gmra.mrb[0].mxu0 %v240
    %v509 = vpop.f32.mrb[0].mxu0
    %v510 = vadd.f32 %v140, %v509
    %v511 = vpop.f32.mrb[0].mxu0
    %v512 = vpop.f32.mrb[0].mxu0
    %v513 = vadd.f32 %v140, %v512
    %v514 = vpop.f32.mrb[0].mxu0
    %515 = vmatprep.mubr.bf16.mxu0 0
    %516 = vmatmul.mubr.bf16.gmra.mrb[0].mxu0 %v243
    %v517 = vpop.f32.mrb[0].mxu0
    %v518 = vadd.f32 %v140, %v517
    %v519 = vpop.f32.mrb[0].mxu0
    %v520 = vpop.f32.mrb[0].mxu0
    %v521 = vadd.f32 %v140, %v520
    %v522 = vpop.f32.mrb[0].mxu0
    %523 = vmatprep.mubr.bf16.mxu0 0
    %524 = vmatmul.mubr.bf16.gmra.mrb[0].mxu0 %v246
    %v525 = vpop.f32.mrb[0].mxu0
    %v526 = vadd.f32 %v140, %v525
    %v527 = vpop.f32.mrb[0].mxu0
    %v528 = vpop.f32.mrb[0].mxu0
    %v529 = vadd.f32 %v140, %v528
    %v530 = vpop.f32.mrb[0].mxu0
    %531 = vmatprep.mubr.bf16.mxu0 0
    %532 = vmatmul.mubr.bf16.gmra.mrb[0].mxu0 %v249
    %v533 = vpop.f32.mrb[0].mxu0
    %v534 = vadd.f32 %v140, %v533
    %v535 = vpop.f32.mrb[0].mxu0
    %v536 = vpop.f32.mrb[0].mxu0
    %v537 = vadd.f32 %v140, %v536
    %v538 = vpop.f32.mrb[0].mxu0
    %539 = vdwg.mxu0
    %v540 = vxor.u32 %v286, 2147483648
    %v541 = vxor.u32 %v289, 2147483648
    %v542 = vxor.u32 %v294, 2147483648
    %v543 = vxor.u32 %v297, 2147483648
    %v544 = vxor.u32 %v302, 2147483648
    %v545 = vxor.u32 %v305, 2147483648
    %v546 = vxor.u32 %v310, 2147483648
    %v547 = vxor.u32 %v313, 2147483648
    %v548 = vxor.u32 %v318, 2147483648
    %v549 = vxor.u32 %v321, 2147483648
    %v550 = vxor.u32 %v326, 2147483648
    %v551 = vxor.u32 %v329, 2147483648
    %v552 = vxor.u32 %v334, 2147483648
    %v553 = vxor.u32 %v337, 2147483648
    %v554 = vxor.u32 %v342, 2147483648
    %v555 = vxor.u32 %v345, 2147483648
    %v556 = vxor.u32 %v350, 2147483648
    %v557 = vxor.u32 %v353, 2147483648
    %v558 = vxor.u32 %v358, 2147483648
    %v559 = vxor.u32 %v361, 2147483648
    %v560 = vxor.u32 %v366, 2147483648
    %v561 = vxor.u32 %v369, 2147483648
    %v562 = vxor.u32 %v374, 2147483648
    %v563 = vxor.u32 %v377, 2147483648
    %v564 = vxor.u32 %v382, 2147483648
    %v565 = vxor.u32 %v385, 2147483648
    %v566 = vxor.u32 %v390, 2147483648
    %v567 = vxor.u32 %v393, 2147483648
    %v568 = vxor.u32 %v398, 2147483648
    %v569 = vxor.u32 %v401, 2147483648
    %v570 = vxor.u32 %v406, 2147483648
    %v571 = vxor.u32 %v409, 2147483648
    %v572 = vxor.u32 %v414, 2147483648
    %v573 = vxor.u32 %v417, 2147483648
    %v574 = vxor.u32 %v422, 2147483648
    %v575 = vxor.u32 %v425, 2147483648
    %v576 = vxor.u32 %v430, 2147483648
    %v577 = vxor.u32 %v433, 2147483648
    %v578 = vxor.u32 %v438, 2147483648
    %v579 = vxor.u32 %v441, 2147483648
    %v580 = vxor.u32 %v446, 2147483648
    %v581 = vxor.u32 %v449, 2147483648
    %v582 = vxor.u32 %v454, 2147483648
    %v583 = vxor.u32 %v457, 2147483648
    %v584 = vxor.u32 %v462, 2147483648
    %v585 = vxor.u32 %v465, 2147483648
    %v586 = vxor.u32 %v470, 2147483648
    %v587 = vxor.u32 %v473, 2147483648
    %v588 = vxor.u32 %v478, 2147483648
    %v589 = vxor.u32 %v481, 2147483648
    %v590 = vxor.u32 %v486, 2147483648
    %v591 = vxor.u32 %v489, 2147483648
    %v592 = vxor.u32 %v494, 2147483648
    %v593 = vxor.u32 %v497, 2147483648
    %v594 = vxor.u32 %v502, 2147483648
    %v595 = vxor.u32 %v505, 2147483648
    %v596 = vxor.u32 %v510, 2147483648
    %v597 = vxor.u32 %v513, 2147483648
    %v598 = vxor.u32 %v518, 2147483648
    %v599 = vxor.u32 %v521, 2147483648
    %v600 = vxor.u32 %v526, 2147483648
    %v601 = vxor.u32 %v529, 2147483648
    %v602 = vxor.u32 %v534, 2147483648
    %v603 = vxor.u32 %v537, 2147483648
    %v604 = vmul.f32 %v540, 1.442695
    %v605 = vpow.pop %v604
    %v606 = vmul.f32 %v541, 1.442695
    %v607 = vpow.pop %v606
    %v608 = vmul.f32 %v542, 1.442695
    %v609 = vpow.pop %v608
    %v610 = vmul.f32 %v543, 1.442695
    %v611 = vpow.pop %v610
    %v612 = vmul.f32 %v544, 1.442695
    %v613 = vpow.pop %v612
    %v614 = vmul.f32 %v545, 1.442695
    %v615 = vpow.pop %v614
    %v616 = vmul.f32 %v546, 1.442695
    %v617 = vpow.pop %v616
    %v618 = vmul.f32 %v547, 1.442695
    %v619 = vpow.pop %v618
    %v620 = vmul.f32 %v548, 1.442695
    %v621 = vpow.pop %v620
    %v622 = vmul.f32 %v549, 1.442695
    %v623 = vpow.pop %v622
    %v624 = vmul.f32 %v550, 1.442695
    %v625 = vpow.pop %v624
    %v626 = vmul.f32 %v551, 1.442695
    %v627 = vpow.pop %v626
    %v628 = vmul.f32 %v552, 1.442695
    %v629 = vpow.pop %v628
    %v630 = vmul.f32 %v553, 1.442695
    %v631 = vpow.pop %v630
    %v632 = vmul.f32 %v554, 1.442695
    %v633 = vpow.pop %v632
    %v634 = vmul.f32 %v555, 1.442695
    %v635 = vpow.pop %v634
    %v636 = vmul.f32 %v556, 1.442695
    %v637 = vpow.pop %v636
    %v638 = vmul.f32 %v557, 1.442695
    %v639 = vpow.pop %v638
    %v640 = vmul.f32 %v558, 1.442695
    %v641 = vpow.pop %v640
    %v642 = vmul.f32 %v559, 1.442695
    %v643 = vpow.pop %v642
    %v644 = vmul.f32 %v560, 1.442695
    %v645 = vpow.pop %v644
    %v646 = vmul.f32 %v561, 1.442695
    %v647 = vpow.pop %v646
    %v648 = vmul.f32 %v562, 1.442695
    %v649 = vpow.pop %v648
    %v650 = vmul.f32 %v563, 1.442695
    %v651 = vpow.pop %v650
    %v652 = vmul.f32 %v564, 1.442695
    %v653 = vpow.pop %v652
    %v654 = vmul.f32 %v565, 1.442695
    %v655 = vpow.pop %v654
    %v656 = vmul.f32 %v566, 1.442695
    %v657 = vpow.pop %v656
    %v658 = vmul.f32 %v567, 1.442695
    %v659 = vpow.pop %v658
    %v660 = vmul.f32 %v568, 1.442695
    %v661 = vpow.pop %v660
    %v662 = vmul.f32 %v569, 1.442695
    %v663 = vpow.pop %v662
    %v664 = vmul.f32 %v570, 1.442695
    %v665 = vpow.pop %v664
    %v666 = vmul.f32 %v571, 1.442695
    %v667 = vpow.pop %v666
    %v668 = vmul.f32 %v572, 1.442695
    %v669 = vpow.pop %v668
    %v670 = vmul.f32 %v573, 1.442695
    %v671 = vpow.pop %v670
    %v672 = vmul.f32 %v574, 1.442695
    %v673 = vpow.pop %v672
    %v674 = vmul.f32 %v575, 1.442695
    %v675 = vpow.pop %v674
    %v676 = vmul.f32 %v576, 1.442695
    %v677 = vpow.pop %v676
    %v678 = vmul.f32 %v577, 1.442695
    %v679 = vpow.pop %v678
    %v680 = vmul.f32 %v578, 1.442695
    %v681 = vpow.pop %v680
    %v682 = vmul.f32 %v579, 1.442695
    %v683 = vpow.pop %v682
    %v684 = vmul.f32 %v580, 1.442695
    %v685 = vpow.pop %v684
    %v686 = vmul.f32 %v581, 1.442695
    %v687 = vpow.pop %v686
    %v688 = vmul.f32 %v582, 1.442695
    %v689 = vpow.pop %v688
    %v690 = vmul.f32 %v583, 1.442695
    %v691 = vpow.pop %v690
    %v692 = vmul.f32 %v584, 1.442695
    %v693 = vpow.pop %v692
    %v694 = vmul.f32 %v585, 1.442695
    %v695 = vpow.pop %v694
    %v696 = vmul.f32 %v586, 1.442695
    %v697 = vpow.pop %v696
    %v698 = vmul.f32 %v587, 1.442695
    %v699 = vpow.pop %v698
    %v700 = vmul.f32 %v588, 1.442695
    %v701 = vpow.pop %v700
    %v702 = vmul.f32 %v589, 1.442695
    %v703 = vpow.pop %v702
    %v704 = vmul.f32 %v590, 1.442695
    %v705 = vpow.pop %v704
    %v706 = vmul.f32 %v591, 1.442695
    %v707 = vpow.pop %v706
    %v708 = vmul.f32 %v592, 1.442695
    %v709 = vpow.pop %v708
    %v710 = vmul.f32 %v593, 1.442695
    %v711 = vpow.pop %v710
    %v712 = vmul.f32 %v594, 1.442695
    %v713 = vpow.pop %v712
    %v714 = vmul.f32 %v595, 1.442695
    %v715 = vpow.pop %v714
    %v716 = vmul.f32 %v596, 1.442695
    %v717 = vpow.pop %v716
    %v718 = vmul.f32 %v597, 1.442695
    %v719 = vpow.pop %v718
    %v720 = vmul.f32 %v598, 1.442695
    %v721 = vpow.pop %v720
    %v722 = vmul.f32 %v599, 1.442695
    %v723 = vpow.pop %v722
    %v724 = vmul.f32 %v600, 1.442695
    %v725 = vpow.pop %v724
    %v726 = vmul.f32 %v601, 1.442695
    %v727 = vpow.pop %v726
    %v728 = vmul.f32 %v602, 1.442695
    %v729 = vpow.pop %v728
    %v730 = vmul.f32 %v603, 1.442695
    %v731 = vpow.pop %v730
    %v732 = vadd.f32 %v605, 1.0
    %v733 = vadd.f32 %v607, 1.0
    %v734 = vadd.f32 %v609, 1.0
    %v735 = vadd.f32 %v611, 1.0
    %v736 = vadd.f32 %v613, 1.0
    %v737 = vadd.f32 %v615, 1.0
    %v738 = vadd.f32 %v617, 1.0
    %v739 = vadd.f32 %v619, 1.0
    %v740 = vadd.f32 %v621, 1.0
    %v741 = vadd.f32 %v623, 1.0
    %v742 = vadd.f32 %v625, 1.0
    %v743 = vadd.f32 %v627, 1.0
    %v744 = vadd.f32 %v629, 1.0
    %v745 = vadd.f32 %v631, 1.0
    %v746 = vadd.f32 %v633, 1.0
    %v747 = vadd.f32 %v635, 1.0
    %v748 = vadd.f32 %v637, 1.0
    %v749 = vadd.f32 %v639, 1.0
    %v750 = vadd.f32 %v641, 1.0
    %v751 = vadd.f32 %v643, 1.0
    %v752 = vadd.f32 %v645, 1.0
    %v753 = vadd.f32 %v647, 1.0
    %v754 = vadd.f32 %v649, 1.0
    %v755 = vadd.f32 %v651, 1.0
    %v756 = vadd.f32 %v653, 1.0
    %v757 = vadd.f32 %v655, 1.0
    %v758 = vadd.f32 %v657, 1.0
    %v759 = vadd.f32 %v659, 1.0
    %v760 = vadd.f32 %v661, 1.0
    %v761 = vadd.f32 %v663, 1.0
    %v762 = vadd.f32 %v665, 1.0
    %v763 = vadd.f32 %v667, 1.0
    %v764 = vadd.f32 %v669, 1.0
    %v765 = vadd.f32 %v671, 1.0
    %v766 = vadd.f32 %v673, 1.0
    %v767 = vadd.f32 %v675, 1.0
    %v768 = vadd.f32 %v677, 1.0
    %v769 = vadd.f32 %v679, 1.0
    %v770 = vadd.f32 %v681, 1.0
    %v771 = vadd.f32 %v683, 1.0
    %v772 = vadd.f32 %v685, 1.0
    %v773 = vadd.f32 %v687, 1.0
    %v774 = vadd.f32 %v689, 1.0
    %v775 = vadd.f32 %v691, 1.0
    %v776 = vadd.f32 %v693, 1.0
    %v777 = vadd.f32 %v695, 1.0
    %v778 = vadd.f32 %v697, 1.0
    %v779 = vadd.f32 %v699, 1.0
    %v780 = vadd.f32 %v701, 1.0
    %v781 = vadd.f32 %v703, 1.0
    %v782 = vadd.f32 %v705, 1.0
    %v783 = vadd.f32 %v707, 1.0
    %v784 = vadd.f32 %v709, 1.0
    %v785 = vadd.f32 %v711, 1.0
    %v786 = vadd.f32 %v713, 1.0
    %v787 = vadd.f32 %v715, 1.0
    %v788 = vadd.f32 %v717, 1.0
    %v789 = vadd.f32 %v719, 1.0
    %v790 = vadd.f32 %v721, 1.0
    %v791 = vadd.f32 %v723, 1.0
    %v792 = vadd.f32 %v725, 1.0
    %v793 = vadd.f32 %v727, 1.0
    %v794 = vadd.f32 %v729, 1.0
    %v795 = vadd.f32 %v731, 1.0
    %v796 = vrcp.pop %v732
    %v797 = vmul.f32 1.0, %v796
    %v798 = vrcp.pop %v733
    %v799 = vmul.f32 1.0, %v798
    %v800 = vrcp.pop %v734
    %v801 = vmul.f32 1.0, %v800
    %v802 = vrcp.pop %v735
    %v803 = vmul.f32 1.0, %v802
    %v804 = vrcp.pop %v736
    %v805 = vmul.f32 1.0, %v804
    %v806 = vrcp.pop %v737
    %v807 = vmul.f32 1.0, %v806
    %v808 = vrcp.pop %v738
    %v809 = vmul.f32 1.0, %v808
    %v810 = vrcp.pop %v739
    %v811 = vmul.f32 1.0, %v810
    %v812 = vrcp.pop %v740
    %v813 = vmul.f32 1.0, %v812
    %v814 = vrcp.pop %v741
    %v815 = vmul.f32 1.0, %v814
    %v816 = vrcp.pop %v742
    %v817 = vmul.f32 1.0, %v816
    %v818 = vrcp.pop %v743
    %v819 = vmul.f32 1.0, %v818
    %v820 = vrcp.pop %v744
    %v821 = vmul.f32 1.0, %v820
    %v822 = vrcp.pop %v745
    %v823 = vmul.f32 1.0, %v822
    %v824 = vrcp.pop %v746
    %v825 = vmul.f32 1.0, %v824
    %v826 = vrcp.pop %v747
    %v827 = vmul.f32 1.0, %v826
    %v828 = vrcp.pop %v748
    %v829 = vmul.f32 1.0, %v828
    %v830 = vrcp.pop %v749
    %v831 = vmul.f32 1.0, %v830
    %v832 = vrcp.pop %v750
    %v833 = vmul.f32 1.0, %v832
    %v834 = vrcp.pop %v751
    %v835 = vmul.f32 1.0, %v834
    %v836 = vrcp.pop %v752
    %v837 = vmul.f32 1.0, %v836
    %v838 = vrcp.pop %v753
    %v839 = vmul.f32 1.0, %v838
    %v840 = vrcp.pop %v754
    %v841 = vmul.f32 1.0, %v840
    %v842 = vrcp.pop %v755
    %v843 = vmul.f32 1.0, %v842
    %v844 = vrcp.pop %v756
    %v845 = vmul.f32 1.0, %v844
    %v846 = vrcp.pop %v757
    %v847 = vmul.f32 1.0, %v846
    %v848 = vrcp.pop %v758
    %v849 = vmul.f32 1.0, %v848
    %v850 = vrcp.pop %v759
    %v851 = vmul.f32 1.0, %v850
    %v852 = vrcp.pop %v760
    %v853 = vmul.f32 1.0, %v852
    %v854 = vrcp.pop %v761
    %v855 = vmul.f32 1.0, %v854
    %v856 = vrcp.pop %v762
    %v857 = vmul.f32 1.0, %v856
    %v858 = vrcp.pop %v763
    %v859 = vmul.f32 1.0, %v858
    %v860 = vrcp.pop %v764
    %v861 = vmul.f32 1.0, %v860
    %v862 = vrcp.pop %v765
    %v863 = vmul.f32 1.0, %v862
    %v864 = vrcp.pop %v766
    %v865 = vmul.f32 1.0, %v864
    %v866 = vrcp.pop %v767
    %v867 = vmul.f32 1.0, %v866
    %v868 = vrcp.pop %v768
    %v869 = vmul.f32 1.0, %v868
    %v870 = vrcp.pop %v769
    %v871 = vmul.f32 1.0, %v870
    %v872 = vrcp.pop %v770
    %v873 = vmul.f32 1.0, %v872
    %v874 = vrcp.pop %v771
    %v875 = vmul.f32 1.0, %v874
    %v876 = vrcp.pop %v772
    %v877 = vmul.f32 1.0, %v876
    %v878 = vrcp.pop %v773
    %v879 = vmul.f32 1.0, %v878
    %v880 = vrcp.pop %v774
    %v881 = vmul.f32 1.0, %v880
    %v882 = vrcp.pop %v775
    %v883 = vmul.f32 1.0, %v882
    %v884 = vrcp.pop %v776
    %v885 = vmul.f32 1.0, %v884
    %v886 = vrcp.pop %v777
    %v887 = vmul.f32 1.0, %v886
    %v888 = vrcp.pop %v778
    %v889 = vmul.f32 1.0, %v888
    %v890 = vrcp.pop %v779
    %v891 = vmul.f32 1.0, %v890
    %v892 = vrcp.pop %v780
    %v893 = vmul.f32 1.0, %v892
    %v894 = vrcp.pop %v781
    %v895 = vmul.f32 1.0, %v894
    %v896 = vrcp.pop %v782
    %v897 = vmul.f32 1.0, %v896
    %v898 = vrcp.pop %v783
    %v899 = vmul.f32 1.0, %v898
    %v900 = vrcp.pop %v784
    %v901 = vmul.f32 1.0, %v900
    %v902 = vrcp.pop %v785
    %v903 = vmul.f32 1.0, %v902
    %v904 = vrcp.pop %v786
    %v905 = vmul.f32 1.0, %v904
    %v906 = vrcp.pop %v787
    %v907 = vmul.f32 1.0, %v906
    %v908 = vrcp.pop %v788
    %v909 = vmul.f32 1.0, %v908
    %v910 = vrcp.pop %v789
    %v911 = vmul.f32 1.0, %v910
    %v912 = vrcp.pop %v790
    %v913 = vmul.f32 1.0, %v912
    %v914 = vrcp.pop %v791
    %v915 = vmul.f32 1.0, %v914
    %v916 = vrcp.pop %v792
    %v917 = vmul.f32 1.0, %v916
    %v918 = vrcp.pop %v793
    %v919 = vmul.f32 1.0, %v918
    %v920 = vrcp.pop %v794
    %v921 = vmul.f32 1.0, %v920
    %v922 = vrcp.pop %v795
    %v923 = vmul.f32 1.0, %v922
    %v924 = vmul.f32 %v286, %v797
    %v925 = vmul.f32 %v289, %v799
    %v926 = vmul.f32 %v294, %v801
    %v927 = vmul.f32 %v297, %v803
    %v928 = vmul.f32 %v302, %v805
    %v929 = vmul.f32 %v305, %v807
    %v930 = vmul.f32 %v310, %v809
    %v931 = vmul.f32 %v313, %v811
    %v932 = vmul.f32 %v318, %v813
    %v933 = vmul.f32 %v321, %v815
    %v934 = vmul.f32 %v326, %v817
    %v935 = vmul.f32 %v329, %v819
    %v936 = vmul.f32 %v334, %v821
    %v937 = vmul.f32 %v337, %v823
    %v938 = vmul.f32 %v342, %v825
    %v939 = vmul.f32 %v345, %v827
    %v940 = vmul.f32 %v350, %v829
    %v941 = vmul.f32 %v353, %v831
    %v942 = vmul.f32 %v358, %v833
    %v943 = vmul.f32 %v361, %v835
    %v944 = vmul.f32 %v366, %v837
    %v945 = vmul.f32 %v369, %v839
    %v946 = vmul.f32 %v374, %v841
    %v947 = vmul.f32 %v377, %v843
    %v948 = vmul.f32 %v382, %v845
    %v949 = vmul.f32 %v385, %v847
    %v950 = vmul.f32 %v390, %v849
    %v951 = vmul.f32 %v393, %v851
    %v952 = vmul.f32 %v398, %v853
    %v953 = vmul.f32 %v401, %v855
    %v954 = vmul.f32 %v406, %v857
    %v955 = vmul.f32 %v409, %v859
    %v956 = vmul.f32 %v414, %v861
    %v957 = vmul.f32 %v417, %v863
    %v958 = vmul.f32 %v422, %v865
    %v959 = vmul.f32 %v425, %v867
    %v960 = vmul.f32 %v430, %v869
    %v961 = vmul.f32 %v433, %v871
    %v962 = vmul.f32 %v438, %v873
    %v963 = vmul.f32 %v441, %v875
    %v964 = vmul.f32 %v446, %v877
    %v965 = vmul.f32 %v449, %v879
    %v966 = vmul.f32 %v454, %v881
    %v967 = vmul.f32 %v457, %v883
    %v968 = vmul.f32 %v462, %v885
    %v969 = vmul.f32 %v465, %v887
    %v970 = vmul.f32 %v470, %v889
    %v971 = vmul.f32 %v473, %v891
    %v972 = vmul.f32 %v478, %v893
    %v973 = vmul.f32 %v481, %v895
    %v974 = vmul.f32 %v486, %v897
    %v975 = vmul.f32 %v489, %v899
    %v976 = vmul.f32 %v494, %v901
    %v977 = vmul.f32 %v497, %v903
    %v978 = vmul.f32 %v502, %v905
    %v979 = vmul.f32 %v505, %v907
    %v980 = vmul.f32 %v510, %v909
    %v981 = vmul.f32 %v513, %v911
    %v982 = vmul.f32 %v518, %v913
    %v983 = vmul.f32 %v521, %v915
    %v984 = vmul.f32 %v526, %v917
    %v985 = vmul.f32 %v529, %v919
    %v986 = vmul.f32 %v534, %v921
    %v987 = vmul.f32 %v537, %v923
    %v988 = vpack.c.bf16 %v925, %v924
    %v989 = vpack.c.bf16 %v927, %v926
    %v990 = vpack.c.bf16 %v929, %v928
    %v991 = vpack.c.bf16 %v931, %v930
    %v992 = vpack.c.bf16 %v933, %v932
    %v993 = vpack.c.bf16 %v935, %v934
    %v994 = vpack.c.bf16 %v937, %v936
    %v995 = vpack.c.bf16 %v939, %v938
    %v996 = vpack.c.bf16 %v941, %v940
    %v997 = vpack.c.bf16 %v943, %v942
    %v998 = vpack.c.bf16 %v945, %v944
    %v999 = vpack.c.bf16 %v947, %v946
    %v1000 = vpack.c.bf16 %v949, %v948
    %v1001 = vpack.c.bf16 %v951, %v950
    %v1002 = vpack.c.bf16 %v953, %v952
    %v1003 = vpack.c.bf16 %v955, %v954
    %v1004 = vpack.c.bf16 %v957, %v956
    %v1005 = vpack.c.bf16 %v959, %v958
    %v1006 = vpack.c.bf16 %v961, %v960
    %v1007 = vpack.c.bf16 %v963, %v962
    %v1008 = vpack.c.bf16 %v965, %v964
    %v1009 = vpack.c.bf16 %v967, %v966
    %v1010 = vpack.c.bf16 %v969, %v968
    %v1011 = vpack.c.bf16 %v971, %v970
    %v1012 = vpack.c.bf16 %v973, %v972
    %v1013 = vpack.c.bf16 %v975, %v974
    %v1014 = vpack.c.bf16 %v977, %v976
    %v1015 = vpack.c.bf16 %v979, %v978
    %v1016 = vpack.c.bf16 %v981, %v980
    %v1017 = vpack.c.bf16 %v983, %v982
    %v1018 = vpack.c.bf16 %v985, %v984
    %v1019 = vpack.c.bf16 %v987, %v986
    %v1020 = vld [vmem:[%s3] sm:$0xf]
    %v1021 = vld [vmem:[%s4] sm:$0x1]
    %v1023 = vlaneseq
    %v1024 = vshrl.u32 %v1023, 7
    %v1025 = vsub.s32 0, %v1024
    %v1026 = vrot.slane %v1021, %v1025
    %vm1028 = vcmask 64512
    %v1030 = vsel %vm1028, %v988, 0
    %v1033 = vsel %vm1028, %v989, 0
    %v1036 = vsel %vm1028, %v990, 0
    %v1039 = vsel %vm1028, %v991, 0
    %v1042 = vsel %vm1028, %v992, 0
    %v1045 = vsel %vm1028, %v993, 0
    %v1048 = vsel %vm1028, %v994, 0
    %v1051 = vsel %vm1028, %v995, 0
    %v1054 = vsel %vm1028, %v996, 0
    %v1057 = vsel %vm1028, %v997, 0
    %v1060 = vsel %vm1028, %v998, 0
    %v1063 = vsel %vm1028, %v999, 0
    %v1066 = vsel %vm1028, %v1000, 0
    %v1069 = vsel %vm1028, %v1001, 0
    %v1072 = vsel %vm1028, %v1002, 0
    %v1075 = vsel %vm1028, %v1003, 0
    %v1078 = vsel %vm1028, %v1004, 0
    %v1081 = vsel %vm1028, %v1005, 0
    %v1084 = vsel %vm1028, %v1006, 0
    %v1087 = vsel %vm1028, %v1007, 0
    %v1090 = vsel %vm1028, %v1008, 0
    %v1093 = vsel %vm1028, %v1009, 0
    %v1096 = vsel %vm1028, %v1010, 0
    %v1099 = vsel %vm1028, %v1011, 0
    %v1102 = vsel %vm1028, %v1012, 0
    %v1105 = vsel %vm1028, %v1013, 0
    %v1108 = vsel %vm1028, %v1014, 0
    %v1111 = vsel %vm1028, %v1015, 0
    %v1114 = vsel %vm1028, %v1016, 0
    %v1117 = vsel %vm1028, %v1017, 0
    %v1120 = vsel %vm1028, %v1018, 0
    %v1123 = vsel %vm1028, %v1019, 0
    %vm1125 = vcmask 1043456
    %v1127 = vsel %vm1125, %v1020, 0
    %1129 = vmatprep.subr.bf16.mxu0 0
    %1130 = vmatpush1.bf16.msra.mxu0 %v1127
    %1131 = vmatprep.subr.bf16.mxu0 0
    %1132 = vmatpush1.bf16.msra.mxu0 0
    %1133 = vmatprep.subr.bf16.mxu0 0
    %1134 = vmatpush1.bf16.msra.mxu0 0
    %1135 = vmatprep.subr.bf16.mxu0 0
    %1136 = vmatpush1.bf16.msra.mxu0 0
    %1137 = vmatprep.subr.bf16.mxu0 0
    %1138 = vmatpush1.bf16.msra.mxu0 0
    %1139 = vmatprep.subr.bf16.mxu0 0
    %1140 = vmatpush1.bf16.msra.mxu0 0
    %1141 = vmatprep.subr.bf16.mxu0 0
    %1142 = vmatpush1.bf16.msra.mxu0 0
    %1143 = vmatprep.subr.bf16.mxu0 0
    %1144 = vmatpush1.bf16.msra.mxu0 0
    %1145 = vmatprep.subr.bf16.mxu0 0
    %1146 = vmatpush1.bf16.msra.mxu0 0
    %1147 = vmatprep.subr.bf16.mxu0 0
    %1148 = vmatpush1.bf16.msra.mxu0 0
    %1149 = vmatprep.subr.bf16.mxu0 0
    %1150 = vmatpush1.bf16.msra.mxu0 0
    %1151 = vmatprep.subr.bf16.mxu0 0
    %1152 = vmatpush1.bf16.msra.mxu0 0
    %1153 = vmatprep.subr.bf16.mxu0 0
    %1154 = vmatpush1.bf16.msra.mxu0 0
    %1155 = vmatprep.subr.bf16.mxu0 0
    %1156 = vmatpush1.bf16.msra.mxu0 0
    %1157 = vmatprep.subr.bf16.mxu0 0
    %1158 = vmatpush1.bf16.msra.mxu0 0
    %1159 = vmatprep.subr.bf16.mxu0 0
    %1160 = vmatpush1.bf16.msra.mxu0 0
    %1161 = vmatprep.mubr.bf16.mxu0 0
    %1162 = vmatmul.mubr.bf16.gmra.mrb[0].mxu0 %v1030
    %v1163 = vpop.f32.mrb[0].mxu0
    %v1164 = vadd.f32 %v1026, %v1163
    %v1165 = vpop.f32.mrb[0].mxu0
    %v1166 = vpop.f32.mrb[0].mxu0
    %v1167 = vadd.f32 %v1026, %v1166
    %v1168 = vpop.f32.mrb[0].mxu0
    %1169 = vmatprep.mubr.bf16.mxu0 0
    %1170 = vmatmul.mubr.bf16.gmra.mrb[0].mxu0 %v1033
    %v1171 = vpop.f32.mrb[0].mxu0
    %v1172 = vadd.f32 %v1026, %v1171
    %v1173 = vpop.f32.mrb[0].mxu0
    %v1174 = vpop.f32.mrb[0].mxu0
    %v1175 = vadd.f32 %v1026, %v1174
    %v1176 = vpop.f32.mrb[0].mxu0
    %1177 = vmatprep.mubr.bf16.mxu0 0
    %1178 = vmatmul.mubr.bf16.gmra.mrb[0].mxu0 %v1036
    %v1179 = vpop.f32.mrb[0].mxu0
    %v1180 = vadd.f32 %v1026, %v1179
    %v1181 = vpop.f32.mrb[0].mxu0
    %v1182 = vpop.f32.mrb[0].mxu0
    %v1183 = vadd.f32 %v1026, %v1182
    %v1184 = vpop.f32.mrb[0].mxu0
    %1185 = vmatprep.mubr.bf16.mxu0 0
    %1186 = vmatmul.mubr.bf16.gmra.mrb[0].mxu0 %v1039
    %v1187 = vpop.f32.mrb[0].mxu0
    %v1188 = vadd.f32 %v1026, %v1187
    %v1189 = vpop.f32.mrb[0].mxu0
    %v1190 = vpop.f32.mrb[0].mxu0
    %v1191 = vadd.f32 %v1026, %v1190
    %v1192 = vpop.f32.mrb[0].mxu0
    %1193 = vmatprep.mubr.bf16.mxu0 0
    %1194 = vmatmul.mubr.bf16.gmra.mrb[0].mxu0 %v1042
    %v1195 = vpop.f32.mrb[0].mxu0
    %v1196 = vadd.f32 %v1026, %v1195
    %v1197 = vpop.f32.mrb[0].mxu0
    %v1198 = vpop.f32.mrb[0].mxu0
    %v1199 = vadd.f32 %v1026, %v1198
    %v1200 = vpop.f32.mrb[0].mxu0
    %1201 = vmatprep.mubr.bf16.mxu0 0
    %1202 = vmatmul.mubr.bf16.gmra.mrb[0].mxu0 %v1045
    %v1203 = vpop.f32.mrb[0].mxu0
    %v1204 = vadd.f32 %v1026, %v1203
    %v1205 = vpop.f32.mrb[0].mxu0
    %v1206 = vpop.f32.mrb[0].mxu0
    %v1207 = vadd.f32 %v1026, %v1206
    %v1208 = vpop.f32.mrb[0].mxu0
    %1209 = vmatprep.mubr.bf16.mxu0 0
    %1210 = vmatmul.mubr.bf16.gmra.mrb[0].mxu0 %v1048
    %v1211 = vpop.f32.mrb[0].mxu0
    %v1212 = vadd.f32 %v1026, %v1211
    %v1213 = vpop.f32.mrb[0].mxu0
    %v1214 = vpop.f32.mrb[0].mxu0
    %v1215 = vadd.f32 %v1026, %v1214
    %v1216 = vpop.f32.mrb[0].mxu0
    %1217 = vmatprep.mubr.bf16.mxu0 0
    %1218 = vmatmul.mubr.bf16.gmra.mrb[0].mxu0 %v1051
    %v1219 = vpop.f32.mrb[0].mxu0
    %v1220 = vadd.f32 %v1026, %v1219
    %v1221 = vpop.f32.mrb[0].mxu0
    %v1222 = vpop.f32.mrb[0].mxu0
    %v1223 = vadd.f32 %v1026, %v1222
    %v1224 = vpop.f32.mrb[0].mxu0
    %1225 = vmatprep.mubr.bf16.mxu0 0
    %1226 = vmatmul.mubr.bf16.gmra.mrb[0].mxu0 %v1054
    %v1227 = vpop.f32.mrb[0].mxu0
    %v1228 = vadd.f32 %v1026, %v1227
    %v1229 = vpop.f32.mrb[0].mxu0
    %v1230 = vpop.f32.mrb[0].mxu0
    %v1231 = vadd.f32 %v1026, %v1230
    %v1232 = vpop.f32.mrb[0].mxu0
    %1233 = vmatprep.mubr.bf16.mxu0 0
    %1234 = vmatmul.mubr.bf16.gmra.mrb[0].mxu0 %v1057
    %v1235 = vpop.f32.mrb[0].mxu0
    %v1236 = vadd.f32 %v1026, %v1235
    %v1237 = vpop.f32.mrb[0].mxu0
    %v1238 = vpop.f32.mrb[0].mxu0
    %v1239 = vadd.f32 %v1026, %v1238
    %v1240 = vpop.f32.mrb[0].mxu0
    %1241 = vmatprep.mubr.bf16.mxu0 0
    %1242 = vmatmul.mubr.bf16.gmra.mrb[0].mxu0 %v1060
    %v1243 = vpop.f32.mrb[0].mxu0
    %v1244 = vadd.f32 %v1026, %v1243
    %v1245 = vpop.f32.mrb[0].mxu0
    %v1246 = vpop.f32.mrb[0].mxu0
    %v1247 = vadd.f32 %v1026, %v1246
    %v1248 = vpop.f32.mrb[0].mxu0
    %1249 = vmatprep.mubr.bf16.mxu0 0
    %1250 = vmatmul.mubr.bf16.gmra.mrb[0].mxu0 %v1063
    %v1251 = vpop.f32.mrb[0].mxu0
    %v1252 = vadd.f32 %v1026, %v1251
    %v1253 = vpop.f32.mrb[0].mxu0
    %v1254 = vpop.f32.mrb[0].mxu0
    %v1255 = vadd.f32 %v1026, %v1254
    %v1256 = vpop.f32.mrb[0].mxu0
    %1257 = vmatprep.mubr.bf16.mxu0 0
    %1258 = vmatmul.mubr.bf16.gmra.mrb[0].mxu0 %v1066
    %v1259 = vpop.f32.mrb[0].mxu0
    %v1260 = vadd.f32 %v1026, %v1259
    %v1261 = vpop.f32.mrb[0].mxu0
    %v1262 = vpop.f32.mrb[0].mxu0
    %v1263 = vadd.f32 %v1026, %v1262
    %v1264 = vpop.f32.mrb[0].mxu0
    %1265 = vmatprep.mubr.bf16.mxu0 0
    %1266 = vmatmul.mubr.bf16.gmra.mrb[0].mxu0 %v1069
    %v1267 = vpop.f32.mrb[0].mxu0
    %v1268 = vadd.f32 %v1026, %v1267
    %v1269 = vpop.f32.mrb[0].mxu0
    %v1270 = vpop.f32.mrb[0].mxu0
    %v1271 = vadd.f32 %v1026, %v1270
    %v1272 = vpop.f32.mrb[0].mxu0
    %1273 = vmatprep.mubr.bf16.mxu0 0
    %1274 = vmatmul.mubr.bf16.gmra.mrb[0].mxu0 %v1072
    %v1275 = vpop.f32.mrb[0].mxu0
    %v1276 = vadd.f32 %v1026, %v1275
    %v1277 = vpop.f32.mrb[0].mxu0
    %v1278 = vpop.f32.mrb[0].mxu0
    %v1279 = vadd.f32 %v1026, %v1278
    %v1280 = vpop.f32.mrb[0].mxu0
    %1281 = vmatprep.mubr.bf16.mxu0 0
    %1282 = vmatmul.mubr.bf16.gmra.mrb[0].mxu0 %v1075
    %v1283 = vpop.f32.mrb[0].mxu0
    %v1284 = vadd.f32 %v1026, %v1283
    %v1285 = vpop.f32.mrb[0].mxu0
    %v1286 = vpop.f32.mrb[0].mxu0
    %v1287 = vadd.f32 %v1026, %v1286
    %v1288 = vpop.f32.mrb[0].mxu0
    %1289 = vmatprep.mubr.bf16.mxu0 0
    %1290 = vmatmul.mubr.bf16.gmra.mrb[0].mxu0 %v1078
    %v1291 = vpop.f32.mrb[0].mxu0
    %v1292 = vadd.f32 %v1026, %v1291
    %v1293 = vpop.f32.mrb[0].mxu0
    %v1294 = vpop.f32.mrb[0].mxu0
    %v1295 = vadd.f32 %v1026, %v1294
    %v1296 = vpop.f32.mrb[0].mxu0
    %1297 = vmatprep.mubr.bf16.mxu0 0
    %1298 = vmatmul.mubr.bf16.gmra.mrb[0].mxu0 %v1081
    %v1299 = vpop.f32.mrb[0].mxu0
    %v1300 = vadd.f32 %v1026, %v1299
    %v1301 = vpop.f32.mrb[0].mxu0
    %v1302 = vpop.f32.mrb[0].mxu0
    %v1303 = vadd.f32 %v1026, %v1302
    %v1304 = vpop.f32.mrb[0].mxu0
    %1305 = vmatprep.mubr.bf16.mxu0 0
    %1306 = vmatmul.mubr.bf16.gmra.mrb[0].mxu0 %v1084
    %v1307 = vpop.f32.mrb[0].mxu0
    %v1308 = vadd.f32 %v1026, %v1307
    %v1309 = vpop.f32.mrb[0].mxu0
    %v1310 = vpop.f32.mrb[0].mxu0
    %v1311 = vadd.f32 %v1026, %v1310
    %v1312 = vpop.f32.mrb[0].mxu0
    %1313 = vmatprep.mubr.bf16.mxu0 0
    %1314 = vmatmul.mubr.bf16.gmra.mrb[0].mxu0 %v1087
    %v1315 = vpop.f32.mrb[0].mxu0
    %v1316 = vadd.f32 %v1026, %v1315
    %v1317 = vpop.f32.mrb[0].mxu0
    %v1318 = vpop.f32.mrb[0].mxu0
    %v1319 = vadd.f32 %v1026, %v1318
    %v1320 = vpop.f32.mrb[0].mxu0
    %1321 = vmatprep.mubr.bf16.mxu0 0
    %1322 = vmatmul.mubr.bf16.gmra.mrb[0].mxu0 %v1090
    %v1323 = vpop.f32.mrb[0].mxu0
    %v1324 = vadd.f32 %v1026, %v1323
    %v1325 = vpop.f32.mrb[0].mxu0
    %v1326 = vpop.f32.mrb[0].mxu0
    %v1327 = vadd.f32 %v1026, %v1326
    %v1328 = vpop.f32.mrb[0].mxu0
    %1329 = vmatprep.mubr.bf16.mxu0 0
    %1330 = vmatmul.mubr.bf16.gmra.mrb[0].mxu0 %v1093
    %v1331 = vpop.f32.mrb[0].mxu0
    %v1332 = vadd.f32 %v1026, %v1331
    %v1333 = vpop.f32.mrb[0].mxu0
    %v1334 = vpop.f32.mrb[0].mxu0
    %v1335 = vadd.f32 %v1026, %v1334
    %v1336 = vpop.f32.mrb[0].mxu0
    %1337 = vmatprep.mubr.bf16.mxu0 0
    %1338 = vmatmul.mubr.bf16.gmra.mrb[0].mxu0 %v1096
    %v1339 = vpop.f32.mrb[0].mxu0
    %v1340 = vadd.f32 %v1026, %v1339
    %v1341 = vpop.f32.mrb[0].mxu0
    %v1342 = vpop.f32.mrb[0].mxu0
    %v1343 = vadd.f32 %v1026, %v1342
    %v1344 = vpop.f32.mrb[0].mxu0
    %1345 = vmatprep.mubr.bf16.mxu0 0
    %1346 = vmatmul.mubr.bf16.gmra.mrb[0].mxu0 %v1099
    %v1347 = vpop.f32.mrb[0].mxu0
    %v1348 = vadd.f32 %v1026, %v1347
    %v1349 = vpop.f32.mrb[0].mxu0
    %v1350 = vpop.f32.mrb[0].mxu0
    %v1351 = vadd.f32 %v1026, %v1350
    %v1352 = vpop.f32.mrb[0].mxu0
    %1353 = vmatprep.mubr.bf16.mxu0 0
    %1354 = vmatmul.mubr.bf16.gmra.mrb[0].mxu0 %v1102
    %v1355 = vpop.f32.mrb[0].mxu0
    %v1356 = vadd.f32 %v1026, %v1355
    %v1357 = vpop.f32.mrb[0].mxu0
    %v1358 = vpop.f32.mrb[0].mxu0
    %v1359 = vadd.f32 %v1026, %v1358
    %v1360 = vpop.f32.mrb[0].mxu0
    %1361 = vmatprep.mubr.bf16.mxu0 0
    %1362 = vmatmul.mubr.bf16.gmra.mrb[0].mxu0 %v1105
    %v1363 = vpop.f32.mrb[0].mxu0
    %v1364 = vadd.f32 %v1026, %v1363
    %v1365 = vpop.f32.mrb[0].mxu0
    %v1366 = vpop.f32.mrb[0].mxu0
    %v1367 = vadd.f32 %v1026, %v1366
    %v1368 = vpop.f32.mrb[0].mxu0
    %1369 = vmatprep.mubr.bf16.mxu0 0
    %1370 = vmatmul.mubr.bf16.gmra.mrb[0].mxu0 %v1108
    %v1371 = vpop.f32.mrb[0].mxu0
    %v1372 = vadd.f32 %v1026, %v1371
    %v1373 = vpop.f32.mrb[0].mxu0
    %v1374 = vpop.f32.mrb[0].mxu0
    %v1375 = vadd.f32 %v1026, %v1374
    %v1376 = vpop.f32.mrb[0].mxu0
    %1377 = vmatprep.mubr.bf16.mxu0 0
    %1378 = vmatmul.mubr.bf16.gmra.mrb[0].mxu0 %v1111
    %v1379 = vpop.f32.mrb[0].mxu0
    %v1380 = vadd.f32 %v1026, %v1379
    %v1381 = vpop.f32.mrb[0].mxu0
    %v1382 = vpop.f32.mrb[0].mxu0
    %v1383 = vadd.f32 %v1026, %v1382
    %v1384 = vpop.f32.mrb[0].mxu0
    %1385 = vmatprep.mubr.bf16.mxu0 0
    %1386 = vmatmul.mubr.bf16.gmra.mrb[0].mxu0 %v1114
    %v1387 = vpop.f32.mrb[0].mxu0
    %v1388 = vadd.f32 %v1026, %v1387
    %v1389 = vpop.f32.mrb[0].mxu0
    %v1390 = vpop.f32.mrb[0].mxu0
    %v1391 = vadd.f32 %v1026, %v1390
    %v1392 = vpop.f32.mrb[0].mxu0
    %1393 = vmatprep.mubr.bf16.mxu0 0
    %1394 = vmatmul.mubr.bf16.gmra.mrb[0].mxu0 %v1117
    %v1395 = vpop.f32.mrb[0].mxu0
    %v1396 = vadd.f32 %v1026, %v1395
    %v1397 = vpop.f32.mrb[0].mxu0
    %v1398 = vpop.f32.mrb[0].mxu0
    %v1399 = vadd.f32 %v1026, %v1398
    %v1400 = vpop.f32.mrb[0].mxu0
    %1401 = vmatprep.mubr.bf16.mxu0 0
    %1402 = vmatmul.mubr.bf16.gmra.mrb[0].mxu0 %v1120
    %v1403 = vpop.f32.mrb[0].mxu0
    %v1404 = vadd.f32 %v1026, %v1403
    %v1405 = vpop.f32.mrb[0].mxu0
    %v1406 = vpop.f32.mrb[0].mxu0
    %v1407 = vadd.f32 %v1026, %v1406
    %v1408 = vpop.f32.mrb[0].mxu0
    %1409 = vmatprep.mubr.bf16.mxu0 0
    %1410 = vmatmul.mubr.bf16.gmra.mrb[0].mxu0 %v1123
    %v1411 = vpop.f32.mrb[0].mxu0
    %v1412 = vadd.f32 %v1026, %v1411
    %v1413 = vpop.f32.mrb[0].mxu0
    %v1414 = vpop.f32.mrb[0].mxu0
    %v1415 = vadd.f32 %v1026, %v1414
    %v1416 = vpop.f32.mrb[0].mxu0
    %1417 = vdwg.mxu0
    %1482 = vrot.lane.b32.xlu0 %v1164, 32
    %v1483 = vpop.permute.xlu0 %1482
    %1484 = vrot.lane.b32.xlu0 %v1167, 32
    %v1485 = vpop.permute.xlu0 %1484
    %1486 = vrot.lane.b32.xlu0 %v1172, 32
    %v1487 = vpop.permute.xlu0 %1486
    %1488 = vrot.lane.b32.xlu0 %v1175, 32
    %v1489 = vpop.permute.xlu0 %1488
    %1490 = vrot.lane.b32.xlu0 %v1180, 32
    %v1491 = vpop.permute.xlu0 %1490
    %1492 = vrot.lane.b32.xlu0 %v1183, 32
    %v1493 = vpop.permute.xlu0 %1492
    %1494 = vrot.lane.b32.xlu0 %v1188, 32
    %v1495 = vpop.permute.xlu0 %1494
    %1496 = vrot.lane.b32.xlu0 %v1191, 32
    %v1497 = vpop.permute.xlu0 %1496
    %1498 = vrot.lane.b32.xlu0 %v1196, 32
    %v1499 = vpop.permute.xlu0 %1498
    %1500 = vrot.lane.b32.xlu0 %v1199, 32
    %v1501 = vpop.permute.xlu0 %1500
    %1502 = vrot.lane.b32.xlu0 %v1204, 32
    %v1503 = vpop.permute.xlu0 %1502
    %1504 = vrot.lane.b32.xlu0 %v1207, 32
    %v1505 = vpop.permute.xlu0 %1504
    %1506 = vrot.lane.b32.xlu0 %v1212, 32
    %v1507 = vpop.permute.xlu0 %1506
    %1508 = vrot.lane.b32.xlu0 %v1215, 32
    %v1509 = vpop.permute.xlu0 %1508
    %1510 = vrot.lane.b32.xlu0 %v1220, 32
    %v1511 = vpop.permute.xlu0 %1510
    %1512 = vrot.lane.b32.xlu0 %v1223, 32
    %v1513 = vpop.permute.xlu0 %1512
    %1514 = vrot.lane.b32.xlu0 %v1228, 32
    %v1515 = vpop.permute.xlu0 %1514
    %1516 = vrot.lane.b32.xlu0 %v1231, 32
    %v1517 = vpop.permute.xlu0 %1516
    %1518 = vrot.lane.b32.xlu0 %v1236, 32
    %v1519 = vpop.permute.xlu0 %1518
    %1520 = vrot.lane.b32.xlu0 %v1239, 32
    %v1521 = vpop.permute.xlu0 %1520
    %1522 = vrot.lane.b32.xlu0 %v1244, 32
    %v1523 = vpop.permute.xlu0 %1522
    %1524 = vrot.lane.b32.xlu0 %v1247, 32
    %v1525 = vpop.permute.xlu0 %1524
    %1526 = vrot.lane.b32.xlu0 %v1252, 32
    %v1527 = vpop.permute.xlu0 %1526
    %1528 = vrot.lane.b32.xlu0 %v1255, 32
    %v1529 = vpop.permute.xlu0 %1528
    %1530 = vrot.lane.b32.xlu0 %v1260, 32
    %v1531 = vpop.permute.xlu0 %1530
    %1532 = vrot.lane.b32.xlu0 %v1263, 32
    %v1533 = vpop.permute.xlu0 %1532
    %1534 = vrot.lane.b32.xlu0 %v1268, 32
    %v1535 = vpop.permute.xlu0 %1534
    %1536 = vrot.lane.b32.xlu0 %v1271, 32
    %v1537 = vpop.permute.xlu0 %1536
    %1538 = vrot.lane.b32.xlu0 %v1276, 32
    %v1539 = vpop.permute.xlu0 %1538
    %1540 = vrot.lane.b32.xlu0 %v1279, 32
    %v1541 = vpop.permute.xlu0 %1540
    %1542 = vrot.lane.b32.xlu0 %v1284, 32
    %v1543 = vpop.permute.xlu0 %1542
    %1544 = vrot.lane.b32.xlu0 %v1287, 32
    %v1545 = vpop.permute.xlu0 %1544
    %1546 = vrot.lane.b32.xlu0 %v1292, 32
    %v1547 = vpop.permute.xlu0 %1546
    %1548 = vrot.lane.b32.xlu0 %v1295, 32
    %v1549 = vpop.permute.xlu0 %1548
    %1550 = vrot.lane.b32.xlu0 %v1300, 32
    %v1551 = vpop.permute.xlu0 %1550
    %1552 = vrot.lane.b32.xlu0 %v1303, 32
    %v1553 = vpop.permute.xlu0 %1552
    %1554 = vrot.lane.b32.xlu0 %v1308, 32
    %v1555 = vpop.permute.xlu0 %1554
    %1556 = vrot.lane.b32.xlu0 %v1311, 32
    %v1557 = vpop.permute.xlu0 %1556
    %1558 = vrot.lane.b32.xlu0 %v1316, 32
    %v1559 = vpop.permute.xlu0 %1558
    %1560 = vrot.lane.b32.xlu0 %v1319, 32
    %v1561 = vpop.permute.xlu0 %1560
    %1562 = vrot.lane.b32.xlu0 %v1324, 32
    %v1563 = vpop.permute.xlu0 %1562
    %1564 = vrot.lane.b32.xlu0 %v1327, 32
    %v1565 = vpop.permute.xlu0 %1564
    %1566 = vrot.lane.b32.xlu0 %v1332, 32
    %v1567 = vpop.permute.xlu0 %1566
    %1568 = vrot.lane.b32.xlu0 %v1335, 32
    %v1569 = vpop.permute.xlu0 %1568
    %1570 = vrot.lane.b32.xlu0 %v1340, 32
    %v1571 = vpop.permute.xlu0 %1570
    %1572 = vrot.lane.b32.xlu0 %v1343, 32
    %v1573 = vpop.permute.xlu0 %1572
    %1574 = vrot.lane.b32.xlu0 %v1348, 32
    %v1575 = vpop.permute.xlu0 %1574
    %1576 = vrot.lane.b32.xlu0 %v1351, 32
    %v1577 = vpop.permute.xlu0 %1576
    %1578 = vrot.lane.b32.xlu0 %v1356, 32
    %v1579 = vpop.permute.xlu0 %1578
    %1580 = vrot.lane.b32.xlu0 %v1359, 32
    %v1581 = vpop.permute.xlu0 %1580
    %1582 = vrot.lane.b32.xlu0 %v1364, 32
    %v1583 = vpop.permute.xlu0 %1582
    %1584 = vrot.lane.b32.xlu0 %v1367, 32
    %v1585 = vpop.permute.xlu0 %1584
    %1586 = vrot.lane.b32.xlu0 %v1372, 32
    %v1587 = vpop.permute.xlu0 %1586
    %1588 = vrot.lane.b32.xlu0 %v1375, 32
    %v1589 = vpop.permute.xlu0 %1588
    %1590 = vrot.lane.b32.xlu0 %v1380, 32
    %v1591 = vpop.permute.xlu0 %1590
    %1592 = vrot.lane.b32.xlu0 %v1383, 32
    %v1593 = vpop.permute.xlu0 %1592
    %1594 = vrot.lane.b32.xlu0 %v1388, 32
    %v1595 = vpop.permute.xlu0 %1594
    %1596 = vrot.lane.b32.xlu0 %v1391, 32
    %v1597 = vpop.permute.xlu0 %1596
    %1598 = vrot.lane.b32.xlu0 %v1396, 32
    %v1599 = vpop.permute.xlu0 %1598
    %1600 = vrot.lane.b32.xlu0 %v1399, 32
    %v1601 = vpop.permute.xlu0 %1600
    %1602 = vrot.lane.b32.xlu0 %v1404, 32
    %v1603 = vpop.permute.xlu0 %1602
    %1604 = vrot.lane.b32.xlu0 %v1407, 32
    %v1605 = vpop.permute.xlu0 %1604
    %1606 = vrot.lane.b32.xlu0 %v1412, 32
    %v1607 = vpop.permute.xlu0 %1606
    %1608 = vrot.lane.b32.xlu0 %v1415, 32
    %v1609 = vpop.permute.xlu0 %1608
    %v1674 = vsel %vm154, %v924, %v1483
    %v1675 = vsel %vm154, %v925, %v1485
    %v1676 = vsel %vm154, %v926, %v1487
    %v1677 = vsel %vm154, %v927, %v1489
    %v1678 = vsel %vm154, %v928, %v1491
    %v1679 = vsel %vm154, %v929, %v1493
    %v1680 = vsel %vm154, %v930, %v1495
    %v1681 = vsel %vm154, %v931, %v1497
    %v1682 = vsel %vm154, %v932, %v1499
    %v1683 = vsel %vm154, %v933, %v1501
    %v1684 = vsel %vm154, %v934, %v1503
    %v1685 = vsel %vm154, %v935, %v1505
    %v1686 = vsel %vm154, %v936, %v1507
    %v1687 = vsel %vm154, %v937, %v1509
    %v1688 = vsel %vm154, %v938, %v1511
    %v1689 = vsel %vm154, %v939, %v1513
    %v1690 = vsel %vm154, %v940, %v1515
    %v1691 = vsel %vm154, %v941, %v1517
    %v1692 = vsel %vm154, %v942, %v1519
    %v1693 = vsel %vm154, %v943, %v1521
    %v1694 = vsel %vm154, %v944, %v1523
    %v1695 = vsel %vm154, %v945, %v1525
    %v1696 = vsel %vm154, %v946, %v1527
    %v1697 = vsel %vm154, %v947, %v1529
    %v1698 = vsel %vm154, %v948, %v1531
    %v1699 = vsel %vm154, %v949, %v1533
    %v1700 = vsel %vm154, %v950, %v1535
    %v1701 = vsel %vm154, %v951, %v1537
    %v1702 = vsel %vm154, %v952, %v1539
    %v1703 = vsel %vm154, %v953, %v1541
    %v1704 = vsel %vm154, %v954, %v1543
    %v1705 = vsel %vm154, %v955, %v1545
    %v1706 = vsel %vm154, %v956, %v1547
    %v1707 = vsel %vm154, %v957, %v1549
    %v1708 = vsel %vm154, %v958, %v1551
    %v1709 = vsel %vm154, %v959, %v1553
    %v1710 = vsel %vm154, %v960, %v1555
    %v1711 = vsel %vm154, %v961, %v1557
    %v1712 = vsel %vm154, %v962, %v1559
    %v1713 = vsel %vm154, %v963, %v1561
    %v1714 = vsel %vm154, %v964, %v1563
    %v1715 = vsel %vm154, %v965, %v1565
    %v1716 = vsel %vm154, %v966, %v1567
    %v1717 = vsel %vm154, %v967, %v1569
    %v1718 = vsel %vm154, %v968, %v1571
    %v1719 = vsel %vm154, %v969, %v1573
    %v1720 = vsel %vm154, %v970, %v1575
    %v1721 = vsel %vm154, %v971, %v1577
    %v1722 = vsel %vm154, %v972, %v1579
    %v1723 = vsel %vm154, %v973, %v1581
    %v1724 = vsel %vm154, %v974, %v1583
    %v1725 = vsel %vm154, %v975, %v1585
    %v1726 = vsel %vm154, %v976, %v1587
    %v1727 = vsel %vm154, %v977, %v1589
    %v1728 = vsel %vm154, %v978, %v1591
    %v1729 = vsel %vm154, %v979, %v1593
    %v1730 = vsel %vm154, %v980, %v1595
    %v1731 = vsel %vm154, %v981, %v1597
    %v1732 = vsel %vm154, %v982, %v1599
    %v1733 = vsel %vm154, %v983, %v1601
    %v1734 = vsel %vm154, %v984, %v1603
    %v1735 = vsel %vm154, %v985, %v1605
    %v1736 = vsel %vm154, %v986, %v1607
    %v1737 = vsel %vm154, %v987, %v1609
    %vm1738 = vcmask 326656
    %v1739 = vsel %vm1738, %v1674, 0.0
    %v1740 = vsel %vm1738, %v1675, 0.0
    %v1741 = vsel %vm1738, %v1676, 0.0
    %v1742 = vsel %vm1738, %v1677, 0.0
    %v1743 = vsel %vm1738, %v1678, 0.0
    %v1744 = vsel %vm1738, %v1679, 0.0
    %v1745 = vsel %vm1738, %v1680, 0.0
    %v1746 = vsel %vm1738, %v1681, 0.0
    %v1747 = vsel %vm1738, %v1682, 0.0
    %v1748 = vsel %vm1738, %v1683, 0.0
    %v1749 = vsel %vm1738, %v1684, 0.0
    %v1750 = vsel %vm1738, %v1685, 0.0
    %v1751 = vsel %vm1738, %v1686, 0.0
    %v1752 = vsel %vm1738, %v1687, 0.0
    %v1753 = vsel %vm1738, %v1688, 0.0
    %v1754 = vsel %vm1738, %v1689, 0.0
    %v1755 = vsel %vm1738, %v1690, 0.0
    %v1756 = vsel %vm1738, %v1691, 0.0
    %v1757 = vsel %vm1738, %v1692, 0.0
    %v1758 = vsel %vm1738, %v1693, 0.0
    %v1759 = vsel %vm1738, %v1694, 0.0
    %v1760 = vsel %vm1738, %v1695, 0.0
    %v1761 = vsel %vm1738, %v1696, 0.0
    %v1762 = vsel %vm1738, %v1697, 0.0
    %v1763 = vsel %vm1738, %v1698, 0.0
    %v1764 = vsel %vm1738, %v1699, 0.0
    %v1765 = vsel %vm1738, %v1700, 0.0
    %v1766 = vsel %vm1738, %v1701, 0.0
    %v1767 = vsel %vm1738, %v1702, 0.0
    %v1768 = vsel %vm1738, %v1703, 0.0
    %v1769 = vsel %vm1738, %v1704, 0.0
    %v1770 = vsel %vm1738, %v1705, 0.0
    %v1771 = vsel %vm1738, %v1706, 0.0
    %v1772 = vsel %vm1738, %v1707, 0.0
    %v1773 = vsel %vm1738, %v1708, 0.0
    %v1774 = vsel %vm1738, %v1709, 0.0
    %v1775 = vsel %vm1738, %v1710, 0.0
    %v1776 = vsel %vm1738, %v1711, 0.0
    %v1777 = vsel %vm1738, %v1712, 0.0
    %v1778 = vsel %vm1738, %v1713, 0.0
    %v1779 = vsel %vm1738, %v1714, 0.0
    %v1780 = vsel %vm1738, %v1715, 0.0
    %v1781 = vsel %vm1738, %v1716, 0.0
    %v1782 = vsel %vm1738, %v1717, 0.0
    %v1783 = vsel %vm1738, %v1718, 0.0
    %v1784 = vsel %vm1738, %v1719, 0.0
    %v1785 = vsel %vm1738, %v1720, 0.0
    %v1786 = vsel %vm1738, %v1721, 0.0
    %v1787 = vsel %vm1738, %v1722, 0.0
    %v1788 = vsel %vm1738, %v1723, 0.0
    %v1789 = vsel %vm1738, %v1724, 0.0
    %v1790 = vsel %vm1738, %v1725, 0.0
    %v1791 = vsel %vm1738, %v1726, 0.0
    %v1792 = vsel %vm1738, %v1727, 0.0
    %v1793 = vsel %vm1738, %v1728, 0.0
    %v1794 = vsel %vm1738, %v1729, 0.0
    %v1795 = vsel %vm1738, %v1730, 0.0
    %v1796 = vsel %vm1738, %v1731, 0.0
    %v1797 = vsel %vm1738, %v1732, 0.0
    %v1798 = vsel %vm1738, %v1733, 0.0
    %v1799 = vsel %vm1738, %v1734, 0.0
    %v1800 = vsel %vm1738, %v1735, 0.0
    %v1801 = vsel %vm1738, %v1736, 0.0
    %v1802 = vsel %vm1738, %v1737, 0.0
    %1803 = vst [vmem:[%s5] sm:$0xff] %v1739
    %1804 = vst [vmem:[%s5 + $0x8] sm:$0xff] %v1740
    %1805 = vst [vmem:[%s5 + $0x10] sm:$0xff] %v1741
    %1806 = vst [vmem:[%s5 + $0x18] sm:$0xff] %v1742
    %1807 = vst [vmem:[%s5 + $0x20] sm:$0xff] %v1743
    %1808 = vst [vmem:[%s5 + $0x28] sm:$0xff] %v1744
    %1809 = vst [vmem:[%s5 + $0x30] sm:$0xff] %v1745
    %1810 = vst [vmem:[%s5 + $0x38] sm:$0xff] %v1746
    %1811 = vst [vmem:[%s5 + $0x40] sm:$0xff] %v1747
    %1812 = vst [vmem:[%s5 + $0x48] sm:$0xff] %v1748
    %1813 = vst [vmem:[%s5 + $0x50] sm:$0xff] %v1749
    %1814 = vst [vmem:[%s5 + $0x58] sm:$0xff] %v1750
    %1815 = vst [vmem:[%s5 + $0x60] sm:$0xff] %v1751
    %1816 = vst [vmem:[%s5 + $0x68] sm:$0xff] %v1752
    %1817 = vst [vmem:[%s5 + $0x70] sm:$0xff] %v1753
    %1818 = vst [vmem:[%s5 + $0x78] sm:$0xff] %v1754
    %1819 = vst [vmem:[%s5 + $0x80] sm:$0xff] %v1755
    %1820 = vst [vmem:[%s5 + $0x88] sm:$0xff] %v1756
    %1821 = vst [vmem:[%s5 + $0x90] sm:$0xff] %v1757
    %1822 = vst [vmem:[%s5 + $0x98] sm:$0xff] %v1758
    %1823 = vst [vmem:[%s5 + $0xa0] sm:$0xff] %v1759
    %1824 = vst [vmem:[%s5 + $0xa8] sm:$0xff] %v1760
    %1825 = vst [vmem:[%s5 + $0xb0] sm:$0xff] %v1761
    %1826 = vst [vmem:[%s5 + $0xb8] sm:$0xff] %v1762
    %1827 = vst [vmem:[%s5 + $0xc0] sm:$0xff] %v1763
    %1828 = vst [vmem:[%s5 + $0xc8] sm:$0xff] %v1764
    %1829 = vst [vmem:[%s5 + $0xd0] sm:$0xff] %v1765
    %1830 = vst [vmem:[%s5 + $0xd8] sm:$0xff] %v1766
    %1831 = vst [vmem:[%s5 + $0xe0] sm:$0xff] %v1767
    %1832 = vst [vmem:[%s5 + $0xe8] sm:$0xff] %v1768
    %1833 = vst [vmem:[%s5 + $0xf0] sm:$0xff] %v1769
    %1834 = vst [vmem:[%s5 + $0xf8] sm:$0xff] %v1770
    %1835 = vst [vmem:[%s5 + $0x100] sm:$0xff] %v1771
    %1836 = vst [vmem:[%s5 + $0x108] sm:$0xff] %v1772
    %1837 = vst [vmem:[%s5 + $0x110] sm:$0xff] %v1773
    %1838 = vst [vmem:[%s5 + $0x118] sm:$0xff] %v1774
    %1839 = vst [vmem:[%s5 + $0x120] sm:$0xff] %v1775
    %1840 = vst [vmem:[%s5 + $0x128] sm:$0xff] %v1776
    %1841 = vst [vmem:[%s5 + $0x130] sm:$0xff] %v1777
    %1842 = vst [vmem:[%s5 + $0x138] sm:$0xff] %v1778
    %1843 = vst [vmem:[%s5 + $0x140] sm:$0xff] %v1779
    %1844 = vst [vmem:[%s5 + $0x148] sm:$0xff] %v1780
    %1845 = vst [vmem:[%s5 + $0x150] sm:$0xff] %v1781
    %1846 = vst [vmem:[%s5 + $0x158] sm:$0xff] %v1782
    %1847 = vst [vmem:[%s5 + $0x160] sm:$0xff] %v1783
    %1848 = vst [vmem:[%s5 + $0x168] sm:$0xff] %v1784
    %1849 = vst [vmem:[%s5 + $0x170] sm:$0xff] %v1785
    %1850 = vst [vmem:[%s5 + $0x178] sm:$0xff] %v1786
    %1851 = vst [vmem:[%s5 + $0x180] sm:$0xff] %v1787
    %1852 = vst [vmem:[%s5 + $0x188] sm:$0xff] %v1788
    %1853 = vst [vmem:[%s5 + $0x190] sm:$0xff] %v1789
    %1854 = vst [vmem:[%s5 + $0x198] sm:$0xff] %v1790
    %1855 = vst [vmem:[%s5 + $0x1a0] sm:$0xff] %v1791
    %1856 = vst [vmem:[%s5 + $0x1a8] sm:$0xff] %v1792
    %1857 = vst [vmem:[%s5 + $0x1b0] sm:$0xff] %v1793
    %1858 = vst [vmem:[%s5 + $0x1b8] sm:$0xff] %v1794
    %1859 = vst [vmem:[%s5 + $0x1c0] sm:$0xff] %v1795
    %1860 = vst [vmem:[%s5 + $0x1c8] sm:$0xff] %v1796
    %1861 = vst [vmem:[%s5 + $0x1d0] sm:$0xff] %v1797
    %1862 = vst [vmem:[%s5 + $0x1d8] sm:$0xff] %v1798
    %1863 = vst [vmem:[%s5 + $0x1e0] sm:$0xff] %v1799
    %1864 = vst [vmem:[%s5 + $0x1e8] sm:$0xff] %v1800
    %1865 = vst [vmem:[%s5 + $0x1f0] sm:$0xff] %v1801
    %1866 = vst [vmem:[%s5 + $0x1f8] sm:$0xff] %v1802
    // Predicated region
    $region26: #{_lambda_.5} parent=1 // pred_check
      _
    $region27: #{_lambda_.5} parent=1 // pred_check_branch
      %1868 = sbr.rel (0) target = $region29
    $region28: #{_lambda_.5} parent=1 // pred_region
      _
    $region29: #{_lambda_.5} parent=1 // pred_fallthru
      _
    // Predicated region
    $region30: #{_lambda_.5} parent=1 // pred_check
      _
    $region31: #{_lambda_.5} parent=1 // pred_check_branch
      %1870 = sbr.rel (0) target = $region33
    $region32: #{_lambda_.5} parent=1 // pred_region
      _
    $region33: #{_lambda_.5} parent=1 // pred_fallthru
      _
    %1871 = vsyncpa [#allocation3], 1

// kernel: _lambda_.7
$region0: #{_lambda_.7}
  #allocation0 [shape = 'u32[]', space=smem, size = 0x4, offset = 0x4, fixed_abs, tag = 'smem constant byte address 0x4 - core index']
  #allocation1 [shape = 'u32[144,128]{1,0:T(1,128)}', space=vmem, size = 0x12000, scoped, tag = 'internal scratch']
  %s0 = inlined_call_operand.vmem [shape: f32[8,8], index: 0, kind: input, shape index: {}]
  %s1 = inlined_call_operand.vmem [shape: f32[8,8], index: 1, kind: input, shape index: {}]
  %s2 = inlined_call_operand.vmem [shape: f32[1,8], index: 2, kind: input, shape index: {}]
  %s3 = inlined_call_operand.vmem [shape: f32[8,8], index: 3, kind: input, shape index: {}]
  %s4 = inlined_call_operand.vmem [shape: f32[1,8], index: 4, kind: input, shape index: {}]
  %s5 = inlined_call_operand.vmem [shape: f32[8,8], index: 5, kind: input, shape index: {}]
  %s6 = inlined_call_operand.vmem [shape: f32[1,8], index: 6, kind: input, shape index: {}]
  %s7 = inlined_call_operand.vmem [shape: f32[8,8], index: 7, kind: output, shape index: {0}]
  %s8 = inlined_call_operand.vmem [shape: f32[8,8], index: 8, kind: output, shape index: {1}]
  %9 = xla_tuple %s7, %s8
  %s10 = sld [smem:[#allocation0]]
  $region46: #{_lambda_.7} parent=0
    _
  %s12 = ssub.s32 1, %s10
  %s13 = scalar_select 0, %s12, %s10
  // Predicated region
  $region2: #{_lambda_.7} parent=0 // pred_check
    _
  $region3: #{_lambda_.7} parent=0 // pred_check_branch
    %15 = sbr.rel (0) target = $region5
  $region4: #{_lambda_.7} parent=0 // pred_region
    _
  $region5: #{_lambda_.7} parent=0 // pred_fallthru
    _
  // Predicated region
  $region6: #{_lambda_.7} parent=0 // pred_check
    _
  $region7: #{_lambda_.7} parent=0 // pred_check_branch
    %17 = sbr.rel (0) target = $region9
  $region8: #{_lambda_.7} parent=0 // pred_region
    _
  $region9: #{_lambda_.7} parent=0 // pred_fallthru
    _
  // Predicated region
  $region10: #{_lambda_.7} parent=0 // pred_check
    _
  $region11: #{_lambda_.7} parent=0 // pred_check_branch
    %19 = sbr.rel (0) target = $region13
  $region12: #{_lambda_.7} parent=0 // pred_region
    _
  $region13: #{_lambda_.7} parent=0 // pred_fallthru
    _
  // Predicated region
  $region14: #{_lambda_.7} parent=0 // pred_check
    _
  $region15: #{_lambda_.7} parent=0 // pred_check_branch
    %21 = sbr.rel (0) target = $region17
  $region16: #{_lambda_.7} parent=0 // pred_region
    _
  $region17: #{_lambda_.7} parent=0 // pred_fallthru
    _
  // Predicated region
  $region18: #{_lambda_.7} parent=0 // pred_check
    _
  $region19: #{_lambda_.7} parent=0 // pred_check_branch
    %23 = sbr.rel (0) target = $region21
  $region20: #{_lambda_.7} parent=0 // pred_region
    _
  $region21: #{_lambda_.7} parent=0 // pred_fallthru
    _
  // Predicated region
  $region22: #{_lambda_.7} parent=0 // pred_check
    _
  $region23: #{_lambda_.7} parent=0 // pred_check_branch
    %25 = sbr.rel (0) target = $region25
  $region24: #{_lambda_.7} parent=0 // pred_region
    _
  $region25: #{_lambda_.7} parent=0 // pred_fallthru
    _
  // Predicated region
  $region26: #{_lambda_.7} parent=0 // pred_check
    _
  $region27: #{_lambda_.7} parent=0 // pred_check_branch
    %27 = sbr.rel (0) target = $region29
  $region28: #{_lambda_.7} parent=0 // pred_region
    _
  $region29: #{_lambda_.7} parent=0 // pred_fallthru
    _
  %v28 = vld [vmem:[%s0] sm:$0xff]
  %v29 = vld [vmem:[%s1] sm:$0xff]
  %v30 = vld [vmem:[%s2] sm:$0x1]
  %v32 = vlaneseq
  %v33 = vshrl.u32 %v32, 7
  %v34 = vsub.s32 0, %v33
  %v35 = vrot.slane %v30, %v34
  %vm37 = vcmask 64512
  %v39 = vsel %vm37, %v28, 0
  %41 = vmatprep.subr.mxu0 0.0
  %42 = vmatpush1.msra.mxu0 %v29
  %43 = vmatprep.subr.mxu0 0.0
  %44 = vmatpush1.msra.mxu0 0.0
  %45 = vmatprep.subr.mxu0 0.0
  %46 = vmatpush1.msra.mxu0 0.0
  %47 = vmatprep.subr.mxu0 0.0
  %48 = vmatpush1.msra.mxu0 0.0
  %49 = vmatprep.subr.mxu0 0.0
  %50 = vmatpush1.msra.mxu0 0.0
  %51 = vmatprep.subr.mxu0 0.0
  %52 = vmatpush1.msra.mxu0 0.0
  %53 = vmatprep.subr.mxu0 0.0
  %54 = vmatpush1.msra.mxu0 0.0
  %55 = vmatprep.subr.mxu0 0.0
  %56 = vmatpush1.msra.mxu0 0.0
  %57 = vmatprep.subr.mxu0 0.0
  %58 = vmatpush1.msra.mxu0 0.0
  %59 = vmatprep.subr.mxu0 0.0
  %60 = vmatpush1.msra.mxu0 0.0
  %61 = vmatprep.subr.mxu0 0.0
  %62 = vmatpush1.msra.mxu0 0.0
  %63 = vmatprep.subr.mxu0 0.0
  %64 = vmatpush1.msra.mxu0 0.0
  %65 = vmatprep.subr.mxu0 0.0
  %66 = vmatpush1.msra.mxu0 0.0
  %67 = vmatprep.subr.mxu0 0.0
  %68 = vmatpush1.msra.mxu0 0.0
  %69 = vmatprep.subr.mxu0 0.0
  %70 = vmatpush1.msra.mxu0 0.0
  %71 = vmatprep.subr.mxu0 0.0
  %72 = vmatpush1.msra.mxu0 0.0
  %73 = vmatprep.subr.mxu0 0.0
  %74 = vmatpush1.msra.mxu0 0.0
  %75 = vmatprep.subr.mxu0 0.0
  %76 = vmatpush1.msra.mxu0 0.0
  %77 = vmatprep.subr.mxu0 0.0
  %78 = vmatpush1.msra.mxu0 0.0
  %79 = vmatprep.subr.mxu0 0.0
  %80 = vmatpush1.msra.mxu0 0.0
  %81 = vmatprep.subr.mxu0 0.0
  %82 = vmatpush1.msra.mxu0 0.0
  %83 = vmatprep.subr.mxu0 0.0
  %84 = vmatpush1.msra.mxu0 0.0
  %85 = vmatprep.subr.mxu0 0.0
  %86 = vmatpush1.msra.mxu0 0.0
  %87 = vmatprep.subr.mxu0 0.0
  %88 = vmatpush1.msra.mxu0 0.0
  %89 = vmatprep.subr.mxu0 0.0
  %90 = vmatpush1.msra.mxu0 0.0
  %91 = vmatprep.subr.mxu0 0.0
  %92 = vmatpush1.msra.mxu0 0.0
  %93 = vmatprep.subr.mxu0 0.0
  %94 = vmatpush1.msra.mxu0 0.0
  %95 = vmatprep.subr.mxu0 0.0
  %96 = vmatpush1.msra.mxu0 0.0
  %97 = vmatprep.subr.mxu0 0.0
  %98 = vmatpush1.msra.mxu0 0.0
  %99 = vmatprep.subr.mxu0 0.0
  %100 = vmatpush1.msra.mxu0 0.0
  %101 = vmatprep.subr.mxu0 0.0
  %102 = vmatpush1.msra.mxu0 0.0
  %103 = vmatprep.subr.mxu0 0.0
  %104 = vmatpush1.msra.mxu0 0.0
  %105 = vmatprep.mubr.f32.mxu0 0.0
  %106 = vmatmul.mubr.f32.gmra.mrb[0].mxu0 %v39
  %v107 = vpop.f32.mrb[0].mxu0
  %v108 = vadd.f32 %v35, %v107
  %v109 = vpop.f32.mrb[0].mxu0
  %110 = vdwg.mxu0
  %v111 = vld [vmem:[%s3] sm:$0xff]
  %v112 = vld [vmem:[%s4] sm:$0x1]
  %v114 = vlaneseq
  %v115 = vshrl.u32 %v114, 7
  %v116 = vsub.s32 0, %v115
  %v117 = vrot.slane %v112, %v116
  %v120 = vsel %vm37, %v108, 0
  %122 = vmatprep.subr.mxu0 0.0
  %123 = vmatpush1.msra.mxu0 %v111
  %124 = vmatprep.subr.mxu0 0.0
  %125 = vmatpush1.msra.mxu0 0.0
  %126 = vmatprep.subr.mxu0 0.0
  %127 = vmatpush1.msra.mxu0 0.0
  %128 = vmatprep.subr.mxu0 0.0
  %129 = vmatpush1.msra.mxu0 0.0
  %130 = vmatprep.subr.mxu0 0.0
  %131 = vmatpush1.msra.mxu0 0.0
  %132 = vmatprep.subr.mxu0 0.0
  %133 = vmatpush1.msra.mxu0 0.0
  %134 = vmatprep.subr.mxu0 0.0
  %135 = vmatpush1.msra.mxu0 0.0
  %136 = vmatprep.subr.mxu0 0.0
  %137 = vmatpush1.msra.mxu0 0.0
  %138 = vmatprep.subr.mxu0 0.0
  %139 = vmatpush1.msra.mxu0 0.0
  %140 = vmatprep.subr.mxu0 0.0
  %141 = vmatpush1.msra.mxu0 0.0
  %142 = vmatprep.subr.mxu0 0.0
  %143 = vmatpush1.msra.mxu0 0.0
  %144 = vmatprep.subr.mxu0 0.0
  %145 = vmatpush1.msra.mxu0 0.0
  %146 = vmatprep.subr.mxu0 0.0
  %147 = vmatpush1.msra.mxu0 0.0
  %148 = vmatprep.subr.mxu0 0.0
  %149 = vmatpush1.msra.mxu0 0.0
  %150 = vmatprep.subr.mxu0 0.0
  %151 = vmatpush1.msra.mxu0 0.0
  %152 = vmatprep.subr.mxu0 0.0
  %153 = vmatpush1.msra.mxu0 0.0
  %154 = vmatprep.subr.mxu0 0.0
  %155 = vmatpush1.msra.mxu0 0.0
  %156 = vmatprep.subr.mxu0 0.0
  %157 = vmatpush1.msra.mxu0 0.0
  %158 = vmatprep.subr.mxu0 0.0
  %159 = vmatpush1.msra.mxu0 0.0
  %160 = vmatprep.subr.mxu0 0.0
  %161 = vmatpush1.msra.mxu0 0.0
  %162 = vmatprep.subr.mxu0 0.0
  %163 = vmatpush1.msra.mxu0 0.0
  %164 = vmatprep.subr.mxu0 0.0
  %165 = vmatpush1.msra.mxu0 0.0
  %166 = vmatprep.subr.mxu0 0.0
  %167 = vmatpush1.msra.mxu0 0.0
  %168 = vmatprep.subr.mxu0 0.0
  %169 = vmatpush1.msra.mxu0 0.0
  %170 = vmatprep.subr.mxu0 0.0
  %171 = vmatpush1.msra.mxu0 0.0
  %172 = vmatprep.subr.mxu0 0.0
  %173 = vmatpush1.msra.mxu0 0.0
  %174 = vmatprep.subr.mxu0 0.0
  %175 = vmatpush1.msra.mxu0 0.0
  %176 = vmatprep.subr.mxu0 0.0
  %177 = vmatpush1.msra.mxu0 0.0
  %178 = vmatprep.subr.mxu0 0.0
  %179 = vmatpush1.msra.mxu0 0.0
  %180 = vmatprep.subr.mxu0 0.0
  %181 = vmatpush1.msra.mxu0 0.0
  %182 = vmatprep.subr.mxu0 0.0
  %183 = vmatpush1.msra.mxu0 0.0
  %184 = vmatprep.subr.mxu0 0.0
  %185 = vmatpush1.msra.mxu0 0.0
  %186 = vmatprep.mubr.f32.mxu0 0.0
  %187 = vmatmul.mubr.f32.gmra.mrb[0].mxu0 %v120
  %v188 = vpop.f32.mrb[0].mxu0
  %v189 = vadd.f32 %v117, %v188
  %v190 = vpop.f32.mrb[0].mxu0
  %191 = vdwg.mxu0
  %v192 = vmax.f32 %v189, 0.0
  %v193 = vld [vmem:[%s5] sm:$0xff]
  %v194 = vld [vmem:[%s6] sm:$0x1]
  %v196 = vlaneseq
  %v197 = vshrl.u32 %v196, 7
  %v198 = vsub.s32 0, %v197
  %v199 = vrot.slane %v194, %v198
  %v202 = vsel %vm37, %v192, 0
  %204 = vmatprep.subr.mxu0 0.0
  %205 = vmatpush1.msra.mxu0 %v193
  %206 = vmatprep.subr.mxu0 0.0
  %207 = vmatpush1.msra.mxu0 0.0
  %208 = vmatprep.subr.mxu0 0.0
  %209 = vmatpush1.msra.mxu0 0.0
  %210 = vmatprep.subr.mxu0 0.0
  %211 = vmatpush1.msra.mxu0 0.0
  %212 = vmatprep.subr.mxu0 0.0
  %213 = vmatpush1.msra.mxu0 0.0
  %214 = vmatprep.subr.mxu0 0.0
  %215 = vmatpush1.msra.mxu0 0.0
  %216 = vmatprep.subr.mxu0 0.0
  %217 = vmatpush1.msra.mxu0 0.0
  %218 = vmatprep.subr.mxu0 0.0
  %219 = vmatpush1.msra.mxu0 0.0
  %220 = vmatprep.subr.mxu0 0.0
  %221 = vmatpush1.msra.mxu0 0.0
  %222 = vmatprep.subr.mxu0 0.0
  %223 = vmatpush1.msra.mxu0 0.0
  %224 = vmatprep.subr.mxu0 0.0
  %225 = vmatpush1.msra.mxu0 0.0
  %226 = vmatprep.subr.mxu0 0.0
  %227 = vmatpush1.msra.mxu0 0.0
  %228 = vmatprep.subr.mxu0 0.0
  %229 = vmatpush1.msra.mxu0 0.0
  %230 = vmatprep.subr.mxu0 0.0
  %231 = vmatpush1.msra.mxu0 0.0
  %232 = vmatprep.subr.mxu0 0.0
  %233 = vmatpush1.msra.mxu0 0.0
  %234 = vmatprep.subr.mxu0 0.0
  %235 = vmatpush1.msra.mxu0 0.0
  %236 = vmatprep.subr.mxu0 0.0
  %237 = vmatpush1.msra.mxu0 0.0
  %238 = vmatprep.subr.mxu0 0.0
  %239 = vmatpush1.msra.mxu0 0.0
  %240 = vmatprep.subr.mxu0 0.0
  %241 = vmatpush1.msra.mxu0 0.0
  %242 = vmatprep.subr.mxu0 0.0
  %243 = vmatpush1.msra.mxu0 0.0
  %244 = vmatprep.subr.mxu0 0.0
  %245 = vmatpush1.msra.mxu0 0.0
  %246 = vmatprep.subr.mxu0 0.0
  %247 = vmatpush1.msra.mxu0 0.0
  %248 = vmatprep.subr.mxu0 0.0
  %249 = vmatpush1.msra.mxu0 0.0
  %250 = vmatprep.subr.mxu0 0.0
  %251 = vmatpush1.msra.mxu0 0.0
  %252 = vmatprep.subr.mxu0 0.0
  %253 = vmatpush1.msra.mxu0 0.0
  %254 = vmatprep.subr.mxu0 0.0
  %255 = vmatpush1.msra.mxu0 0.0
  %256 = vmatprep.subr.mxu0 0.0
  %257 = vmatpush1.msra.mxu0 0.0
  %258 = vmatprep.subr.mxu0 0.0
  %259 = vmatpush1.msra.mxu0 0.0
  %260 = vmatprep.subr.mxu0 0.0
  %261 = vmatpush1.msra.mxu0 0.0
  %262 = vmatprep.subr.mxu0 0.0
  %263 = vmatpush1.msra.mxu0 0.0
  %264 = vmatprep.subr.mxu0 0.0
  %265 = vmatpush1.msra.mxu0 0.0
  %266 = vmatprep.subr.mxu0 0.0
  %267 = vmatpush1.msra.mxu0 0.0
  %268 = vmatprep.mubr.f32.mxu0 0.0
  %269 = vmatmul.mubr.f32.gmra.mrb[0].mxu0 %v202
  %v270 = vpop.f32.mrb[0].mxu0
  %v271 = vadd.f32 %v199, %v270
  %v272 = vpop.f32.mrb[0].mxu0
  %273 = vdwg.mxu0
  %v274 = vxor.u32 %v271, 2147483648
  %v275 = vmul.f32 %v274, 1.442695
  %v276 = vpow.pop %v275
  %v277 = vadd.f32 %v276, 1.0
  %v278 = vrcp.pop %v277
  %v279 = vmul.f32 1.0, %v278
  %280 = vst.msk [vmem:[%s7] sm:$0xff] %vm37, %v108
  %281 = vst.msk [vmem:[%s8] sm:$0xff] %vm37, %v279
  // Predicated region
  $region30: #{_lambda_.7} parent=0 // pred_check
    _
  $region31: #{_lambda_.7} parent=0 // pred_check_branch
    %283 = sbr.rel (0) target = $region33
  $region32: #{_lambda_.7} parent=0 // pred_region
    _
  $region33: #{_lambda_.7} parent=0 // pred_fallthru
    _
  // Predicated region
  $region34: #{_lambda_.7} parent=0 // pred_check
    _
  $region35: #{_lambda_.7} parent=0 // pred_check_branch
    %285 = sbr.rel (0) target = $region37
  $region36: #{_lambda_.7} parent=0 // pred_region
    _
  $region37: #{_lambda_.7} parent=0 // pred_fallthru
    _
  // Predicated region
  $region38: #{_lambda_.7} parent=0 // pred_check
    _
  $region39: #{_lambda_.7} parent=0 // pred_check_branch
    %287 = sbr.rel (0) target = $region41
  $region40: #{_lambda_.7} parent=0 // pred_region
    _
  $region41: #{_lambda_.7} parent=0 // pred_fallthru
    _
  // Predicated region
  $region42: #{_lambda_.7} parent=0 // pred_check
    _
  $region43: #{_lambda_.7} parent=0 // pred_check_branch
    %289 = sbr.rel (0) target = $region45
  $region44: #{_lambda_.7} parent=0 // pred_region
    _
  $region45: #{_lambda_.7} parent=0 // pred_fallthru
    _

// kernel: _lambda_.6
$region0: #{_lambda_.6}
  #allocation0 [shape = 'u32[]', space=smem, size = 0x4, offset = 0x4, fixed_abs, tag = 'smem constant byte address 0x4 - core index']
  #allocation1 [shape = 'u32[144,128]{1,0:T(1,128)}', space=vmem, size = 0x12000, scoped, tag = 'internal scratch']
  %s0 = inlined_call_operand.vmem [shape: f32[8,2,256], index: 0, kind: input, shape index: {}]
  %s1 = inlined_call_operand.vmem [shape: bf16[8,256,256], index: 1, kind: input, shape index: {}]
  %s2 = inlined_call_operand.vmem [shape: f32[8,2,256], index: 2, kind: output, shape index: {}]
  %s3 = sld [smem:[#allocation0]]
  $region18: #{_lambda_.6} parent=0
    _
  %s5 = ssub.s32 1, %s3
  %s6 = scalar_select 0, %s5, %s3
  // Predicated region
  $region2: #{_lambda_.6} parent=0 // pred_check
    _
  $region3: #{_lambda_.6} parent=0 // pred_check_branch
    %8 = sbr.rel (0) target = $region5
  $region4: #{_lambda_.6} parent=0 // pred_region
    _
  $region5: #{_lambda_.6} parent=0 // pred_fallthru
    _
  // Predicated region
  $region6: #{_lambda_.6} parent=0 // pred_check
    _
  $region7: #{_lambda_.6} parent=0 // pred_check_branch
    %10 = sbr.rel (0) target = $region9
  $region8: #{_lambda_.6} parent=0 // pred_region
    _
  $region9: #{_lambda_.6} parent=0 // pred_fallthru
    _
  %v11 = vld [vmem:[%s0] sm:$0xf]
  %v14 = vunpack.c.l.s4 1983009808
  %v15 = vunpack.c.0.s8 %v14
  %v16 = vlaneseq
  %v17 = vshrl.u32 %v16, 7
  %v18 = vsub.s32 %v15, %v17
  %v19 = vrot.slane %v11, %v18
  %v20 = vcombine.high %v19, %v19
  %v23 = vpack.c.bf16 %v19, %v19
  %v24 = vpack.c.bf16 %v20, %v20
  %v25 = vld [vmem:[%s1] sm:$0xff]
  %v26 = vld [vmem:[%s1 + $0x8] sm:$0xff]
  %v27 = vld [vmem:[%s1 + $0x10] sm:$0xff]
  %v28 = vld [vmem:[%s1 + $0x18] sm:$0xff]
  %v29 = vld [vmem:[%s1 + $0x20] sm:$0xff]
  %v30 = vld [vmem:[%s1 + $0x28] sm:$0xff]
  %v31 = vld [vmem:[%s1 + $0x30] sm:$0xff]
  %v32 = vld [vmem:[%s1 + $0x38] sm:$0xff]
  %v33 = vld [vmem:[%s1 + $0x40] sm:$0xff]
  %v34 = vld [vmem:[%s1 + $0x48] sm:$0xff]
  %v35 = vld [vmem:[%s1 + $0x50] sm:$0xff]
  %v36 = vld [vmem:[%s1 + $0x58] sm:$0xff]
  %v37 = vld [vmem:[%s1 + $0x60] sm:$0xff]
  %v38 = vld [vmem:[%s1 + $0x68] sm:$0xff]
  %v39 = vld [vmem:[%s1 + $0x70] sm:$0xff]
  %v40 = vld [vmem:[%s1 + $0x78] sm:$0xff]
  %v41 = vld [vmem:[%s1 + $0x80] sm:$0xff]
  %v42 = vld [vmem:[%s1 + $0x88] sm:$0xff]
  %v43 = vld [vmem:[%s1 + $0x90] sm:$0xff]
  %v44 = vld [vmem:[%s1 + $0x98] sm:$0xff]
  %v45 = vld [vmem:[%s1 + $0xa0] sm:$0xff]
  %v46 = vld [vmem:[%s1 + $0xa8] sm:$0xff]
  %v47 = vld [vmem:[%s1 + $0xb0] sm:$0xff]
  %v48 = vld [vmem:[%s1 + $0xb8] sm:$0xff]
  %v49 = vld [vmem:[%s1 + $0xc0] sm:$0xff]
  %v50 = vld [vmem:[%s1 + $0xc8] sm:$0xff]
  %v51 = vld [vmem:[%s1 + $0xd0] sm:$0xff]
  %v52 = vld [vmem:[%s1 + $0xd8] sm:$0xff]
  %v53 = vld [vmem:[%s1 + $0xe0] sm:$0xff]
  %v54 = vld [vmem:[%s1 + $0xe8] sm:$0xff]
  %v55 = vld [vmem:[%s1 + $0xf0] sm:$0xff]
  %v56 = vld [vmem:[%s1 + $0xf8] sm:$0xff]
  %v89 = vunpack.c.l.b16 %v25
  %v90 = vunpack.c.h.b16 %v25
  %v91 = vunpack.c.l.b16 %v26
  %v92 = vunpack.c.h.b16 %v26
  %v93 = vunpack.c.l.b16 %v27
  %v94 = vunpack.c.h.b16 %v27
  %v95 = vunpack.c.l.b16 %v28
  %v96 = vunpack.c.h.b16 %v28
  %v97 = vunpack.c.l.b16 %v29
  %v98 = vunpack.c.h.b16 %v29
  %v99 = vunpack.c.l.b16 %v30
  %v100 = vunpack.c.h.b16 %v30
  %v101 = vunpack.c.l.b16 %v31
  %v102 = vunpack.c.h.b16 %v31
  %v103 = vunpack.c.l.b16 %v32
  %v104 = vunpack.c.h.b16 %v32
  %v105 = vunpack.c.l.b16 %v33
  %v106 = vunpack.c.h.b16 %v33
  %v107 = vunpack.c.l.b16 %v34
  %v108 = vunpack.c.h.b16 %v34
  %v109 = vunpack.c.l.b16 %v35
  %v110 = vunpack.c.h.b16 %v35
  %v111 = vunpack.c.l.b16 %v36
  %v112 = vunpack.c.h.b16 %v36
  %v113 = vunpack.c.l.b16 %v37
  %v114 = vunpack.c.h.b16 %v37
  %v115 = vunpack.c.l.b16 %v38
  %v116 = vunpack.c.h.b16 %v38
  %v117 = vunpack.c.l.b16 %v39
  %v118 = vunpack.c.h.b16 %v39
  %v119 = vunpack.c.l.b16 %v40
  %v120 = vunpack.c.h.b16 %v40
  %v121 = vunpack.c.l.b16 %v41
  %v122 = vunpack.c.h.b16 %v41
  %v123 = vunpack.c.l.b16 %v42
  %v124 = vunpack.c.h.b16 %v42
  %v125 = vunpack.c.l.b16 %v43
  %v126 = vunpack.c.h.b16 %v43
  %v127 = vunpack.c.l.b16 %v44
  %v128 = vunpack.c.h.b16 %v44
  %v129 = vunpack.c.l.b16 %v45
  %v130 = vunpack.c.h.b16 %v45
  %v131 = vunpack.c.l.b16 %v46
  %v132 = vunpack.c.h.b16 %v46
  %v133 = vunpack.c.l.b16 %v47
  %v134 = vunpack.c.h.b16 %v47
  %v135 = vunpack.c.l.b16 %v48
  %v136 = vunpack.c.h.b16 %v48
  %v137 = vunpack.c.l.b16 %v49
  %v138 = vunpack.c.h.b16 %v49
  %v139 = vunpack.c.l.b16 %v50
  %v140 = vunpack.c.h.b16 %v50
  %v141 = vunpack.c.l.b16 %v51
  %v142 = vunpack.c.h.b16 %v51
  %v143 = vunpack.c.l.b16 %v52
  %v144 = vunpack.c.h.b16 %v52
  %v145 = vunpack.c.l.b16 %v53
  %v146 = vunpack.c.h.b16 %v53
  %v147 = vunpack.c.l.b16 %v54
  %v148 = vunpack.c.h.b16 %v54
  %v149 = vunpack.c.l.b16 %v55
  %v150 = vunpack.c.h.b16 %v55
  %v151 = vunpack.c.l.b16 %v56
  %v152 = vunpack.c.h.b16 %v56
  %v153 = vpack.c.b16 %v91, %v89
  %v154 = vpack.c.b16 %v92, %v90
  %v155 = vpack.c.b16 %v95, %v93
  %v156 = vpack.c.b16 %v96, %v94
  %v157 = vpack.c.b16 %v99, %v97
  %v158 = vpack.c.b16 %v100, %v98
  %v159 = vpack.c.b16 %v103, %v101
  %v160 = vpack.c.b16 %v104, %v102
  %v161 = vpack.c.b16 %v107, %v105
  %v162 = vpack.c.b16 %v108, %v106
  %v163 = vpack.c.b16 %v111, %v109
  %v164 = vpack.c.b16 %v112, %v110
  %v165 = vpack.c.b16 %v115, %v113
  %v166 = vpack.c.b16 %v116, %v114
  %v167 = vpack.c.b16 %v119, %v117
  %v168 = vpack.c.b16 %v120, %v118
  %v169 = vpack.c.b16 %v123, %v121
  %v170 = vpack.c.b16 %v124, %v122
  %v171 = vpack.c.b16 %v127, %v125
  %v172 = vpack.c.b16 %v128, %v126
  %v173 = vpack.c.b16 %v131, %v129
  %v174 = vpack.c.b16 %v132, %v130
  %v175 = vpack.c.b16 %v135, %v133
  %v176 = vpack.c.b16 %v136, %v134
  %v177 = vpack.c.b16 %v139, %v137
  %v178 = vpack.c.b16 %v140, %v138
  %v179 = vpack.c.b16 %v143, %v141
  %v180 = vpack.c.b16 %v144, %v142
  %v181 = vpack.c.b16 %v147, %v145
  %v182 = vpack.c.b16 %v148, %v146
  %v183 = vpack.c.b16 %v151, %v149
  %v184 = vpack.c.b16 %v152, %v150
  %217 = vmatprep.subr.bf16.mxu0 %v154
  %218 = vmatpush1.bf16.msra.mxu0 %v153
  %219 = vmatprep.subr.bf16.mxu0 %v156
  %220 = vmatpush1.bf16.msra.mxu0 %v155
  %221 = vmatprep.subr.bf16.mxu0 %v158
  %222 = vmatpush1.bf16.msra.mxu0 %v157
  %223 = vmatprep.subr.bf16.mxu0 %v160
  %224 = vmatpush1.bf16.msra.mxu0 %v159
  %225 = vmatprep.subr.bf16.mxu0 %v162
  %226 = vmatpush1.bf16.msra.mxu0 %v161
  %227 = vmatprep.subr.bf16.mxu0 %v164
  %228 = vmatpush1.bf16.msra.mxu0 %v163
  %229 = vmatprep.subr.bf16.mxu0 %v166
  %230 = vmatpush1.bf16.msra.mxu0 %v165
  %231 = vmatprep.subr.bf16.mxu0 %v168
  %232 = vmatpush1.bf16.msra.mxu0 %v167
  %233 = vmatprep.subr.bf16.mxu0 %v170
  %234 = vmatpush1.bf16.msra.mxu0 %v169
  %235 = vmatprep.subr.bf16.mxu0 %v172
  %236 = vmatpush1.bf16.msra.mxu0 %v171
  %237 = vmatprep.subr.bf16.mxu0 %v174
  %238 = vmatpush1.bf16.msra.mxu0 %v173
  %239 = vmatprep.subr.bf16.mxu0 %v176
  %240 = vmatpush1.bf16.msra.mxu0 %v175
  %241 = vmatprep.subr.bf16.mxu0 %v178
  %242 = vmatpush1.bf16.msra.mxu0 %v177
  %243 = vmatprep.subr.bf16.mxu0 %v180
  %244 = vmatpush1.bf16.msra.mxu0 %v179
  %245 = vmatprep.subr.bf16.mxu0 %v182
  %246 = vmatpush1.bf16.msra.mxu0 %v181
  %247 = vmatprep.subr.bf16.mxu0 %v184
  %248 = vmatpush1.bf16.msra.mxu0 %v183
  %249 = vmatprep.mubr.bf16.mxu0 %v24
  %250 = vmatmul.mubr.bf16.gmra.mrb[0].mxu0 %v23
  %v251 = vpop.f32.mrb[0].mxu0
  %v252 = vadd.f32 0.0, %v251
  %v253 = vpop.f32.mrb[0].mxu0
  %v254 = vadd.f32 0.0, %v253
  %v255 = vpop.f32.mrb[0].mxu0
  %v256 = vpop.f32.mrb[0].mxu0
  %257 = vdwg.mxu0
  %v260 = vcombine.low %v252, %v254
  %v262 = vunpack.c.l.s4 1983009808
  %v263 = vunpack.c.0.s8 %v262
  %v264 = vlaneseq
  %v265 = vshrl.u32 %v264, 7
  %v266 = vsub.s32 %v263, %v265
  %v267 = vrot.slane %v260, %v266
  %269 = vst [vmem:[%s2] sm:$0xf] %v267
  %s270 = scalar_lea.vmem %s0, 4
  %v271 = vld [vmem:[%s270] sm:$0xf]
  %v274 = vunpack.c.l.s4 1983009808
  %v275 = vunpack.c.0.s8 %v274
  %v276 = vlaneseq
  %v277 = vshrl.u32 %v276, 7
  %v278 = vsub.s32 %v275, %v277
  %v279 = vrot.slane %v271, %v278
  %v280 = vcombine.high %v279, %v279
  %v283 = vpack.c.bf16 %v279, %v279
  %v284 = vpack.c.bf16 %v280, %v280
  %s285 = scalar_lea.vmem %s1, 256
  %v286 = vld [vmem:[%s285] sm:$0xff]
  %v287 = vld [vmem:[%s285 + $0x8] sm:$0xff]
  %v288 = vld [vmem:[%s285 + $0x10] sm:$0xff]
  %v289 = vld [vmem:[%s285 + $0x18] sm:$0xff]
  %v290 = vld [vmem:[%s285 + $0x20] sm:$0xff]
  %v291 = vld [vmem:[%s285 + $0x28] sm:$0xff]
  %v292 = vld [vmem:[%s285 + $0x30] sm:$0xff]
  %v293 = vld [vmem:[%s285 + $0x38] sm:$0xff]
  %v294 = vld [vmem:[%s285 + $0x40] sm:$0xff]
  %v295 = vld [vmem:[%s285 + $0x48] sm:$0xff]
  %v296 = vld [vmem:[%s285 + $0x50] sm:$0xff]
  %v297 = vld [vmem:[%s285 + $0x58] sm:$0xff]
  %v298 = vld [vmem:[%s285 + $0x60] sm:$0xff]
  %v299 = vld [vmem:[%s285 + $0x68] sm:$0xff]
  %v300 = vld [vmem:[%s285 + $0x70] sm:$0xff]
  %v301 = vld [vmem:[%s285 + $0x78] sm:$0xff]
  %v302 = vld [vmem:[%s285 + $0x80] sm:$0xff]
  %v303 = vld [vmem:[%s285 + $0x88] sm:$0xff]
  %v304 = vld [vmem:[%s285 + $0x90] sm:$0xff]
  %v305 = vld [vmem:[%s285 + $0x98] sm:$0xff]
  %v306 = vld [vmem:[%s285 + $0xa0] sm:$0xff]
  %v307 = vld [vmem:[%s285 + $0xa8] sm:$0xff]
  %v308 = vld [vmem:[%s285 + $0xb0] sm:$0xff]
  %v309 = vld [vmem:[%s285 + $0xb8] sm:$0xff]
  %v310 = vld [vmem:[%s285 + $0xc0] sm:$0xff]
  %v311 = vld [vmem:[%s285 + $0xc8] sm:$0xff]
  %v312 = vld [vmem:[%s285 + $0xd0] sm:$0xff]
  %v313 = vld [vmem:[%s285 + $0xd8] sm:$0xff]
  %v314 = vld [vmem:[%s285 + $0xe0] sm:$0xff]
  %v315 = vld [vmem:[%s285 + $0xe8] sm:$0xff]
  %v316 = vld [vmem:[%s285 + $0xf0] sm:$0xff]
  %v317 = vld [vmem:[%s285 + $0xf8] sm:$0xff]
  %v350 = vunpack.c.l.b16 %v286
  %v351 = vunpack.c.h.b16 %v286
  %v352 = vunpack.c.l.b16 %v287
  %v353 = vunpack.c.h.b16 %v287
  %v354 = vunpack.c.l.b16 %v288
  %v355 = vunpack.c.h.b16 %v288
  %v356 = vunpack.c.l.b16 %v289
  %v357 = vunpack.c.h.b16 %v289
  %v358 = vunpack.c.l.b16 %v290
  %v359 = vunpack.c.h.b16 %v290
  %v360 = vunpack.c.l.b16 %v291
  %v361 = vunpack.c.h.b16 %v291
  %v362 = vunpack.c.l.b16 %v292
  %v363 = vunpack.c.h.b16 %v292
  %v364 = vunpack.c.l.b16 %v293
  %v365 = vunpack.c.h.b16 %v293
  %v366 = vunpack.c.l.b16 %v294
  %v367 = vunpack.c.h.b16 %v294
  %v368 = vunpack.c.l.b16 %v295
  %v369 = vunpack.c.h.b16 %v295
  %v370 = vunpack.c.l.b16 %v296
  %v371 = vunpack.c.h.b16 %v296
  %v372 = vunpack.c.l.b16 %v297
  %v373 = vunpack.c.h.b16 %v297
  %v374 = vunpack.c.l.b16 %v298
  %v375 = vunpack.c.h.b16 %v298
  %v376 = vunpack.c.l.b16 %v299
  %v377 = vunpack.c.h.b16 %v299
  %v378 = vunpack.c.l.b16 %v300
  %v379 = vunpack.c.h.b16 %v300
  %v380 = vunpack.c.l.b16 %v301
  %v381 = vunpack.c.h.b16 %v301
  %v382 = vunpack.c.l.b16 %v302
  %v383 = vunpack.c.h.b16 %v302
  %v384 = vunpack.c.l.b16 %v303
  %v385 = vunpack.c.h.b16 %v303
  %v386 = vunpack.c.l.b16 %v304
  %v387 = vunpack.c.h.b16 %v304
  %v388 = vunpack.c.l.b16 %v305
  %v389 = vunpack.c.h.b16 %v305
  %v390 = vunpack.c.l.b16 %v306
  %v391 = vunpack.c.h.b16 %v306
  %v392 = vunpack.c.l.b16 %v307
  %v393 = vunpack.c.h.b16 %v307
  %v394 = vunpack.c.l.b16 %v308
  %v395 = vunpack.c.h.b16 %v308
  %v396 = vunpack.c.l.b16 %v309
  %v397 = vunpack.c.h.b16 %v309
  %v398 = vunpack.c.l.b16 %v310
  %v399 = vunpack.c.h.b16 %v310
  %v400 = vunpack.c.l.b16 %v311
  %v401 = vunpack.c.h.b16 %v311
  %v402 = vunpack.c.l.b16 %v312
  %v403 = vunpack.c.h.b16 %v312
  %v404 = vunpack.c.l.b16 %v313
  %v405 = vunpack.c.h.b16 %v313
  %v406 = vunpack.c.l.b16 %v314
  %v407 = vunpack.c.h.b16 %v314
  %v408 = vunpack.c.l.b16 %v315
  %v409 = vunpack.c.h.b16 %v315
  %v410 = vunpack.c.l.b16 %v316
  %v411 = vunpack.c.h.b16 %v316
  %v412 = vunpack.c.l.b16 %v317
  %v413 = vunpack.c.h.b16 %v317
  %v414 = vpack.c.b16 %v352, %v350
  %v415 = vpack.c.b16 %v353, %v351
  %v416 = vpack.c.b16 %v356, %v354
  %v417 = vpack.c.b16 %v357, %v355
  %v418 = vpack.c.b16 %v360, %v358
  %v419 = vpack.c.b16 %v361, %v359
  %v420 = vpack.c.b16 %v364, %v362
  %v421 = vpack.c.b16 %v365, %v363
  %v422 = vpack.c.b16 %v368, %v366
  %v423 = vpack.c.b16 %v369, %v367
  %v424 = vpack.c.b16 %v372, %v370
  %v425 = vpack.c.b16 %v373, %v371
  %v426 = vpack.c.b16 %v376, %v374
  %v427 = vpack.c.b16 %v377, %v375
  %v428 = vpack.c.b16 %v380, %v378
  %v429 = vpack.c.b16 %v381, %v379
  %v430 = vpack.c.b16 %v384, %v382
  %v431 = vpack.c.b16 %v385, %v383
  %v432 = vpack.c.b16 %v388, %v386
  %v433 = vpack.c.b16 %v389, %v387
  %v434 = vpack.c.b16 %v392, %v390
  %v435 = vpack.c.b16 %v393, %v391
  %v436 = vpack.c.b16 %v396, %v394
  %v437 = vpack.c.b16 %v397, %v395
  %v438 = vpack.c.b16 %v400, %v398
  %v439 = vpack.c.b16 %v401, %v399
  %v440 = vpack.c.b16 %v404, %v402
  %v441 = vpack.c.b16 %v405, %v403
  %v442 = vpack.c.b16 %v408, %v406
  %v443 = vpack.c.b16 %v409, %v407
  %v444 = vpack.c.b16 %v412, %v410
  %v445 = vpack.c.b16 %v413, %v411
  %478 = vmatprep.subr.bf16.mxu0 %v415
  %479 = vmatpush1.bf16.msra.mxu0 %v414
  %480 = vmatprep.subr.bf16.mxu0 %v417
  %481 = vmatpush1.bf16.msra.mxu0 %v416
  %482 = vmatprep.subr.bf16.mxu0 %v419
  %483 = vmatpush1.bf16.msra.mxu0 %v418
  %484 = vmatprep.subr.bf16.mxu0 %v421
  %485 = vmatpush1.bf16.msra.mxu0 %v420
  %486 = vmatprep.subr.bf16.mxu0 %v423
  %487 = vmatpush1.bf16.msra.mxu0 %v422
  %488 = vmatprep.subr.bf16.mxu0 %v425
  %489 = vmatpush1.bf16.msra.mxu0 %v424
  %490 = vmatprep.subr.bf16.mxu0 %v427
  %491 = vmatpush1.bf16.msra.mxu0 %v426
  %492 = vmatprep.subr.bf16.mxu0 %v429
  %493 = vmatpush1.bf16.msra.mxu0 %v428
  %494 = vmatprep.subr.bf16.mxu0 %v431
  %495 = vmatpush1.bf16.msra.mxu0 %v430
  %496 = vmatprep.subr.bf16.mxu0 %v433
  %497 = vmatpush1.bf16.msra.mxu0 %v432
  %498 = vmatprep.subr.bf16.mxu0 %v435
  %499 = vmatpush1.bf16.msra.mxu0 %v434
  %500 = vmatprep.subr.bf16.mxu0 %v437
  %501 = vmatpush1.bf16.msra.mxu0 %v436
  %502 = vmatprep.subr.bf16.mxu0 %v439
  %503 = vmatpush1.bf16.msra.mxu0 %v438
  %504 = vmatprep.subr.bf16.mxu0 %v441
  %505 = vmatpush1.bf16.msra.mxu0 %v440
  %506 = vmatprep.subr.bf16.mxu0 %v443
  %507 = vmatpush1.bf16.msra.mxu0 %v442
  %508 = vmatprep.subr.bf16.mxu0 %v445
  %509 = vmatpush1.bf16.msra.mxu0 %v444
  %510 = vmatprep.mubr.bf16.mxu0 %v284
  %511 = vmatmul.mubr.bf16.gmra.mrb[0].mxu0 %v283
  %v512 = vpop.f32.mrb[0].mxu0
  %v513 = vadd.f32 0.0, %v512
  %v514 = vpop.f32.mrb[0].mxu0
  %v515 = vadd.f32 0.0, %v514
  %v516 = vpop.f32.mrb[0].mxu0
  %v517 = vpop.f32.mrb[0].mxu0
  %518 = vdwg.mxu0
  %v521 = vcombine.low %v513, %v515
  %v523 = vunpack.c.l.s4 1983009808
  %v524 = vunpack.c.0.s8 %v523
  %v525 = vlaneseq
  %v526 = vshrl.u32 %v525, 7
  %v527 = vsub.s32 %v524, %v526
  %v528 = vrot.slane %v521, %v527
  %s530 = scalar_lea.vmem %s2, 4
  %531 = vst [vmem:[%s530] sm:$0xf] %v528
  %s532 = scalar_lea.vmem %s0, 8
  %v533 = vld [vmem:[%s532] sm:$0xf]
  %v536 = vunpack.c.l.s4 1983009808
  %v537 = vunpack.c.0.s8 %v536
  %v538 = vlaneseq
  %v539 = vshrl.u32 %v538, 7
  %v540 = vsub.s32 %v537, %v539
  %v541 = vrot.slane %v533, %v540
  %v542 = vcombine.high %v541, %v541
  %v545 = vpack.c.bf16 %v541, %v541
  %v546 = vpack.c.bf16 %v542, %v542
  %s547 = scalar_lea.vmem %s1, 512
  %v548 = vld [vmem:[%s547] sm:$0xff]
  %v549 = vld [vmem:[%s547 + $0x8] sm:$0xff]
  %v550 = vld [vmem:[%s547 + $0x10] sm:$0xff]
  %v551 = vld [vmem:[%s547 + $0x18] sm:$0xff]
  %v552 = vld [vmem:[%s547 + $0x20] sm:$0xff]
  %v553 = vld [vmem:[%s547 + $0x28] sm:$0xff]
  %v554 = vld [vmem:[%s547 + $0x30] sm:$0xff]
  %v555 = vld [vmem:[%s547 + $0x38] sm:$0xff]
  %v556 = vld [vmem:[%s547 + $0x40] sm:$0xff]
  %v557 = vld [vmem:[%s547 + $0x48] sm:$0xff]
  %v558 = vld [vmem:[%s547 + $0x50] sm:$0xff]
  %v559 = vld [vmem:[%s547 + $0x58] sm:$0xff]
  %v560 = vld [vmem:[%s547 + $0x60] sm:$0xff]
  %v561 = vld [vmem:[%s547 + $0x68] sm:$0xff]
  %v562 = vld [vmem:[%s547 + $0x70] sm:$0xff]
  %v563 = vld [vmem:[%s547 + $0x78] sm:$0xff]
  %v564 = vld [vmem:[%s547 + $0x80] sm:$0xff]
  %v565 = vld [vmem:[%s547 + $0x88] sm:$0xff]
  %v566 = vld [vmem:[%s547 + $0x90] sm:$0xff]
  %v567 = vld [vmem:[%s547 + $0x98] sm:$0xff]
  %v568 = vld [vmem:[%s547 + $0xa0] sm:$0xff]
  %v569 = vld [vmem:[%s547 + $0xa8] sm:$0xff]
  %v570 = vld [vmem:[%s547 + $0xb0] sm:$0xff]
  %v571 = vld [vmem:[%s547 + $0xb8] sm:$0xff]
  %v572 = vld [vmem:[%s547 + $0xc0] sm:$0xff]
  %v573 = vld [vmem:[%s547 + $0xc8] sm:$0xff]
  %v574 = vld [vmem:[%s547 + $0xd0] sm:$0xff]
  %v575 = vld [vmem:[%s547 + $0xd8] sm:$0xff]
  %v576 = vld [vmem:[%s547 + $0xe0] sm:$0xff]
  %v577 = vld [vmem:[%s547 + $0xe8] sm:$0xff]
  %v578 = vld [vmem:[%s547 + $0xf0] sm:$0xff]
  %v579 = vld [vmem:[%s547 + $0xf8] sm:$0xff]
  %v612 = vunpack.c.l.b16 %v548
  %v613 = vunpack.c.h.b16 %v548
  %v614 = vunpack.c.l.b16 %v549
  %v615 = vunpack.c.h.b16 %v549
  %v616 = vunpack.c.l.b16 %v550
  %v617 = vunpack.c.h.b16 %v550
  %v618 = vunpack.c.l.b16 %v551
  %v619 = vunpack.c.h.b16 %v551
  %v620 = vunpack.c.l.b16 %v552
  %v621 = vunpack.c.h.b16 %v552
  %v622 = vunpack.c.l.b16 %v553
  %v623 = vunpack.c.h.b16 %v553
  %v624 = vunpack.c.l.b16 %v554
  %v625 = vunpack.c.h.b16 %v554
  %v626 = vunpack.c.l.b16 %v555
  %v627 = vunpack.c.h.b16 %v555
  %v628 = vunpack.c.l.b16 %v556
  %v629 = vunpack.c.h.b16 %v556
  %v630 = vunpack.c.l.b16 %v557
  %v631 = vunpack.c.h.b16 %v557
  %v632 = vunpack.c.l.b16 %v558
  %v633 = vunpack.c.h.b16 %v558
  %v634 = vunpack.c.l.b16 %v559
  %v635 = vunpack.c.h.b16 %v559
  %v636 = vunpack.c.l.b16 %v560
  %v637 = vunpack.c.h.b16 %v560
  %v638 = vunpack.c.l.b16 %v561
  %v639 = vunpack.c.h.b16 %v561
  %v640 = vunpack.c.l.b16 %v562
  %v641 = vunpack.c.h.b16 %v562
  %v642 = vunpack.c.l.b16 %v563
  %v643 = vunpack.c.h.b16 %v563
  %v644 = vunpack.c.l.b16 %v564
  %v645 = vunpack.c.h.b16 %v564
  %v646 = vunpack.c.l.b16 %v565
  %v647 = vunpack.c.h.b16 %v565
  %v648 = vunpack.c.l.b16 %v566
  %v649 = vunpack.c.h.b16 %v566
  %v650 = vunpack.c.l.b16 %v567
  %v651 = vunpack.c.h.b16 %v567
  %v652 = vunpack.c.l.b16 %v568
  %v653 = vunpack.c.h.b16 %v568
  %v654 = vunpack.c.l.b16 %v569
  %v655 = vunpack.c.h.b16 %v569
  %v656 = vunpack.c.l.b16 %v570
  %v657 = vunpack.c.h.b16 %v570
  %v658 = vunpack.c.l.b16 %v571
  %v659 = vunpack.c.h.b16 %v571
  %v660 = vunpack.c.l.b16 %v572
  %v661 = vunpack.c.h.b16 %v572
  %v662 = vunpack.c.l.b16 %v573
  %v663 = vunpack.c.h.b16 %v573
  %v664 = vunpack.c.l.b16 %v574
  %v665 = vunpack.c.h.b16 %v574
  %v666 = vunpack.c.l.b16 %v575
  %v667 = vunpack.c.h.b16 %v575
  %v668 = vunpack.c.l.b16 %v576
  %v669 = vunpack.c.h.b16 %v576
  %v670 = vunpack.c.l.b16 %v577
  %v671 = vunpack.c.h.b16 %v577
  %v672 = vunpack.c.l.b16 %v578
  %v673 = vunpack.c.h.b16 %v578
  %v674 = vunpack.c.l.b16 %v579
  %v675 = vunpack.c.h.b16 %v579
  %v676 = vpack.c.b16 %v614, %v612
  %v677 = vpack.c.b16 %v615, %v613
  %v678 = vpack.c.b16 %v618, %v616
  %v679 = vpack.c.b16 %v619, %v617
  %v680 = vpack.c.b16 %v622, %v620
  %v681 = vpack.c.b16 %v623, %v621
  %v682 = vpack.c.b16 %v626, %v624
  %v683 = vpack.c.b16 %v627, %v625
  %v684 = vpack.c.b16 %v630, %v628
  %v685 = vpack.c.b16 %v631, %v629
  %v686 = vpack.c.b16 %v634, %v632
  %v687 = vpack.c.b16 %v635, %v633
  %v688 = vpack.c.b16 %v638, %v636
  %v689 = vpack.c.b16 %v639, %v637
  %v690 = vpack.c.b16 %v642, %v640
  %v691 = vpack.c.b16 %v643, %v641
  %v692 = vpack.c.b16 %v646, %v644
  %v693 = vpack.c.b16 %v647, %v645
  %v694 = vpack.c.b16 %v650, %v648
  %v695 = vpack.c.b16 %v651, %v649
  %v696 = vpack.c.b16 %v654, %v652
  %v697 = vpack.c.b16 %v655, %v653
  %v698 = vpack.c.b16 %v658, %v656
  %v699 = vpack.c.b16 %v659, %v657
  %v700 = vpack.c.b16 %v662, %v660
  %v701 = vpack.c.b16 %v663, %v661
  %v702 = vpack.c.b16 %v666, %v664
  %v703 = vpack.c.b16 %v667, %v665
  %v704 = vpack.c.b16 %v670, %v668
  %v705 = vpack.c.b16 %v671, %v669
  %v706 = vpack.c.b16 %v674, %v672
  %v707 = vpack.c.b16 %v675, %v673
  %740 = vmatprep.subr.bf16.mxu0 %v677
  %741 = vmatpush1.bf16.msra.mxu0 %v676
  %742 = vmatprep.subr.bf16.mxu0 %v679
  %743 = vmatpush1.bf16.msra.mxu0 %v678
  %744 = vmatprep.subr.bf16.mxu0 %v681
  %745 = vmatpush1.bf16.msra.mxu0 %v680
  %746 = vmatprep.subr.bf16.mxu0 %v683
  %747 = vmatpush1.bf16.msra.mxu0 %v682
  %748 = vmatprep.subr.bf16.mxu0 %v685
  %749 = vmatpush1.bf16.msra.mxu0 %v684
  %750 = vmatprep.subr.bf16.mxu0 %v687
  %751 = vmatpush1.bf16.msra.mxu0 %v686
  %752 = vmatprep.subr.bf16.mxu0 %v689
  %753 = vmatpush1.bf16.msra.mxu0 %v688
  %754 = vmatprep.subr.bf16.mxu0 %v691
  %755 = vmatpush1.bf16.msra.mxu0 %v690
  %756 = vmatprep.subr.bf16.mxu0 %v693
  %757 = vmatpush1.bf16.msra.mxu0 %v692
  %758 = vmatprep.subr.bf16.mxu0 %v695
  %759 = vmatpush1.bf16.msra.mxu0 %v694
  %760 = vmatprep.subr.bf16.mxu0 %v697
  %761 = vmatpush1.bf16.msra.mxu0 %v696
  %762 = vmatprep.subr.bf16.mxu0 %v699
  %763 = vmatpush1.bf16.msra.mxu0 %v698
  %764 = vmatprep.subr.bf16.mxu0 %v701
  %765 = vmatpush1.bf16.msra.mxu0 %v700
  %766 = vmatprep.subr.bf16.mxu0 %v703
  %767 = vmatpush1.bf16.msra.mxu0 %v702
  %768 = vmatprep.subr.bf16.mxu0 %v705
  %769 = vmatpush1.bf16.msra.mxu0 %v704
  %770 = vmatprep.subr.bf16.mxu0 %v707
  %771 = vmatpush1.bf16.msra.mxu0 %v706
  %772 = vmatprep.mubr.bf16.mxu0 %v546
  %773 = vmatmul.mubr.bf16.gmra.mrb[0].mxu0 %v545
  %v774 = vpop.f32.mrb[0].mxu0
  %v775 = vadd.f32 0.0, %v774
  %v776 = vpop.f32.mrb[0].mxu0
  %v777 = vadd.f32 0.0, %v776
  %v778 = vpop.f32.mrb[0].mxu0
  %v779 = vpop.f32.mrb[0].mxu0
  %780 = vdwg.mxu0
  %v783 = vcombine.low %v775, %v777
  %v785 = vunpack.c.l.s4 1983009808
  %v786 = vunpack.c.0.s8 %v785
  %v787 = vlaneseq
  %v788 = vshrl.u32 %v787, 7
  %v789 = vsub.s32 %v786, %v788
  %v790 = vrot.slane %v783, %v789
  %s792 = scalar_lea.vmem %s2, 8
  %793 = vst [vmem:[%s792] sm:$0xf] %v790
  %s794 = scalar_lea.vmem %s0, 12
  %v795 = vld [vmem:[%s794] sm:$0xf]
  %v798 = vunpack.c.l.s4 1983009808
  %v799 = vunpack.c.0.s8 %v798
  %v800 = vlaneseq
  %v801 = vshrl.u32 %v800, 7
  %v802 = vsub.s32 %v799, %v801
  %v803 = vrot.slane %v795, %v802
  %v804 = vcombine.high %v803, %v803
  %v807 = vpack.c.bf16 %v803, %v803
  %v808 = vpack.c.bf16 %v804, %v804
  %s809 = scalar_lea.vmem %s1, 768
  %v810 = vld [vmem:[%s809] sm:$0xff]
  %v811 = vld [vmem:[%s809 + $0x8] sm:$0xff]
  %v812 = vld [vmem:[%s809 + $0x10] sm:$0xff]
  %v813 = vld [vmem:[%s809 + $0x18] sm:$0xff]
  %v814 = vld [vmem:[%s809 + $0x20] sm:$0xff]
  %v815 = vld [vmem:[%s809 + $0x28] sm:$0xff]
  %v816 = vld [vmem:[%s809 + $0x30] sm:$0xff]
  %v817 = vld [vmem:[%s809 + $0x38] sm:$0xff]
  %v818 = vld [vmem:[%s809 + $0x40] sm:$0xff]
  %v819 = vld [vmem:[%s809 + $0x48] sm:$0xff]
  %v820 = vld [vmem:[%s809 + $0x50] sm:$0xff]
  %v821 = vld [vmem:[%s809 + $0x58] sm:$0xff]
  %v822 = vld [vmem:[%s809 + $0x60] sm:$0xff]
  %v823 = vld [vmem:[%s809 + $0x68] sm:$0xff]
  %v824 = vld [vmem:[%s809 + $0x70] sm:$0xff]
  %v825 = vld [vmem:[%s809 + $0x78] sm:$0xff]
  %v826 = vld [vmem:[%s809 + $0x80] sm:$0xff]
  %v827 = vld [vmem:[%s809 + $0x88] sm:$0xff]
  %v828 = vld [vmem:[%s809 + $0x90] sm:$0xff]
  %v829 = vld [vmem:[%s809 + $0x98] sm:$0xff]
  %v830 = vld [vmem:[%s809 + $0xa0] sm:$0xff]
  %v831 = vld [vmem:[%s809 + $0xa8] sm:$0xff]
  %v832 = vld [vmem:[%s809 + $0xb0] sm:$0xff]
  %v833 = vld [vmem:[%s809 + $0xb8] sm:$0xff]
  %v834 = vld [vmem:[%s809 + $0xc0] sm:$0xff]
  %v835 = vld [vmem:[%s809 + $0xc8] sm:$0xff]
  %v836 = vld [vmem:[%s809 + $0xd0] sm:$0xff]
  %v837 = vld [vmem:[%s809 + $0xd8] sm:$0xff]
  %v838 = vld [vmem:[%s809 + $0xe0] sm:$0xff]
  %v839 = vld [vmem:[%s809 + $0xe8] sm:$0xff]
  %v840 = vld [vmem:[%s809 + $0xf0] sm:$0xff]
  %v841 = vld [vmem:[%s809 + $0xf8] sm:$0xff]
  %v874 = vunpack.c.l.b16 %v810
  %v875 = vunpack.c.h.b16 %v810
  %v876 = vunpack.c.l.b16 %v811
  %v877 = vunpack.c.h.b16 %v811
  %v878 = vunpack.c.l.b16 %v812
  %v879 = vunpack.c.h.b16 %v812
  %v880 = vunpack.c.l.b16 %v813
  %v881 = vunpack.c.h.b16 %v813
  %v882 = vunpack.c.l.b16 %v814
  %v883 = vunpack.c.h.b16 %v814
  %v884 = vunpack.c.l.b16 %v815
  %v885 = vunpack.c.h.b16 %v815
  %v886 = vunpack.c.l.b16 %v816
  %v887 = vunpack.c.h.b16 %v816
  %v888 = vunpack.c.l.b16 %v817
  %v889 = vunpack.c.h.b16 %v817
  %v890 = vunpack.c.l.b16 %v818
  %v891 = vunpack.c.h.b16 %v818
  %v892 = vunpack.c.l.b16 %v819
  %v893 = vunpack.c.h.b16 %v819
  %v894 = vunpack.c.l.b16 %v820
  %v895 = vunpack.c.h.b16 %v820
  %v896 = vunpack.c.l.b16 %v821
  %v897 = vunpack.c.h.b16 %v821
  %v898 = vunpack.c.l.b16 %v822
  %v899 = vunpack.c.h.b16 %v822
  %v900 = vunpack.c.l.b16 %v823
  %v901 = vunpack.c.h.b16 %v823
  %v902 = vunpack.c.l.b16 %v824
  %v903 = vunpack.c.h.b16 %v824
  %v904 = vunpack.c.l.b16 %v825
  %v905 = vunpack.c.h.b16 %v825
  %v906 = vunpack.c.l.b16 %v826
  %v907 = vunpack.c.h.b16 %v826
  %v908 = vunpack.c.l.b16 %v827
  %v909 = vunpack.c.h.b16 %v827
  %v910 = vunpack.c.l.b16 %v828
  %v911 = vunpack.c.h.b16 %v828
  %v912 = vunpack.c.l.b16 %v829
  %v913 = vunpack.c.h.b16 %v829
  %v914 = vunpack.c.l.b16 %v830
  %v915 = vunpack.c.h.b16 %v830
  %v916 = vunpack.c.l.b16 %v831
  %v917 = vunpack.c.h.b16 %v831
  %v918 = vunpack.c.l.b16 %v832
  %v919 = vunpack.c.h.b16 %v832
  %v920 = vunpack.c.l.b16 %v833
  %v921 = vunpack.c.h.b16 %v833
  %v922 = vunpack.c.l.b16 %v834
  %v923 = vunpack.c.h.b16 %v834
  %v924 = vunpack.c.l.b16 %v835
  %v925 = vunpack.c.h.b16 %v835
  %v926 = vunpack.c.l.b16 %v836
  %v927 = vunpack.c.h.b16 %v836
  %v928 = vunpack.c.l.b16 %v837
  %v929 = vunpack.c.h.b16 %v837
  %v930 = vunpack.c.l.b16 %v838
  %v931 = vunpack.c.h.b16 %v838
  %v932 = vunpack.c.l.b16 %v839
  %v933 = vunpack.c.h.b16 %v839
  %v934 = vunpack.c.l.b16 %v840
  %v935 = vunpack.c.h.b16 %v840
  %v936 = vunpack.c.l.b16 %v841
  %v937 = vunpack.c.h.b16 %v841
  %v938 = vpack.c.b16 %v876, %v874
  %v939 = vpack.c.b16 %v877, %v875
  %v940 = vpack.c.b16 %v880, %v878
  %v941 = vpack.c.b16 %v881, %v879
  %v942 = vpack.c.b16 %v884, %v882
  %v943 = vpack.c.b16 %v885, %v883
  %v944 = vpack.c.b16 %v888, %v886
  %v945 = vpack.c.b16 %v889, %v887
  %v946 = vpack.c.b16 %v892, %v890
  %v947 = vpack.c.b16 %v893, %v891
  %v948 = vpack.c.b16 %v896, %v894
  %v949 = vpack.c.b16 %v897, %v895
  %v950 = vpack.c.b16 %v900, %v898
  %v951 = vpack.c.b16 %v901, %v899
  %v952 = vpack.c.b16 %v904, %v902
  %v953 = vpack.c.b16 %v905, %v903
  %v954 = vpack.c.b16 %v908, %v906
  %v955 = vpack.c.b16 %v909, %v907
  %v956 = vpack.c.b16 %v912, %v910
  %v957 = vpack.c.b16 %v913, %v911
  %v958 = vpack.c.b16 %v916, %v914
  %v959 = vpack.c.b16 %v917, %v915
  %v960 = vpack.c.b16 %v920, %v918
  %v961 = vpack.c.b16 %v921, %v919
  %v962 = vpack.c.b16 %v924, %v922
  %v963 = vpack.c.b16 %v925, %v923
  %v964 = vpack.c.b16 %v928, %v926
  %v965 = vpack.c.b16 %v929, %v927
  %v966 = vpack.c.b16 %v932, %v930
  %v967 = vpack.c.b16 %v933, %v931
  %v968 = vpack.c.b16 %v936, %v934
  %v969 = vpack.c.b16 %v937, %v935
  %1002 = vmatprep.subr.bf16.mxu0 %v939
  %1003 = vmatpush1.bf16.msra.mxu0 %v938
  %1004 = vmatprep.subr.bf16.mxu0 %v941
  %1005 = vmatpush1.bf16.msra.mxu0 %v940
  %1006 = vmatprep.subr.bf16.mxu0 %v943
  %1007 = vmatpush1.bf16.msra.mxu0 %v942
  %1008 = vmatprep.subr.bf16.mxu0 %v945
  %1009 = vmatpush1.bf16.msra.mxu0 %v944
  %1010 = vmatprep.subr.bf16.mxu0 %v947
  %1011 = vmatpush1.bf16.msra.mxu0 %v946
  %1012 = vmatprep.subr.bf16.mxu0 %v949
  %1013 = vmatpush1.bf16.msra.mxu0 %v948
  %1014 = vmatprep.subr.bf16.mxu0 %v951
  %1015 = vmatpush1.bf16.msra.mxu0 %v950
  %1016 = vmatprep.subr.bf16.mxu0 %v953
  %1017 = vmatpush1.bf16.msra.mxu0 %v952
  %1018 = vmatprep.subr.bf16.mxu0 %v955
  %1019 = vmatpush1.bf16.msra.mxu0 %v954
  %1020 = vmatprep.subr.bf16.mxu0 %v957
  %1021 = vmatpush1.bf16.msra.mxu0 %v956
  %1022 = vmatprep.subr.bf16.mxu0 %v959
  %1023 = vmatpush1.bf16.msra.mxu0 %v958
  %1024 = vmatprep.subr.bf16.mxu0 %v961
  %1025 = vmatpush1.bf16.msra.mxu0 %v960
  %1026 = vmatprep.subr.bf16.mxu0 %v963
  %1027 = vmatpush1.bf16.msra.mxu0 %v962
  %1028 = vmatprep.subr.bf16.mxu0 %v965
  %1029 = vmatpush1.bf16.msra.mxu0 %v964
  %1030 = vmatprep.subr.bf16.mxu0 %v967
  %1031 = vmatpush1.bf16.msra.mxu0 %v966
  %1032 = vmatprep.subr.bf16.mxu0 %v969
  %1033 = vmatpush1.bf16.msra.mxu0 %v968
  %1034 = vmatprep.mubr.bf16.mxu0 %v808
  %1035 = vmatmul.mubr.bf16.gmra.mrb[0].mxu0 %v807
  %v1036 = vpop.f32.mrb[0].mxu0
  %v1037 = vadd.f32 0.0, %v1036
  %v1038 = vpop.f32.mrb[0].mxu0
  %v1039 = vadd.f32 0.0, %v1038
  %v1040 = vpop.f32.mrb[0].mxu0
  %v1041 = vpop.f32.mrb[0].mxu0
  %1042 = vdwg.mxu0
  %v1045 = vcombine.low %v1037, %v1039
  %v1047 = vunpack.c.l.s4 1983009808
  %v1048 = vunpack.c.0.s8 %v1047
  %v1049 = vlaneseq
  %v1050 = vshrl.u32 %v1049, 7
  %v1051 = vsub.s32 %v1048, %v1050
  %v1052 = vrot.slane %v1045, %v1051
  %s1054 = scalar_lea.vmem %s2, 12
  %1055 = vst [vmem:[%s1054] sm:$0xf] %v1052
  %s1056 = scalar_lea.vmem %s0, 16
  %v1057 = vld [vmem:[%s1056] sm:$0xf]
  %v1060 = vunpack.c.l.s4 1983009808
  %v1061 = vunpack.c.0.s8 %v1060
  %v1062 = vlaneseq
  %v1063 = vshrl.u32 %v1062, 7
  %v1064 = vsub.s32 %v1061, %v1063
  %v1065 = vrot.slane %v1057, %v1064
  %v1066 = vcombine.high %v1065, %v1065
  %v1069 = vpack.c.bf16 %v1065, %v1065
  %v1070 = vpack.c.bf16 %v1066, %v1066
  %s1071 = scalar_lea.vmem %s1, 1024
  %v1072 = vld [vmem:[%s1071] sm:$0xff]
  %v1073 = vld [vmem:[%s1071 + $0x8] sm:$0xff]
  %v1074 = vld [vmem:[%s1071 + $0x10] sm:$0xff]
  %v1075 = vld [vmem:[%s1071 + $0x18] sm:$0xff]
  %v1076 = vld [vmem:[%s1071 + $0x20] sm:$0xff]
  %v1077 = vld [vmem:[%s1071 + $0x28] sm:$0xff]
  %v1078 = vld [vmem:[%s1071 + $0x30] sm:$0xff]
  %v1079 = vld [vmem:[%s1071 + $0x38] sm:$0xff]
  %v1080 = vld [vmem:[%s1071 + $0x40] sm:$0xff]
  %v1081 = vld [vmem:[%s1071 + $0x48] sm:$0xff]
  %v1082 = vld [vmem:[%s1071 + $0x50] sm:$0xff]
  %v1083 = vld [vmem:[%s1071 + $0x58] sm:$0xff]
  %v1084 = vld [vmem:[%s1071 + $0x60] sm:$0xff]
  %v1085 = vld [vmem:[%s1071 + $0x68] sm:$0xff]
  %v1086 = vld [vmem:[%s1071 + $0x70] sm:$0xff]
  %v1087 = vld [vmem:[%s1071 + $0x78] sm:$0xff]
  %v1088 = vld [vmem:[%s1071 + $0x80] sm:$0xff]
  %v1089 = vld [vmem:[%s1071 + $0x88] sm:$0xff]
  %v1090 = vld [vmem:[%s1071 + $0x90] sm:$0xff]
  %v1091 = vld [vmem:[%s1071 + $0x98] sm:$0xff]
  %v1092 = vld [vmem:[%s1071 + $0xa0] sm:$0xff]
  %v1093 = vld [vmem:[%s1071 + $0xa8] sm:$0xff]
  %v1094 = vld [vmem:[%s1071 + $0xb0] sm:$0xff]
  %v1095 = vld [vmem:[%s1071 + $0xb8] sm:$0xff]
  %v1096 = vld [vmem:[%s1071 + $0xc0] sm:$0xff]
  %v1097 = vld [vmem:[%s1071 + $0xc8] sm:$0xff]
  %v1098 = vld [vmem:[%s1071 + $0xd0] sm:$0xff]
  %v1099 = vld [vmem:[%s1071 + $0xd8] sm:$0xff]
  %v1100 = vld [vmem:[%s1071 + $0xe0] sm:$0xff]
  %v1101 = vld [vmem:[%s1071 + $0xe8] sm:$0xff]
  %v1102 = vld [vmem:[%s1071 + $0xf0] sm:$0xff]
  %v1103 = vld [vmem:[%s1071 + $0xf8] sm:$0xff]
  %v1136 = vunpack.c.l.b16 %v1072
  %v1137 = vunpack.c.h.b16 %v1072
  %v1138 = vunpack.c.l.b16 %v1073
  %v1139 = vunpack.c.h.b16 %v1073
  %v1140 = vunpack.c.l.b16 %v1074
  %v1141 = vunpack.c.h.b16 %v1074
  %v1142 = vunpack.c.l.b16 %v1075
  %v1143 = vunpack.c.h.b16 %v1075
  %v1144 = vunpack.c.l.b16 %v1076
  %v1145 = vunpack.c.h.b16 %v1076
  %v1146 = vunpack.c.l.b16 %v1077
  %v1147 = vunpack.c.h.b16 %v1077
  %v1148 = vunpack.c.l.b16 %v1078
  %v1149 = vunpack.c.h.b16 %v1078
  %v1150 = vunpack.c.l.b16 %v1079
  %v1151 = vunpack.c.h.b16 %v1079
  %v1152 = vunpack.c.l.b16 %v1080
  %v1153 = vunpack.c.h.b16 %v1080
  %v1154 = vunpack.c.l.b16 %v1081
  %v1155 = vunpack.c.h.b16 %v1081
  %v1156 = vunpack.c.l.b16 %v1082
  %v1157 = vunpack.c.h.b16 %v1082
  %v1158 = vunpack.c.l.b16 %v1083
  %v1159 = vunpack.c.h.b16 %v1083
  %v1160 = vunpack.c.l.b16 %v1084
  %v1161 = vunpack.c.h.b16 %v1084
  %v1162 = vunpack.c.l.b16 %v1085
  %v1163 = vunpack.c.h.b16 %v1085
  %v1164 = vunpack.c.l.b16 %v1086
  %v1165 = vunpack.c.h.b16 %v1086
  %v1166 = vunpack.c.l.b16 %v1087
  %v1167 = vunpack.c.h.b16 %v1087
  %v1168 = vunpack.c.l.b16 %v1088
  %v1169 = vunpack.c.h.b16 %v1088
  %v1170 = vunpack.c.l.b16 %v1089
  %v1171 = vunpack.c.h.b16 %v1089
  %v1172 = vunpack.c.l.b16 %v1090
  %v1173 = vunpack.c.h.b16 %v1090
  %v1174 = vunpack.c.l.b16 %v1091
  %v1175 = vunpack.c.h.b16 %v1091
  %v1176 = vunpack.c.l.b16 %v1092
  %v1177 = vunpack.c.h.b16 %v1092
  %v1178 = vunpack.c.l.b16 %v1093
  %v1179 = vunpack.c.h.b16 %v1093
  %v1180 = vunpack.c.l.b16 %v1094
  %v1181 = vunpack.c.h.b16 %v1094
  %v1182 = vunpack.c.l.b16 %v1095
  %v1183 = vunpack.c.h.b16 %v1095
  %v1184 = vunpack.c.l.b16 %v1096
  %v1185 = vunpack.c.h.b16 %v1096
  %v1186 = vunpack.c.l.b16 %v1097
  %v1187 = vunpack.c.h.b16 %v1097
  %v1188 = vunpack.c.l.b16 %v1098
  %v1189 = vunpack.c.h.b16 %v1098
  %v1190 = vunpack.c.l.b16 %v1099
  %v1191 = vunpack.c.h.b16 %v1099
  %v1192 = vunpack.c.l.b16 %v1100
  %v1193 = vunpack.c.h.b16 %v1100
  %v1194 = vunpack.c.l.b16 %v1101
  %v1195 = vunpack.c.h.b16 %v1101
  %v1196 = vunpack.c.l.b16 %v1102
  %v1197 = vunpack.c.h.b16 %v1102
  %v1198 = vunpack.c.l.b16 %v1103
  %v1199 = vunpack.c.h.b16 %v1103
  %v1200 = vpack.c.b16 %v1138, %v1136
  %v1201 = vpack.c.b16 %v1139, %v1137
  %v1202 = vpack.c.b16 %v1142, %v1140
  %v1203 = vpack.c.b16 %v1143, %v1141
  %v1204 = vpack.c.b16 %v1146, %v1144
  %v1205 = vpack.c.b16 %v1147, %v1145
  %v1206 = vpack.c.b16 %v1150, %v1148
  %v1207 = vpack.c.b16 %v1151, %v1149
  %v1208 = vpack.c.b16 %v1154, %v1152
  %v1209 = vpack.c.b16 %v1155, %v1153
  %v1210 = vpack.c.b16 %v1158, %v1156
  %v1211 = vpack.c.b16 %v1159, %v1157
  %v1212 = vpack.c.b16 %v1162, %v1160
  %v1213 = vpack.c.b16 %v1163, %v1161
  %v1214 = vpack.c.b16 %v1166, %v1164
  %v1215 = vpack.c.b16 %v1167, %v1165
  %v1216 = vpack.c.b16 %v1170, %v1168
  %v1217 = vpack.c.b16 %v1171, %v1169
  %v1218 = vpack.c.b16 %v1174, %v1172
  %v1219 = vpack.c.b16 %v1175, %v1173
  %v1220 = vpack.c.b16 %v1178, %v1176
  %v1221 = vpack.c.b16 %v1179, %v1177
  %v1222 = vpack.c.b16 %v1182, %v1180
  %v1223 = vpack.c.b16 %v1183, %v1181
  %v1224 = vpack.c.b16 %v1186, %v1184
  %v1225 = vpack.c.b16 %v1187, %v1185
  %v1226 = vpack.c.b16 %v1190, %v1188
  %v1227 = vpack.c.b16 %v1191, %v1189
  %v1228 = vpack.c.b16 %v1194, %v1192
  %v1229 = vpack.c.b16 %v1195, %v1193
  %v1230 = vpack.c.b16 %v1198, %v1196
  %v1231 = vpack.c.b16 %v1199, %v1197
  %1264 = vmatprep.subr.bf16.mxu0 %v1201
  %1265 = vmatpush1.bf16.msra.mxu0 %v1200
  %1266 = vmatprep.subr.bf16.mxu0 %v1203
  %1267 = vmatpush1.bf16.msra.mxu0 %v1202
  %1268 = vmatprep.subr.bf16.mxu0 %v1205
  %1269 = vmatpush1.bf16.msra.mxu0 %v1204
  %1270 = vmatprep.subr.bf16.mxu0 %v1207
  %1271 = vmatpush1.bf16.msra.mxu0 %v1206
  %1272 = vmatprep.subr.bf16.mxu0 %v1209
  %1273 = vmatpush1.bf16.msra.mxu0 %v1208
  %1274 = vmatprep.subr.bf16.mxu0 %v1211
  %1275 = vmatpush1.bf16.msra.mxu0 %v1210
  %1276 = vmatprep.subr.bf16.mxu0 %v1213
  %1277 = vmatpush1.bf16.msra.mxu0 %v1212
  %1278 = vmatprep.subr.bf16.mxu0 %v1215
  %1279 = vmatpush1.bf16.msra.mxu0 %v1214
  %1280 = vmatprep.subr.bf16.mxu0 %v1217
  %1281 = vmatpush1.bf16.msra.mxu0 %v1216
  %1282 = vmatprep.subr.bf16.mxu0 %v1219
  %1283 = vmatpush1.bf16.msra.mxu0 %v1218
  %1284 = vmatprep.subr.bf16.mxu0 %v1221
  %1285 = vmatpush1.bf16.msra.mxu0 %v1220
  %1286 = vmatprep.subr.bf16.mxu0 %v1223
  %1287 = vmatpush1.bf16.msra.mxu0 %v1222
  %1288 = vmatprep.subr.bf16.mxu0 %v1225
  %1289 = vmatpush1.bf16.msra.mxu0 %v1224
  %1290 = vmatprep.subr.bf16.mxu0 %v1227
  %1291 = vmatpush1.bf16.msra.mxu0 %v1226
  %1292 = vmatprep.subr.bf16.mxu0 %v1229
  %1293 = vmatpush1.bf16.msra.mxu0 %v1228
  %1294 = vmatprep.subr.bf16.mxu0 %v1231
  %1295 = vmatpush1.bf16.msra.mxu0 %v1230
  %1296 = vmatprep.mubr.bf16.mxu0 %v1070
  %1297 = vmatmul.mubr.bf16.gmra.mrb[0].mxu0 %v1069
  %v1298 = vpop.f32.mrb[0].mxu0
  %v1299 = vadd.f32 0.0, %v1298
  %v1300 = vpop.f32.mrb[0].mxu0
  %v1301 = vadd.f32 0.0, %v1300
  %v1302 = vpop.f32.mrb[0].mxu0
  %v1303 = vpop.f32.mrb[0].mxu0
  %1304 = vdwg.mxu0
  %v1307 = vcombine.low %v1299, %v1301
  %v1309 = vunpack.c.l.s4 1983009808
  %v1310 = vunpack.c.0.s8 %v1309
  %v1311 = vlaneseq
  %v1312 = vshrl.u32 %v1311, 7
  %v1313 = vsub.s32 %v1310, %v1312
  %v1314 = vrot.slane %v1307, %v1313
  %s1316 = scalar_lea.vmem %s2, 16
  %1317 = vst [vmem:[%s1316] sm:$0xf] %v1314
  %s1318 = scalar_lea.vmem %s0, 20
  %v1319 = vld [vmem:[%s1318] sm:$0xf]
  %v1322 = vunpack.c.l.s4 1983009808
  %v1323 = vunpack.c.0.s8 %v1322
  %v1324 = vlaneseq
  %v1325 = vshrl.u32 %v1324, 7
  %v1326 = vsub.s32 %v1323, %v1325
  %v1327 = vrot.slane %v1319, %v1326
  %v1328 = vcombine.high %v1327, %v1327
  %v1331 = vpack.c.bf16 %v1327, %v1327
  %v1332 = vpack.c.bf16 %v1328, %v1328
  %s1333 = scalar_lea.vmem %s1, 1280
  %v1334 = vld [vmem:[%s1333] sm:$0xff]
  %v1335 = vld [vmem:[%s1333 + $0x8] sm:$0xff]
  %v1336 = vld [vmem:[%s1333 + $0x10] sm:$0xff]
  %v1337 = vld [vmem:[%s1333 + $0x18] sm:$0xff]
  %v1338 = vld [vmem:[%s1333 + $0x20] sm:$0xff]
  %v1339 = vld [vmem:[%s1333 + $0x28] sm:$0xff]
  %v1340 = vld [vmem:[%s1333 + $0x30] sm:$0xff]
  %v1341 = vld [vmem:[%s1333 + $0x38] sm:$0xff]
  %v1342 = vld [vmem:[%s1333 + $0x40] sm:$0xff]
  %v1343 = vld [vmem:[%s1333 + $0x48] sm:$0xff]
  %v1344 = vld [vmem:[%s1333 + $0x50] sm:$0xff]
  %v1345 = vld [vmem:[%s1333 + $0x58] sm:$0xff]
  %v1346 = vld [vmem:[%s1333 + $0x60] sm:$0xff]
  %v1347 = vld [vmem:[%s1333 + $0x68] sm:$0xff]
  %v1348 = vld [vmem:[%s1333 + $0x70] sm:$0xff]
  %v1349 = vld [vmem:[%s1333 + $0x78] sm:$0xff]
  %v1350 = vld [vmem:[%s1333 + $0x80] sm:$0xff]
  %v1351 = vld [vmem:[%s1333 + $0x88] sm:$0xff]
  %v1352 = vld [vmem:[%s1333 + $0x90] sm:$0xff]
  %v1353 = vld [vmem:[%s1333 + $0x98] sm:$0xff]
  %v1354 = vld [vmem:[%s1333 + $0xa0] sm:$0xff]
  %v1355 = vld [vmem:[%s1333 + $0xa8] sm:$0xff]
  %v1356 = vld [vmem:[%s1333 + $0xb0] sm:$0xff]
  %v1357 = vld [vmem:[%s1333 + $0xb8] sm:$0xff]
  %v1358 = vld [vmem:[%s1333 + $0xc0] sm:$0xff]
  %v1359 = vld [vmem:[%s1333 + $0xc8] sm:$0xff]
  %v1360 = vld [vmem:[%s1333 + $0xd0] sm:$0xff]
  %v1361 = vld [vmem:[%s1333 + $0xd8] sm:$0xff]
  %v1362 = vld [vmem:[%s1333 + $0xe0] sm:$0xff]
  %v1363 = vld [vmem:[%s1333 + $0xe8] sm:$0xff]
  %v1364 = vld [vmem:[%s1333 + $0xf0] sm:$0xff]
  %v1365 = vld [vmem:[%s1333 + $0xf8] sm:$0xff]
  %v1398 = vunpack.c.l.b16 %v1334
  %v1399 = vunpack.c.h.b16 %v1334
  %v1400 = vunpack.c.l.b16 %v1335
  %v1401 = vunpack.c.h.b16 %v1335
  %v1402 = vunpack.c.l.b16 %v1336
  %v1403 = vunpack.c.h.b16 %v1336
  %v1404 = vunpack.c.l.b16 %v1337
  %v1405 = vunpack.c.h.b16 %v1337
  %v1406 = vunpack.c.l.b16 %v1338
  %v1407 = vunpack.c.h.b16 %v1338
  %v1408 = vunpack.c.l.b16 %v1339
  %v1409 = vunpack.c.h.b16 %v1339
  %v1410 = vunpack.c.l.b16 %v1340
  %v1411 = vunpack.c.h.b16 %v1340
  %v1412 = vunpack.c.l.b16 %v1341
  %v1413 = vunpack.c.h.b16 %v1341
  %v1414 = vunpack.c.l.b16 %v1342
  %v1415 = vunpack.c.h.b16 %v1342
  %v1416 = vunpack.c.l.b16 %v1343
  %v1417 = vunpack.c.h.b16 %v1343
  %v1418 = vunpack.c.l.b16 %v1344
  %v1419 = vunpack.c.h.b16 %v1344
  %v1420 = vunpack.c.l.b16 %v1345
  %v1421 = vunpack.c.h.b16 %v1345
  %v1422 = vunpack.c.l.b16 %v1346
  %v1423 = vunpack.c.h.b16 %v1346
  %v1424 = vunpack.c.l.b16 %v1347
  %v1425 = vunpack.c.h.b16 %v1347
  %v1426 = vunpack.c.l.b16 %v1348
  %v1427 = vunpack.c.h.b16 %v1348
  %v1428 = vunpack.c.l.b16 %v1349
  %v1429 = vunpack.c.h.b16 %v1349
  %v1430 = vunpack.c.l.b16 %v1350
  %v1431 = vunpack.c.h.b16 %v1350
  %v1432 = vunpack.c.l.b16 %v1351
  %v1433 = vunpack.c.h.b16 %v1351
  %v1434 = vunpack.c.l.b16 %v1352
  %v1435 = vunpack.c.h.b16 %v1352
  %v1436 = vunpack.c.l.b16 %v1353
  %v1437 = vunpack.c.h.b16 %v1353
  %v1438 = vunpack.c.l.b16 %v1354
  %v1439 = vunpack.c.h.b16 %v1354
  %v1440 = vunpack.c.l.b16 %v1355
  %v1441 = vunpack.c.h.b16 %v1355
  %v1442 = vunpack.c.l.b16 %v1356
  %v1443 = vunpack.c.h.b16 %v1356
  %v1444 = vunpack.c.l.b16 %v1357
  %v1445 = vunpack.c.h.b16 %v1357
  %v1446 = vunpack.c.l.b16 %v1358
  %v1447 = vunpack.c.h.b16 %v1358
  %v1448 = vunpack.c.l.b16 %v1359
  %v1449 = vunpack.c.h.b16 %v1359
  %v1450 = vunpack.c.l.b16 %v1360
  %v1451 = vunpack.c.h.b16 %v1360
  %v1452 = vunpack.c.l.b16 %v1361
  %v1453 = vunpack.c.h.b16 %v1361
  %v1454 = vunpack.c.l.b16 %v1362
  %v1455 = vunpack.c.h.b16 %v1362
  %v1456 = vunpack.c.l.b16 %v1363
  %v1457 = vunpack.c.h.b16 %v1363
  %v1458 = vunpack.c.l.b16 %v1364
  %v1459 = vunpack.c.h.b16 %v1364
  %v1460 = vunpack.c.l.b16 %v1365
  %v1461 = vunpack.c.h.b16 %v1365
  %v1462 = vpack.c.b16 %v1400, %v1398
  %v1463 = vpack.c.b16 %v1401, %v1399
  %v1464 = vpack.c.b16 %v1404, %v1402
  %v1465 = vpack.c.b16 %v1405, %v1403
  %v1466 = vpack.c.b16 %v1408, %v1406
  %v1467 = vpack.c.b16 %v1409, %v1407
  %v1468 = vpack.c.b16 %v1412, %v1410
  %v1469 = vpack.c.b16 %v1413, %v1411
  %v1470 = vpack.c.b16 %v1416, %v1414
  %v1471 = vpack.c.b16 %v1417, %v1415
  %v1472 = vpack.c.b16 %v1420, %v1418
  %v1473 = vpack.c.b16 %v1421, %v1419
  %v1474 = vpack.c.b16 %v1424, %v1422
  %v1475 = vpack.c.b16 %v1425, %v1423
  %v1476 = vpack.c.b16 %v1428, %v1426
  %v1477 = vpack.c.b16 %v1429, %v1427
  %v1478 = vpack.c.b16 %v1432, %v1430
  %v1479 = vpack.c.b16 %v1433, %v1431
  %v1480 = vpack.c.b16 %v1436, %v1434
  %v1481 = vpack.c.b16 %v1437, %v1435
  %v1482 = vpack.c.b16 %v1440, %v1438
  %v1483 = vpack.c.b16 %v1441, %v1439
  %v1484 = vpack.c.b16 %v1444, %v1442
  %v1485 = vpack.c.b16 %v1445, %v1443
  %v1486 = vpack.c.b16 %v1448, %v1446
  %v1487 = vpack.c.b16 %v1449, %v1447
  %v1488 = vpack.c.b16 %v1452, %v1450
  %v1489 = vpack.c.b16 %v1453, %v1451
  %v1490 = vpack.c.b16 %v1456, %v1454
  %v1491 = vpack.c.b16 %v1457, %v1455
  %v1492 = vpack.c.b16 %v1460, %v1458
  %v1493 = vpack.c.b16 %v1461, %v1459
  %1526 = vmatprep.subr.bf16.mxu0 %v1463
  %1527 = vmatpush1.bf16.msra.mxu0 %v1462
  %1528 = vmatprep.subr.bf16.mxu0 %v1465
  %1529 = vmatpush1.bf16.msra.mxu0 %v1464
  %1530 = vmatprep.subr.bf16.mxu0 %v1467
  %1531 = vmatpush1.bf16.msra.mxu0 %v1466
  %1532 = vmatprep.subr.bf16.mxu0 %v1469
  %1533 = vmatpush1.bf16.msra.mxu0 %v1468
  %1534 = vmatprep.subr.bf16.mxu0 %v1471
  %1535 = vmatpush1.bf16.msra.mxu0 %v1470
  %1536 = vmatprep.subr.bf16.mxu0 %v1473
  %1537 = vmatpush1.bf16.msra.mxu0 %v1472
  %1538 = vmatprep.subr.bf16.mxu0 %v1475
  %1539 = vmatpush1.bf16.msra.mxu0 %v1474
  %1540 = vmatprep.subr.bf16.mxu0 %v1477
  %1541 = vmatpush1.bf16.msra.mxu0 %v1476
  %1542 = vmatprep.subr.bf16.mxu0 %v1479
  %1543 = vmatpush1.bf16.msra.mxu0 %v1478
  %1544 = vmatprep.subr.bf16.mxu0 %v1481
  %1545 = vmatpush1.bf16.msra.mxu0 %v1480
  %1546 = vmatprep.subr.bf16.mxu0 %v1483
  %1547 = vmatpush1.bf16.msra.mxu0 %v1482
  %1548 = vmatprep.subr.bf16.mxu0 %v1485
  %1549 = vmatpush1.bf16.msra.mxu0 %v1484
  %1550 = vmatprep.subr.bf16.mxu0 %v1487
  %1551 = vmatpush1.bf16.msra.mxu0 %v1486
  %1552 = vmatprep.subr.bf16.mxu0 %v1489
  %1553 = vmatpush1.bf16.msra.mxu0 %v1488
  %1554 = vmatprep.subr.bf16.mxu0 %v1491
  %1555 = vmatpush1.bf16.msra.mxu0 %v1490
  %1556 = vmatprep.subr.bf16.mxu0 %v1493
  %1557 = vmatpush1.bf16.msra.mxu0 %v1492
  %1558 = vmatprep.mubr.bf16.mxu0 %v1332
  %1559 = vmatmul.mubr.bf16.gmra.mrb[0].mxu0 %v1331
  %v1560 = vpop.f32.mrb[0].mxu0
  %v1561 = vadd.f32 0.0, %v1560
  %v1562 = vpop.f32.mrb[0].mxu0
  %v1563 = vadd.f32 0.0, %v1562
  %v1564 = vpop.f32.mrb[0].mxu0
  %v1565 = vpop.f32.mrb[0].mxu0
  %1566 = vdwg.mxu0
  %v1569 = vcombine.low %v1561, %v1563
  %v1571 = vunpack.c.l.s4 1983009808
  %v1572 = vunpack.c.0.s8 %v1571
  %v1573 = vlaneseq
  %v1574 = vshrl.u32 %v1573, 7
  %v1575 = vsub.s32 %v1572, %v1574
  %v1576 = vrot.slane %v1569, %v1575
  %s1578 = scalar_lea.vmem %s2, 20
  %1579 = vst [vmem:[%s1578] sm:$0xf] %v1576
  %s1580 = scalar_lea.vmem %s0, 24
  %v1581 = vld [vmem:[%s1580] sm:$0xf]
  %v1584 = vunpack.c.l.s4 1983009808
  %v1585 = vunpack.c.0.s8 %v1584
  %v1586 = vlaneseq
  %v1587 = vshrl.u32 %v1586, 7
  %v1588 = vsub.s32 %v1585, %v1587
  %v1589 = vrot.slane %v1581, %v1588
  %v1590 = vcombine.high %v1589, %v1589
  %v1593 = vpack.c.bf16 %v1589, %v1589
  %v1594 = vpack.c.bf16 %v1590, %v1590
  %s1595 = scalar_lea.vmem %s1, 1536
  %v1596 = vld [vmem:[%s1595] sm:$0xff]
  %v1597 = vld [vmem:[%s1595 + $0x8] sm:$0xff]
  %v1598 = vld [vmem:[%s1595 + $0x10] sm:$0xff]
  %v1599 = vld [vmem:[%s1595 + $0x18] sm:$0xff]
  %v1600 = vld [vmem:[%s1595 + $0x20] sm:$0xff]
  %v1601 = vld [vmem:[%s1595 + $0x28] sm:$0xff]
  %v1602 = vld [vmem:[%s1595 + $0x30] sm:$0xff]
  %v1603 = vld [vmem:[%s1595 + $0x38] sm:$0xff]
  %v1604 = vld [vmem:[%s1595 + $0x40] sm:$0xff]
  %v1605 = vld [vmem:[%s1595 + $0x48] sm:$0xff]
  %v1606 = vld [vmem:[%s1595 + $0x50] sm:$0xff]
  %v1607 = vld [vmem:[%s1595 + $0x58] sm:$0xff]
  %v1608 = vld [vmem:[%s1595 + $0x60] sm:$0xff]
  %v1609 = vld [vmem:[%s1595 + $0x68] sm:$0xff]
  %v1610 = vld [vmem:[%s1595 + $0x70] sm:$0xff]
  %v1611 = vld [vmem:[%s1595 + $0x78] sm:$0xff]
  %v1612 = vld [vmem:[%s1595 + $0x80] sm:$0xff]
  %v1613 = vld [vmem:[%s1595 + $0x88] sm:$0xff]
  %v1614 = vld [vmem:[%s1595 + $0x90] sm:$0xff]
  %v1615 = vld [vmem:[%s1595 + $0x98] sm:$0xff]
  %v1616 = vld [vmem:[%s1595 + $0xa0] sm:$0xff]
  %v1617 = vld [vmem:[%s1595 + $0xa8] sm:$0xff]
  %v1618 = vld [vmem:[%s1595 + $0xb0] sm:$0xff]
  %v1619 = vld [vmem:[%s1595 + $0xb8] sm:$0xff]
  %v1620 = vld [vmem:[%s1595 + $0xc0] sm:$0xff]
  %v1621 = vld [vmem:[%s1595 + $0xc8] sm:$0xff]
  %v1622 = vld [vmem:[%s1595 + $0xd0] sm:$0xff]
  %v1623 = vld [vmem:[%s1595 + $0xd8] sm:$0xff]
  %v1624 = vld [vmem:[%s1595 + $0xe0] sm:$0xff]
  %v1625 = vld [vmem:[%s1595 + $0xe8] sm:$0xff]
  %v1626 = vld [vmem:[%s1595 + $0xf0] sm:$0xff]
  %v1627 = vld [vmem:[%s1595 + $0xf8] sm:$0xff]
  %v1660 = vunpack.c.l.b16 %v1596
  %v1661 = vunpack.c.h.b16 %v1596
  %v1662 = vunpack.c.l.b16 %v1597
  %v1663 = vunpack.c.h.b16 %v1597
  %v1664 = vunpack.c.l.b16 %v1598
  %v1665 = vunpack.c.h.b16 %v1598
  %v1666 = vunpack.c.l.b16 %v1599
  %v1667 = vunpack.c.h.b16 %v1599
  %v1668 = vunpack.c.l.b16 %v1600
  %v1669 = vunpack.c.h.b16 %v1600
  %v1670 = vunpack.c.l.b16 %v1601
  %v1671 = vunpack.c.h.b16 %v1601
  %v1672 = vunpack.c.l.b16 %v1602
  %v1673 = vunpack.c.h.b16 %v1602
  %v1674 = vunpack.c.l.b16 %v1603
  %v1675 = vunpack.c.h.b16 %v1603
  %v1676 = vunpack.c.l.b16 %v1604
  %v1677 = vunpack.c.h.b16 %v1604
  %v1678 = vunpack.c.l.b16 %v1605
  %v1679 = vunpack.c.h.b16 %v1605
  %v1680 = vunpack.c.l.b16 %v1606
  %v1681 = vunpack.c.h.b16 %v1606
  %v1682 = vunpack.c.l.b16 %v1607
  %v1683 = vunpack.c.h.b16 %v1607
  %v1684 = vunpack.c.l.b16 %v1608
  %v1685 = vunpack.c.h.b16 %v1608
  %v1686 = vunpack.c.l.b16 %v1609
  %v1687 = vunpack.c.h.b16 %v1609
  %v1688 = vunpack.c.l.b16 %v1610
  %v1689 = vunpack.c.h.b16 %v1610
  %v1690 = vunpack.c.l.b16 %v1611
  %v1691 = vunpack.c.h.b16 %v1611
  %v1692 = vunpack.c.l.b16 %v1612
  %v1693 = vunpack.c.h.b16 %v1612
  %v1694 = vunpack.c.l.b16 %v1613
  %v1695 = vunpack.c.h.b16 %v1613
  %v1696 = vunpack.c.l.b16 %v1614
  %v1697 = vunpack.c.h.b16 %v1614
  %v1698 = vunpack.c.l.b16 %v1615
  %v1699 = vunpack.c.h.b16 %v1615
  %v1700 = vunpack.c.l.b16 %v1616
  %v1701 = vunpack.c.h.b16 %v1616
  %v1702 = vunpack.c.l.b16 %v1617
  %v1703 = vunpack.c.h.b16 %v1617
  %v1704 = vunpack.c.l.b16 %v1618
  %v1705 = vunpack.c.h.b16 %v1618
  %v1706 = vunpack.c.l.b16 %v1619
  %v1707 = vunpack.c.h.b16 %v1619
  %v1708 = vunpack.c.l.b16 %v1620
  %v1709 = vunpack.c.h.b16 %v1620
  %v1710 = vunpack.c.l.b16 %v1621
  %v1711 = vunpack.c.h.b16 %v1621
  %v1712 = vunpack.c.l.b16 %v1622
  %v1713 = vunpack.c.h.b16 %v1622
  %v1714 = vunpack.c.l.b16 %v1623
  %v1715 = vunpack.c.h.b16 %v1623
  %v1716 = vunpack.c.l.b16 %v1624
  %v1717 = vunpack.c.h.b16 %v1624
  %v1718 = vunpack.c.l.b16 %v1625
  %v1719 = vunpack.c.h.b16 %v1625
  %v1720 = vunpack.c.l.b16 %v1626
  %v1721 = vunpack.c.h.b16 %v1626
  %v1722 = vunpack.c.l.b16 %v1627
  %v1723 = vunpack.c.h.b16 %v1627
  %v1724 = vpack.c.b16 %v1662, %v1660
  %v1725 = vpack.c.b16 %v1663, %v1661
  %v1726 = vpack.c.b16 %v1666, %v1664
  %v1727 = vpack.c.b16 %v1667, %v1665
  %v1728 = vpack.c.b16 %v1670, %v1668
  %v1729 = vpack.c.b16 %v1671, %v1669
  %v1730 = vpack.c.b16 %v1674, %v1672
  %v1731 = vpack.c.b16 %v1675, %v1673
  %v1732 = vpack.c.b16 %v1678, %v1676
  %v1733 = vpack.c.b16 %v1679, %v1677
  %v1734 = vpack.c.b16 %v1682, %v1680
  %v1735 = vpack.c.b16 %v1683, %v1681
  %v1736 = vpack.c.b16 %v1686, %v1684
  %v1737 = vpack.c.b16 %v1687, %v1685
  %v1738 = vpack.c.b16 %v1690, %v1688
  %v1739 = vpack.c.b16 %v1691, %v1689
  %v1740 = vpack.c.b16 %v1694, %v1692
  %v1741 = vpack.c.b16 %v1695, %v1693
  %v1742 = vpack.c.b16 %v1698, %v1696
  %v1743 = vpack.c.b16 %v1699, %v1697
  %v1744 = vpack.c.b16 %v1702, %v1700
  %v1745 = vpack.c.b16 %v1703, %v1701
  %v1746 = vpack.c.b16 %v1706, %v1704
  %v1747 = vpack.c.b16 %v1707, %v1705
  %v1748 = vpack.c.b16 %v1710, %v1708
  %v1749 = vpack.c.b16 %v1711, %v1709
  %v1750 = vpack.c.b16 %v1714, %v1712
  %v1751 = vpack.c.b16 %v1715, %v1713
  %v1752 = vpack.c.b16 %v1718, %v1716
  %v1753 = vpack.c.b16 %v1719, %v1717
  %v1754 = vpack.c.b16 %v1722, %v1720
  %v1755 = vpack.c.b16 %v1723, %v1721
  %1788 = vmatprep.subr.bf16.mxu0 %v1725
  %1789 = vmatpush1.bf16.msra.mxu0 %v1724
  %1790 = vmatprep.subr.bf16.mxu0 %v1727
  %1791 = vmatpush1.bf16.msra.mxu0 %v1726
  %1792 = vmatprep.subr.bf16.mxu0 %v1729
  %1793 = vmatpush1.bf16.msra.mxu0 %v1728
  %1794 = vmatprep.subr.bf16.mxu0 %v1731
  %1795 = vmatpush1.bf16.msra.mxu0 %v1730
  %1796 = vmatprep.subr.bf16.mxu0 %v1733
  %1797 = vmatpush1.bf16.msra.mxu0 %v1732
  %1798 = vmatprep.subr.bf16.mxu0 %v1735
  %1799 = vmatpush1.bf16.msra.mxu0 %v1734
  %1800 = vmatprep.subr.bf16.mxu0 %v1737
  %1801 = vmatpush1.bf16.msra.mxu0 %v1736
  %1802 = vmatprep.subr.bf16.mxu0 %v1739
  %1803 = vmatpush1.bf16.msra.mxu0 %v1738
  %1804 = vmatprep.subr.bf16.mxu0 %v1741
  %1805 = vmatpush1.bf16.msra.mxu0 %v1740
  %1806 = vmatprep.subr.bf16.mxu0 %v1743
  %1807 = vmatpush1.bf16.msra.mxu0 %v1742
  %1808 = vmatprep.subr.bf16.mxu0 %v1745
  %1809 = vmatpush1.bf16.msra.mxu0 %v1744
  %1810 = vmatprep.subr.bf16.mxu0 %v1747
  %1811 = vmatpush1.bf16.msra.mxu0 %v1746
  %1812 = vmatprep.subr.bf16.mxu0 %v1749
  %1813 = vmatpush1.bf16.msra.mxu0 %v1748
  %1814 = vmatprep.subr.bf16.mxu0 %v1751
  %1815 = vmatpush1.bf16.msra.mxu0 %v1750
  %1816 = vmatprep.subr.bf16.mxu0 %v1753
  %1817 = vmatpush1.bf16.msra.mxu0 %v1752
  %1818 = vmatprep.subr.bf16.mxu0 %v1755
  %1819 = vmatpush1.bf16.msra.mxu0 %v1754
  %1820 = vmatprep.mubr.bf16.mxu0 %v1594
  %1821 = vmatmul.mubr.bf16.gmra.mrb[0].mxu0 %v1593
  %v1822 = vpop.f32.mrb[0].mxu0
  %v1823 = vadd.f32 0.0, %v1822
  %v1824 = vpop.f32.mrb[0].mxu0
  %v1825 = vadd.f32 0.0, %v1824
  %v1826 = vpop.f32.mrb[0].mxu0
  %v1827 = vpop.f32.mrb[0].mxu0
  %1828 = vdwg.mxu0
  %v1831 = vcombine.low %v1823, %v1825
  %v1833 = vunpack.c.l.s4 1983009808
  %v1834 = vunpack.c.0.s8 %v1833
  %v1835 = vlaneseq
  %v1836 = vshrl.u32 %v1835, 7
  %v1837 = vsub.s32 %v1834, %v1836
  %v1838 = vrot.slane %v1831, %v1837
  %s1840 = scalar_lea.vmem %s2, 24
  %1841 = vst [vmem:[%s1840] sm:$0xf] %v1838
  %s1842 = scalar_lea.vmem %s0, 28
  %v1843 = vld [vmem:[%s1842] sm:$0xf]
  %v1846 = vunpack.c.l.s4 1983009808
  %v1847 = vunpack.c.0.s8 %v1846
  %v1848 = vlaneseq
  %v1849 = vshrl.u32 %v1848, 7
  %v1850 = vsub.s32 %v1847, %v1849
  %v1851 = vrot.slane %v1843, %v1850
  %v1852 = vcombine.high %v1851, %v1851
  %v1855 = vpack.c.bf16 %v1851, %v1851
  %v1856 = vpack.c.bf16 %v1852, %v1852
  %s1857 = scalar_lea.vmem %s1, 1792
  %v1858 = vld [vmem:[%s1857] sm:$0xff]
  %v1859 = vld [vmem:[%s1857 + $0x8] sm:$0xff]
  %v1860 = vld [vmem:[%s1857 + $0x10] sm:$0xff]
  %v1861 = vld [vmem:[%s1857 + $0x18] sm:$0xff]
  %v1862 = vld [vmem:[%s1857 + $0x20] sm:$0xff]
  %v1863 = vld [vmem:[%s1857 + $0x28] sm:$0xff]
  %v1864 = vld [vmem:[%s1857 + $0x30] sm:$0xff]
  %v1865 = vld [vmem:[%s1857 + $0x38] sm:$0xff]
  %v1866 = vld [vmem:[%s1857 + $0x40] sm:$0xff]
  %v1867 = vld [vmem:[%s1857 + $0x48] sm:$0xff]
  %v1868 = vld [vmem:[%s1857 + $0x50] sm:$0xff]
  %v1869 = vld [vmem:[%s1857 + $0x58] sm:$0xff]
  %v1870 = vld [vmem:[%s1857 + $0x60] sm:$0xff]
  %v1871 = vld [vmem:[%s1857 + $0x68] sm:$0xff]
  %v1872 = vld [vmem:[%s1857 + $0x70] sm:$0xff]
  %v1873 = vld [vmem:[%s1857 + $0x78] sm:$0xff]
  %v1874 = vld [vmem:[%s1857 + $0x80] sm:$0xff]
  %v1875 = vld [vmem:[%s1857 + $0x88] sm:$0xff]
  %v1876 = vld [vmem:[%s1857 + $0x90] sm:$0xff]
  %v1877 = vld [vmem:[%s1857 + $0x98] sm:$0xff]
  %v1878 = vld [vmem:[%s1857 + $0xa0] sm:$0xff]
  %v1879 = vld [vmem:[%s1857 + $0xa8] sm:$0xff]
  %v1880 = vld [vmem:[%s1857 + $0xb0] sm:$0xff]
  %v1881 = vld [vmem:[%s1857 + $0xb8] sm:$0xff]
  %v1882 = vld [vmem:[%s1857 + $0xc0] sm:$0xff]
  %v1883 = vld [vmem:[%s1857 + $0xc8] sm:$0xff]
  %v1884 = vld [vmem:[%s1857 + $0xd0] sm:$0xff]
  %v1885 = vld [vmem:[%s1857 + $0xd8] sm:$0xff]
  %v1886 = vld [vmem:[%s1857 + $0xe0] sm:$0xff]
  %v1887 = vld [vmem:[%s1857 + $0xe8] sm:$0xff]
  %v1888 = vld [vmem:[%s1857 + $0xf0] sm:$0xff]
  %v1889 = vld [vmem:[%s1857 + $0xf8] sm:$0xff]
  %v1922 = vunpack.c.l.b16 %v1858
  %v1923 = vunpack.c.h.b16 %v1858
  %v1924 = vunpack.c.l.b16 %v1859
  %v1925 = vunpack.c.h.b16 %v1859
  %v1926 = vunpack.c.l.b16 %v1860
  %v1927 = vunpack.c.h.b16 %v1860
  %v1928 = vunpack.c.l.b16 %v1861
  %v1929 = vunpack.c.h.b16 %v1861
  %v1930 = vunpack.c.l.b16 %v1862
  %v1931 = vunpack.c.h.b16 %v1862
  %v1932 = vunpack.c.l.b16 %v1863
  %v1933 = vunpack.c.h.b16 %v1863
  %v1934 = vunpack.c.l.b16 %v1864
  %v1935 = vunpack.c.h.b16 %v1864
  %v1936 = vunpack.c.l.b16 %v1865
  %v1937 = vunpack.c.h.b16 %v1865
  %v1938 = vunpack.c.l.b16 %v1866
  %v1939 = vunpack.c.h.b16 %v1866
  %v1940 = vunpack.c.l.b16 %v1867
  %v1941 = vunpack.c.h.b16 %v1867
  %v1942 = vunpack.c.l.b16 %v1868
  %v1943 = vunpack.c.h.b16 %v1868
  %v1944 = vunpack.c.l.b16 %v1869
  %v1945 = vunpack.c.h.b16 %v1869
  %v1946 = vunpack.c.l.b16 %v1870
  %v1947 = vunpack.c.h.b16 %v1870
  %v1948 = vunpack.c.l.b16 %v1871
  %v1949 = vunpack.c.h.b16 %v1871
  %v1950 = vunpack.c.l.b16 %v1872
  %v1951 = vunpack.c.h.b16 %v1872
  %v1952 = vunpack.c.l.b16 %v1873
  %v1953 = vunpack.c.h.b16 %v1873
  %v1954 = vunpack.c.l.b16 %v1874
  %v1955 = vunpack.c.h.b16 %v1874
  %v1956 = vunpack.c.l.b16 %v1875
  %v1957 = vunpack.c.h.b16 %v1875
  %v1958 = vunpack.c.l.b16 %v1876
  %v1959 = vunpack.c.h.b16 %v1876
  %v1960 = vunpack.c.l.b16 %v1877
  %v1961 = vunpack.c.h.b16 %v1877
  %v1962 = vunpack.c.l.b16 %v1878
  %v1963 = vunpack.c.h.b16 %v1878
  %v1964 = vunpack.c.l.b16 %v1879
  %v1965 = vunpack.c.h.b16 %v1879
  %v1966 = vunpack.c.l.b16 %v1880
  %v1967 = vunpack.c.h.b16 %v1880
  %v1968 = vunpack.c.l.b16 %v1881
  %v1969 = vunpack.c.h.b16 %v1881
  %v1970 = vunpack.c.l.b16 %v1882
  %v1971 = vunpack.c.h.b16 %v1882
  %v1972 = vunpack.c.l.b16 %v1883
  %v1973 = vunpack.c.h.b16 %v1883
  %v1974 = vunpack.c.l.b16 %v1884
  %v1975 = vunpack.c.h.b16 %v1884
  %v1976 = vunpack.c.l.b16 %v1885
  %v1977 = vunpack.c.h.b16 %v1885
  %v1978 = vunpack.c.l.b16 %v1886
  %v1979 = vunpack.c.h.b16 %v1886
  %v1980 = vunpack.c.l.b16 %v1887
  %v1981 = vunpack.c.h.b16 %v1887
  %v1982 = vunpack.c.l.b16 %v1888
  %v1983 = vunpack.c.h.b16 %v1888
  %v1984 = vunpack.c.l.b16 %v1889
  %v1985 = vunpack.c.h.b16 %v1889
  %v1986 = vpack.c.b16 %v1924, %v1922
  %v1987 = vpack.c.b16 %v1925, %v1923
  %v1988 = vpack.c.b16 %v1928, %v1926
  %v1989 = vpack.c.b16 %v1929, %v1927
  %v1990 = vpack.c.b16 %v1932, %v1930
  %v1991 = vpack.c.b16 %v1933, %v1931
  %v1992 = vpack.c.b16 %v1936, %v1934
  %v1993 = vpack.c.b16 %v1937, %v1935
  %v1994 = vpack.c.b16 %v1940, %v1938
  %v1995 = vpack.c.b16 %v1941, %v1939
  %v1996 = vpack.c.b16 %v1944, %v1942
  %v1997 = vpack.c.b16 %v1945, %v1943
  %v1998 = vpack.c.b16 %v1948, %v1946
  %v1999 = vpack.c.b16 %v1949, %v1947
  %v2000 = vpack.c.b16 %v1952, %v1950
  %v2001 = vpack.c.b16 %v1953, %v1951
  %v2002 = vpack.c.b16 %v1956, %v1954
  %v2003 = vpack.c.b16 %v1957, %v1955
  %v2004 = vpack.c.b16 %v1960, %v1958
  %v2005 = vpack.c.b16 %v1961, %v1959
  %v2006 = vpack.c.b16 %v1964, %v1962
  %v2007 = vpack.c.b16 %v1965, %v1963
  %v2008 = vpack.c.b16 %v1968, %v1966
  %v2009 = vpack.c.b16 %v1969, %v1967
  %v2010 = vpack.c.b16 %v1972, %v1970
  %v2011 = vpack.c.b16 %v1973, %v1971
  %v2012 = vpack.c.b16 %v1976, %v1974
  %v2013 = vpack.c.b16 %v1977, %v1975
  %v2014 = vpack.c.b16 %v1980, %v1978
  %v2015 = vpack.c.b16 %v1981, %v1979
  %v2016 = vpack.c.b16 %v1984, %v1982
  %v2017 = vpack.c.b16 %v1985, %v1983
  %2050 = vmatprep.subr.bf16.mxu0 %v1987
  %2051 = vmatpush1.bf16.msra.mxu0 %v1986
  %2052 = vmatprep.subr.bf16.mxu0 %v1989
  %2053 = vmatpush1.bf16.msra.mxu0 %v1988
  %2054 = vmatprep.subr.bf16.mxu0 %v1991
  %2055 = vmatpush1.bf16.msra.mxu0 %v1990
  %2056 = vmatprep.subr.bf16.mxu0 %v1993
  %2057 = vmatpush1.bf16.msra.mxu0 %v1992
  %2058 = vmatprep.subr.bf16.mxu0 %v1995
  %2059 = vmatpush1.bf16.msra.mxu0 %v1994
  %2060 = vmatprep.subr.bf16.mxu0 %v1997
  %2061 = vmatpush1.bf16.msra.mxu0 %v1996
  %2062 = vmatprep.subr.bf16.mxu0 %v1999
  %2063 = vmatpush1.bf16.msra.mxu0 %v1998
  %2064 = vmatprep.subr.bf16.mxu0 %v2001
  %2065 = vmatpush1.bf16.msra.mxu0 %v2000
  %2066 = vmatprep.subr.bf16.mxu0 %v2003
  %2067 = vmatpush1.bf16.msra.mxu0 %v2002
  %2068 = vmatprep.subr.bf16.mxu0 %v2005
  %2069 = vmatpush1.bf16.msra.mxu0 %v2004
  %2070 = vmatprep.subr.bf16.mxu0 %v2007
  %2071 = vmatpush1.bf16.msra.mxu0 %v2006
  %2072 = vmatprep.subr.bf16.mxu0 %v2009
  %2073 = vmatpush1.bf16.msra.mxu0 %v2008
  %2074 = vmatprep.subr.bf16.mxu0 %v2011
  %2075 = vmatpush1.bf16.msra.mxu0 %v2010
  %2076 = vmatprep.subr.bf16.mxu0 %v2013
  %2077 = vmatpush1.bf16.msra.mxu0 %v2012
  %2078 = vmatprep.subr.bf16.mxu0 %v2015
  %2079 = vmatpush1.bf16.msra.mxu0 %v2014
  %2080 = vmatprep.subr.bf16.mxu0 %v2017
  %2081 = vmatpush1.bf16.msra.mxu0 %v2016
  %2082 = vmatprep.mubr.bf16.mxu0 %v1856
  %2083 = vmatmul.mubr.bf16.gmra.mrb[0].mxu0 %v1855
  %v2084 = vpop.f32.mrb[0].mxu0
  %v2085 = vadd.f32 0.0, %v2084
  %v2086 = vpop.f32.mrb[0].mxu0
  %v2087 = vadd.f32 0.0, %v2086
  %v2088 = vpop.f32.mrb[0].mxu0
  %v2089 = vpop.f32.mrb[0].mxu0
  %2090 = vdwg.mxu0
  %v2093 = vcombine.low %v2085, %v2087
  %v2095 = vunpack.c.l.s4 1983009808
  %v2096 = vunpack.c.0.s8 %v2095
  %v2097 = vlaneseq
  %v2098 = vshrl.u32 %v2097, 7
  %v2099 = vsub.s32 %v2096, %v2098
  %v2100 = vrot.slane %v2093, %v2099
  %s2102 = scalar_lea.vmem %s2, 28
  %2103 = vst [vmem:[%s2102] sm:$0xf] %v2100
  // Predicated region
  $region10: #{_lambda_.6} parent=0 // pred_check
    _
  $region11: #{_lambda_.6} parent=0 // pred_check_branch
    %2105 = sbr.rel (0) target = $region13
  $region12: #{_lambda_.6} parent=0 // pred_region
    _
  $region13: #{_lambda_.6} parent=0 // pred_fallthru
    _
  // Predicated region
  $region14: #{_lambda_.6} parent=0 // pred_check
    _
  $region15: #{_lambda_.6} parent=0 // pred_check_branch
    %2107 = sbr.rel (0) target = $region17
  $region16: #{_lambda_.6} parent=0 // pred_region
    _
  $region17: #{_lambda_.6} parent=0 // pred_fallthru
    _

// kernel: _lambda_.8
$region0: #{_lambda_.8}
  #allocation0 [shape = 'u32[]', space=smem, size = 0x4, offset = 0x4, fixed_abs, tag = 'smem constant byte address 0x4 - core index']
  #allocation1 [shape = 'u32[144,128]{1,0:T(1,128)}', space=vmem, size = 0x12000, scoped, tag = 'internal scratch']
  %s0 = inlined_call_operand.vmem [shape: f32[2,5,20,128], index: 0, kind: input, shape index: {}]
  %s1 = inlined_call_operand.vmem [shape: f32[5,5,128], index: 1, kind: input, shape index: {}]
  %s2 = inlined_call_operand.vmem [shape: bf16[128,128], index: 2, kind: input, shape index: {}]
  %s3 = inlined_call_operand.vmem [shape: f32[1,128], index: 3, kind: input, shape index: {}]
  %s4 = inlined_call_operand.vmem [shape: f32[2,1,128], index: 4, kind: input, shape index: {}]
  %s5 = inlined_call_operand.vmem [shape: bf16[128,256], index: 5, kind: input, shape index: {}]
  %s6 = inlined_call_operand.vmem [shape: f32[1,256], index: 6, kind: input, shape index: {}]
  %s7 = inlined_call_operand.vmem [shape: f32[2,16,128], index: 7, kind: output, shape index: {0}]
  %s8 = inlined_call_operand.vmem [shape: f32[2,16,256], index: 8, kind: output, shape index: {1}]
  %9 = xla_tuple %s7, %s8
  %s10 = sld [smem:[#allocation0]]
  $region69: #{_lambda_.8} parent=0
    _
  %s12 = ssub.s32 1, %s10
  %s13 = scalar_select 0, %s12, %s10
  loop: start=0, step=1, limit=4
  $region2: #{_lambda_.8} parent=0 // loop_pre_header
    _
  $region3: #{_lambda_.8} parent=0 // loop_header
    %s15 = sphi 0, %s19
    %p16 = scmp.ge.s32.totalorder %s15, 4
    %s25 = sphi 0, %s27
    %s28 = sphi 0, %s25
    %s29 = sphi 0, %s28
    %s45 = sphi 0, %s29
    %s49 = sphi 0, %s49
    %s51 = sphi 0, %s49
    %s52 = sphi 0, %s51
    %s66 = sphi 0, %s52
    %s70 = sphi 0, %s70
    %s72 = sphi 0, %s70
    %s73 = sphi 0, %s72
    %s87 = sphi 0, %s73
    %s91 = sphi 0, %s91
    %s93 = sphi 0, %s91
    %s94 = sphi 0, %s93
    %s108 = sphi 0, %s94
    %s114 = sphi 0, %s116
    %s117 = sphi 0, %s114
    %s118 = sphi 0, %s117
    %s134 = sphi 0, %s118
    %s138 = sphi 0, %s138
    %s140 = sphi 0, %s138
    %s141 = sphi 0, %s140
    %s155 = sphi 0, %s141
    %s159 = sphi 0, %s159
    %s161 = sphi 0, %s159
    %s162 = sphi 0, %s161
    %s176 = sphi 0, %s162
    %s182 = sphi 0, %s184
    %s185 = sphi 0, %s182
    %s186 = sphi 0, %s185
    %s202 = sphi 0, %s186
    %s208 = sphi 0, %s210
    %s211 = sphi 0, %s208
    %s212 = sphi 0, %s211
    %s228 = sphi 0, %s212
  $region4: #{_lambda_.8} parent=0 // loop_header_branch
    %18 = sbr.rel (%p16) target = $region8
  $region5: #{_lambda_.8} parent=0 // loop_body
    %s20 = ssub.s32 %s15, 1
    %s21 = ssub.s32 %s15, 2
    %s22 = sadd.s32 %s15, 1
    %s23 = ssub.s32 %s15, %s22
    %p24 = scmp.eq.s32.totalorder %s23, 0
    %s26 = sadd.s32 %s25, 1
    %s27 = scalar_select %p24, %s25, %s26
    %p30 = pneg %p24
    %p31 = scmp.eq.s32.totalorder %s15, 1
    %p32 = por %p30, %p31
    %p33 = scmp.ne.s32.totalorder %s25, %s28
    %p34 = scmp.eq.s32.totalorder %s15, 0
    %p35 = por %p33, %p34
    %p36 = scmp.ne.s32.totalorder %s25, %s28
    %p37 = scmp.eq.s32.totalorder %s20, 1
    %p38 = por %p36, %p37
    %p39 = scmp.ne.s32.totalorder %s28, %s29
    %p40 = scmp.eq.s32.totalorder %s20, 0
    %p41 = por %p39, %p40
    %p42 = scmp.ne.s32.totalorder %s28, %s29
    %p43 = scmp.eq.s32.totalorder %s21, 1
    %p44 = por %p42, %p43
    %p46 = scmp.ne.s32.totalorder %s29, %s45
    %p47 = scmp.eq.s32.totalorder %s21, 0
    %p48 = por %p46, %p47
    %s50 = sadd.s32 %s49, 1
    %p53 = scmp.eq.s32.totalorder %s15, 1
    %p54 = scmp.ne.s32.totalorder %s49, %s51
    %p55 = scmp.eq.s32.totalorder %s15, 0
    %p56 = por %p54, %p55
    %p57 = scmp.ne.s32.totalorder %s49, %s51
    %p58 = scmp.eq.s32.totalorder %s20, 1
    %p59 = por %p57, %p58
    %p60 = scmp.ne.s32.totalorder %s51, %s52
    %p61 = scmp.eq.s32.totalorder %s20, 0
    %p62 = por %p60, %p61
    %p63 = scmp.ne.s32.totalorder %s51, %s52
    %p64 = scmp.eq.s32.totalorder %s21, 1
    %p65 = por %p63, %p64
    %p67 = scmp.ne.s32.totalorder %s52, %s66
    %p68 = scmp.eq.s32.totalorder %s21, 0
    %p69 = por %p67, %p68
    %s71 = sadd.s32 %s70, 1
    %p74 = scmp.eq.s32.totalorder %s15, 1
    %p75 = scmp.ne.s32.totalorder %s70, %s72
    %p76 = scmp.eq.s32.totalorder %s15, 0
    %p77 = por %p75, %p76
    %p78 = scmp.ne.s32.totalorder %s70, %s72
    %p79 = scmp.eq.s32.totalorder %s20, 1
    %p80 = por %p78, %p79
    %p81 = scmp.ne.s32.totalorder %s72, %s73
    %p82 = scmp.eq.s32.totalorder %s20, 0
    %p83 = por %p81, %p82
    %p84 = scmp.ne.s32.totalorder %s72, %s73
    %p85 = scmp.eq.s32.totalorder %s21, 1
    %p86 = por %p84, %p85
    %p88 = scmp.ne.s32.totalorder %s73, %s87
    %p89 = scmp.eq.s32.totalorder %s21, 0
    %p90 = por %p88, %p89
    %s92 = sadd.s32 %s91, 1
    %p95 = scmp.eq.s32.totalorder %s15, 1
    %p96 = scmp.ne.s32.totalorder %s91, %s93
    %p97 = scmp.eq.s32.totalorder %s15, 0
    %p98 = por %p96, %p97
    %p99 = scmp.ne.s32.totalorder %s91, %s93
    %p100 = scmp.eq.s32.totalorder %s20, 1
    %p101 = por %p99, %p100
    %p102 = scmp.ne.s32.totalorder %s93, %s94
    %p103 = scmp.eq.s32.totalorder %s20, 0
    %p104 = por %p102, %p103
    %p105 = scmp.ne.s32.totalorder %s93, %s94
    %p106 = scmp.eq.s32.totalorder %s21, 1
    %p107 = por %p105, %p106
    %p109 = scmp.ne.s32.totalorder %s94, %s108
    %p110 = scmp.eq.s32.totalorder %s21, 0
    %p111 = por %p109, %p110
    %s112 = ssub.s32 %s15, %s22
    %p113 = scmp.eq.s32.totalorder %s112, 0
    %s115 = sadd.s32 %s114, 1
    %s116 = scalar_select %p113, %s114, %s115
    %p119 = pneg %p113
    %p120 = scmp.eq.s32.totalorder %s15, 1
    %p121 = por %p119, %p120
    %p122 = scmp.ne.s32.totalorder %s114, %s117
    %p123 = scmp.eq.s32.totalorder %s15, 0
    %p124 = por %p122, %p123
    %p125 = scmp.ne.s32.totalorder %s114, %s117
    %p126 = scmp.eq.s32.totalorder %s20, 1
    %p127 = por %p125, %p126
    %p128 = scmp.ne.s32.totalorder %s117, %s118
    %p129 = scmp.eq.s32.totalorder %s20, 0
    %p130 = por %p128, %p129
    %p131 = scmp.ne.s32.totalorder %s117, %s118
    %p132 = scmp.eq.s32.totalorder %s21, 1
    %p133 = por %p131, %p132
    %p135 = scmp.ne.s32.totalorder %s118, %s134
    %p136 = scmp.eq.s32.totalorder %s21, 0
    %p137 = por %p135, %p136
    %s139 = sadd.s32 %s138, 1
    %p142 = scmp.eq.s32.totalorder %s15, 1
    %p143 = scmp.ne.s32.totalorder %s138, %s140
    %p144 = scmp.eq.s32.totalorder %s15, 0
    %p145 = por %p143, %p144
    %p146 = scmp.ne.s32.totalorder %s138, %s140
    %p147 = scmp.eq.s32.totalorder %s20, 1
    %p148 = por %p146, %p147
    %p149 = scmp.ne.s32.totalorder %s140, %s141
    %p150 = scmp.eq.s32.totalorder %s20, 0
    %p151 = por %p149, %p150
    %p152 = scmp.ne.s32.totalorder %s140, %s141
    %p153 = scmp.eq.s32.totalorder %s21, 1
    %p154 = por %p152, %p153
    %p156 = scmp.ne.s32.totalorder %s141, %s155
    %p157 = scmp.eq.s32.totalorder %s21, 0
    %p158 = por %p156, %p157
    %s160 = sadd.s32 %s159, 1
    %p163 = scmp.eq.s32.totalorder %s15, 1
    %p164 = scmp.ne.s32.totalorder %s159, %s161
    %p165 = scmp.eq.s32.totalorder %s15, 0
    %p166 = por %p164, %p165
    %p167 = scmp.ne.s32.totalorder %s159, %s161
    %p168 = scmp.eq.s32.totalorder %s20, 1
    %p169 = por %p167, %p168
    %p170 = scmp.ne.s32.totalorder %s161, %s162
    %p171 = scmp.eq.s32.totalorder %s20, 0
    %p172 = por %p170, %p171
    %p173 = scmp.ne.s32.totalorder %s161, %s162
    %p174 = scmp.eq.s32.totalorder %s21, 1
    %p175 = por %p173, %p174
    %p177 = scmp.ne.s32.totalorder %s162, %s176
    %p178 = scmp.eq.s32.totalorder %s21, 0
    %p179 = por %p177, %p178
    %s180 = ssub.s32 %s15, %s22
    %p181 = scmp.eq.s32.totalorder %s180, 0
    %s183 = sadd.s32 %s182, 1
    %s184 = scalar_select %p181, %s182, %s183
    %p187 = pneg %p181
    %p188 = scmp.eq.s32.totalorder %s15, 1
    %p189 = por %p187, %p188
    %p190 = scmp.ne.s32.totalorder %s182, %s185
    %p191 = scmp.eq.s32.totalorder %s15, 0
    %p192 = por %p190, %p191
    %p193 = scmp.ne.s32.totalorder %s182, %s185
    %p194 = scmp.eq.s32.totalorder %s20, 1
    %p195 = por %p193, %p194
    %p196 = scmp.ne.s32.totalorder %s185, %s186
    %p197 = scmp.eq.s32.totalorder %s20, 0
    %p198 = por %p196, %p197
    %p199 = scmp.ne.s32.totalorder %s185, %s186
    %p200 = scmp.eq.s32.totalorder %s21, 1
    %p201 = por %p199, %p200
    %p203 = scmp.ne.s32.totalorder %s186, %s202
    %p204 = scmp.eq.s32.totalorder %s21, 0
    %p205 = por %p203, %p204
    %s206 = ssub.s32 %s15, %s22
    %p207 = scmp.eq.s32.totalorder %s206, 0
    %s209 = sadd.s32 %s208, 1
    %s210 = scalar_select %p207, %s208, %s209
    %p213 = pneg %p207
    %p214 = scmp.eq.s32.totalorder %s15, 1
    %p215 = por %p213, %p214
    %p216 = scmp.ne.s32.totalorder %s208, %s211
    %p217 = scmp.eq.s32.totalorder %s15, 0
    %p218 = por %p216, %p217
    %p219 = scmp.ne.s32.totalorder %s208, %s211
    %p220 = scmp.eq.s32.totalorder %s20, 1
    %p221 = por %p219, %p220
    %p222 = scmp.ne.s32.totalorder %s211, %s212
    %p223 = scmp.eq.s32.totalorder %s20, 0
    %p224 = por %p222, %p223
    %p225 = scmp.ne.s32.totalorder %s211, %s212
    %p226 = scmp.eq.s32.totalorder %s21, 1
    %p227 = por %p225, %p226
    %p229 = scmp.ne.s32.totalorder %s212, %s228
    %p230 = scmp.eq.s32.totalorder %s21, 0
    %p231 = por %p229, %p230
    %p232 = scmp.le.s32.totalorder 1, %s15
    %p233 = scmp.lt.s32.totalorder %s15, 3
    %p234 = pnand %p232, %p233
    %p235 = pneg %p234
    // Predicated region
    $region9: #{_lambda_.8} parent=5 // pred_check
      _
    $region10: #{_lambda_.8} parent=5 // pred_check_branch
      %237 = sbr.rel (%p234) target = $region12
    $region11: #{_lambda_.8} parent=5 // pred_region
      %s238 = ssub.s32 %s15, 1
      // Predicated region
      $region13: #{_lambda_.8} parent=11 // pred_check
        %p239 = pneg %p62
      $region14: #{_lambda_.8} parent=11 // pred_check_branch
        %241 = sbr.rel (%p239) target = $region16
      $region15: #{_lambda_.8} parent=11 // pred_region
        _
      $region16: #{_lambda_.8} parent=11 // pred_fallthru
        _
      // Predicated region
      $region17: #{_lambda_.8} parent=11 // pred_check
        %p242 = pneg %p83
      $region18: #{_lambda_.8} parent=11 // pred_check_branch
        %244 = sbr.rel (%p242) target = $region20
      $region19: #{_lambda_.8} parent=11 // pred_region
        _
      $region20: #{_lambda_.8} parent=11 // pred_fallthru
        _
      // Predicated region
      $region21: #{_lambda_.8} parent=11 // pred_check
        %p245 = pneg %p104
      $region22: #{_lambda_.8} parent=11 // pred_check_branch
        %247 = sbr.rel (%p245) target = $region24
      $region23: #{_lambda_.8} parent=11 // pred_region
        _
      $region24: #{_lambda_.8} parent=11 // pred_fallthru
        _
      // Predicated region
      $region25: #{_lambda_.8} parent=11 // pred_check
        %p248 = pneg %p151
      $region26: #{_lambda_.8} parent=11 // pred_check_branch
        %250 = sbr.rel (%p248) target = $region28
      $region27: #{_lambda_.8} parent=11 // pred_region
        _
      $region28: #{_lambda_.8} parent=11 // pred_fallthru
        _
      // Predicated region
      $region29: #{_lambda_.8} parent=11 // pred_check
        %p251 = pneg %p172
      $region30: #{_lambda_.8} parent=11 // pred_check_branch
        %253 = sbr.rel (%p251) target = $region32
      $region31: #{_lambda_.8} parent=11 // pred_region
        _
      $region32: #{_lambda_.8} parent=11 // pred_fallthru
        _
    $region12: #{_lambda_.8} parent=5 // pred_fallthru
      _
    %p254 = scmp.lt.s32.totalorder %s15, 2
    // Predicated region
    $region33: #{_lambda_.8} parent=5 // pred_check
      %p255 = pneg %p254
    $region34: #{_lambda_.8} parent=5 // pred_check_branch
      %257 = sbr.rel (%p255) target = $region36
    $region35: #{_lambda_.8} parent=5 // pred_region
      // Predicated region
      $region37: #{_lambda_.8} parent=35 // pred_check
        %p258 = pneg %p35
      $region38: #{_lambda_.8} parent=35 // pred_check_branch
        %260 = sbr.rel (%p258) target = $region40
      $region39: #{_lambda_.8} parent=35 // pred_region
        %p261 = scmp.lt.s32.totalorder %s15, 1
        %s262 = scalar_select %p261, %s15, 1
        %s263 = smul.addr %s262, 15
        %s264 = smul.addr %s263, 8
        %s265 = scalar_lea.vmem %s0, %s264
      $region40: #{_lambda_.8} parent=35 // pred_fallthru
        _
      // Predicated region
      $region41: #{_lambda_.8} parent=35 // pred_check
        %p266 = pneg %p124
      $region42: #{_lambda_.8} parent=35 // pred_check_branch
        %268 = sbr.rel (%p266) target = $region44
      $region43: #{_lambda_.8} parent=35 // pred_region
        %p269 = scmp.lt.s32.totalorder %s15, 1
        %s270 = scalar_select %p269, %s15, 1
        %s271 = scalar_lea.vmem %s4, %s270
      $region44: #{_lambda_.8} parent=35 // pred_fallthru
        _
    $region36: #{_lambda_.8} parent=5 // pred_fallthru
      _
    %p272 = scmp.le.s32.totalorder 1, %s15
    %p273 = scmp.lt.s32.totalorder %s15, 3
    %p274 = pnand %p272, %p273
    %p275 = pneg %p274
    // Predicated region
    $region45: #{_lambda_.8} parent=5 // pred_check
      _
    $region46: #{_lambda_.8} parent=5 // pred_check_branch
      %277 = sbr.rel (%p274) target = $region48
    $region47: #{_lambda_.8} parent=5 // pred_region
      %s278 = ssub.s32 %s15, 1
      %p279 = scmp.lt.s32.totalorder %s20, 1
      %s280 = scalar_select %p279, %s20, 1
      %s281 = smul.addr %s280, 15
      %s282 = smul.addr %s281, 8
      %s283 = scalar_lea.vmem %s0, %s282
      %p284 = pneg %p41
      %p285 = pneg %p38
      %p286 = pneg %p62
      %p287 = pneg %p59
      %p288 = pneg %p83
      %p289 = pneg %p80
      %p290 = pneg %p104
      %p291 = pneg %p101
      %p292 = scmp.lt.s32.totalorder %s20, 1
      %s293 = scalar_select %p292, %s20, 1
      %s294 = scalar_lea.vmem %s4, %s293
      %p295 = pneg %p130
      %p296 = pneg %p127
      %p297 = pneg %p151
      %p298 = pneg %p148
      %p299 = pneg %p172
      %p300 = pneg %p169
      %p301 = pneg %p198
      %p302 = pneg %p195
      %p303 = scmp.lt.s32.totalorder %s20, 1
      %s304 = scalar_select %p303, %s20, 1
      %s305 = smul.addr %s304, 2
      %s306 = smul.addr %s305, 8
      %s307 = scalar_lea.vmem %s7, %s306
      %p308 = pneg %p224
      %p309 = pneg %p221
      %p310 = scmp.lt.s32.totalorder %s20, 1
      %s311 = scalar_select %p310, %s20, 1
      %s312 = smul.addr %s311, 4
      %s313 = smul.addr %s312, 8
      %s314 = scalar_lea.vmem %s8, %s313
      %p315 = scmp.lt.s32.totalorder %s20, 1
      %s316 = scalar_select %p315, %s20, 1
      %s317 = smul.addr %s316, 15
      %s318 = smul.addr %s317, 8
      %s319 = scalar_lea.vmem %s0, %s318
      %p320 = scmp.lt.s32.totalorder %s20, 1
      %s321 = scalar_select %p320, %s20, 1
      %s322 = scalar_lea.vmem %s4, %s321
      %p323 = scmp.lt.s32.totalorder %s20, 1
      %s324 = scalar_select %p323, %s20, 1
      %s325 = smul.addr %s324, 2
      %s326 = smul.addr %s325, 8
      %s327 = scalar_lea.vmem %s7, %s326
      %p328 = scmp.lt.s32.totalorder %s20, 1
      %s329 = scalar_select %p328, %s20, 1
      %s330 = smul.addr %s329, 4
      %s331 = smul.addr %s330, 8
      %s332 = scalar_lea.vmem %s8, %s331
      %v334 = vld [vmem:[%s319] sm:$0xff]
      %v335 = vld [vmem:[%s319 + $0x8] sm:$0xff]
      %v336 = vld [vmem:[%s319 + $0x10] sm:$0xf]
      %v337 = vld [vmem:[%s1] sm:$0x1]
      %v338 = vlaneseq
      %v339 = vshrl.u32 %v338, 7
      %v340 = vsub.s32 0, %v339
      %v341 = vrot.slane %v337, %v340
      %v342 = vmul.f32 %v334, %v341
      %v343 = vmul.f32 %v335, %v341
      %s344 = scalar_lea.vmem %s1, 8
      %v345 = vld [vmem:[%s344] sm:$0x1]
      %v346 = vlaneseq
      %v347 = vshrl.u32 %v346, 7
      %v348 = vsub.s32 0, %v347
      %v349 = vrot.slane %v345, %v348
      %v350 = vmul.f32 %v334, %v349
      %v351 = vmul.f32 %v335, %v349
      %v352 = vmul.f32 %v336, %v349
      %vm356 = vcmask 1046528
      %v357 = vrot.slane %v350, 1
      %v358 = vrot.slane %v351, 1
      %v359 = vsel %vm356, %v357, %v358
      %v360 = vrot.slane %v352, 1
      %v361 = vsel %vm356, %v358, %v360
      %v364 = vadd.f32 %v342, %v359
      %v365 = vadd.f32 %v343, %v361
      %s366 = scalar_lea.vmem %s1, 16
      %v367 = vld [vmem:[%s366] sm:$0x1]
      %v368 = vlaneseq
      %v369 = vshrl.u32 %v368, 7
      %v370 = vsub.s32 0, %v369
      %v371 = vrot.slane %v367, %v370
      %v372 = vmul.f32 %v334, %v371
      %v373 = vmul.f32 %v335, %v371
      %v374 = vmul.f32 %v336, %v371
      %vm378 = vcmask 1045504
      %v379 = vrot.slane %v372, 2
      %v380 = vrot.slane %v373, 2
      %v381 = vsel %vm378, %v379, %v380
      %v382 = vrot.slane %v374, 2
      %v383 = vsel %vm378, %v380, %v382
      %v386 = vadd.f32 %v364, %v381
      %v387 = vadd.f32 %v365, %v383
      %s388 = scalar_lea.vmem %s1, 24
      %v389 = vld [vmem:[%s388] sm:$0x1]
      %v390 = vlaneseq
      %v391 = vshrl.u32 %v390, 7
      %v392 = vsub.s32 0, %v391
      %v393 = vrot.slane %v389, %v392
      %v394 = vmul.f32 %v334, %v393
      %v395 = vmul.f32 %v335, %v393
      %v396 = vmul.f32 %v336, %v393
      %vm400 = vcmask 1044480
      %v401 = vrot.slane %v394, 3
      %v402 = vrot.slane %v395, 3
      %v403 = vsel %vm400, %v401, %v402
      %v404 = vrot.slane %v396, 3
      %v405 = vsel %vm400, %v402, %v404
      %v408 = vadd.f32 %v386, %v403
      %v409 = vadd.f32 %v387, %v405
      %s410 = scalar_lea.vmem %s1, 32
      %v411 = vld [vmem:[%s410] sm:$0x1]
      %v412 = vlaneseq
      %v413 = vshrl.u32 %v412, 7
      %v414 = vsub.s32 0, %v413
      %v415 = vrot.slane %v411, %v414
      %v416 = vmul.f32 %v334, %v415
      %v417 = vmul.f32 %v335, %v415
      %v418 = vmul.f32 %v336, %v415
      %vm422 = vcmask 1043456
      %v423 = vrot.slane %v416, 4
      %v424 = vrot.slane %v417, 4
      %v425 = vsel %vm422, %v423, %v424
      %v426 = vrot.slane %v418, 4
      %v427 = vsel %vm422, %v424, %v426
      %v430 = vadd.f32 %v408, %v425
      %v431 = vadd.f32 %v409, %v427
      %s432 = scalar_lea.vmem %s319, 24
      %v433 = vld [vmem:[%s432] sm:$0xff]
      %v434 = vld [vmem:[%s432 + $0x8] sm:$0xff]
      %v435 = vld [vmem:[%s432 + $0x10] sm:$0xf]
      %v436 = vld [vmem:[%s1 + $0x1] sm:$0x1]
      %v437 = vlaneseq
      %v438 = vshrl.u32 %v437, 7
      %v439 = vsub.s32 0, %v438
      %v440 = vrot.slane %v436, %v439
      %v441 = vmul.f32 %v433, %v440
      %v442 = vmul.f32 %v434, %v440
      %v443 = vadd.f32 %v430, %v441
      %v444 = vadd.f32 %v431, %v442
      %v445 = vld [vmem:[%s344 + $0x1] sm:$0x1]
      %v446 = vlaneseq
      %v447 = vshrl.u32 %v446, 7
      %v448 = vsub.s32 0, %v447
      %v449 = vrot.slane %v445, %v448
      %v450 = vmul.f32 %v433, %v449
      %v451 = vmul.f32 %v434, %v449
      %v452 = vmul.f32 %v435, %v449
      %v456 = vrot.slane %v450, 1
      %v457 = vrot.slane %v451, 1
      %v458 = vsel %vm356, %v456, %v457
      %v459 = vrot.slane %v452, 1
      %v460 = vsel %vm356, %v457, %v459
      %v463 = vadd.f32 %v443, %v458
      %v464 = vadd.f32 %v444, %v460
      %v465 = vld [vmem:[%s366 + $0x1] sm:$0x1]
      %v466 = vlaneseq
      %v467 = vshrl.u32 %v466, 7
      %v468 = vsub.s32 0, %v467
      %v469 = vrot.slane %v465, %v468
      %v470 = vmul.f32 %v433, %v469
      %v471 = vmul.f32 %v434, %v469
      %v472 = vmul.f32 %v435, %v469
      %v476 = vrot.slane %v470, 2
      %v477 = vrot.slane %v471, 2
      %v478 = vsel %vm378, %v476, %v477
      %v479 = vrot.slane %v472, 2
      %v480 = vsel %vm378, %v477, %v479
      %v483 = vadd.f32 %v463, %v478
      %v484 = vadd.f32 %v464, %v480
      %v485 = vld [vmem:[%s388 + $0x1] sm:$0x1]
      %v486 = vlaneseq
      %v487 = vshrl.u32 %v486, 7
      %v488 = vsub.s32 0, %v487
      %v489 = vrot.slane %v485, %v488
      %v490 = vmul.f32 %v433, %v489
      %v491 = vmul.f32 %v434, %v489
      %v492 = vmul.f32 %v435, %v489
      %v496 = vrot.slane %v490, 3
      %v497 = vrot.slane %v491, 3
      %v498 = vsel %vm400, %v496, %v497
      %v499 = vrot.slane %v492, 3
      %v500 = vsel %vm400, %v497, %v499
      %v503 = vadd.f32 %v483, %v498
      %v504 = vadd.f32 %v484, %v500
      %v505 = vld [vmem:[%s410 + $0x1] sm:$0x1]
      %v506 = vlaneseq
      %v507 = vshrl.u32 %v506, 7
      %v508 = vsub.s32 0, %v507
      %v509 = vrot.slane %v505, %v508
      %v510 = vmul.f32 %v433, %v509
      %v511 = vmul.f32 %v434, %v509
      %v512 = vmul.f32 %v435, %v509
      %v516 = vrot.slane %v510, 4
      %v517 = vrot.slane %v511, 4
      %v518 = vsel %vm422, %v516, %v517
      %v519 = vrot.slane %v512, 4
      %v520 = vsel %vm422, %v517, %v519
      %v523 = vadd.f32 %v503, %v518
      %v524 = vadd.f32 %v504, %v520
      %s525 = scalar_lea.vmem %s319, 48
      %v526 = vld [vmem:[%s525] sm:$0xff]
      %v527 = vld [vmem:[%s525 + $0x8] sm:$0xff]
      %v528 = vld [vmem:[%s525 + $0x10] sm:$0xf]
      %v529 = vld [vmem:[%s1 + $0x2] sm:$0x1]
      %v530 = vlaneseq
      %v531 = vshrl.u32 %v530, 7
      %v532 = vsub.s32 0, %v531
      %v533 = vrot.slane %v529, %v532
      %v534 = vmul.f32 %v526, %v533
      %v535 = vmul.f32 %v527, %v533
      %v536 = vadd.f32 %v523, %v534
      %v537 = vadd.f32 %v524, %v535
      %v538 = vld [vmem:[%s344 + $0x2] sm:$0x1]
      %v539 = vlaneseq
      %v540 = vshrl.u32 %v539, 7
      %v541 = vsub.s32 0, %v540
      %v542 = vrot.slane %v538, %v541
      %v543 = vmul.f32 %v526, %v542
      %v544 = vmul.f32 %v527, %v542
      %v545 = vmul.f32 %v528, %v542
      %v549 = vrot.slane %v543, 1
      %v550 = vrot.slane %v544, 1
      %v551 = vsel %vm356, %v549, %v550
      %v552 = vrot.slane %v545, 1
      %v553 = vsel %vm356, %v550, %v552
      %v556 = vadd.f32 %v536, %v551
      %v557 = vadd.f32 %v537, %v553
      %v558 = vld [vmem:[%s366 + $0x2] sm:$0x1]
      %v559 = vlaneseq
      %v560 = vshrl.u32 %v559, 7
      %v561 = vsub.s32 0, %v560
      %v562 = vrot.slane %v558, %v561
      %v563 = vmul.f32 %v526, %v562
      %v564 = vmul.f32 %v527, %v562
      %v565 = vmul.f32 %v528, %v562
      %v569 = vrot.slane %v563, 2
      %v570 = vrot.slane %v564, 2
      %v571 = vsel %vm378, %v569, %v570
      %v572 = vrot.slane %v565, 2
      %v573 = vsel %vm378, %v570, %v572
      %v576 = vadd.f32 %v556, %v571
      %v577 = vadd.f32 %v557, %v573
      %v578 = vld [vmem:[%s388 + $0x2] sm:$0x1]
      %v579 = vlaneseq
      %v580 = vshrl.u32 %v579, 7
      %v581 = vsub.s32 0, %v580
      %v582 = vrot.slane %v578, %v581
      %v583 = vmul.f32 %v526, %v582
      %v584 = vmul.f32 %v527, %v582
      %v585 = vmul.f32 %v528, %v582
      %v589 = vrot.slane %v583, 3
      %v590 = vrot.slane %v584, 3
      %v591 = vsel %vm400, %v589, %v590
      %v592 = vrot.slane %v585, 3
      %v593 = vsel %vm400, %v590, %v592
      %v596 = vadd.f32 %v576, %v591
      %v597 = vadd.f32 %v577, %v593
      %v598 = vld [vmem:[%s410 + $0x2] sm:$0x1]
      %v599 = vlaneseq
      %v600 = vshrl.u32 %v599, 7
      %v601 = vsub.s32 0, %v600
      %v602 = vrot.slane %v598, %v601
      %v603 = vmul.f32 %v526, %v602
      %v604 = vmul.f32 %v527, %v602
      %v605 = vmul.f32 %v528, %v602
      %v609 = vrot.slane %v603, 4
      %v610 = vrot.slane %v604, 4
      %v611 = vsel %vm422, %v609, %v610
      %v612 = vrot.slane %v605, 4
      %v613 = vsel %vm422, %v610, %v612
      %v616 = vadd.f32 %v596, %v611
      %v617 = vadd.f32 %v597, %v613
      %s618 = scalar_lea.vmem %s319, 72
      %v619 = vld [vmem:[%s618] sm:$0xff]
      %v620 = vld [vmem:[%s618 + $0x8] sm:$0xff]
      %v621 = vld [vmem:[%s618 + $0x10] sm:$0xf]
      %v622 = vld [vmem:[%s1 + $0x3] sm:$0x1]
      %v623 = vlaneseq
      %v624 = vshrl.u32 %v623, 7
      %v625 = vsub.s32 0, %v624
      %v626 = vrot.slane %v622, %v625
      %v627 = vmul.f32 %v619, %v626
      %v628 = vmul.f32 %v620, %v626
      %v629 = vadd.f32 %v616, %v627
      %v630 = vadd.f32 %v617, %v628
      %v631 = vld [vmem:[%s344 + $0x3] sm:$0x1]
      %v632 = vlaneseq
      %v633 = vshrl.u32 %v632, 7
      %v634 = vsub.s32 0, %v633
      %v635 = vrot.slane %v631, %v634
      %v636 = vmul.f32 %v619, %v635
      %v637 = vmul.f32 %v620, %v635
      %v638 = vmul.f32 %v621, %v635
      %v642 = vrot.slane %v636, 1
      %v643 = vrot.slane %v637, 1
      %v644 = vsel %vm356, %v642, %v643
      %v645 = vrot.slane %v638, 1
      %v646 = vsel %vm356, %v643, %v645
      %v649 = vadd.f32 %v629, %v644
      %v650 = vadd.f32 %v630, %v646
      %v651 = vld [vmem:[%s366 + $0x3] sm:$0x1]
      %v652 = vlaneseq
      %v653 = vshrl.u32 %v652, 7
      %v654 = vsub.s32 0, %v653
      %v655 = vrot.slane %v651, %v654
      %v656 = vmul.f32 %v619, %v655
      %v657 = vmul.f32 %v620, %v655
      %v658 = vmul.f32 %v621, %v655
      %v662 = vrot.slane %v656, 2
      %v663 = vrot.slane %v657, 2
      %v664 = vsel %vm378, %v662, %v663
      %v665 = vrot.slane %v658, 2
      %v666 = vsel %vm378, %v663, %v665
      %v669 = vadd.f32 %v649, %v664
      %v670 = vadd.f32 %v650, %v666
      %v671 = vld [vmem:[%s388 + $0x3] sm:$0x1]
      %v672 = vlaneseq
      %v673 = vshrl.u32 %v672, 7
      %v674 = vsub.s32 0, %v673
      %v675 = vrot.slane %v671, %v674
      %v676 = vmul.f32 %v619, %v675
      %v677 = vmul.f32 %v620, %v675
      %v678 = vmul.f32 %v621, %v675
      %v682 = vrot.slane %v676, 3
      %v683 = vrot.slane %v677, 3
      %v684 = vsel %vm400, %v682, %v683
      %v685 = vrot.slane %v678, 3
      %v686 = vsel %vm400, %v683, %v685
      %v689 = vadd.f32 %v669, %v684
      %v690 = vadd.f32 %v670, %v686
      %v691 = vld [vmem:[%s410 + $0x3] sm:$0x1]
      %v692 = vlaneseq
      %v693 = vshrl.u32 %v692, 7
      %v694 = vsub.s32 0, %v693
      %v695 = vrot.slane %v691, %v694
      %v696 = vmul.f32 %v619, %v695
      %v697 = vmul.f32 %v620, %v695
      %v698 = vmul.f32 %v621, %v695
      %v702 = vrot.slane %v696, 4
      %v703 = vrot.slane %v697, 4
      %v704 = vsel %vm422, %v702, %v703
      %v705 = vrot.slane %v698, 4
      %v706 = vsel %vm422, %v703, %v705
      %v709 = vadd.f32 %v689, %v704
      %v710 = vadd.f32 %v690, %v706
      %s711 = scalar_lea.vmem %s319, 96
      %v712 = vld [vmem:[%s711] sm:$0xff]
      %v713 = vld [vmem:[%s711 + $0x8] sm:$0xff]
      %v714 = vld [vmem:[%s711 + $0x10] sm:$0xf]
      %v715 = vld [vmem:[%s1 + $0x4] sm:$0x1]
      %v716 = vlaneseq
      %v717 = vshrl.u32 %v716, 7
      %v718 = vsub.s32 0, %v717
      %v719 = vrot.slane %v715, %v718
      %v720 = vmul.f32 %v712, %v719
      %v721 = vmul.f32 %v713, %v719
      %v722 = vadd.f32 %v709, %v720
      %v723 = vadd.f32 %v710, %v721
      %v724 = vld [vmem:[%s344 + $0x4] sm:$0x1]
      %v725 = vlaneseq
      %v726 = vshrl.u32 %v725, 7
      %v727 = vsub.s32 0, %v726
      %v728 = vrot.slane %v724, %v727
      %v729 = vmul.f32 %v712, %v728
      %v730 = vmul.f32 %v713, %v728
      %v731 = vmul.f32 %v714, %v728
      %v735 = vrot.slane %v729, 1
      %v736 = vrot.slane %v730, 1
      %v737 = vsel %vm356, %v735, %v736
      %v738 = vrot.slane %v731, 1
      %v739 = vsel %vm356, %v736, %v738
      %v742 = vadd.f32 %v722, %v737
      %v743 = vadd.f32 %v723, %v739
      %v744 = vld [vmem:[%s366 + $0x4] sm:$0x1]
      %v745 = vlaneseq
      %v746 = vshrl.u32 %v745, 7
      %v747 = vsub.s32 0, %v746
      %v748 = vrot.slane %v744, %v747
      %v749 = vmul.f32 %v712, %v748
      %v750 = vmul.f32 %v713, %v748
      %v751 = vmul.f32 %v714, %v748
      %v755 = vrot.slane %v749, 2
      %v756 = vrot.slane %v750, 2
      %v757 = vsel %vm378, %v755, %v756
      %v758 = vrot.slane %v751, 2
      %v759 = vsel %vm378, %v756, %v758
      %v762 = vadd.f32 %v742, %v757
      %v763 = vadd.f32 %v743, %v759
      %v764 = vld [vmem:[%s388 + $0x4] sm:$0x1]
      %v765 = vlaneseq
      %v766 = vshrl.u32 %v765, 7
      %v767 = vsub.s32 0, %v766
      %v768 = vrot.slane %v764, %v767
      %v769 = vmul.f32 %v712, %v768
      %v770 = vmul.f32 %v713, %v768
      %v771 = vmul.f32 %v714, %v768
      %v775 = vrot.slane %v769, 3
      %v776 = vrot.slane %v770, 3
      %v777 = vsel %vm400, %v775, %v776
      %v778 = vrot.slane %v771, 3
      %v779 = vsel %vm400, %v776, %v778
      %v782 = vadd.f32 %v762, %v777
      %v783 = vadd.f32 %v763, %v779
      %v784 = vld [vmem:[%s410 + $0x4] sm:$0x1]
      %v785 = vlaneseq
      %v786 = vshrl.u32 %v785, 7
      %v787 = vsub.s32 0, %v786
      %v788 = vrot.slane %v784, %v787
      %v789 = vmul.f32 %v712, %v788
      %v790 = vmul.f32 %v713, %v788
      %v791 = vmul.f32 %v714, %v788
      %v795 = vrot.slane %v789, 4
      %v796 = vrot.slane %v790, 4
      %v797 = vsel %vm422, %v795, %v796
      %v798 = vrot.slane %v791, 4
      %v799 = vsel %vm422, %v796, %v798
      %v802 = vadd.f32 %v782, %v797
      %v803 = vadd.f32 %v783, %v799
      %v804 = vld [vmem:[%s525 + $0x2] sm:$0xff]
      %v805 = vld [vmem:[%s525 + $0xa] sm:$0xff]
      %v806 = vpack.c.bf16 %v805, %v804
      %v807 = vld [vmem:[%s2] sm:$0xf]
      %v808 = vld [vmem:[%s2 + $0x4] sm:$0xf]
      %v809 = vld [vmem:[%s2 + $0x8] sm:$0xf]
      %v810 = vld [vmem:[%s2 + $0xc] sm:$0xf]
      %v811 = vld [vmem:[%s2 + $0x10] sm:$0xf]
      %v812 = vld [vmem:[%s2 + $0x14] sm:$0xf]
      %v813 = vld [vmem:[%s2 + $0x18] sm:$0xf]
      %v814 = vld [vmem:[%s2 + $0x1c] sm:$0xf]
      %v815 = vld [vmem:[%s2 + $0x20] sm:$0xf]
      %v816 = vld [vmem:[%s2 + $0x24] sm:$0xf]
      %v817 = vld [vmem:[%s2 + $0x28] sm:$0xf]
      %v818 = vld [vmem:[%s2 + $0x2c] sm:$0xf]
      %v819 = vld [vmem:[%s2 + $0x30] sm:$0xf]
      %v820 = vld [vmem:[%s2 + $0x34] sm:$0xf]
      %v821 = vld [vmem:[%s2 + $0x38] sm:$0xf]
      %v822 = vld [vmem:[%s2 + $0x3c] sm:$0xf]
      %v823 = vld [vmem:[%s3] sm:$0x1]
      %v825 = vlaneseq
      %v826 = vshrl.u32 %v825, 7
      %v827 = vsub.s32 0, %v826
      %v828 = vrot.slane %v823, %v827
      %v846 = vunpack.c.l.b16 %v807
      %v847 = vunpack.c.l.b16 %v808
      %v848 = vunpack.c.l.b16 %v809
      %v849 = vunpack.c.l.b16 %v810
      %v850 = vunpack.c.l.b16 %v811
      %v851 = vunpack.c.l.b16 %v812
      %v852 = vunpack.c.l.b16 %v813
      %v853 = vunpack.c.l.b16 %v814
      %v854 = vunpack.c.l.b16 %v815
      %v855 = vunpack.c.l.b16 %v816
      %v856 = vunpack.c.l.b16 %v817
      %v857 = vunpack.c.l.b16 %v818
      %v858 = vunpack.c.l.b16 %v819
      %v859 = vunpack.c.l.b16 %v820
      %v860 = vunpack.c.l.b16 %v821
      %v861 = vunpack.c.l.b16 %v822
      %v862 = vpack.c.b16 %v847, %v846
      %v863 = vpack.c.b16 %v849, %v848
      %v864 = vpack.c.b16 %v851, %v850
      %v865 = vpack.c.b16 %v853, %v852
      %v866 = vpack.c.b16 %v855, %v854
      %v867 = vpack.c.b16 %v857, %v856
      %v868 = vpack.c.b16 %v859, %v858
      %v869 = vpack.c.b16 %v861, %v860
      %878 = vmatprep.subr.bf16.mxu0 0
      %879 = vmatpush1.bf16.msra.mxu0 %v862
      %880 = vmatprep.subr.bf16.mxu0 0
      %881 = vmatpush1.bf16.msra.mxu0 %v863
      %882 = vmatprep.subr.bf16.mxu0 0
      %883 = vmatpush1.bf16.msra.mxu0 %v864
      %884 = vmatprep.subr.bf16.mxu0 0
      %885 = vmatpush1.bf16.msra.mxu0 %v865
      %886 = vmatprep.subr.bf16.mxu0 0
      %887 = vmatpush1.bf16.msra.mxu0 %v866
      %888 = vmatprep.subr.bf16.mxu0 0
      %889 = vmatpush1.bf16.msra.mxu0 %v867
      %890 = vmatprep.subr.bf16.mxu0 0
      %891 = vmatpush1.bf16.msra.mxu0 %v868
      %892 = vmatprep.subr.bf16.mxu0 0
      %893 = vmatpush1.bf16.msra.mxu0 %v869
      %894 = vmatprep.subr.bf16.mxu0 0
      %895 = vmatpush1.bf16.msra.mxu0 0
      %896 = vmatprep.subr.bf16.mxu0 0
      %897 = vmatpush1.bf16.msra.mxu0 0
      %898 = vmatprep.subr.bf16.mxu0 0
      %899 = vmatpush1.bf16.msra.mxu0 0
      %900 = vmatprep.subr.bf16.mxu0 0
      %901 = vmatpush1.bf16.msra.mxu0 0
      %902 = vmatprep.subr.bf16.mxu0 0
      %903 = vmatpush1.bf16.msra.mxu0 0
      %904 = vmatprep.subr.bf16.mxu0 0
      %905 = vmatpush1.bf16.msra.mxu0 0
      %906 = vmatprep.subr.bf16.mxu0 0
      %907 = vmatpush1.bf16.msra.mxu0 0
      %908 = vmatprep.subr.bf16.mxu0 0
      %909 = vmatpush1.bf16.msra.mxu0 0
      %910 = vmatprep.mubr.bf16.mxu0 0
      %911 = vmatmul.mubr.bf16.gmra.mrb[0].mxu0 %v806
      %v912 = vpop.f32.mrb[0].mxu0
      %v913 = vadd.f32 %v828, %v912
      %v914 = vpop.f32.mrb[0].mxu0
      %v915 = vpop.f32.mrb[0].mxu0
      %v916 = vadd.f32 %v828, %v915
      %v917 = vpop.f32.mrb[0].mxu0
      %918 = vdwg.mxu0
      %v919 = vadd.f32 %v913, %v802
      %v920 = vadd.f32 %v916, %v803
      %v921 = vld [vmem:[%s322] sm:$0x1]
      %v923 = vlaneseq
      %v924 = vshrl.u32 %v923, 7
      %v925 = vsub.s32 0, %v924
      %v926 = vrot.slane %v921, %v925
      %v928 = vmul.f32 %v919, %v926
      %v929 = vmul.f32 %v920, %v926
      %930 = vst [vmem:[%s327] sm:$0xff] %v928
      %931 = vst [vmem:[%s327 + $0x8] sm:$0xff] %v929
      %v932 = vpack.c.bf16 %v929, %v928
      %v933 = vld [vmem:[%s5] sm:$0xff]
      %v934 = vld [vmem:[%s5 + $0x8] sm:$0xff]
      %v935 = vld [vmem:[%s5 + $0x10] sm:$0xff]
      %v936 = vld [vmem:[%s5 + $0x18] sm:$0xff]
      %v937 = vld [vmem:[%s5 + $0x20] sm:$0xff]
      %v938 = vld [vmem:[%s5 + $0x28] sm:$0xff]
      %v939 = vld [vmem:[%s5 + $0x30] sm:$0xff]
      %v940 = vld [vmem:[%s5 + $0x38] sm:$0xff]
      %v941 = vld [vmem:[%s5 + $0x40] sm:$0xff]
      %v942 = vld [vmem:[%s5 + $0x48] sm:$0xff]
      %v943 = vld [vmem:[%s5 + $0x50] sm:$0xff]
      %v944 = vld [vmem:[%s5 + $0x58] sm:$0xff]
      %v945 = vld [vmem:[%s5 + $0x60] sm:$0xff]
      %v946 = vld [vmem:[%s5 + $0x68] sm:$0xff]
      %v947 = vld [vmem:[%s5 + $0x70] sm:$0xff]
      %v948 = vld [vmem:[%s5 + $0x78] sm:$0xff]
      %v949 = vld [vmem:[%s6] sm:$0x3]
      %v951 = vlaneseq
      %v952 = vshrl.u32 %v951, 7
      %v953 = vsub.s32 0, %v952
      %v954 = vrot.slane %v949, %v953
      %v955 = vlaneseq
      %v956 = vshrl.u32 %v955, 7
      %v957 = vsub.s32 1, %v956
      %v958 = vrot.slane %v949, %v957
      %v977 = vunpack.c.l.b16 %v933
      %v978 = vunpack.c.h.b16 %v933
      %v979 = vunpack.c.l.b16 %v934
      %v980 = vunpack.c.h.b16 %v934
      %v981 = vunpack.c.l.b16 %v935
      %v982 = vunpack.c.h.b16 %v935
      %v983 = vunpack.c.l.b16 %v936
      %v984 = vunpack.c.h.b16 %v936
      %v985 = vunpack.c.l.b16 %v937
      %v986 = vunpack.c.h.b16 %v937
      %v987 = vunpack.c.l.b16 %v938
      %v988 = vunpack.c.h.b16 %v938
      %v989 = vunpack.c.l.b16 %v939
      %v990 = vunpack.c.h.b16 %v939
      %v991 = vunpack.c.l.b16 %v940
      %v992 = vunpack.c.h.b16 %v940
      %v993 = vunpack.c.l.b16 %v941
      %v994 = vunpack.c.h.b16 %v941
      %v995 = vunpack.c.l.b16 %v942
      %v996 = vunpack.c.h.b16 %v942
      %v997 = vunpack.c.l.b16 %v943
      %v998 = vunpack.c.h.b16 %v943
      %v999 = vunpack.c.l.b16 %v944
      %v1000 = vunpack.c.h.b16 %v944
      %v1001 = vunpack.c.l.b16 %v945
      %v1002 = vunpack.c.h.b16 %v945
      %v1003 = vunpack.c.l.b16 %v946
      %v1004 = vunpack.c.h.b16 %v946
      %v1005 = vunpack.c.l.b16 %v947
      %v1006 = vunpack.c.h.b16 %v947
      %v1007 = vunpack.c.l.b16 %v948
      %v1008 = vunpack.c.h.b16 %v948
      %v1009 = vpack.c.b16 %v979, %v977
      %v1010 = vpack.c.b16 %v980, %v978
      %v1011 = vpack.c.b16 %v983, %v981
      %v1012 = vpack.c.b16 %v984, %v982
      %v1013 = vpack.c.b16 %v987, %v985
      %v1014 = vpack.c.b16 %v988, %v986
      %v1015 = vpack.c.b16 %v991, %v989
      %v1016 = vpack.c.b16 %v992, %v990
      %v1017 = vpack.c.b16 %v995, %v993
      %v1018 = vpack.c.b16 %v996, %v994
      %v1019 = vpack.c.b16 %v999, %v997
      %v1020 = vpack.c.b16 %v1000, %v998
      %v1021 = vpack.c.b16 %v1003, %v1001
      %v1022 = vpack.c.b16 %v1004, %v1002
      %v1023 = vpack.c.b16 %v1007, %v1005
      %v1024 = vpack.c.b16 %v1008, %v1006
      %1041 = vmatprep.subr.bf16.mxu0 %v1010
      %1042 = vmatpush1.bf16.msra.mxu0 %v1009
      %1043 = vmatprep.subr.bf16.mxu0 %v1012
      %1044 = vmatpush1.bf16.msra.mxu0 %v1011
      %1045 = vmatprep.subr.bf16.mxu0 %v1014
      %1046 = vmatpush1.bf16.msra.mxu0 %v1013
      %1047 = vmatprep.subr.bf16.mxu0 %v1016
      %1048 = vmatpush1.bf16.msra.mxu0 %v1015
      %1049 = vmatprep.subr.bf16.mxu0 %v1018
      %1050 = vmatpush1.bf16.msra.mxu0 %v1017
      %1051 = vmatprep.subr.bf16.mxu0 %v1020
      %1052 = vmatpush1.bf16.msra.mxu0 %v1019
      %1053 = vmatprep.subr.bf16.mxu0 %v1022
      %1054 = vmatpush1.bf16.msra.mxu0 %v1021
      %1055 = vmatprep.subr.bf16.mxu0 %v1024
      %1056 = vmatpush1.bf16.msra.mxu0 %v1023
      %1057 = vmatprep.subr.bf16.mxu0 0
      %1058 = vmatpush1.bf16.msra.mxu0 0
      %1059 = vmatprep.subr.bf16.mxu0 0
      %1060 = vmatpush1.bf16.msra.mxu0 0
      %1061 = vmatprep.subr.bf16.mxu0 0
      %1062 = vmatpush1.bf16.msra.mxu0 0
      %1063 = vmatprep.subr.bf16.mxu0 0
      %1064 = vmatpush1.bf16.msra.mxu0 0
      %1065 = vmatprep.subr.bf16.mxu0 0
      %1066 = vmatpush1.bf16.msra.mxu0 0
      %1067 = vmatprep.subr.bf16.mxu0 0
      %1068 = vmatpush1.bf16.msra.mxu0 0
      %1069 = vmatprep.subr.bf16.mxu0 0
      %1070 = vmatpush1.bf16.msra.mxu0 0
      %1071 = vmatprep.subr.bf16.mxu0 0
      %1072 = vmatpush1.bf16.msra.mxu0 0
      %1073 = vmatprep.mubr.bf16.mxu0 0
      %1074 = vmatmul.mubr.bf16.gmra.mrb[0].mxu0 %v932
      %v1075 = vpop.f32.mrb[0].mxu0
      %v1076 = vadd.f32 %v954, %v1075
      %v1077 = vpop.f32.mrb[0].mxu0
      %v1078 = vadd.f32 %v958, %v1077
      %v1079 = vpop.f32.mrb[0].mxu0
      %v1080 = vadd.f32 %v954, %v1079
      %v1081 = vpop.f32.mrb[0].mxu0
      %v1082 = vadd.f32 %v958, %v1081
      %1083 = vdwg.mxu0
      %1084 = vst [vmem:[%s332] sm:$0xff] %v1076
      %1085 = vst [vmem:[%s332 + $0x8] sm:$0xff] %v1078
      %1086 = vst [vmem:[%s332 + $0x10] sm:$0xff] %v1080
      %1087 = vst [vmem:[%s332 + $0x18] sm:$0xff] %v1082
      %p1088 = scmp.lt.s32.totalorder %s20, 1
      %s1089 = scalar_select %p1088, %s20, 1
      %s1090 = smul.addr %s1089, 2
      %s1091 = smul.addr %s1090, 8
      %s1092 = scalar_lea.vmem %s7, %s1091
      %p1093 = scmp.lt.s32.totalorder %s20, 1
      %s1094 = scalar_select %p1093, %s20, 1
      %s1095 = smul.addr %s1094, 4
      %s1096 = smul.addr %s1095, 8
      %s1097 = scalar_lea.vmem %s8, %s1096
      // Predicated region
      $region49: #{_lambda_.8} parent=47 // pred_check
        %p1098 = pneg %p195
      $region50: #{_lambda_.8} parent=47 // pred_check_branch
        %1100 = sbr.rel (%p1098) target = $region52
      $region51: #{_lambda_.8} parent=47 // pred_region
        _
      $region52: #{_lambda_.8} parent=47 // pred_fallthru
        _
      // Predicated region
      $region53: #{_lambda_.8} parent=47 // pred_check
        %p1101 = pneg %p221
      $region54: #{_lambda_.8} parent=47 // pred_check_branch
        %1103 = sbr.rel (%p1101) target = $region56
      $region55: #{_lambda_.8} parent=47 // pred_region
        _
      $region56: #{_lambda_.8} parent=47 // pred_fallthru
        _
    $region48: #{_lambda_.8} parent=5 // pred_fallthru
      _
    %p1104 = scmp.le.s32.totalorder 2, %s15
    // Predicated region
    $region57: #{_lambda_.8} parent=5 // pred_check
      %p1105 = pneg %p1104
    $region58: #{_lambda_.8} parent=5 // pred_check_branch
      %1107 = sbr.rel (%p1105) target = $region60
    $region59: #{_lambda_.8} parent=5 // pred_region
      %s1108 = ssub.s32 %s15, 2
      // Predicated region
      $region61: #{_lambda_.8} parent=59 // pred_check
        %p1109 = pneg %p201
      $region62: #{_lambda_.8} parent=59 // pred_check_branch
        %1111 = sbr.rel (%p1109) target = $region64
      $region63: #{_lambda_.8} parent=59 // pred_region
        %p1112 = scmp.lt.s32.totalorder %s21, 1
        %s1113 = scalar_select %p1112, %s21, 1
        %s1114 = smul.addr %s1113, 2
        %s1115 = smul.addr %s1114, 8
        %s1116 = scalar_lea.vmem %s7, %s1115
      $region64: #{_lambda_.8} parent=59 // pred_fallthru
        _
      // Predicated region
      $region65: #{_lambda_.8} parent=59 // pred_check
        %p1117 = pneg %p227
      $region66: #{_lambda_.8} parent=59 // pred_check_branch
        %1119 = sbr.rel (%p1117) target = $region68
      $region67: #{_lambda_.8} parent=59 // pred_region
        %p1120 = scmp.lt.s32.totalorder %s21, 1
        %s1121 = scalar_select %p1120, %s21, 1
        %s1122 = smul.addr %s1121, 4
        %s1123 = smul.addr %s1122, 8
        %s1124 = scalar_lea.vmem %s8, %s1123
      $region68: #{_lambda_.8} parent=59 // pred_fallthru
        _
    $region60: #{_lambda_.8} parent=5 // pred_fallthru
      _
  $region6: #{_lambda_.8} parent=0 // loop_footer
    %s19 = sadd.s32 1, %s15
  $region7: #{_lambda_.8} parent=0 // loop_footer_branch
    %14 = sbr.rel target = $region3
  $region8: #{_lambda_.8} parent=0 // loop_exit
    _

// kernel: _lambda_.9
$region0: #{_lambda_.9}
  #allocation0 [shape = 'u32[]', space=smem, size = 0x4, offset = 0x4, fixed_abs, tag = 'smem constant byte address 0x4 - core index']
  #allocation1 [shape = 'u32[144,128]{1,0:T(1,128)}', space=vmem, size = 0x12000, scoped, tag = 'internal scratch']
  %s0 = inlined_call_operand.vmem [shape: f32[512,128], index: 0, kind: input, shape index: {}]
  %s1 = inlined_call_operand.vmem [shape: f32[512,8], index: 1, kind: input, shape index: {}]
  %s2 = inlined_call_operand.vmem [shape: f32[512,8], index: 2, kind: input, shape index: {}]
  %s3 = inlined_call_operand.vmem [shape: f32[512,8], index: 3, kind: input, shape index: {}]
  %s4 = inlined_call_operand.vmem [shape: f32[1,8], index: 4, kind: input, shape index: {}]
  %s5 = inlined_call_operand.vmem [shape: f32[1,8], index: 5, kind: input, shape index: {}]
  %s6 = inlined_call_operand.vmem [shape: f32[1,8], index: 6, kind: input, shape index: {}]
  %s7 = inlined_call_operand.vmem [shape: bf16[8,32], index: 7, kind: input, shape index: {}]
  %s8 = inlined_call_operand.vmem [shape: bf16[32,32], index: 8, kind: input, shape index: {}]
  %s9 = inlined_call_operand.vmem [shape: f32[1,32], index: 9, kind: input, shape index: {}]
  %s10 = inlined_call_operand.hbm [shape: f32[512,32], index: 10, kind: output, shape index: {}]
  %s11 = sld [smem:[#allocation0]]
  $region50: #{_lambda_.9} parent=0
    _
  %s13 = ssub.s32 1, %s11
  %s14 = scalar_select 0, %s13, %s11
  $region1: #{_lambda_.9} parent=0
    #allocation2 [shape = 'u8[262144]{0}', space=vmem, size = 0x40000, scoped, tag = 'output window, operand 0, single buffered']
    #allocation3 [shape = 's32[1]{0}', space=sflag, size = 0x4, scoped, tag = 'scoped memory for _lambda_.9']
    %15 = vsyncpa [#allocation3], 0
    // Predicated region
    $region2: #{_lambda_.9} parent=1 // pred_check
      _
    $region3: #{_lambda_.9} parent=1 // pred_check_branch
      %17 = sbr.rel (0) target = $region5
    $region4: #{_lambda_.9} parent=1 // pred_region
      _
    $region5: #{_lambda_.9} parent=1 // pred_fallthru
      _
    // Predicated region
    $region6: #{_lambda_.9} parent=1 // pred_check
      _
    $region7: #{_lambda_.9} parent=1 // pred_check_branch
      %19 = sbr.rel (0) target = $region9
    $region8: #{_lambda_.9} parent=1 // pred_region
      _
    $region9: #{_lambda_.9} parent=1 // pred_fallthru
      _
    // Predicated region
    $region10: #{_lambda_.9} parent=1 // pred_check
      _
    $region11: #{_lambda_.9} parent=1 // pred_check_branch
      %21 = sbr.rel (0) target = $region13
    $region12: #{_lambda_.9} parent=1 // pred_region
      _
    $region13: #{_lambda_.9} parent=1 // pred_fallthru
      _
    // Predicated region
    $region14: #{_lambda_.9} parent=1 // pred_check
      _
    $region15: #{_lambda_.9} parent=1 // pred_check_branch
      %23 = sbr.rel (0) target = $region17
    $region16: #{_lambda_.9} parent=1 // pred_region
      _
    $region17: #{_lambda_.9} parent=1 // pred_fallthru
      _
    // Predicated region
    $region18: #{_lambda_.9} parent=1 // pred_check
      _
    $region19: #{_lambda_.9} parent=1 // pred_check_branch
      %25 = sbr.rel (0) target = $region21
    $region20: #{_lambda_.9} parent=1 // pred_region
      _
    $region21: #{_lambda_.9} parent=1 // pred_fallthru
      _
    // Predicated region
    $region22: #{_lambda_.9} parent=1 // pred_check
      _
    $region23: #{_lambda_.9} parent=1 // pred_check_branch
      %27 = sbr.rel (0) target = $region25
    $region24: #{_lambda_.9} parent=1 // pred_region
      _
    $region25: #{_lambda_.9} parent=1 // pred_fallthru
      _
    // Predicated region
    $region26: #{_lambda_.9} parent=1 // pred_check
      _
    $region27: #{_lambda_.9} parent=1 // pred_check_branch
      %29 = sbr.rel (0) target = $region29
    $region28: #{_lambda_.9} parent=1 // pred_region
      _
    $region29: #{_lambda_.9} parent=1 // pred_fallthru
      _
    // Predicated region
    $region30: #{_lambda_.9} parent=1 // pred_check
      _
    $region31: #{_lambda_.9} parent=1 // pred_check_branch
      %31 = sbr.rel (0) target = $region33
    $region32: #{_lambda_.9} parent=1 // pred_region
      _
    $region33: #{_lambda_.9} parent=1 // pred_fallthru
      _
    // Predicated region
    $region34: #{_lambda_.9} parent=1 // pred_check
      _
    $region35: #{_lambda_.9} parent=1 // pred_check_branch
      %33 = sbr.rel (0) target = $region37
    $region36: #{_lambda_.9} parent=1 // pred_region
      _
    $region37: #{_lambda_.9} parent=1 // pred_fallthru
      _
    // Predicated region
    $region38: #{_lambda_.9} parent=1 // pred_check
      _
    $region39: #{_lambda_.9} parent=1 // pred_check_branch
      %35 = sbr.rel (0) target = $region41
    $region40: #{_lambda_.9} parent=1 // pred_region
      _
    $region41: #{_lambda_.9} parent=1 // pred_fallthru
      _
    %v37 = vld [vmem:[%s0] sm:$0xff]
    %v38 = vld [vmem:[%s0 + $0x8] sm:$0xff]
    %v39 = vld [vmem:[%s0 + $0x10] sm:$0xff]
    %v40 = vld [vmem:[%s0 + $0x18] sm:$0xff]
    %v41 = vld [vmem:[%s0 + $0x20] sm:$0xff]
    %v42 = vld [vmem:[%s0 + $0x28] sm:$0xff]
    %v43 = vld [vmem:[%s0 + $0x30] sm:$0xff]
    %v44 = vld [vmem:[%s0 + $0x38] sm:$0xff]
    %v45 = vld [vmem:[%s0 + $0x40] sm:$0xff]
    %v46 = vld [vmem:[%s0 + $0x48] sm:$0xff]
    %v47 = vld [vmem:[%s0 + $0x50] sm:$0xff]
    %v48 = vld [vmem:[%s0 + $0x58] sm:$0xff]
    %v49 = vld [vmem:[%s0 + $0x60] sm:$0xff]
    %v50 = vld [vmem:[%s0 + $0x68] sm:$0xff]
    %v51 = vld [vmem:[%s0 + $0x70] sm:$0xff]
    %v52 = vld [vmem:[%s0 + $0x78] sm:$0xff]
    %v53 = vld [vmem:[%s0 + $0x80] sm:$0xff]
    %v54 = vld [vmem:[%s0 + $0x88] sm:$0xff]
    %v55 = vld [vmem:[%s0 + $0x90] sm:$0xff]
    %v56 = vld [vmem:[%s0 + $0x98] sm:$0xff]
    %v57 = vld [vmem:[%s0 + $0xa0] sm:$0xff]
    %v58 = vld [vmem:[%s0 + $0xa8] sm:$0xff]
    %v59 = vld [vmem:[%s0 + $0xb0] sm:$0xff]
    %v60 = vld [vmem:[%s0 + $0xb8] sm:$0xff]
    %v61 = vld [vmem:[%s0 + $0xc0] sm:$0xff]
    %v62 = vld [vmem:[%s0 + $0xc8] sm:$0xff]
    %v63 = vld [vmem:[%s0 + $0xd0] sm:$0xff]
    %v64 = vld [vmem:[%s0 + $0xd8] sm:$0xff]
    %v65 = vld [vmem:[%s0 + $0xe0] sm:$0xff]
    %v66 = vld [vmem:[%s0 + $0xe8] sm:$0xff]
    %v67 = vld [vmem:[%s0 + $0xf0] sm:$0xff]
    %v68 = vld [vmem:[%s0 + $0xf8] sm:$0xff]
    %v69 = vld [vmem:[%s0 + $0x100] sm:$0xff]
    %v70 = vld [vmem:[%s0 + $0x108] sm:$0xff]
    %v71 = vld [vmem:[%s0 + $0x110] sm:$0xff]
    %v72 = vld [vmem:[%s0 + $0x118] sm:$0xff]
    %v73 = vld [vmem:[%s0 + $0x120] sm:$0xff]
    %v74 = vld [vmem:[%s0 + $0x128] sm:$0xff]
    %v75 = vld [vmem:[%s0 + $0x130] sm:$0xff]
    %v76 = vld [vmem:[%s0 + $0x138] sm:$0xff]
    %v77 = vld [vmem:[%s0 + $0x140] sm:$0xff]
    %v78 = vld [vmem:[%s0 + $0x148] sm:$0xff]
    %v79 = vld [vmem:[%s0 + $0x150] sm:$0xff]
    %v80 = vld [vmem:[%s0 + $0x158] sm:$0xff]
    %v81 = vld [vmem:[%s0 + $0x160] sm:$0xff]
    %v82 = vld [vmem:[%s0 + $0x168] sm:$0xff]
    %v83 = vld [vmem:[%s0 + $0x170] sm:$0xff]
    %v84 = vld [vmem:[%s0 + $0x178] sm:$0xff]
    %v85 = vld [vmem:[%s0 + $0x180] sm:$0xff]
    %v86 = vld [vmem:[%s0 + $0x188] sm:$0xff]
    %v87 = vld [vmem:[%s0 + $0x190] sm:$0xff]
    %v88 = vld [vmem:[%s0 + $0x198] sm:$0xff]
    %v89 = vld [vmem:[%s0 + $0x1a0] sm:$0xff]
    %v90 = vld [vmem:[%s0 + $0x1a8] sm:$0xff]
    %v91 = vld [vmem:[%s0 + $0x1b0] sm:$0xff]
    %v92 = vld [vmem:[%s0 + $0x1b8] sm:$0xff]
    %v93 = vld [vmem:[%s0 + $0x1c0] sm:$0xff]
    %v94 = vld [vmem:[%s0 + $0x1c8] sm:$0xff]
    %v95 = vld [vmem:[%s0 + $0x1d0] sm:$0xff]
    %v96 = vld [vmem:[%s0 + $0x1d8] sm:$0xff]
    %v97 = vld [vmem:[%s0 + $0x1e0] sm:$0xff]
    %v98 = vld [vmem:[%s0 + $0x1e8] sm:$0xff]
    %v99 = vld [vmem:[%s0 + $0x1f0] sm:$0xff]
    %v100 = vld [vmem:[%s0 + $0x1f8] sm:$0xff]
    %v101 = vld [vmem:[%s1] sm:$0xff]
    %v102 = vld [vmem:[%s1 + $0x8] sm:$0xff]
    %v103 = vld [vmem:[%s1 + $0x10] sm:$0xff]
    %v104 = vld [vmem:[%s1 + $0x18] sm:$0xff]
    %v105 = vld [vmem:[%s1 + $0x20] sm:$0xff]
    %v106 = vld [vmem:[%s1 + $0x28] sm:$0xff]
    %v107 = vld [vmem:[%s1 + $0x30] sm:$0xff]
    %v108 = vld [vmem:[%s1 + $0x38] sm:$0xff]
    %v109 = vld [vmem:[%s1 + $0x40] sm:$0xff]
    %v110 = vld [vmem:[%s1 + $0x48] sm:$0xff]
    %v111 = vld [vmem:[%s1 + $0x50] sm:$0xff]
    %v112 = vld [vmem:[%s1 + $0x58] sm:$0xff]
    %v113 = vld [vmem:[%s1 + $0x60] sm:$0xff]
    %v114 = vld [vmem:[%s1 + $0x68] sm:$0xff]
    %v115 = vld [vmem:[%s1 + $0x70] sm:$0xff]
    %v116 = vld [vmem:[%s1 + $0x78] sm:$0xff]
    %v117 = vld [vmem:[%s1 + $0x80] sm:$0xff]
    %v118 = vld [vmem:[%s1 + $0x88] sm:$0xff]
    %v119 = vld [vmem:[%s1 + $0x90] sm:$0xff]
    %v120 = vld [vmem:[%s1 + $0x98] sm:$0xff]
    %v121 = vld [vmem:[%s1 + $0xa0] sm:$0xff]
    %v122 = vld [vmem:[%s1 + $0xa8] sm:$0xff]
    %v123 = vld [vmem:[%s1 + $0xb0] sm:$0xff]
    %v124 = vld [vmem:[%s1 + $0xb8] sm:$0xff]
    %v125 = vld [vmem:[%s1 + $0xc0] sm:$0xff]
    %v126 = vld [vmem:[%s1 + $0xc8] sm:$0xff]
    %v127 = vld [vmem:[%s1 + $0xd0] sm:$0xff]
    %v128 = vld [vmem:[%s1 + $0xd8] sm:$0xff]
    %v129 = vld [vmem:[%s1 + $0xe0] sm:$0xff]
    %v130 = vld [vmem:[%s1 + $0xe8] sm:$0xff]
    %v131 = vld [vmem:[%s1 + $0xf0] sm:$0xff]
    %v132 = vld [vmem:[%s1 + $0xf8] sm:$0xff]
    %v133 = vld [vmem:[%s1 + $0x100] sm:$0xff]
    %v134 = vld [vmem:[%s1 + $0x108] sm:$0xff]
    %v135 = vld [vmem:[%s1 + $0x110] sm:$0xff]
    %v136 = vld [vmem:[%s1 + $0x118] sm:$0xff]
    %v137 = vld [vmem:[%s1 + $0x120] sm:$0xff]
    %v138 = vld [vmem:[%s1 + $0x128] sm:$0xff]
    %v139 = vld [vmem:[%s1 + $0x130] sm:$0xff]
    %v140 = vld [vmem:[%s1 + $0x138] sm:$0xff]
    %v141 = vld [vmem:[%s1 + $0x140] sm:$0xff]
    %v142 = vld [vmem:[%s1 + $0x148] sm:$0xff]
    %v143 = vld [vmem:[%s1 + $0x150] sm:$0xff]
    %v144 = vld [vmem:[%s1 + $0x158] sm:$0xff]
    %v145 = vld [vmem:[%s1 + $0x160] sm:$0xff]
    %v146 = vld [vmem:[%s1 + $0x168] sm:$0xff]
    %v147 = vld [vmem:[%s1 + $0x170] sm:$0xff]
    %v148 = vld [vmem:[%s1 + $0x178] sm:$0xff]
    %v149 = vld [vmem:[%s1 + $0x180] sm:$0xff]
    %v150 = vld [vmem:[%s1 + $0x188] sm:$0xff]
    %v151 = vld [vmem:[%s1 + $0x190] sm:$0xff]
    %v152 = vld [vmem:[%s1 + $0x198] sm:$0xff]
    %v153 = vld [vmem:[%s1 + $0x1a0] sm:$0xff]
    %v154 = vld [vmem:[%s1 + $0x1a8] sm:$0xff]
    %v155 = vld [vmem:[%s1 + $0x1b0] sm:$0xff]
    %v156 = vld [vmem:[%s1 + $0x1b8] sm:$0xff]
    %v157 = vld [vmem:[%s1 + $0x1c0] sm:$0xff]
    %v158 = vld [vmem:[%s1 + $0x1c8] sm:$0xff]
    %v159 = vld [vmem:[%s1 + $0x1d0] sm:$0xff]
    %v160 = vld [vmem:[%s1 + $0x1d8] sm:$0xff]
    %v161 = vld [vmem:[%s1 + $0x1e0] sm:$0xff]
    %v162 = vld [vmem:[%s1 + $0x1e8] sm:$0xff]
    %v163 = vld [vmem:[%s1 + $0x1f0] sm:$0xff]
    %v164 = vld [vmem:[%s1 + $0x1f8] sm:$0xff]
    %v165 = vadd.f32 %v37, %v101
    %v166 = vadd.f32 %v38, %v102
    %v167 = vadd.f32 %v39, %v103
    %v168 = vadd.f32 %v40, %v104
    %v169 = vadd.f32 %v41, %v105
    %v170 = vadd.f32 %v42, %v106
    %v171 = vadd.f32 %v43, %v107
    %v172 = vadd.f32 %v44, %v108
    %v173 = vadd.f32 %v45, %v109
    %v174 = vadd.f32 %v46, %v110
    %v175 = vadd.f32 %v47, %v111
    %v176 = vadd.f32 %v48, %v112
    %v177 = vadd.f32 %v49, %v113
    %v178 = vadd.f32 %v50, %v114
    %v179 = vadd.f32 %v51, %v115
    %v180 = vadd.f32 %v52, %v116
    %v181 = vadd.f32 %v53, %v117
    %v182 = vadd.f32 %v54, %v118
    %v183 = vadd.f32 %v55, %v119
    %v184 = vadd.f32 %v56, %v120
    %v185 = vadd.f32 %v57, %v121
    %v186 = vadd.f32 %v58, %v122
    %v187 = vadd.f32 %v59, %v123
    %v188 = vadd.f32 %v60, %v124
    %v189 = vadd.f32 %v61, %v125
    %v190 = vadd.f32 %v62, %v126
    %v191 = vadd.f32 %v63, %v127
    %v192 = vadd.f32 %v64, %v128
    %v193 = vadd.f32 %v65, %v129
    %v194 = vadd.f32 %v66, %v130
    %v195 = vadd.f32 %v67, %v131
    %v196 = vadd.f32 %v68, %v132
    %v197 = vadd.f32 %v69, %v133
    %v198 = vadd.f32 %v70, %v134
    %v199 = vadd.f32 %v71, %v135
    %v200 = vadd.f32 %v72, %v136
    %v201 = vadd.f32 %v73, %v137
    %v202 = vadd.f32 %v74, %v138
    %v203 = vadd.f32 %v75, %v139
    %v204 = vadd.f32 %v76, %v140
    %v205 = vadd.f32 %v77, %v141
    %v206 = vadd.f32 %v78, %v142
    %v207 = vadd.f32 %v79, %v143
    %v208 = vadd.f32 %v80, %v144
    %v209 = vadd.f32 %v81, %v145
    %v210 = vadd.f32 %v82, %v146
    %v211 = vadd.f32 %v83, %v147
    %v212 = vadd.f32 %v84, %v148
    %v213 = vadd.f32 %v85, %v149
    %v214 = vadd.f32 %v86, %v150
    %v215 = vadd.f32 %v87, %v151
    %v216 = vadd.f32 %v88, %v152
    %v217 = vadd.f32 %v89, %v153
    %v218 = vadd.f32 %v90, %v154
    %v219 = vadd.f32 %v91, %v155
    %v220 = vadd.f32 %v92, %v156
    %v221 = vadd.f32 %v93, %v157
    %v222 = vadd.f32 %v94, %v158
    %v223 = vadd.f32 %v95, %v159
    %v224 = vadd.f32 %v96, %v160
    %v225 = vadd.f32 %v97, %v161
    %v226 = vadd.f32 %v98, %v162
    %v227 = vadd.f32 %v99, %v163
    %v228 = vadd.f32 %v100, %v164
    %v229 = vld [vmem:[%s4] sm:$0x1]
    %v231 = vlaneseq
    %v232 = vshrl.u32 %v231, 7
    %v233 = vsub.s32 0, %v232
    %v234 = vrot.slane %v229, %v233
    %v236 = vadd.f32 %v165, %v234
    %v237 = vadd.f32 %v166, %v234
    %v238 = vadd.f32 %v167, %v234
    %v239 = vadd.f32 %v168, %v234
    %v240 = vadd.f32 %v169, %v234
    %v241 = vadd.f32 %v170, %v234
    %v242 = vadd.f32 %v171, %v234
    %v243 = vadd.f32 %v172, %v234
    %v244 = vadd.f32 %v173, %v234
    %v245 = vadd.f32 %v174, %v234
    %v246 = vadd.f32 %v175, %v234
    %v247 = vadd.f32 %v176, %v234
    %v248 = vadd.f32 %v177, %v234
    %v249 = vadd.f32 %v178, %v234
    %v250 = vadd.f32 %v179, %v234
    %v251 = vadd.f32 %v180, %v234
    %v252 = vadd.f32 %v181, %v234
    %v253 = vadd.f32 %v182, %v234
    %v254 = vadd.f32 %v183, %v234
    %v255 = vadd.f32 %v184, %v234
    %v256 = vadd.f32 %v185, %v234
    %v257 = vadd.f32 %v186, %v234
    %v258 = vadd.f32 %v187, %v234
    %v259 = vadd.f32 %v188, %v234
    %v260 = vadd.f32 %v189, %v234
    %v261 = vadd.f32 %v190, %v234
    %v262 = vadd.f32 %v191, %v234
    %v263 = vadd.f32 %v192, %v234
    %v264 = vadd.f32 %v193, %v234
    %v265 = vadd.f32 %v194, %v234
    %v266 = vadd.f32 %v195, %v234
    %v267 = vadd.f32 %v196, %v234
    %v268 = vadd.f32 %v197, %v234
    %v269 = vadd.f32 %v198, %v234
    %v270 = vadd.f32 %v199, %v234
    %v271 = vadd.f32 %v200, %v234
    %v272 = vadd.f32 %v201, %v234
    %v273 = vadd.f32 %v202, %v234
    %v274 = vadd.f32 %v203, %v234
    %v275 = vadd.f32 %v204, %v234
    %v276 = vadd.f32 %v205, %v234
    %v277 = vadd.f32 %v206, %v234
    %v278 = vadd.f32 %v207, %v234
    %v279 = vadd.f32 %v208, %v234
    %v280 = vadd.f32 %v209, %v234
    %v281 = vadd.f32 %v210, %v234
    %v282 = vadd.f32 %v211, %v234
    %v283 = vadd.f32 %v212, %v234
    %v284 = vadd.f32 %v213, %v234
    %v285 = vadd.f32 %v214, %v234
    %v286 = vadd.f32 %v215, %v234
    %v287 = vadd.f32 %v216, %v234
    %v288 = vadd.f32 %v217, %v234
    %v289 = vadd.f32 %v218, %v234
    %v290 = vadd.f32 %v219, %v234
    %v291 = vadd.f32 %v220, %v234
    %v292 = vadd.f32 %v221, %v234
    %v293 = vadd.f32 %v222, %v234
    %v294 = vadd.f32 %v223, %v234
    %v295 = vadd.f32 %v224, %v234
    %v296 = vadd.f32 %v225, %v234
    %v297 = vadd.f32 %v226, %v234
    %v298 = vadd.f32 %v227, %v234
    %v299 = vadd.f32 %v228, %v234
    %v300 = vld [vmem:[%s2] sm:$0xff]
    %v301 = vld [vmem:[%s2 + $0x8] sm:$0xff]
    %v302 = vld [vmem:[%s2 + $0x10] sm:$0xff]
    %v303 = vld [vmem:[%s2 + $0x18] sm:$0xff]
    %v304 = vld [vmem:[%s2 + $0x20] sm:$0xff]
    %v305 = vld [vmem:[%s2 + $0x28] sm:$0xff]
    %v306 = vld [vmem:[%s2 + $0x30] sm:$0xff]
    %v307 = vld [vmem:[%s2 + $0x38] sm:$0xff]
    %v308 = vld [vmem:[%s2 + $0x40] sm:$0xff]
    %v309 = vld [vmem:[%s2 + $0x48] sm:$0xff]
    %v310 = vld [vmem:[%s2 + $0x50] sm:$0xff]
    %v311 = vld [vmem:[%s2 + $0x58] sm:$0xff]
    %v312 = vld [vmem:[%s2 + $0x60] sm:$0xff]
    %v313 = vld [vmem:[%s2 + $0x68] sm:$0xff]
    %v314 = vld [vmem:[%s2 + $0x70] sm:$0xff]
    %v315 = vld [vmem:[%s2 + $0x78] sm:$0xff]
    %v316 = vld [vmem:[%s2 + $0x80] sm:$0xff]
    %v317 = vld [vmem:[%s2 + $0x88] sm:$0xff]
    %v318 = vld [vmem:[%s2 + $0x90] sm:$0xff]
    %v319 = vld [vmem:[%s2 + $0x98] sm:$0xff]
    %v320 = vld [vmem:[%s2 + $0xa0] sm:$0xff]
    %v321 = vld [vmem:[%s2 + $0xa8] sm:$0xff]
    %v322 = vld [vmem:[%s2 + $0xb0] sm:$0xff]
    %v323 = vld [vmem:[%s2 + $0xb8] sm:$0xff]
    %v324 = vld [vmem:[%s2 + $0xc0] sm:$0xff]
    %v325 = vld [vmem:[%s2 + $0xc8] sm:$0xff]
    %v326 = vld [vmem:[%s2 + $0xd0] sm:$0xff]
    %v327 = vld [vmem:[%s2 + $0xd8] sm:$0xff]
    %v328 = vld [vmem:[%s2 + $0xe0] sm:$0xff]
    %v329 = vld [vmem:[%s2 + $0xe8] sm:$0xff]
    %v330 = vld [vmem:[%s2 + $0xf0] sm:$0xff]
    %v331 = vld [vmem:[%s2 + $0xf8] sm:$0xff]
    %v332 = vld [vmem:[%s2 + $0x100] sm:$0xff]
    %v333 = vld [vmem:[%s2 + $0x108] sm:$0xff]
    %v334 = vld [vmem:[%s2 + $0x110] sm:$0xff]
    %v335 = vld [vmem:[%s2 + $0x118] sm:$0xff]
    %v336 = vld [vmem:[%s2 + $0x120] sm:$0xff]
    %v337 = vld [vmem:[%s2 + $0x128] sm:$0xff]
    %v338 = vld [vmem:[%s2 + $0x130] sm:$0xff]
    %v339 = vld [vmem:[%s2 + $0x138] sm:$0xff]
    %v340 = vld [vmem:[%s2 + $0x140] sm:$0xff]
    %v341 = vld [vmem:[%s2 + $0x148] sm:$0xff]
    %v342 = vld [vmem:[%s2 + $0x150] sm:$0xff]
    %v343 = vld [vmem:[%s2 + $0x158] sm:$0xff]
    %v344 = vld [vmem:[%s2 + $0x160] sm:$0xff]
    %v345 = vld [vmem:[%s2 + $0x168] sm:$0xff]
    %v346 = vld [vmem:[%s2 + $0x170] sm:$0xff]
    %v347 = vld [vmem:[%s2 + $0x178] sm:$0xff]
    %v348 = vld [vmem:[%s2 + $0x180] sm:$0xff]
    %v349 = vld [vmem:[%s2 + $0x188] sm:$0xff]
    %v350 = vld [vmem:[%s2 + $0x190] sm:$0xff]
    %v351 = vld [vmem:[%s2 + $0x198] sm:$0xff]
    %v352 = vld [vmem:[%s2 + $0x1a0] sm:$0xff]
    %v353 = vld [vmem:[%s2 + $0x1a8] sm:$0xff]
    %v354 = vld [vmem:[%s2 + $0x1b0] sm:$0xff]
    %v355 = vld [vmem:[%s2 + $0x1b8] sm:$0xff]
    %v356 = vld [vmem:[%s2 + $0x1c0] sm:$0xff]
    %v357 = vld [vmem:[%s2 + $0x1c8] sm:$0xff]
    %v358 = vld [vmem:[%s2 + $0x1d0] sm:$0xff]
    %v359 = vld [vmem:[%s2 + $0x1d8] sm:$0xff]
    %v360 = vld [vmem:[%s2 + $0x1e0] sm:$0xff]
    %v361 = vld [vmem:[%s2 + $0x1e8] sm:$0xff]
    %v362 = vld [vmem:[%s2 + $0x1f0] sm:$0xff]
    %v363 = vld [vmem:[%s2 + $0x1f8] sm:$0xff]
    %v364 = vld [vmem:[%s5] sm:$0x1]
    %v366 = vlaneseq
    %v367 = vshrl.u32 %v366, 7
    %v368 = vsub.s32 0, %v367
    %v369 = vrot.slane %v364, %v368
    %v371 = vmul.f32 %v300, %v369
    %v372 = vmul.f32 %v301, %v369
    %v373 = vmul.f32 %v302, %v369
    %v374 = vmul.f32 %v303, %v369
    %v375 = vmul.f32 %v304, %v369
    %v376 = vmul.f32 %v305, %v369
    %v377 = vmul.f32 %v306, %v369
    %v378 = vmul.f32 %v307, %v369
    %v379 = vmul.f32 %v308, %v369
    %v380 = vmul.f32 %v309, %v369
    %v381 = vmul.f32 %v310, %v369
    %v382 = vmul.f32 %v311, %v369
    %v383 = vmul.f32 %v312, %v369
    %v384 = vmul.f32 %v313, %v369
    %v385 = vmul.f32 %v314, %v369
    %v386 = vmul.f32 %v315, %v369
    %v387 = vmul.f32 %v316, %v369
    %v388 = vmul.f32 %v317, %v369
    %v389 = vmul.f32 %v318, %v369
    %v390 = vmul.f32 %v319, %v369
    %v391 = vmul.f32 %v320, %v369
    %v392 = vmul.f32 %v321, %v369
    %v393 = vmul.f32 %v322, %v369
    %v394 = vmul.f32 %v323, %v369
    %v395 = vmul.f32 %v324, %v369
    %v396 = vmul.f32 %v325, %v369
    %v397 = vmul.f32 %v326, %v369
    %v398 = vmul.f32 %v327, %v369
    %v399 = vmul.f32 %v328, %v369
    %v400 = vmul.f32 %v329, %v369
    %v401 = vmul.f32 %v330, %v369
    %v402 = vmul.f32 %v331, %v369
    %v403 = vmul.f32 %v332, %v369
    %v404 = vmul.f32 %v333, %v369
    %v405 = vmul.f32 %v334, %v369
    %v406 = vmul.f32 %v335, %v369
    %v407 = vmul.f32 %v336, %v369
    %v408 = vmul.f32 %v337, %v369
    %v409 = vmul.f32 %v338, %v369
    %v410 = vmul.f32 %v339, %v369
    %v411 = vmul.f32 %v340, %v369
    %v412 = vmul.f32 %v341, %v369
    %v413 = vmul.f32 %v342, %v369
    %v414 = vmul.f32 %v343, %v369
    %v415 = vmul.f32 %v344, %v369
    %v416 = vmul.f32 %v345, %v369
    %v417 = vmul.f32 %v346, %v369
    %v418 = vmul.f32 %v347, %v369
    %v419 = vmul.f32 %v348, %v369
    %v420 = vmul.f32 %v349, %v369
    %v421 = vmul.f32 %v350, %v369
    %v422 = vmul.f32 %v351, %v369
    %v423 = vmul.f32 %v352, %v369
    %v424 = vmul.f32 %v353, %v369
    %v425 = vmul.f32 %v354, %v369
    %v426 = vmul.f32 %v355, %v369
    %v427 = vmul.f32 %v356, %v369
    %v428 = vmul.f32 %v357, %v369
    %v429 = vmul.f32 %v358, %v369
    %v430 = vmul.f32 %v359, %v369
    %v431 = vmul.f32 %v360, %v369
    %v432 = vmul.f32 %v361, %v369
    %v433 = vmul.f32 %v362, %v369
    %v434 = vmul.f32 %v363, %v369
    %v435 = vadd.f32 %v236, %v371
    %v436 = vadd.f32 %v237, %v372
    %v437 = vadd.f32 %v238, %v373
    %v438 = vadd.f32 %v239, %v374
    %v439 = vadd.f32 %v240, %v375
    %v440 = vadd.f32 %v241, %v376
    %v441 = vadd.f32 %v242, %v377
    %v442 = vadd.f32 %v243, %v378
    %v443 = vadd.f32 %v244, %v379
    %v444 = vadd.f32 %v245, %v380
    %v445 = vadd.f32 %v246, %v381
    %v446 = vadd.f32 %v247, %v382
    %v447 = vadd.f32 %v248, %v383
    %v448 = vadd.f32 %v249, %v384
    %v449 = vadd.f32 %v250, %v385
    %v450 = vadd.f32 %v251, %v386
    %v451 = vadd.f32 %v252, %v387
    %v452 = vadd.f32 %v253, %v388
    %v453 = vadd.f32 %v254, %v389
    %v454 = vadd.f32 %v255, %v390
    %v455 = vadd.f32 %v256, %v391
    %v456 = vadd.f32 %v257, %v392
    %v457 = vadd.f32 %v258, %v393
    %v458 = vadd.f32 %v259, %v394
    %v459 = vadd.f32 %v260, %v395
    %v460 = vadd.f32 %v261, %v396
    %v461 = vadd.f32 %v262, %v397
    %v462 = vadd.f32 %v263, %v398
    %v463 = vadd.f32 %v264, %v399
    %v464 = vadd.f32 %v265, %v400
    %v465 = vadd.f32 %v266, %v401
    %v466 = vadd.f32 %v267, %v402
    %v467 = vadd.f32 %v268, %v403
    %v468 = vadd.f32 %v269, %v404
    %v469 = vadd.f32 %v270, %v405
    %v470 = vadd.f32 %v271, %v406
    %v471 = vadd.f32 %v272, %v407
    %v472 = vadd.f32 %v273, %v408
    %v473 = vadd.f32 %v274, %v409
    %v474 = vadd.f32 %v275, %v410
    %v475 = vadd.f32 %v276, %v411
    %v476 = vadd.f32 %v277, %v412
    %v477 = vadd.f32 %v278, %v413
    %v478 = vadd.f32 %v279, %v414
    %v479 = vadd.f32 %v280, %v415
    %v480 = vadd.f32 %v281, %v416
    %v481 = vadd.f32 %v282, %v417
    %v482 = vadd.f32 %v283, %v418
    %v483 = vadd.f32 %v284, %v419
    %v484 = vadd.f32 %v285, %v420
    %v485 = vadd.f32 %v286, %v421
    %v486 = vadd.f32 %v287, %v422
    %v487 = vadd.f32 %v288, %v423
    %v488 = vadd.f32 %v289, %v424
    %v489 = vadd.f32 %v290, %v425
    %v490 = vadd.f32 %v291, %v426
    %v491 = vadd.f32 %v292, %v427
    %v492 = vadd.f32 %v293, %v428
    %v493 = vadd.f32 %v294, %v429
    %v494 = vadd.f32 %v295, %v430
    %v495 = vadd.f32 %v296, %v431
    %v496 = vadd.f32 %v297, %v432
    %v497 = vadd.f32 %v298, %v433
    %v498 = vadd.f32 %v299, %v434
    %v499 = vld [vmem:[%s3] sm:$0xff]
    %v500 = vld [vmem:[%s3 + $0x8] sm:$0xff]
    %v501 = vld [vmem:[%s3 + $0x10] sm:$0xff]
    %v502 = vld [vmem:[%s3 + $0x18] sm:$0xff]
    %v503 = vld [vmem:[%s3 + $0x20] sm:$0xff]
    %v504 = vld [vmem:[%s3 + $0x28] sm:$0xff]
    %v505 = vld [vmem:[%s3 + $0x30] sm:$0xff]
    %v506 = vld [vmem:[%s3 + $0x38] sm:$0xff]
    %v507 = vld [vmem:[%s3 + $0x40] sm:$0xff]
    %v508 = vld [vmem:[%s3 + $0x48] sm:$0xff]
    %v509 = vld [vmem:[%s3 + $0x50] sm:$0xff]
    %v510 = vld [vmem:[%s3 + $0x58] sm:$0xff]
    %v511 = vld [vmem:[%s3 + $0x60] sm:$0xff]
    %v512 = vld [vmem:[%s3 + $0x68] sm:$0xff]
    %v513 = vld [vmem:[%s3 + $0x70] sm:$0xff]
    %v514 = vld [vmem:[%s3 + $0x78] sm:$0xff]
    %v515 = vld [vmem:[%s3 + $0x80] sm:$0xff]
    %v516 = vld [vmem:[%s3 + $0x88] sm:$0xff]
    %v517 = vld [vmem:[%s3 + $0x90] sm:$0xff]
    %v518 = vld [vmem:[%s3 + $0x98] sm:$0xff]
    %v519 = vld [vmem:[%s3 + $0xa0] sm:$0xff]
    %v520 = vld [vmem:[%s3 + $0xa8] sm:$0xff]
    %v521 = vld [vmem:[%s3 + $0xb0] sm:$0xff]
    %v522 = vld [vmem:[%s3 + $0xb8] sm:$0xff]
    %v523 = vld [vmem:[%s3 + $0xc0] sm:$0xff]
    %v524 = vld [vmem:[%s3 + $0xc8] sm:$0xff]
    %v525 = vld [vmem:[%s3 + $0xd0] sm:$0xff]
    %v526 = vld [vmem:[%s3 + $0xd8] sm:$0xff]
    %v527 = vld [vmem:[%s3 + $0xe0] sm:$0xff]
    %v528 = vld [vmem:[%s3 + $0xe8] sm:$0xff]
    %v529 = vld [vmem:[%s3 + $0xf0] sm:$0xff]
    %v530 = vld [vmem:[%s3 + $0xf8] sm:$0xff]
    %v531 = vld [vmem:[%s3 + $0x100] sm:$0xff]
    %v532 = vld [vmem:[%s3 + $0x108] sm:$0xff]
    %v533 = vld [vmem:[%s3 + $0x110] sm:$0xff]
    %v534 = vld [vmem:[%s3 + $0x118] sm:$0xff]
    %v535 = vld [vmem:[%s3 + $0x120] sm:$0xff]
    %v536 = vld [vmem:[%s3 + $0x128] sm:$0xff]
    %v537 = vld [vmem:[%s3 + $0x130] sm:$0xff]
    %v538 = vld [vmem:[%s3 + $0x138] sm:$0xff]
    %v539 = vld [vmem:[%s3 + $0x140] sm:$0xff]
    %v540 = vld [vmem:[%s3 + $0x148] sm:$0xff]
    %v541 = vld [vmem:[%s3 + $0x150] sm:$0xff]
    %v542 = vld [vmem:[%s3 + $0x158] sm:$0xff]
    %v543 = vld [vmem:[%s3 + $0x160] sm:$0xff]
    %v544 = vld [vmem:[%s3 + $0x168] sm:$0xff]
    %v545 = vld [vmem:[%s3 + $0x170] sm:$0xff]
    %v546 = vld [vmem:[%s3 + $0x178] sm:$0xff]
    %v547 = vld [vmem:[%s3 + $0x180] sm:$0xff]
    %v548 = vld [vmem:[%s3 + $0x188] sm:$0xff]
    %v549 = vld [vmem:[%s3 + $0x190] sm:$0xff]
    %v550 = vld [vmem:[%s3 + $0x198] sm:$0xff]
    %v551 = vld [vmem:[%s3 + $0x1a0] sm:$0xff]
    %v552 = vld [vmem:[%s3 + $0x1a8] sm:$0xff]
    %v553 = vld [vmem:[%s3 + $0x1b0] sm:$0xff]
    %v554 = vld [vmem:[%s3 + $0x1b8] sm:$0xff]
    %v555 = vld [vmem:[%s3 + $0x1c0] sm:$0xff]
    %v556 = vld [vmem:[%s3 + $0x1c8] sm:$0xff]
    %v557 = vld [vmem:[%s3 + $0x1d0] sm:$0xff]
    %v558 = vld [vmem:[%s3 + $0x1d8] sm:$0xff]
    %v559 = vld [vmem:[%s3 + $0x1e0] sm:$0xff]
    %v560 = vld [vmem:[%s3 + $0x1e8] sm:$0xff]
    %v561 = vld [vmem:[%s3 + $0x1f0] sm:$0xff]
    %v562 = vld [vmem:[%s3 + $0x1f8] sm:$0xff]
    %v563 = vld [vmem:[%s6] sm:$0x1]
    %v565 = vlaneseq
    %v566 = vshrl.u32 %v565, 7
    %v567 = vsub.s32 0, %v566
    %v568 = vrot.slane %v563, %v567
    %v570 = vmul.f32 %v499, %v568
    %v571 = vmul.f32 %v500, %v568
    %v572 = vmul.f32 %v501, %v568
    %v573 = vmul.f32 %v502, %v568
    %v574 = vmul.f32 %v503, %v568
    %v575 = vmul.f32 %v504, %v568
    %v576 = vmul.f32 %v505, %v568
    %v577 = vmul.f32 %v506, %v568
    %v578 = vmul.f32 %v507, %v568
    %v579 = vmul.f32 %v508, %v568
    %v580 = vmul.f32 %v509, %v568
    %v581 = vmul.f32 %v510, %v568
    %v582 = vmul.f32 %v511, %v568
    %v583 = vmul.f32 %v512, %v568
    %v584 = vmul.f32 %v513, %v568
    %v585 = vmul.f32 %v514, %v568
    %v586 = vmul.f32 %v515, %v568
    %v587 = vmul.f32 %v516, %v568
    %v588 = vmul.f32 %v517, %v568
    %v589 = vmul.f32 %v518, %v568
    %v590 = vmul.f32 %v519, %v568
    %v591 = vmul.f32 %v520, %v568
    %v592 = vmul.f32 %v521, %v568
    %v593 = vmul.f32 %v522, %v568
    %v594 = vmul.f32 %v523, %v568
    %v595 = vmul.f32 %v524, %v568
    %v596 = vmul.f32 %v525, %v568
    %v597 = vmul.f32 %v526, %v568
    %v598 = vmul.f32 %v527, %v568
    %v599 = vmul.f32 %v528, %v568
    %v600 = vmul.f32 %v529, %v568
    %v601 = vmul.f32 %v530, %v568
    %v602 = vmul.f32 %v531, %v568
    %v603 = vmul.f32 %v532, %v568
    %v604 = vmul.f32 %v533, %v568
    %v605 = vmul.f32 %v534, %v568
    %v606 = vmul.f32 %v535, %v568
    %v607 = vmul.f32 %v536, %v568
    %v608 = vmul.f32 %v537, %v568
    %v609 = vmul.f32 %v538, %v568
    %v610 = vmul.f32 %v539, %v568
    %v611 = vmul.f32 %v540, %v568
    %v612 = vmul.f32 %v541, %v568
    %v613 = vmul.f32 %v542, %v568
    %v614 = vmul.f32 %v543, %v568
    %v615 = vmul.f32 %v544, %v568
    %v616 = vmul.f32 %v545, %v568
    %v617 = vmul.f32 %v546, %v568
    %v618 = vmul.f32 %v547, %v568
    %v619 = vmul.f32 %v548, %v568
    %v620 = vmul.f32 %v549, %v568
    %v621 = vmul.f32 %v550, %v568
    %v622 = vmul.f32 %v551, %v568
    %v623 = vmul.f32 %v552, %v568
    %v624 = vmul.f32 %v553, %v568
    %v625 = vmul.f32 %v554, %v568
    %v626 = vmul.f32 %v555, %v568
    %v627 = vmul.f32 %v556, %v568
    %v628 = vmul.f32 %v557, %v568
    %v629 = vmul.f32 %v558, %v568
    %v630 = vmul.f32 %v559, %v568
    %v631 = vmul.f32 %v560, %v568
    %v632 = vmul.f32 %v561, %v568
    %v633 = vmul.f32 %v562, %v568
    %v634 = vadd.f32 %v435, %v570
    %v635 = vadd.f32 %v436, %v571
    %v636 = vadd.f32 %v437, %v572
    %v637 = vadd.f32 %v438, %v573
    %v638 = vadd.f32 %v439, %v574
    %v639 = vadd.f32 %v440, %v575
    %v640 = vadd.f32 %v441, %v576
    %v641 = vadd.f32 %v442, %v577
    %v642 = vadd.f32 %v443, %v578
    %v643 = vadd.f32 %v444, %v579
    %v644 = vadd.f32 %v445, %v580
    %v645 = vadd.f32 %v446, %v581
    %v646 = vadd.f32 %v447, %v582
    %v647 = vadd.f32 %v448, %v583
    %v648 = vadd.f32 %v449, %v584
    %v649 = vadd.f32 %v450, %v585
    %v650 = vadd.f32 %v451, %v586
    %v651 = vadd.f32 %v452, %v587
    %v652 = vadd.f32 %v453, %v588
    %v653 = vadd.f32 %v454, %v589
    %v654 = vadd.f32 %v455, %v590
    %v655 = vadd.f32 %v456, %v591
    %v656 = vadd.f32 %v457, %v592
    %v657 = vadd.f32 %v458, %v593
    %v658 = vadd.f32 %v459, %v594
    %v659 = vadd.f32 %v460, %v595
    %v660 = vadd.f32 %v461, %v596
    %v661 = vadd.f32 %v462, %v597
    %v662 = vadd.f32 %v463, %v598
    %v663 = vadd.f32 %v464, %v599
    %v664 = vadd.f32 %v465, %v600
    %v665 = vadd.f32 %v466, %v601
    %v666 = vadd.f32 %v467, %v602
    %v667 = vadd.f32 %v468, %v603
    %v668 = vadd.f32 %v469, %v604
    %v669 = vadd.f32 %v470, %v605
    %v670 = vadd.f32 %v471, %v606
    %v671 = vadd.f32 %v472, %v607
    %v672 = vadd.f32 %v473, %v608
    %v673 = vadd.f32 %v474, %v609
    %v674 = vadd.f32 %v475, %v610
    %v675 = vadd.f32 %v476, %v611
    %v676 = vadd.f32 %v477, %v612
    %v677 = vadd.f32 %v478, %v613
    %v678 = vadd.f32 %v479, %v614
    %v679 = vadd.f32 %v480, %v615
    %v680 = vadd.f32 %v481, %v616
    %v681 = vadd.f32 %v482, %v617
    %v682 = vadd.f32 %v483, %v618
    %v683 = vadd.f32 %v484, %v619
    %v684 = vadd.f32 %v485, %v620
    %v685 = vadd.f32 %v486, %v621
    %v686 = vadd.f32 %v487, %v622
    %v687 = vadd.f32 %v488, %v623
    %v688 = vadd.f32 %v489, %v624
    %v689 = vadd.f32 %v490, %v625
    %v690 = vadd.f32 %v491, %v626
    %v691 = vadd.f32 %v492, %v627
    %v692 = vadd.f32 %v493, %v628
    %v693 = vadd.f32 %v494, %v629
    %v694 = vadd.f32 %v495, %v630
    %v695 = vadd.f32 %v496, %v631
    %v696 = vadd.f32 %v497, %v632
    %v697 = vadd.f32 %v498, %v633
    %v698 = vmax.f32 %v634, 0.0
    %v699 = vmax.f32 %v635, 0.0
    %v700 = vmax.f32 %v636, 0.0
    %v701 = vmax.f32 %v637, 0.0
    %v702 = vmax.f32 %v638, 0.0
    %v703 = vmax.f32 %v639, 0.0
    %v704 = vmax.f32 %v640, 0.0
    %v705 = vmax.f32 %v641, 0.0
    %v706 = vmax.f32 %v642, 0.0
    %v707 = vmax.f32 %v643, 0.0
    %v708 = vmax.f32 %v644, 0.0
    %v709 = vmax.f32 %v645, 0.0
    %v710 = vmax.f32 %v646, 0.0
    %v711 = vmax.f32 %v647, 0.0
    %v712 = vmax.f32 %v648, 0.0
    %v713 = vmax.f32 %v649, 0.0
    %v714 = vmax.f32 %v650, 0.0
    %v715 = vmax.f32 %v651, 0.0
    %v716 = vmax.f32 %v652, 0.0
    %v717 = vmax.f32 %v653, 0.0
    %v718 = vmax.f32 %v654, 0.0
    %v719 = vmax.f32 %v655, 0.0
    %v720 = vmax.f32 %v656, 0.0
    %v721 = vmax.f32 %v657, 0.0
    %v722 = vmax.f32 %v658, 0.0
    %v723 = vmax.f32 %v659, 0.0
    %v724 = vmax.f32 %v660, 0.0
    %v725 = vmax.f32 %v661, 0.0
    %v726 = vmax.f32 %v662, 0.0
    %v727 = vmax.f32 %v663, 0.0
    %v728 = vmax.f32 %v664, 0.0
    %v729 = vmax.f32 %v665, 0.0
    %v730 = vmax.f32 %v666, 0.0
    %v731 = vmax.f32 %v667, 0.0
    %v732 = vmax.f32 %v668, 0.0
    %v733 = vmax.f32 %v669, 0.0
    %v734 = vmax.f32 %v670, 0.0
    %v735 = vmax.f32 %v671, 0.0
    %v736 = vmax.f32 %v672, 0.0
    %v737 = vmax.f32 %v673, 0.0
    %v738 = vmax.f32 %v674, 0.0
    %v739 = vmax.f32 %v675, 0.0
    %v740 = vmax.f32 %v676, 0.0
    %v741 = vmax.f32 %v677, 0.0
    %v742 = vmax.f32 %v678, 0.0
    %v743 = vmax.f32 %v679, 0.0
    %v744 = vmax.f32 %v680, 0.0
    %v745 = vmax.f32 %v681, 0.0
    %v746 = vmax.f32 %v682, 0.0
    %v747 = vmax.f32 %v683, 0.0
    %v748 = vmax.f32 %v684, 0.0
    %v749 = vmax.f32 %v685, 0.0
    %v750 = vmax.f32 %v686, 0.0
    %v751 = vmax.f32 %v687, 0.0
    %v752 = vmax.f32 %v688, 0.0
    %v753 = vmax.f32 %v689, 0.0
    %v754 = vmax.f32 %v690, 0.0
    %v755 = vmax.f32 %v691, 0.0
    %v756 = vmax.f32 %v692, 0.0
    %v757 = vmax.f32 %v693, 0.0
    %v758 = vmax.f32 %v694, 0.0
    %v759 = vmax.f32 %v695, 0.0
    %v760 = vmax.f32 %v696, 0.0
    %v761 = vmax.f32 %v697, 0.0
    %v762 = vpack.c.bf16 %v699, %v698
    %v763 = vpack.c.bf16 %v701, %v700
    %v764 = vpack.c.bf16 %v703, %v702
    %v765 = vpack.c.bf16 %v705, %v704
    %v766 = vpack.c.bf16 %v707, %v706
    %v767 = vpack.c.bf16 %v709, %v708
    %v768 = vpack.c.bf16 %v711, %v710
    %v769 = vpack.c.bf16 %v713, %v712
    %v770 = vpack.c.bf16 %v715, %v714
    %v771 = vpack.c.bf16 %v717, %v716
    %v772 = vpack.c.bf16 %v719, %v718
    %v773 = vpack.c.bf16 %v721, %v720
    %v774 = vpack.c.bf16 %v723, %v722
    %v775 = vpack.c.bf16 %v725, %v724
    %v776 = vpack.c.bf16 %v727, %v726
    %v777 = vpack.c.bf16 %v729, %v728
    %v778 = vpack.c.bf16 %v731, %v730
    %v779 = vpack.c.bf16 %v733, %v732
    %v780 = vpack.c.bf16 %v735, %v734
    %v781 = vpack.c.bf16 %v737, %v736
    %v782 = vpack.c.bf16 %v739, %v738
    %v783 = vpack.c.bf16 %v741, %v740
    %v784 = vpack.c.bf16 %v743, %v742
    %v785 = vpack.c.bf16 %v745, %v744
    %v786 = vpack.c.bf16 %v747, %v746
    %v787 = vpack.c.bf16 %v749, %v748
    %v788 = vpack.c.bf16 %v751, %v750
    %v789 = vpack.c.bf16 %v753, %v752
    %v790 = vpack.c.bf16 %v755, %v754
    %v791 = vpack.c.bf16 %v757, %v756
    %v792 = vpack.c.bf16 %v759, %v758
    %v793 = vpack.c.bf16 %v761, %v760
    %v794 = vld [vmem:[%s7] sm:$0xf]
    %v795 = vpack.c.bf16 %v38, %v37
    %v796 = vpack.c.bf16 %v40, %v39
    %v797 = vpack.c.bf16 %v42, %v41
    %v798 = vpack.c.bf16 %v44, %v43
    %v799 = vpack.c.bf16 %v46, %v45
    %v800 = vpack.c.bf16 %v48, %v47
    %v801 = vpack.c.bf16 %v50, %v49
    %v802 = vpack.c.bf16 %v52, %v51
    %v803 = vpack.c.bf16 %v54, %v53
    %v804 = vpack.c.bf16 %v56, %v55
    %v805 = vpack.c.bf16 %v58, %v57
    %v806 = vpack.c.bf16 %v60, %v59
    %v807 = vpack.c.bf16 %v62, %v61
    %v808 = vpack.c.bf16 %v64, %v63
    %v809 = vpack.c.bf16 %v66, %v65
    %v810 = vpack.c.bf16 %v68, %v67
    %v811 = vpack.c.bf16 %v70, %v69
    %v812 = vpack.c.bf16 %v72, %v71
    %v813 = vpack.c.bf16 %v74, %v73
    %v814 = vpack.c.bf16 %v76, %v75
    %v815 = vpack.c.bf16 %v78, %v77
    %v816 = vpack.c.bf16 %v80, %v79
    %v817 = vpack.c.bf16 %v82, %v81
    %v818 = vpack.c.bf16 %v84, %v83
    %v819 = vpack.c.bf16 %v86, %v85
    %v820 = vpack.c.bf16 %v88, %v87
    %v821 = vpack.c.bf16 %v90, %v89
    %v822 = vpack.c.bf16 %v92, %v91
    %v823 = vpack.c.bf16 %v94, %v93
    %v824 = vpack.c.bf16 %v96, %v95
    %v825 = vpack.c.bf16 %v98, %v97
    %v826 = vpack.c.bf16 %v100, %v99
    %v827 = vld [vmem:[%s8] sm:$0xf]
    %v828 = vld [vmem:[%s8 + $0x4] sm:$0xf]
    %v829 = vld [vmem:[%s8 + $0x8] sm:$0xf]
    %v830 = vld [vmem:[%s8 + $0xc] sm:$0xf]
    %v835 = vunpack.c.l.b16 %v827
    %v836 = vunpack.c.l.b16 %v828
    %v837 = vunpack.c.l.b16 %v829
    %v838 = vunpack.c.l.b16 %v830
    %v839 = vpack.c.b16 %v836, %v835
    %v840 = vpack.c.b16 %v838, %v837
    %vm843 = vcmask 261120
    %v845 = vsel %vm843, %v795, 0
    %v848 = vsel %vm843, %v796, 0
    %v851 = vsel %vm843, %v797, 0
    %v854 = vsel %vm843, %v798, 0
    %v857 = vsel %vm843, %v799, 0
    %v860 = vsel %vm843, %v800, 0
    %v863 = vsel %vm843, %v801, 0
    %v866 = vsel %vm843, %v802, 0
    %v869 = vsel %vm843, %v803, 0
    %v872 = vsel %vm843, %v804, 0
    %v875 = vsel %vm843, %v805, 0
    %v878 = vsel %vm843, %v806, 0
    %v881 = vsel %vm843, %v807, 0
    %v884 = vsel %vm843, %v808, 0
    %v887 = vsel %vm843, %v809, 0
    %v890 = vsel %vm843, %v810, 0
    %v893 = vsel %vm843, %v811, 0
    %v896 = vsel %vm843, %v812, 0
    %v899 = vsel %vm843, %v813, 0
    %v902 = vsel %vm843, %v814, 0
    %v905 = vsel %vm843, %v815, 0
    %v908 = vsel %vm843, %v816, 0
    %v911 = vsel %vm843, %v817, 0
    %v914 = vsel %vm843, %v818, 0
    %v917 = vsel %vm843, %v819, 0
    %v920 = vsel %vm843, %v820, 0
    %v923 = vsel %vm843, %v821, 0
    %v926 = vsel %vm843, %v822, 0
    %v929 = vsel %vm843, %v823, 0
    %v932 = vsel %vm843, %v824, 0
    %v935 = vsel %vm843, %v825, 0
    %v938 = vsel %vm843, %v826, 0
    %940 = vmatprep.subr.bf16.mxu0 0
    %941 = vmatpush1.bf16.msra.mxu0 %v839
    %942 = vmatprep.subr.bf16.mxu0 0
    %943 = vmatpush1.bf16.msra.mxu0 %v840
    %944 = vmatprep.subr.bf16.mxu0 0
    %945 = vmatpush1.bf16.msra.mxu0 0
    %946 = vmatprep.subr.bf16.mxu0 0
    %947 = vmatpush1.bf16.msra.mxu0 0
    %948 = vmatprep.subr.bf16.mxu0 0
    %949 = vmatpush1.bf16.msra.mxu0 0
    %950 = vmatprep.subr.bf16.mxu0 0
    %951 = vmatpush1.bf16.msra.mxu0 0
    %952 = vmatprep.subr.bf16.mxu0 0
    %953 = vmatpush1.bf16.msra.mxu0 0
    %954 = vmatprep.subr.bf16.mxu0 0
    %955 = vmatpush1.bf16.msra.mxu0 0
    %956 = vmatprep.subr.bf16.mxu0 0
    %957 = vmatpush1.bf16.msra.mxu0 0
    %958 = vmatprep.subr.bf16.mxu0 0
    %959 = vmatpush1.bf16.msra.mxu0 0
    %960 = vmatprep.subr.bf16.mxu0 0
    %961 = vmatpush1.bf16.msra.mxu0 0
    %962 = vmatprep.subr.bf16.mxu0 0
    %963 = vmatpush1.bf16.msra.mxu0 0
    %964 = vmatprep.subr.bf16.mxu0 0
    %965 = vmatpush1.bf16.msra.mxu0 0
    %966 = vmatprep.subr.bf16.mxu0 0
    %967 = vmatpush1.bf16.msra.mxu0 0
    %968 = vmatprep.subr.bf16.mxu0 0
    %969 = vmatpush1.bf16.msra.mxu0 0
    %970 = vmatprep.subr.bf16.mxu0 0
    %971 = vmatpush1.bf16.msra.mxu0 0
    %972 = vmatprep.mubr.bf16.mxu0 0
    %973 = vmatmul.mubr.bf16.gmra.mrb[0].mxu0 %v845
    %v974 = vpop.f32.mrb[0].mxu0
    %v975 = vadd.f32 0.0, %v974
    %v976 = vpop.f32.mrb[0].mxu0
    %v977 = vpop.f32.mrb[0].mxu0
    %v978 = vadd.f32 0.0, %v977
    %v979 = vpop.f32.mrb[0].mxu0
    %980 = vmatprep.mubr.bf16.mxu0 0
    %981 = vmatmul.mubr.bf16.gmra.mrb[0].mxu0 %v848
    %v982 = vpop.f32.mrb[0].mxu0
    %v983 = vadd.f32 0.0, %v982
    %v984 = vpop.f32.mrb[0].mxu0
    %v985 = vpop.f32.mrb[0].mxu0
    %v986 = vadd.f32 0.0, %v985
    %v987 = vpop.f32.mrb[0].mxu0
    %988 = vmatprep.mubr.bf16.mxu0 0
    %989 = vmatmul.mubr.bf16.gmra.mrb[0].mxu0 %v851
    %v990 = vpop.f32.mrb[0].mxu0
    %v991 = vadd.f32 0.0, %v990
    %v992 = vpop.f32.mrb[0].mxu0
    %v993 = vpop.f32.mrb[0].mxu0
    %v994 = vadd.f32 0.0, %v993
    %v995 = vpop.f32.mrb[0].mxu0
    %996 = vmatprep.mubr.bf16.mxu0 0
    %997 = vmatmul.mubr.bf16.gmra.mrb[0].mxu0 %v854
    %v998 = vpop.f32.mrb[0].mxu0
    %v999 = vadd.f32 0.0, %v998
    %v1000 = vpop.f32.mrb[0].mxu0
    %v1001 = vpop.f32.mrb[0].mxu0
    %v1002 = vadd.f32 0.0, %v1001
    %v1003 = vpop.f32.mrb[0].mxu0
    %1004 = vmatprep.mubr.bf16.mxu0 0
    %1005 = vmatmul.mubr.bf16.gmra.mrb[0].mxu0 %v857
    %v1006 = vpop.f32.mrb[0].mxu0
    %v1007 = vadd.f32 0.0, %v1006
    %v1008 = vpop.f32.mrb[0].mxu0
    %v1009 = vpop.f32.mrb[0].mxu0
    %v1010 = vadd.f32 0.0, %v1009
    %v1011 = vpop.f32.mrb[0].mxu0
    %1012 = vmatprep.mubr.bf16.mxu0 0
    %1013 = vmatmul.mubr.bf16.gmra.mrb[0].mxu0 %v860
    %v1014 = vpop.f32.mrb[0].mxu0
    %v1015 = vadd.f32 0.0, %v1014
    %v1016 = vpop.f32.mrb[0].mxu0
    %v1017 = vpop.f32.mrb[0].mxu0
    %v1018 = vadd.f32 0.0, %v1017
    %v1019 = vpop.f32.mrb[0].mxu0
    %1020 = vmatprep.mubr.bf16.mxu0 0
    %1021 = vmatmul.mubr.bf16.gmra.mrb[0].mxu0 %v863
    %v1022 = vpop.f32.mrb[0].mxu0
    %v1023 = vadd.f32 0.0, %v1022
    %v1024 = vpop.f32.mrb[0].mxu0
    %v1025 = vpop.f32.mrb[0].mxu0
    %v1026 = vadd.f32 0.0, %v1025
    %v1027 = vpop.f32.mrb[0].mxu0
    %1028 = vmatprep.mubr.bf16.mxu0 0
    %1029 = vmatmul.mubr.bf16.gmra.mrb[0].mxu0 %v866
    %v1030 = vpop.f32.mrb[0].mxu0
    %v1031 = vadd.f32 0.0, %v1030
    %v1032 = vpop.f32.mrb[0].mxu0
    %v1033 = vpop.f32.mrb[0].mxu0
    %v1034 = vadd.f32 0.0, %v1033
    %v1035 = vpop.f32.mrb[0].mxu0
    %1036 = vmatprep.mubr.bf16.mxu0 0
    %1037 = vmatmul.mubr.bf16.gmra.mrb[0].mxu0 %v869
    %v1038 = vpop.f32.mrb[0].mxu0
    %v1039 = vadd.f32 0.0, %v1038
    %v1040 = vpop.f32.mrb[0].mxu0
    %v1041 = vpop.f32.mrb[0].mxu0
    %v1042 = vadd.f32 0.0, %v1041
    %v1043 = vpop.f32.mrb[0].mxu0
    %1044 = vmatprep.mubr.bf16.mxu0 0
    %1045 = vmatmul.mubr.bf16.gmra.mrb[0].mxu0 %v872
    %v1046 = vpop.f32.mrb[0].mxu0
    %v1047 = vadd.f32 0.0, %v1046
    %v1048 = vpop.f32.mrb[0].mxu0
    %v1049 = vpop.f32.mrb[0].mxu0
    %v1050 = vadd.f32 0.0, %v1049
    %v1051 = vpop.f32.mrb[0].mxu0
    %1052 = vmatprep.mubr.bf16.mxu0 0
    %1053 = vmatmul.mubr.bf16.gmra.mrb[0].mxu0 %v875
    %v1054 = vpop.f32.mrb[0].mxu0
    %v1055 = vadd.f32 0.0, %v1054
    %v1056 = vpop.f32.mrb[0].mxu0
    %v1057 = vpop.f32.mrb[0].mxu0
    %v1058 = vadd.f32 0.0, %v1057
    %v1059 = vpop.f32.mrb[0].mxu0
    %1060 = vmatprep.mubr.bf16.mxu0 0
    %1061 = vmatmul.mubr.bf16.gmra.mrb[0].mxu0 %v878
    %v1062 = vpop.f32.mrb[0].mxu0
    %v1063 = vadd.f32 0.0, %v1062
    %v1064 = vpop.f32.mrb[0].mxu0
    %v1065 = vpop.f32.mrb[0].mxu0
    %v1066 = vadd.f32 0.0, %v1065
    %v1067 = vpop.f32.mrb[0].mxu0
    %1068 = vmatprep.mubr.bf16.mxu0 0
    %1069 = vmatmul.mubr.bf16.gmra.mrb[0].mxu0 %v881
    %v1070 = vpop.f32.mrb[0].mxu0
    %v1071 = vadd.f32 0.0, %v1070
    %v1072 = vpop.f32.mrb[0].mxu0
    %v1073 = vpop.f32.mrb[0].mxu0
    %v1074 = vadd.f32 0.0, %v1073
    %v1075 = vpop.f32.mrb[0].mxu0
    %1076 = vmatprep.mubr.bf16.mxu0 0
    %1077 = vmatmul.mubr.bf16.gmra.mrb[0].mxu0 %v884
    %v1078 = vpop.f32.mrb[0].mxu0
    %v1079 = vadd.f32 0.0, %v1078
    %v1080 = vpop.f32.mrb[0].mxu0
    %v1081 = vpop.f32.mrb[0].mxu0
    %v1082 = vadd.f32 0.0, %v1081
    %v1083 = vpop.f32.mrb[0].mxu0
    %1084 = vmatprep.mubr.bf16.mxu0 0
    %1085 = vmatmul.mubr.bf16.gmra.mrb[0].mxu0 %v887
    %v1086 = vpop.f32.mrb[0].mxu0
    %v1087 = vadd.f32 0.0, %v1086
    %v1088 = vpop.f32.mrb[0].mxu0
    %v1089 = vpop.f32.mrb[0].mxu0
    %v1090 = vadd.f32 0.0, %v1089
    %v1091 = vpop.f32.mrb[0].mxu0
    %1092 = vmatprep.mubr.bf16.mxu0 0
    %1093 = vmatmul.mubr.bf16.gmra.mrb[0].mxu0 %v890
    %v1094 = vpop.f32.mrb[0].mxu0
    %v1095 = vadd.f32 0.0, %v1094
    %v1096 = vpop.f32.mrb[0].mxu0
    %v1097 = vpop.f32.mrb[0].mxu0
    %v1098 = vadd.f32 0.0, %v1097
    %v1099 = vpop.f32.mrb[0].mxu0
    %1100 = vmatprep.mubr.bf16.mxu0 0
    %1101 = vmatmul.mubr.bf16.gmra.mrb[0].mxu0 %v893
    %v1102 = vpop.f32.mrb[0].mxu0
    %v1103 = vadd.f32 0.0, %v1102
    %v1104 = vpop.f32.mrb[0].mxu0
    %v1105 = vpop.f32.mrb[0].mxu0
    %v1106 = vadd.f32 0.0, %v1105
    %v1107 = vpop.f32.mrb[0].mxu0
    %1108 = vmatprep.mubr.bf16.mxu0 0
    %1109 = vmatmul.mubr.bf16.gmra.mrb[0].mxu0 %v896
    %v1110 = vpop.f32.mrb[0].mxu0
    %v1111 = vadd.f32 0.0, %v1110
    %v1112 = vpop.f32.mrb[0].mxu0
    %v1113 = vpop.f32.mrb[0].mxu0
    %v1114 = vadd.f32 0.0, %v1113
    %v1115 = vpop.f32.mrb[0].mxu0
    %1116 = vmatprep.mubr.bf16.mxu0 0
    %1117 = vmatmul.mubr.bf16.gmra.mrb[0].mxu0 %v899
    %v1118 = vpop.f32.mrb[0].mxu0
    %v1119 = vadd.f32 0.0, %v1118
    %v1120 = vpop.f32.mrb[0].mxu0
    %v1121 = vpop.f32.mrb[0].mxu0
    %v1122 = vadd.f32 0.0, %v1121
    %v1123 = vpop.f32.mrb[0].mxu0
    %1124 = vmatprep.mubr.bf16.mxu0 0
    %1125 = vmatmul.mubr.bf16.gmra.mrb[0].mxu0 %v902
    %v1126 = vpop.f32.mrb[0].mxu0
    %v1127 = vadd.f32 0.0, %v1126
    %v1128 = vpop.f32.mrb[0].mxu0
    %v1129 = vpop.f32.mrb[0].mxu0
    %v1130 = vadd.f32 0.0, %v1129
    %v1131 = vpop.f32.mrb[0].mxu0
    %1132 = vmatprep.mubr.bf16.mxu0 0
    %1133 = vmatmul.mubr.bf16.gmra.mrb[0].mxu0 %v905
    %v1134 = vpop.f32.mrb[0].mxu0
    %v1135 = vadd.f32 0.0, %v1134
    %v1136 = vpop.f32.mrb[0].mxu0
    %v1137 = vpop.f32.mrb[0].mxu0
    %v1138 = vadd.f32 0.0, %v1137
    %v1139 = vpop.f32.mrb[0].mxu0
    %1140 = vmatprep.mubr.bf16.mxu0 0
    %1141 = vmatmul.mubr.bf16.gmra.mrb[0].mxu0 %v908
    %v1142 = vpop.f32.mrb[0].mxu0
    %v1143 = vadd.f32 0.0, %v1142
    %v1144 = vpop.f32.mrb[0].mxu0
    %v1145 = vpop.f32.mrb[0].mxu0
    %v1146 = vadd.f32 0.0, %v1145
    %v1147 = vpop.f32.mrb[0].mxu0
    %1148 = vmatprep.mubr.bf16.mxu0 0
    %1149 = vmatmul.mubr.bf16.gmra.mrb[0].mxu0 %v911
    %v1150 = vpop.f32.mrb[0].mxu0
    %v1151 = vadd.f32 0.0, %v1150
    %v1152 = vpop.f32.mrb[0].mxu0
    %v1153 = vpop.f32.mrb[0].mxu0
    %v1154 = vadd.f32 0.0, %v1153
    %v1155 = vpop.f32.mrb[0].mxu0
    %1156 = vmatprep.mubr.bf16.mxu0 0
    %1157 = vmatmul.mubr.bf16.gmra.mrb[0].mxu0 %v914
    %v1158 = vpop.f32.mrb[0].mxu0
    %v1159 = vadd.f32 0.0, %v1158
    %v1160 = vpop.f32.mrb[0].mxu0
    %v1161 = vpop.f32.mrb[0].mxu0
    %v1162 = vadd.f32 0.0, %v1161
    %v1163 = vpop.f32.mrb[0].mxu0
    %1164 = vmatprep.mubr.bf16.mxu0 0
    %1165 = vmatmul.mubr.bf16.gmra.mrb[0].mxu0 %v917
    %v1166 = vpop.f32.mrb[0].mxu0
    %v1167 = vadd.f32 0.0, %v1166
    %v1168 = vpop.f32.mrb[0].mxu0
    %v1169 = vpop.f32.mrb[0].mxu0
    %v1170 = vadd.f32 0.0, %v1169
    %v1171 = vpop.f32.mrb[0].mxu0
    %1172 = vmatprep.mubr.bf16.mxu0 0
    %1173 = vmatmul.mubr.bf16.gmra.mrb[0].mxu0 %v920
    %v1174 = vpop.f32.mrb[0].mxu0
    %v1175 = vadd.f32 0.0, %v1174
    %v1176 = vpop.f32.mrb[0].mxu0
    %v1177 = vpop.f32.mrb[0].mxu0
    %v1178 = vadd.f32 0.0, %v1177
    %v1179 = vpop.f32.mrb[0].mxu0
    %1180 = vmatprep.mubr.bf16.mxu0 0
    %1181 = vmatmul.mubr.bf16.gmra.mrb[0].mxu0 %v923
    %v1182 = vpop.f32.mrb[0].mxu0
    %v1183 = vadd.f32 0.0, %v1182
    %v1184 = vpop.f32.mrb[0].mxu0
    %v1185 = vpop.f32.mrb[0].mxu0
    %v1186 = vadd.f32 0.0, %v1185
    %v1187 = vpop.f32.mrb[0].mxu0
    %1188 = vmatprep.mubr.bf16.mxu0 0
    %1189 = vmatmul.mubr.bf16.gmra.mrb[0].mxu0 %v926
    %v1190 = vpop.f32.mrb[0].mxu0
    %v1191 = vadd.f32 0.0, %v1190
    %v1192 = vpop.f32.mrb[0].mxu0
    %v1193 = vpop.f32.mrb[0].mxu0
    %v1194 = vadd.f32 0.0, %v1193
    %v1195 = vpop.f32.mrb[0].mxu0
    %1196 = vmatprep.mubr.bf16.mxu0 0
    %1197 = vmatmul.mubr.bf16.gmra.mrb[0].mxu0 %v929
    %v1198 = vpop.f32.mrb[0].mxu0
    %v1199 = vadd.f32 0.0, %v1198
    %v1200 = vpop.f32.mrb[0].mxu0
    %v1201 = vpop.f32.mrb[0].mxu0
    %v1202 = vadd.f32 0.0, %v1201
    %v1203 = vpop.f32.mrb[0].mxu0
    %1204 = vmatprep.mubr.bf16.mxu0 0
    %1205 = vmatmul.mubr.bf16.gmra.mrb[0].mxu0 %v932
    %v1206 = vpop.f32.mrb[0].mxu0
    %v1207 = vadd.f32 0.0, %v1206
    %v1208 = vpop.f32.mrb[0].mxu0
    %v1209 = vpop.f32.mrb[0].mxu0
    %v1210 = vadd.f32 0.0, %v1209
    %v1211 = vpop.f32.mrb[0].mxu0
    %1212 = vmatprep.mubr.bf16.mxu0 0
    %1213 = vmatmul.mubr.bf16.gmra.mrb[0].mxu0 %v935
    %v1214 = vpop.f32.mrb[0].mxu0
    %v1215 = vadd.f32 0.0, %v1214
    %v1216 = vpop.f32.mrb[0].mxu0
    %v1217 = vpop.f32.mrb[0].mxu0
    %v1218 = vadd.f32 0.0, %v1217
    %v1219 = vpop.f32.mrb[0].mxu0
    %1220 = vmatprep.mubr.bf16.mxu0 0
    %1221 = vmatmul.mubr.bf16.gmra.mrb[0].mxu0 %v938
    %v1222 = vpop.f32.mrb[0].mxu0
    %v1223 = vadd.f32 0.0, %v1222
    %v1224 = vpop.f32.mrb[0].mxu0
    %v1225 = vpop.f32.mrb[0].mxu0
    %v1226 = vadd.f32 0.0, %v1225
    %v1227 = vpop.f32.mrb[0].mxu0
    %1228 = vdwg.mxu0
    %vm1229 = vcmask 64512
    %v1231 = vsel %vm1229, %v762, 0
    %v1234 = vsel %vm1229, %v763, 0
    %v1237 = vsel %vm1229, %v764, 0
    %v1240 = vsel %vm1229, %v765, 0
    %v1243 = vsel %vm1229, %v766, 0
    %v1246 = vsel %vm1229, %v767, 0
    %v1249 = vsel %vm1229, %v768, 0
    %v1252 = vsel %vm1229, %v769, 0
    %v1255 = vsel %vm1229, %v770, 0
    %v1258 = vsel %vm1229, %v771, 0
    %v1261 = vsel %vm1229, %v772, 0
    %v1264 = vsel %vm1229, %v773, 0
    %v1267 = vsel %vm1229, %v774, 0
    %v1270 = vsel %vm1229, %v775, 0
    %v1273 = vsel %vm1229, %v776, 0
    %v1276 = vsel %vm1229, %v777, 0
    %v1279 = vsel %vm1229, %v778, 0
    %v1282 = vsel %vm1229, %v779, 0
    %v1285 = vsel %vm1229, %v780, 0
    %v1288 = vsel %vm1229, %v781, 0
    %v1291 = vsel %vm1229, %v782, 0
    %v1294 = vsel %vm1229, %v783, 0
    %v1297 = vsel %vm1229, %v784, 0
    %v1300 = vsel %vm1229, %v785, 0
    %v1303 = vsel %vm1229, %v786, 0
    %v1306 = vsel %vm1229, %v787, 0
    %v1309 = vsel %vm1229, %v788, 0
    %v1312 = vsel %vm1229, %v789, 0
    %v1315 = vsel %vm1229, %v790, 0
    %v1318 = vsel %vm1229, %v791, 0
    %v1321 = vsel %vm1229, %v792, 0
    %v1324 = vsel %vm1229, %v793, 0
    %vm1326 = vcmask 1043456
    %v1328 = vsel %vm1326, %v794, 0
    %1330 = vmatprep.subr.bf16.mxu0 0
    %1331 = vmatpush1.bf16.msra.mxu0 %v1328
    %1332 = vmatprep.subr.bf16.mxu0 0
    %1333 = vmatpush1.bf16.msra.mxu0 0
    %1334 = vmatprep.subr.bf16.mxu0 0
    %1335 = vmatpush1.bf16.msra.mxu0 0
    %1336 = vmatprep.subr.bf16.mxu0 0
    %1337 = vmatpush1.bf16.msra.mxu0 0
    %1338 = vmatprep.subr.bf16.mxu0 0
    %1339 = vmatpush1.bf16.msra.mxu0 0
    %1340 = vmatprep.subr.bf16.mxu0 0
    %1341 = vmatpush1.bf16.msra.mxu0 0
    %1342 = vmatprep.subr.bf16.mxu0 0
    %1343 = vmatpush1.bf16.msra.mxu0 0
    %1344 = vmatprep.subr.bf16.mxu0 0
    %1345 = vmatpush1.bf16.msra.mxu0 0
    %1346 = vmatprep.subr.bf16.mxu0 0
    %1347 = vmatpush1.bf16.msra.mxu0 0
    %1348 = vmatprep.subr.bf16.mxu0 0
    %1349 = vmatpush1.bf16.msra.mxu0 0
    %1350 = vmatprep.subr.bf16.mxu0 0
    %1351 = vmatpush1.bf16.msra.mxu0 0
    %1352 = vmatprep.subr.bf16.mxu0 0
    %1353 = vmatpush1.bf16.msra.mxu0 0
    %1354 = vmatprep.subr.bf16.mxu0 0
    %1355 = vmatpush1.bf16.msra.mxu0 0
    %1356 = vmatprep.subr.bf16.mxu0 0
    %1357 = vmatpush1.bf16.msra.mxu0 0
    %1358 = vmatprep.subr.bf16.mxu0 0
    %1359 = vmatpush1.bf16.msra.mxu0 0
    %1360 = vmatprep.subr.bf16.mxu0 0
    %1361 = vmatpush1.bf16.msra.mxu0 0
    %1362 = vmatprep.mubr.bf16.mxu0 0
    %1363 = vmatmul.mubr.bf16.gmra.mrb[0].mxu0 %v1231
    %v1364 = vpop.f32.mrb[0].mxu0
    %v1365 = vadd.f32 %v975, %v1364
    %v1366 = vpop.f32.mrb[0].mxu0
    %v1367 = vpop.f32.mrb[0].mxu0
    %v1368 = vadd.f32 %v978, %v1367
    %v1369 = vpop.f32.mrb[0].mxu0
    %1370 = vmatprep.mubr.bf16.mxu0 0
    %1371 = vmatmul.mubr.bf16.gmra.mrb[0].mxu0 %v1234
    %v1372 = vpop.f32.mrb[0].mxu0
    %v1373 = vadd.f32 %v983, %v1372
    %v1374 = vpop.f32.mrb[0].mxu0
    %v1375 = vpop.f32.mrb[0].mxu0
    %v1376 = vadd.f32 %v986, %v1375
    %v1377 = vpop.f32.mrb[0].mxu0
    %1378 = vmatprep.mubr.bf16.mxu0 0
    %1379 = vmatmul.mubr.bf16.gmra.mrb[0].mxu0 %v1237
    %v1380 = vpop.f32.mrb[0].mxu0
    %v1381 = vadd.f32 %v991, %v1380
    %v1382 = vpop.f32.mrb[0].mxu0
    %v1383 = vpop.f32.mrb[0].mxu0
    %v1384 = vadd.f32 %v994, %v1383
    %v1385 = vpop.f32.mrb[0].mxu0
    %1386 = vmatprep.mubr.bf16.mxu0 0
    %1387 = vmatmul.mubr.bf16.gmra.mrb[0].mxu0 %v1240
    %v1388 = vpop.f32.mrb[0].mxu0
    %v1389 = vadd.f32 %v999, %v1388
    %v1390 = vpop.f32.mrb[0].mxu0
    %v1391 = vpop.f32.mrb[0].mxu0
    %v1392 = vadd.f32 %v1002, %v1391
    %v1393 = vpop.f32.mrb[0].mxu0
    %1394 = vmatprep.mubr.bf16.mxu0 0
    %1395 = vmatmul.mubr.bf16.gmra.mrb[0].mxu0 %v1243
    %v1396 = vpop.f32.mrb[0].mxu0
    %v1397 = vadd.f32 %v1007, %v1396
    %v1398 = vpop.f32.mrb[0].mxu0
    %v1399 = vpop.f32.mrb[0].mxu0
    %v1400 = vadd.f32 %v1010, %v1399
    %v1401 = vpop.f32.mrb[0].mxu0
    %1402 = vmatprep.mubr.bf16.mxu0 0
    %1403 = vmatmul.mubr.bf16.gmra.mrb[0].mxu0 %v1246
    %v1404 = vpop.f32.mrb[0].mxu0
    %v1405 = vadd.f32 %v1015, %v1404
    %v1406 = vpop.f32.mrb[0].mxu0
    %v1407 = vpop.f32.mrb[0].mxu0
    %v1408 = vadd.f32 %v1018, %v1407
    %v1409 = vpop.f32.mrb[0].mxu0
    %1410 = vmatprep.mubr.bf16.mxu0 0
    %1411 = vmatmul.mubr.bf16.gmra.mrb[0].mxu0 %v1249
    %v1412 = vpop.f32.mrb[0].mxu0
    %v1413 = vadd.f32 %v1023, %v1412
    %v1414 = vpop.f32.mrb[0].mxu0
    %v1415 = vpop.f32.mrb[0].mxu0
    %v1416 = vadd.f32 %v1026, %v1415
    %v1417 = vpop.f32.mrb[0].mxu0
    %1418 = vmatprep.mubr.bf16.mxu0 0
    %1419 = vmatmul.mubr.bf16.gmra.mrb[0].mxu0 %v1252
    %v1420 = vpop.f32.mrb[0].mxu0
    %v1421 = vadd.f32 %v1031, %v1420
    %v1422 = vpop.f32.mrb[0].mxu0
    %v1423 = vpop.f32.mrb[0].mxu0
    %v1424 = vadd.f32 %v1034, %v1423
    %v1425 = vpop.f32.mrb[0].mxu0
    %1426 = vmatprep.mubr.bf16.mxu0 0
    %1427 = vmatmul.mubr.bf16.gmra.mrb[0].mxu0 %v1255
    %v1428 = vpop.f32.mrb[0].mxu0
    %v1429 = vadd.f32 %v1039, %v1428
    %v1430 = vpop.f32.mrb[0].mxu0
    %v1431 = vpop.f32.mrb[0].mxu0
    %v1432 = vadd.f32 %v1042, %v1431
    %v1433 = vpop.f32.mrb[0].mxu0
    %1434 = vmatprep.mubr.bf16.mxu0 0
    %1435 = vmatmul.mubr.bf16.gmra.mrb[0].mxu0 %v1258
    %v1436 = vpop.f32.mrb[0].mxu0
    %v1437 = vadd.f32 %v1047, %v1436
    %v1438 = vpop.f32.mrb[0].mxu0
    %v1439 = vpop.f32.mrb[0].mxu0
    %v1440 = vadd.f32 %v1050, %v1439
    %v1441 = vpop.f32.mrb[0].mxu0
    %1442 = vmatprep.mubr.bf16.mxu0 0
    %1443 = vmatmul.mubr.bf16.gmra.mrb[0].mxu0 %v1261
    %v1444 = vpop.f32.mrb[0].mxu0
    %v1445 = vadd.f32 %v1055, %v1444
    %v1446 = vpop.f32.mrb[0].mxu0
    %v1447 = vpop.f32.mrb[0].mxu0
    %v1448 = vadd.f32 %v1058, %v1447
    %v1449 = vpop.f32.mrb[0].mxu0
    %1450 = vmatprep.mubr.bf16.mxu0 0
    %1451 = vmatmul.mubr.bf16.gmra.mrb[0].mxu0 %v1264
    %v1452 = vpop.f32.mrb[0].mxu0
    %v1453 = vadd.f32 %v1063, %v1452
    %v1454 = vpop.f32.mrb[0].mxu0
    %v1455 = vpop.f32.mrb[0].mxu0
    %v1456 = vadd.f32 %v1066, %v1455
    %v1457 = vpop.f32.mrb[0].mxu0
    %1458 = vmatprep.mubr.bf16.mxu0 0
    %1459 = vmatmul.mubr.bf16.gmra.mrb[0].mxu0 %v1267
    %v1460 = vpop.f32.mrb[0].mxu0
    %v1461 = vadd.f32 %v1071, %v1460
    %v1462 = vpop.f32.mrb[0].mxu0
    %v1463 = vpop.f32.mrb[0].mxu0
    %v1464 = vadd.f32 %v1074, %v1463
    %v1465 = vpop.f32.mrb[0].mxu0
    %1466 = vmatprep.mubr.bf16.mxu0 0
    %1467 = vmatmul.mubr.bf16.gmra.mrb[0].mxu0 %v1270
    %v1468 = vpop.f32.mrb[0].mxu0
    %v1469 = vadd.f32 %v1079, %v1468
    %v1470 = vpop.f32.mrb[0].mxu0
    %v1471 = vpop.f32.mrb[0].mxu0
    %v1472 = vadd.f32 %v1082, %v1471
    %v1473 = vpop.f32.mrb[0].mxu0
    %1474 = vmatprep.mubr.bf16.mxu0 0
    %1475 = vmatmul.mubr.bf16.gmra.mrb[0].mxu0 %v1273
    %v1476 = vpop.f32.mrb[0].mxu0
    %v1477 = vadd.f32 %v1087, %v1476
    %v1478 = vpop.f32.mrb[0].mxu0
    %v1479 = vpop.f32.mrb[0].mxu0
    %v1480 = vadd.f32 %v1090, %v1479
    %v1481 = vpop.f32.mrb[0].mxu0
    %1482 = vmatprep.mubr.bf16.mxu0 0
    %1483 = vmatmul.mubr.bf16.gmra.mrb[0].mxu0 %v1276
    %v1484 = vpop.f32.mrb[0].mxu0
    %v1485 = vadd.f32 %v1095, %v1484
    %v1486 = vpop.f32.mrb[0].mxu0
    %v1487 = vpop.f32.mrb[0].mxu0
    %v1488 = vadd.f32 %v1098, %v1487
    %v1489 = vpop.f32.mrb[0].mxu0
    %1490 = vmatprep.mubr.bf16.mxu0 0
    %1491 = vmatmul.mubr.bf16.gmra.mrb[0].mxu0 %v1279
    %v1492 = vpop.f32.mrb[0].mxu0
    %v1493 = vadd.f32 %v1103, %v1492
    %v1494 = vpop.f32.mrb[0].mxu0
    %v1495 = vpop.f32.mrb[0].mxu0
    %v1496 = vadd.f32 %v1106, %v1495
    %v1497 = vpop.f32.mrb[0].mxu0
    %1498 = vmatprep.mubr.bf16.mxu0 0
    %1499 = vmatmul.mubr.bf16.gmra.mrb[0].mxu0 %v1282
    %v1500 = vpop.f32.mrb[0].mxu0
    %v1501 = vadd.f32 %v1111, %v1500
    %v1502 = vpop.f32.mrb[0].mxu0
    %v1503 = vpop.f32.mrb[0].mxu0
    %v1504 = vadd.f32 %v1114, %v1503
    %v1505 = vpop.f32.mrb[0].mxu0
    %1506 = vmatprep.mubr.bf16.mxu0 0
    %1507 = vmatmul.mubr.bf16.gmra.mrb[0].mxu0 %v1285
    %v1508 = vpop.f32.mrb[0].mxu0
    %v1509 = vadd.f32 %v1119, %v1508
    %v1510 = vpop.f32.mrb[0].mxu0
    %v1511 = vpop.f32.mrb[0].mxu0
    %v1512 = vadd.f32 %v1122, %v1511
    %v1513 = vpop.f32.mrb[0].mxu0
    %1514 = vmatprep.mubr.bf16.mxu0 0
    %1515 = vmatmul.mubr.bf16.gmra.mrb[0].mxu0 %v1288
    %v1516 = vpop.f32.mrb[0].mxu0
    %v1517 = vadd.f32 %v1127, %v1516
    %v1518 = vpop.f32.mrb[0].mxu0
    %v1519 = vpop.f32.mrb[0].mxu0
    %v1520 = vadd.f32 %v1130, %v1519
    %v1521 = vpop.f32.mrb[0].mxu0
    %1522 = vmatprep.mubr.bf16.mxu0 0
    %1523 = vmatmul.mubr.bf16.gmra.mrb[0].mxu0 %v1291
    %v1524 = vpop.f32.mrb[0].mxu0
    %v1525 = vadd.f32 %v1135, %v1524
    %v1526 = vpop.f32.mrb[0].mxu0
    %v1527 = vpop.f32.mrb[0].mxu0
    %v1528 = vadd.f32 %v1138, %v1527
    %v1529 = vpop.f32.mrb[0].mxu0
    %1530 = vmatprep.mubr.bf16.mxu0 0
    %1531 = vmatmul.mubr.bf16.gmra.mrb[0].mxu0 %v1294
    %v1532 = vpop.f32.mrb[0].mxu0
    %v1533 = vadd.f32 %v1143, %v1532
    %v1534 = vpop.f32.mrb[0].mxu0
    %v1535 = vpop.f32.mrb[0].mxu0
    %v1536 = vadd.f32 %v1146, %v1535
    %v1537 = vpop.f32.mrb[0].mxu0
    %1538 = vmatprep.mubr.bf16.mxu0 0
    %1539 = vmatmul.mubr.bf16.gmra.mrb[0].mxu0 %v1297
    %v1540 = vpop.f32.mrb[0].mxu0
    %v1541 = vadd.f32 %v1151, %v1540
    %v1542 = vpop.f32.mrb[0].mxu0
    %v1543 = vpop.f32.mrb[0].mxu0
    %v1544 = vadd.f32 %v1154, %v1543
    %v1545 = vpop.f32.mrb[0].mxu0
    %1546 = vmatprep.mubr.bf16.mxu0 0
    %1547 = vmatmul.mubr.bf16.gmra.mrb[0].mxu0 %v1300
    %v1548 = vpop.f32.mrb[0].mxu0
    %v1549 = vadd.f32 %v1159, %v1548
    %v1550 = vpop.f32.mrb[0].mxu0
    %v1551 = vpop.f32.mrb[0].mxu0
    %v1552 = vadd.f32 %v1162, %v1551
    %v1553 = vpop.f32.mrb[0].mxu0
    %1554 = vmatprep.mubr.bf16.mxu0 0
    %1555 = vmatmul.mubr.bf16.gmra.mrb[0].mxu0 %v1303
    %v1556 = vpop.f32.mrb[0].mxu0
    %v1557 = vadd.f32 %v1167, %v1556
    %v1558 = vpop.f32.mrb[0].mxu0
    %v1559 = vpop.f32.mrb[0].mxu0
    %v1560 = vadd.f32 %v1170, %v1559
    %v1561 = vpop.f32.mrb[0].mxu0
    %1562 = vmatprep.mubr.bf16.mxu0 0
    %1563 = vmatmul.mubr.bf16.gmra.mrb[0].mxu0 %v1306
    %v1564 = vpop.f32.mrb[0].mxu0
    %v1565 = vadd.f32 %v1175, %v1564
    %v1566 = vpop.f32.mrb[0].mxu0
    %v1567 = vpop.f32.mrb[0].mxu0
    %v1568 = vadd.f32 %v1178, %v1567
    %v1569 = vpop.f32.mrb[0].mxu0
    %1570 = vmatprep.mubr.bf16.mxu0 0
    %1571 = vmatmul.mubr.bf16.gmra.mrb[0].mxu0 %v1309
    %v1572 = vpop.f32.mrb[0].mxu0
    %v1573 = vadd.f32 %v1183, %v1572
    %v1574 = vpop.f32.mrb[0].mxu0
    %v1575 = vpop.f32.mrb[0].mxu0
    %v1576 = vadd.f32 %v1186, %v1575
    %v1577 = vpop.f32.mrb[0].mxu0
    %1578 = vmatprep.mubr.bf16.mxu0 0
    %1579 = vmatmul.mubr.bf16.gmra.mrb[0].mxu0 %v1312
    %v1580 = vpop.f32.mrb[0].mxu0
    %v1581 = vadd.f32 %v1191, %v1580
    %v1582 = vpop.f32.mrb[0].mxu0
    %v1583 = vpop.f32.mrb[0].mxu0
    %v1584 = vadd.f32 %v1194, %v1583
    %v1585 = vpop.f32.mrb[0].mxu0
    %1586 = vmatprep.mubr.bf16.mxu0 0
    %1587 = vmatmul.mubr.bf16.gmra.mrb[0].mxu0 %v1315
    %v1588 = vpop.f32.mrb[0].mxu0
    %v1589 = vadd.f32 %v1199, %v1588
    %v1590 = vpop.f32.mrb[0].mxu0
    %v1591 = vpop.f32.mrb[0].mxu0
    %v1592 = vadd.f32 %v1202, %v1591
    %v1593 = vpop.f32.mrb[0].mxu0
    %1594 = vmatprep.mubr.bf16.mxu0 0
    %1595 = vmatmul.mubr.bf16.gmra.mrb[0].mxu0 %v1318
    %v1596 = vpop.f32.mrb[0].mxu0
    %v1597 = vadd.f32 %v1207, %v1596
    %v1598 = vpop.f32.mrb[0].mxu0
    %v1599 = vpop.f32.mrb[0].mxu0
    %v1600 = vadd.f32 %v1210, %v1599
    %v1601 = vpop.f32.mrb[0].mxu0
    %1602 = vmatprep.mubr.bf16.mxu0 0
    %1603 = vmatmul.mubr.bf16.gmra.mrb[0].mxu0 %v1321
    %v1604 = vpop.f32.mrb[0].mxu0
    %v1605 = vadd.f32 %v1215, %v1604
    %v1606 = vpop.f32.mrb[0].mxu0
    %v1607 = vpop.f32.mrb[0].mxu0
    %v1608 = vadd.f32 %v1218, %v1607
    %v1609 = vpop.f32.mrb[0].mxu0
    %1610 = vmatprep.mubr.bf16.mxu0 0
    %1611 = vmatmul.mubr.bf16.gmra.mrb[0].mxu0 %v1324
    %v1612 = vpop.f32.mrb[0].mxu0
    %v1613 = vadd.f32 %v1223, %v1612
    %v1614 = vpop.f32.mrb[0].mxu0
    %v1615 = vpop.f32.mrb[0].mxu0
    %v1616 = vadd.f32 %v1226, %v1615
    %v1617 = vpop.f32.mrb[0].mxu0
    %1618 = vdwg.mxu0
    %v1619 = vld [vmem:[%s9] sm:$0x1]
    %v1621 = vlaneseq
    %v1622 = vshrl.u32 %v1621, 7
    %v1623 = vsub.s32 0, %v1622
    %v1624 = vrot.slane %v1619, %v1623
    %v1626 = vadd.f32 %v1365, %v1624
    %v1627 = vadd.f32 %v1368, %v1624
    %v1628 = vadd.f32 %v1373, %v1624
    %v1629 = vadd.f32 %v1376, %v1624
    %v1630 = vadd.f32 %v1381, %v1624
    %v1631 = vadd.f32 %v1384, %v1624
    %v1632 = vadd.f32 %v1389, %v1624
    %v1633 = vadd.f32 %v1392, %v1624
    %v1634 = vadd.f32 %v1397, %v1624
    %v1635 = vadd.f32 %v1400, %v1624
    %v1636 = vadd.f32 %v1405, %v1624
    %v1637 = vadd.f32 %v1408, %v1624
    %v1638 = vadd.f32 %v1413, %v1624
    %v1639 = vadd.f32 %v1416, %v1624
    %v1640 = vadd.f32 %v1421, %v1624
    %v1641 = vadd.f32 %v1424, %v1624
    %v1642 = vadd.f32 %v1429, %v1624
    %v1643 = vadd.f32 %v1432, %v1624
    %v1644 = vadd.f32 %v1437, %v1624
    %v1645 = vadd.f32 %v1440, %v1624
    %v1646 = vadd.f32 %v1445, %v1624
    %v1647 = vadd.f32 %v1448, %v1624
    %v1648 = vadd.f32 %v1453, %v1624
    %v1649 = vadd.f32 %v1456, %v1624
    %v1650 = vadd.f32 %v1461, %v1624
    %v1651 = vadd.f32 %v1464, %v1624
    %v1652 = vadd.f32 %v1469, %v1624
    %v1653 = vadd.f32 %v1472, %v1624
    %v1654 = vadd.f32 %v1477, %v1624
    %v1655 = vadd.f32 %v1480, %v1624
    %v1656 = vadd.f32 %v1485, %v1624
    %v1657 = vadd.f32 %v1488, %v1624
    %v1658 = vadd.f32 %v1493, %v1624
    %v1659 = vadd.f32 %v1496, %v1624
    %v1660 = vadd.f32 %v1501, %v1624
    %v1661 = vadd.f32 %v1504, %v1624
    %v1662 = vadd.f32 %v1509, %v1624
    %v1663 = vadd.f32 %v1512, %v1624
    %v1664 = vadd.f32 %v1517, %v1624
    %v1665 = vadd.f32 %v1520, %v1624
    %v1666 = vadd.f32 %v1525, %v1624
    %v1667 = vadd.f32 %v1528, %v1624
    %v1668 = vadd.f32 %v1533, %v1624
    %v1669 = vadd.f32 %v1536, %v1624
    %v1670 = vadd.f32 %v1541, %v1624
    %v1671 = vadd.f32 %v1544, %v1624
    %v1672 = vadd.f32 %v1549, %v1624
    %v1673 = vadd.f32 %v1552, %v1624
    %v1674 = vadd.f32 %v1557, %v1624
    %v1675 = vadd.f32 %v1560, %v1624
    %v1676 = vadd.f32 %v1565, %v1624
    %v1677 = vadd.f32 %v1568, %v1624
    %v1678 = vadd.f32 %v1573, %v1624
    %v1679 = vadd.f32 %v1576, %v1624
    %v1680 = vadd.f32 %v1581, %v1624
    %v1681 = vadd.f32 %v1584, %v1624
    %v1682 = vadd.f32 %v1589, %v1624
    %v1683 = vadd.f32 %v1592, %v1624
    %v1684 = vadd.f32 %v1597, %v1624
    %v1685 = vadd.f32 %v1600, %v1624
    %v1686 = vadd.f32 %v1605, %v1624
    %v1687 = vadd.f32 %v1608, %v1624
    %v1688 = vadd.f32 %v1613, %v1624
    %v1689 = vadd.f32 %v1616, %v1624
    %v1690 = vxor.u32 %v1626, 2147483648
    %v1691 = vxor.u32 %v1627, 2147483648
    %v1692 = vxor.u32 %v1628, 2147483648
    %v1693 = vxor.u32 %v1629, 2147483648
    %v1694 = vxor.u32 %v1630, 2147483648
    %v1695 = vxor.u32 %v1631, 2147483648
    %v1696 = vxor.u32 %v1632, 2147483648
    %v1697 = vxor.u32 %v1633, 2147483648
    %v1698 = vxor.u32 %v1634, 2147483648
    %v1699 = vxor.u32 %v1635, 2147483648
    %v1700 = vxor.u32 %v1636, 2147483648
    %v1701 = vxor.u32 %v1637, 2147483648
    %v1702 = vxor.u32 %v1638, 2147483648
    %v1703 = vxor.u32 %v1639, 2147483648
    %v1704 = vxor.u32 %v1640, 2147483648
    %v1705 = vxor.u32 %v1641, 2147483648
    %v1706 = vxor.u32 %v1642, 2147483648
    %v1707 = vxor.u32 %v1643, 2147483648
    %v1708 = vxor.u32 %v1644, 2147483648
    %v1709 = vxor.u32 %v1645, 2147483648
    %v1710 = vxor.u32 %v1646, 2147483648
    %v1711 = vxor.u32 %v1647, 2147483648
    %v1712 = vxor.u32 %v1648, 2147483648
    %v1713 = vxor.u32 %v1649, 2147483648
    %v1714 = vxor.u32 %v1650, 2147483648
    %v1715 = vxor.u32 %v1651, 2147483648
    %v1716 = vxor.u32 %v1652, 2147483648
    %v1717 = vxor.u32 %v1653, 2147483648
    %v1718 = vxor.u32 %v1654, 2147483648
    %v1719 = vxor.u32 %v1655, 2147483648
    %v1720 = vxor.u32 %v1656, 2147483648
    %v1721 = vxor.u32 %v1657, 2147483648
    %v1722 = vxor.u32 %v1658, 2147483648
    %v1723 = vxor.u32 %v1659, 2147483648
    %v1724 = vxor.u32 %v1660, 2147483648
    %v1725 = vxor.u32 %v1661, 2147483648
    %v1726 = vxor.u32 %v1662, 2147483648
    %v1727 = vxor.u32 %v1663, 2147483648
    %v1728 = vxor.u32 %v1664, 2147483648
    %v1729 = vxor.u32 %v1665, 2147483648
    %v1730 = vxor.u32 %v1666, 2147483648
    %v1731 = vxor.u32 %v1667, 2147483648
    %v1732 = vxor.u32 %v1668, 2147483648
    %v1733 = vxor.u32 %v1669, 2147483648
    %v1734 = vxor.u32 %v1670, 2147483648
    %v1735 = vxor.u32 %v1671, 2147483648
    %v1736 = vxor.u32 %v1672, 2147483648
    %v1737 = vxor.u32 %v1673, 2147483648
    %v1738 = vxor.u32 %v1674, 2147483648
    %v1739 = vxor.u32 %v1675, 2147483648
    %v1740 = vxor.u32 %v1676, 2147483648
    %v1741 = vxor.u32 %v1677, 2147483648
    %v1742 = vxor.u32 %v1678, 2147483648
    %v1743 = vxor.u32 %v1679, 2147483648
    %v1744 = vxor.u32 %v1680, 2147483648
    %v1745 = vxor.u32 %v1681, 2147483648
    %v1746 = vxor.u32 %v1682, 2147483648
    %v1747 = vxor.u32 %v1683, 2147483648
    %v1748 = vxor.u32 %v1684, 2147483648
    %v1749 = vxor.u32 %v1685, 2147483648
    %v1750 = vxor.u32 %v1686, 2147483648
    %v1751 = vxor.u32 %v1687, 2147483648
    %v1752 = vxor.u32 %v1688, 2147483648
    %v1753 = vxor.u32 %v1689, 2147483648
    %v1754 = vmul.f32 %v1690, 1.442695
    %v1755 = vpow.pop %v1754
    %v1756 = vmul.f32 %v1691, 1.442695
    %v1757 = vpow.pop %v1756
    %v1758 = vmul.f32 %v1692, 1.442695
    %v1759 = vpow.pop %v1758
    %v1760 = vmul.f32 %v1693, 1.442695
    %v1761 = vpow.pop %v1760
    %v1762 = vmul.f32 %v1694, 1.442695
    %v1763 = vpow.pop %v1762
    %v1764 = vmul.f32 %v1695, 1.442695
    %v1765 = vpow.pop %v1764
    %v1766 = vmul.f32 %v1696, 1.442695
    %v1767 = vpow.pop %v1766
    %v1768 = vmul.f32 %v1697, 1.442695
    %v1769 = vpow.pop %v1768
    %v1770 = vmul.f32 %v1698, 1.442695
    %v1771 = vpow.pop %v1770
    %v1772 = vmul.f32 %v1699, 1.442695
    %v1773 = vpow.pop %v1772
    %v1774 = vmul.f32 %v1700, 1.442695
    %v1775 = vpow.pop %v1774
    %v1776 = vmul.f32 %v1701, 1.442695
    %v1777 = vpow.pop %v1776
    %v1778 = vmul.f32 %v1702, 1.442695
    %v1779 = vpow.pop %v1778
    %v1780 = vmul.f32 %v1703, 1.442695
    %v1781 = vpow.pop %v1780
    %v1782 = vmul.f32 %v1704, 1.442695
    %v1783 = vpow.pop %v1782
    %v1784 = vmul.f32 %v1705, 1.442695
    %v1785 = vpow.pop %v1784
    %v1786 = vmul.f32 %v1706, 1.442695
    %v1787 = vpow.pop %v1786
    %v1788 = vmul.f32 %v1707, 1.442695
    %v1789 = vpow.pop %v1788
    %v1790 = vmul.f32 %v1708, 1.442695
    %v1791 = vpow.pop %v1790
    %v1792 = vmul.f32 %v1709, 1.442695
    %v1793 = vpow.pop %v1792
    %v1794 = vmul.f32 %v1710, 1.442695
    %v1795 = vpow.pop %v1794
    %v1796 = vmul.f32 %v1711, 1.442695
    %v1797 = vpow.pop %v1796
    %v1798 = vmul.f32 %v1712, 1.442695
    %v1799 = vpow.pop %v1798
    %v1800 = vmul.f32 %v1713, 1.442695
    %v1801 = vpow.pop %v1800
    %v1802 = vmul.f32 %v1714, 1.442695
    %v1803 = vpow.pop %v1802
    %v1804 = vmul.f32 %v1715, 1.442695
    %v1805 = vpow.pop %v1804
    %v1806 = vmul.f32 %v1716, 1.442695
    %v1807 = vpow.pop %v1806
    %v1808 = vmul.f32 %v1717, 1.442695
    %v1809 = vpow.pop %v1808
    %v1810 = vmul.f32 %v1718, 1.442695
    %v1811 = vpow.pop %v1810
    %v1812 = vmul.f32 %v1719, 1.442695
    %v1813 = vpow.pop %v1812
    %v1814 = vmul.f32 %v1720, 1.442695
    %v1815 = vpow.pop %v1814
    %v1816 = vmul.f32 %v1721, 1.442695
    %v1817 = vpow.pop %v1816
    %v1818 = vmul.f32 %v1722, 1.442695
    %v1819 = vpow.pop %v1818
    %v1820 = vmul.f32 %v1723, 1.442695
    %v1821 = vpow.pop %v1820
    %v1822 = vmul.f32 %v1724, 1.442695
    %v1823 = vpow.pop %v1822
    %v1824 = vmul.f32 %v1725, 1.442695
    %v1825 = vpow.pop %v1824
    %v1826 = vmul.f32 %v1726, 1.442695
    %v1827 = vpow.pop %v1826
    %v1828 = vmul.f32 %v1727, 1.442695
    %v1829 = vpow.pop %v1828
    %v1830 = vmul.f32 %v1728, 1.442695
    %v1831 = vpow.pop %v1830
    %v1832 = vmul.f32 %v1729, 1.442695
    %v1833 = vpow.pop %v1832
    %v1834 = vmul.f32 %v1730, 1.442695
    %v1835 = vpow.pop %v1834
    %v1836 = vmul.f32 %v1731, 1.442695
    %v1837 = vpow.pop %v1836
    %v1838 = vmul.f32 %v1732, 1.442695
    %v1839 = vpow.pop %v1838
    %v1840 = vmul.f32 %v1733, 1.442695
    %v1841 = vpow.pop %v1840
    %v1842 = vmul.f32 %v1734, 1.442695
    %v1843 = vpow.pop %v1842
    %v1844 = vmul.f32 %v1735, 1.442695
    %v1845 = vpow.pop %v1844
    %v1846 = vmul.f32 %v1736, 1.442695
    %v1847 = vpow.pop %v1846
    %v1848 = vmul.f32 %v1737, 1.442695
    %v1849 = vpow.pop %v1848
    %v1850 = vmul.f32 %v1738, 1.442695
    %v1851 = vpow.pop %v1850
    %v1852 = vmul.f32 %v1739, 1.442695
    %v1853 = vpow.pop %v1852
    %v1854 = vmul.f32 %v1740, 1.442695
    %v1855 = vpow.pop %v1854
    %v1856 = vmul.f32 %v1741, 1.442695
    %v1857 = vpow.pop %v1856
    %v1858 = vmul.f32 %v1742, 1.442695
    %v1859 = vpow.pop %v1858
    %v1860 = vmul.f32 %v1743, 1.442695
    %v1861 = vpow.pop %v1860
    %v1862 = vmul.f32 %v1744, 1.442695
    %v1863 = vpow.pop %v1862
    %v1864 = vmul.f32 %v1745, 1.442695
    %v1865 = vpow.pop %v1864
    %v1866 = vmul.f32 %v1746, 1.442695
    %v1867 = vpow.pop %v1866
    %v1868 = vmul.f32 %v1747, 1.442695
    %v1869 = vpow.pop %v1868
    %v1870 = vmul.f32 %v1748, 1.442695
    %v1871 = vpow.pop %v1870
    %v1872 = vmul.f32 %v1749, 1.442695
    %v1873 = vpow.pop %v1872
    %v1874 = vmul.f32 %v1750, 1.442695
    %v1875 = vpow.pop %v1874
    %v1876 = vmul.f32 %v1751, 1.442695
    %v1877 = vpow.pop %v1876
    %v1878 = vmul.f32 %v1752, 1.442695
    %v1879 = vpow.pop %v1878
    %v1880 = vmul.f32 %v1753, 1.442695
    %v1881 = vpow.pop %v1880
    %v1882 = vadd.f32 %v1755, 1.0
    %v1883 = vadd.f32 %v1757, 1.0
    %v1884 = vadd.f32 %v1759, 1.0
    %v1885 = vadd.f32 %v1761, 1.0
    %v1886 = vadd.f32 %v1763, 1.0
    %v1887 = vadd.f32 %v1765, 1.0
    %v1888 = vadd.f32 %v1767, 1.0
    %v1889 = vadd.f32 %v1769, 1.0
    %v1890 = vadd.f32 %v1771, 1.0
    %v1891 = vadd.f32 %v1773, 1.0
    %v1892 = vadd.f32 %v1775, 1.0
    %v1893 = vadd.f32 %v1777, 1.0
    %v1894 = vadd.f32 %v1779, 1.0
    %v1895 = vadd.f32 %v1781, 1.0
    %v1896 = vadd.f32 %v1783, 1.0
    %v1897 = vadd.f32 %v1785, 1.0
    %v1898 = vadd.f32 %v1787, 1.0
    %v1899 = vadd.f32 %v1789, 1.0
    %v1900 = vadd.f32 %v1791, 1.0
    %v1901 = vadd.f32 %v1793, 1.0
    %v1902 = vadd.f32 %v1795, 1.0
    %v1903 = vadd.f32 %v1797, 1.0
    %v1904 = vadd.f32 %v1799, 1.0
    %v1905 = vadd.f32 %v1801, 1.0
    %v1906 = vadd.f32 %v1803, 1.0
    %v1907 = vadd.f32 %v1805, 1.0
    %v1908 = vadd.f32 %v1807, 1.0
    %v1909 = vadd.f32 %v1809, 1.0
    %v1910 = vadd.f32 %v1811, 1.0
    %v1911 = vadd.f32 %v1813, 1.0
    %v1912 = vadd.f32 %v1815, 1.0
    %v1913 = vadd.f32 %v1817, 1.0
    %v1914 = vadd.f32 %v1819, 1.0
    %v1915 = vadd.f32 %v1821, 1.0
    %v1916 = vadd.f32 %v1823, 1.0
    %v1917 = vadd.f32 %v1825, 1.0
    %v1918 = vadd.f32 %v1827, 1.0
    %v1919 = vadd.f32 %v1829, 1.0
    %v1920 = vadd.f32 %v1831, 1.0
    %v1921 = vadd.f32 %v1833, 1.0
    %v1922 = vadd.f32 %v1835, 1.0
    %v1923 = vadd.f32 %v1837, 1.0
    %v1924 = vadd.f32 %v1839, 1.0
    %v1925 = vadd.f32 %v1841, 1.0
    %v1926 = vadd.f32 %v1843, 1.0
    %v1927 = vadd.f32 %v1845, 1.0
    %v1928 = vadd.f32 %v1847, 1.0
    %v1929 = vadd.f32 %v1849, 1.0
    %v1930 = vadd.f32 %v1851, 1.0
    %v1931 = vadd.f32 %v1853, 1.0
    %v1932 = vadd.f32 %v1855, 1.0
    %v1933 = vadd.f32 %v1857, 1.0
    %v1934 = vadd.f32 %v1859, 1.0
    %v1935 = vadd.f32 %v1861, 1.0
    %v1936 = vadd.f32 %v1863, 1.0
    %v1937 = vadd.f32 %v1865, 1.0
    %v1938 = vadd.f32 %v1867, 1.0
    %v1939 = vadd.f32 %v1869, 1.0
    %v1940 = vadd.f32 %v1871, 1.0
    %v1941 = vadd.f32 %v1873, 1.0
    %v1942 = vadd.f32 %v1875, 1.0
    %v1943 = vadd.f32 %v1877, 1.0
    %v1944 = vadd.f32 %v1879, 1.0
    %v1945 = vadd.f32 %v1881, 1.0
    %v1946 = vrcp.pop %v1882
    %v1947 = vmul.f32 1.0, %v1946
    %v1948 = vrcp.pop %v1883
    %v1949 = vmul.f32 1.0, %v1948
    %v1950 = vrcp.pop %v1884
    %v1951 = vmul.f32 1.0, %v1950
    %v1952 = vrcp.pop %v1885
    %v1953 = vmul.f32 1.0, %v1952
    %v1954 = vrcp.pop %v1886
    %v1955 = vmul.f32 1.0, %v1954
    %v1956 = vrcp.pop %v1887
    %v1957 = vmul.f32 1.0, %v1956
    %v1958 = vrcp.pop %v1888
    %v1959 = vmul.f32 1.0, %v1958
    %v1960 = vrcp.pop %v1889
    %v1961 = vmul.f32 1.0, %v1960
    %v1962 = vrcp.pop %v1890
    %v1963 = vmul.f32 1.0, %v1962
    %v1964 = vrcp.pop %v1891
    %v1965 = vmul.f32 1.0, %v1964
    %v1966 = vrcp.pop %v1892
    %v1967 = vmul.f32 1.0, %v1966
    %v1968 = vrcp.pop %v1893
    %v1969 = vmul.f32 1.0, %v1968
    %v1970 = vrcp.pop %v1894
    %v1971 = vmul.f32 1.0, %v1970
    %v1972 = vrcp.pop %v1895
    %v1973 = vmul.f32 1.0, %v1972
    %v1974 = vrcp.pop %v1896
    %v1975 = vmul.f32 1.0, %v1974
    %v1976 = vrcp.pop %v1897
    %v1977 = vmul.f32 1.0, %v1976
    %v1978 = vrcp.pop %v1898
    %v1979 = vmul.f32 1.0, %v1978
    %v1980 = vrcp.pop %v1899
    %v1981 = vmul.f32 1.0, %v1980
    %v1982 = vrcp.pop %v1900
    %v1983 = vmul.f32 1.0, %v1982
    %v1984 = vrcp.pop %v1901
    %v1985 = vmul.f32 1.0, %v1984
    %v1986 = vrcp.pop %v1902
    %v1987 = vmul.f32 1.0, %v1986
    %v1988 = vrcp.pop %v1903
    %v1989 = vmul.f32 1.0, %v1988
    %v1990 = vrcp.pop %v1904
    %v1991 = vmul.f32 1.0, %v1990
    %v1992 = vrcp.pop %v1905
    %v1993 = vmul.f32 1.0, %v1992
    %v1994 = vrcp.pop %v1906
    %v1995 = vmul.f32 1.0, %v1994
    %v1996 = vrcp.pop %v1907
    %v1997 = vmul.f32 1.0, %v1996
    %v1998 = vrcp.pop %v1908
    %v1999 = vmul.f32 1.0, %v1998
    %v2000 = vrcp.pop %v1909
    %v2001 = vmul.f32 1.0, %v2000
    %v2002 = vrcp.pop %v1910
    %v2003 = vmul.f32 1.0, %v2002
    %v2004 = vrcp.pop %v1911
    %v2005 = vmul.f32 1.0, %v2004
    %v2006 = vrcp.pop %v1912
    %v2007 = vmul.f32 1.0, %v2006
    %v2008 = vrcp.pop %v1913
    %v2009 = vmul.f32 1.0, %v2008
    %v2010 = vrcp.pop %v1914
    %v2011 = vmul.f32 1.0, %v2010
    %v2012 = vrcp.pop %v1915
    %v2013 = vmul.f32 1.0, %v2012
    %v2014 = vrcp.pop %v1916
    %v2015 = vmul.f32 1.0, %v2014
    %v2016 = vrcp.pop %v1917
    %v2017 = vmul.f32 1.0, %v2016
    %v2018 = vrcp.pop %v1918
    %v2019 = vmul.f32 1.0, %v2018
    %v2020 = vrcp.pop %v1919
    %v2021 = vmul.f32 1.0, %v2020
    %v2022 = vrcp.pop %v1920
    %v2023 = vmul.f32 1.0, %v2022
    %v2024 = vrcp.pop %v1921
    %v2025 = vmul.f32 1.0, %v2024
    %v2026 = vrcp.pop %v1922
    %v2027 = vmul.f32 1.0, %v2026
    %v2028 = vrcp.pop %v1923
    %v2029 = vmul.f32 1.0, %v2028
    %v2030 = vrcp.pop %v1924
    %v2031 = vmul.f32 1.0, %v2030
    %v2032 = vrcp.pop %v1925
    %v2033 = vmul.f32 1.0, %v2032
    %v2034 = vrcp.pop %v1926
    %v2035 = vmul.f32 1.0, %v2034
    %v2036 = vrcp.pop %v1927
    %v2037 = vmul.f32 1.0, %v2036
    %v2038 = vrcp.pop %v1928
    %v2039 = vmul.f32 1.0, %v2038
    %v2040 = vrcp.pop %v1929
    %v2041 = vmul.f32 1.0, %v2040
    %v2042 = vrcp.pop %v1930
    %v2043 = vmul.f32 1.0, %v2042
    %v2044 = vrcp.pop %v1931
    %v2045 = vmul.f32 1.0, %v2044
    %v2046 = vrcp.pop %v1932
    %v2047 = vmul.f32 1.0, %v2046
    %v2048 = vrcp.pop %v1933
    %v2049 = vmul.f32 1.0, %v2048
    %v2050 = vrcp.pop %v1934
    %v2051 = vmul.f32 1.0, %v2050
    %v2052 = vrcp.pop %v1935
    %v2053 = vmul.f32 1.0, %v2052
    %v2054 = vrcp.pop %v1936
    %v2055 = vmul.f32 1.0, %v2054
    %v2056 = vrcp.pop %v1937
    %v2057 = vmul.f32 1.0, %v2056
    %v2058 = vrcp.pop %v1938
    %v2059 = vmul.f32 1.0, %v2058
    %v2060 = vrcp.pop %v1939
    %v2061 = vmul.f32 1.0, %v2060
    %v2062 = vrcp.pop %v1940
    %v2063 = vmul.f32 1.0, %v2062
    %v2064 = vrcp.pop %v1941
    %v2065 = vmul.f32 1.0, %v2064
    %v2066 = vrcp.pop %v1942
    %v2067 = vmul.f32 1.0, %v2066
    %v2068 = vrcp.pop %v1943
    %v2069 = vmul.f32 1.0, %v2068
    %v2070 = vrcp.pop %v1944
    %v2071 = vmul.f32 1.0, %v2070
    %v2072 = vrcp.pop %v1945
    %v2073 = vmul.f32 1.0, %v2072
    %v2074 = vmul.f32 %v1626, %v1947
    %v2075 = vmul.f32 %v1627, %v1949
    %v2076 = vmul.f32 %v1628, %v1951
    %v2077 = vmul.f32 %v1629, %v1953
    %v2078 = vmul.f32 %v1630, %v1955
    %v2079 = vmul.f32 %v1631, %v1957
    %v2080 = vmul.f32 %v1632, %v1959
    %v2081 = vmul.f32 %v1633, %v1961
    %v2082 = vmul.f32 %v1634, %v1963
    %v2083 = vmul.f32 %v1635, %v1965
    %v2084 = vmul.f32 %v1636, %v1967
    %v2085 = vmul.f32 %v1637, %v1969
    %v2086 = vmul.f32 %v1638, %v1971
    %v2087 = vmul.f32 %v1639, %v1973
    %v2088 = vmul.f32 %v1640, %v1975
    %v2089 = vmul.f32 %v1641, %v1977
    %v2090 = vmul.f32 %v1642, %v1979
    %v2091 = vmul.f32 %v1643, %v1981
    %v2092 = vmul.f32 %v1644, %v1983
    %v2093 = vmul.f32 %v1645, %v1985
    %v2094 = vmul.f32 %v1646, %v1987
    %v2095 = vmul.f32 %v1647, %v1989
    %v2096 = vmul.f32 %v1648, %v1991
    %v2097 = vmul.f32 %v1649, %v1993
    %v2098 = vmul.f32 %v1650, %v1995
    %v2099 = vmul.f32 %v1651, %v1997
    %v2100 = vmul.f32 %v1652, %v1999
    %v2101 = vmul.f32 %v1653, %v2001
    %v2102 = vmul.f32 %v1654, %v2003
    %v2103 = vmul.f32 %v1655, %v2005
    %v2104 = vmul.f32 %v1656, %v2007
    %v2105 = vmul.f32 %v1657, %v2009
    %v2106 = vmul.f32 %v1658, %v2011
    %v2107 = vmul.f32 %v1659, %v2013
    %v2108 = vmul.f32 %v1660, %v2015
    %v2109 = vmul.f32 %v1661, %v2017
    %v2110 = vmul.f32 %v1662, %v2019
    %v2111 = vmul.f32 %v1663, %v2021
    %v2112 = vmul.f32 %v1664, %v2023
    %v2113 = vmul.f32 %v1665, %v2025
    %v2114 = vmul.f32 %v1666, %v2027
    %v2115 = vmul.f32 %v1667, %v2029
    %v2116 = vmul.f32 %v1668, %v2031
    %v2117 = vmul.f32 %v1669, %v2033
    %v2118 = vmul.f32 %v1670, %v2035
    %v2119 = vmul.f32 %v1671, %v2037
    %v2120 = vmul.f32 %v1672, %v2039
    %v2121 = vmul.f32 %v1673, %v2041
    %v2122 = vmul.f32 %v1674, %v2043
    %v2123 = vmul.f32 %v1675, %v2045
    %v2124 = vmul.f32 %v1676, %v2047
    %v2125 = vmul.f32 %v1677, %v2049
    %v2126 = vmul.f32 %v1678, %v2051
    %v2127 = vmul.f32 %v1679, %v2053
    %v2128 = vmul.f32 %v1680, %v2055
    %v2129 = vmul.f32 %v1681, %v2057
    %v2130 = vmul.f32 %v1682, %v2059
    %v2131 = vmul.f32 %v1683, %v2061
    %v2132 = vmul.f32 %v1684, %v2063
    %v2133 = vmul.f32 %v1685, %v2065
    %v2134 = vmul.f32 %v1686, %v2067
    %v2135 = vmul.f32 %v1687, %v2069
    %v2136 = vmul.f32 %v1688, %v2071
    %v2137 = vmul.f32 %v1689, %v2073
    %2138 = vst.msk [vmem:[#allocation2] sm:$0xff] %vm843, %v2074
    %2139 = vst.msk [vmem:[#allocation2 + $0x8] sm:$0xff] %vm843, %v2075
    %2140 = vst.msk [vmem:[#allocation2 + $0x10] sm:$0xff] %vm843, %v2076
    %2141 = vst.msk [vmem:[#allocation2 + $0x18] sm:$0xff] %vm843, %v2077
    %2142 = vst.msk [vmem:[#allocation2 + $0x20] sm:$0xff] %vm843, %v2078
    %2143 = vst.msk [vmem:[#allocation2 + $0x28] sm:$0xff] %vm843, %v2079
    %2144 = vst.msk [vmem:[#allocation2 + $0x30] sm:$0xff] %vm843, %v2080
    %2145 = vst.msk [vmem:[#allocation2 + $0x38] sm:$0xff] %vm843, %v2081
    %2146 = vst.msk [vmem:[#allocation2 + $0x40] sm:$0xff] %vm843, %v2082
    %2147 = vst.msk [vmem:[#allocation2 + $0x48] sm:$0xff] %vm843, %v2083
    %2148 = vst.msk [vmem:[#allocation2 + $0x50] sm:$0xff] %vm843, %v2084
    %2149 = vst.msk [vmem:[#allocation2 + $0x58] sm:$0xff] %vm843, %v2085
    %2150 = vst.msk [vmem:[#allocation2 + $0x60] sm:$0xff] %vm843, %v2086
    %2151 = vst.msk [vmem:[#allocation2 + $0x68] sm:$0xff] %vm843, %v2087
    %2152 = vst.msk [vmem:[#allocation2 + $0x70] sm:$0xff] %vm843, %v2088
    %2153 = vst.msk [vmem:[#allocation2 + $0x78] sm:$0xff] %vm843, %v2089
    %2154 = vst.msk [vmem:[#allocation2 + $0x80] sm:$0xff] %vm843, %v2090
    %2155 = vst.msk [vmem:[#allocation2 + $0x88] sm:$0xff] %vm843, %v2091
    %2156 = vst.msk [vmem:[#allocation2 + $0x90] sm:$0xff] %vm843, %v2092
    %2157 = vst.msk [vmem:[#allocation2 + $0x98] sm:$0xff] %vm843, %v2093
    %2158 = vst.msk [vmem:[#allocation2 + $0xa0] sm:$0xff] %vm843, %v2094
    %2159 = vst.msk [vmem:[#allocation2 + $0xa8] sm:$0xff] %vm843, %v2095
    %2160 = vst.msk [vmem:[#allocation2 + $0xb0] sm:$0xff] %vm843, %v2096
    %2161 = vst.msk [vmem:[#allocation2 + $0xb8] sm:$0xff] %vm843, %v2097
    %2162 = vst.msk [vmem:[#allocation2 + $0xc0] sm:$0xff] %vm843, %v2098
    %2163 = vst.msk [vmem:[#allocation2 + $0xc8] sm:$0xff] %vm843, %v2099
    %2164 = vst.msk [vmem:[#allocation2 + $0xd0] sm:$0xff] %vm843, %v2100
    %2165 = vst.msk [vmem:[#allocation2 + $0xd8] sm:$0xff] %vm843, %v2101
    %2166 = vst.msk [vmem:[#allocation2 + $0xe0] sm:$0xff] %vm843, %v2102
    %2167 = vst.msk [vmem:[#allocation2 + $0xe8] sm:$0xff] %vm843, %v2103
    %2168 = vst.msk [vmem:[#allocation2 + $0xf0] sm:$0xff] %vm843, %v2104
    %2169 = vst.msk [vmem:[#allocation2 + $0xf8] sm:$0xff] %vm843, %v2105
    %2170 = vst.msk [vmem:[#allocation2 + $0x100] sm:$0xff] %vm843, %v2106
    %2171 = vst.msk [vmem:[#allocation2 + $0x108] sm:$0xff] %vm843, %v2107
    %2172 = vst.msk [vmem:[#allocation2 + $0x110] sm:$0xff] %vm843, %v2108
    %2173 = vst.msk [vmem:[#allocation2 + $0x118] sm:$0xff] %vm843, %v2109
    %2174 = vst.msk [vmem:[#allocation2 + $0x120] sm:$0xff] %vm843, %v2110
    %2175 = vst.msk [vmem:[#allocation2 + $0x128] sm:$0xff] %vm843, %v2111
    %2176 = vst.msk [vmem:[#allocation2 + $0x130] sm:$0xff] %vm843, %v2112
    %2177 = vst.msk [vmem:[#allocation2 + $0x138] sm:$0xff] %vm843, %v2113
    %2178 = vst.msk [vmem:[#allocation2 + $0x140] sm:$0xff] %vm843, %v2114
    %2179 = vst.msk [vmem:[#allocation2 + $0x148] sm:$0xff] %vm843, %v2115
    %2180 = vst.msk [vmem:[#allocation2 + $0x150] sm:$0xff] %vm843, %v2116
    %2181 = vst.msk [vmem:[#allocation2 + $0x158] sm:$0xff] %vm843, %v2117
    %2182 = vst.msk [vmem:[#allocation2 + $0x160] sm:$0xff] %vm843, %v2118
    %2183 = vst.msk [vmem:[#allocation2 + $0x168] sm:$0xff] %vm843, %v2119
    %2184 = vst.msk [vmem:[#allocation2 + $0x170] sm:$0xff] %vm843, %v2120
    %2185 = vst.msk [vmem:[#allocation2 + $0x178] sm:$0xff] %vm843, %v2121
    %2186 = vst.msk [vmem:[#allocation2 + $0x180] sm:$0xff] %vm843, %v2122
    %2187 = vst.msk [vmem:[#allocation2 + $0x188] sm:$0xff] %vm843, %v2123
    %2188 = vst.msk [vmem:[#allocation2 + $0x190] sm:$0xff] %vm843, %v2124
    %2189 = vst.msk [vmem:[#allocation2 + $0x198] sm:$0xff] %vm843, %v2125
    %2190 = vst.msk [vmem:[#allocation2 + $0x1a0] sm:$0xff] %vm843, %v2126
    %2191 = vst.msk [vmem:[#allocation2 + $0x1a8] sm:$0xff] %vm843, %v2127
    %2192 = vst.msk [vmem:[#allocation2 + $0x1b0] sm:$0xff] %vm843, %v2128
    %2193 = vst.msk [vmem:[#allocation2 + $0x1b8] sm:$0xff] %vm843, %v2129
    %2194 = vst.msk [vmem:[#allocation2 + $0x1c0] sm:$0xff] %vm843, %v2130
    %2195 = vst.msk [vmem:[#allocation2 + $0x1c8] sm:$0xff] %vm843, %v2131
    %2196 = vst.msk [vmem:[#allocation2 + $0x1d0] sm:$0xff] %vm843, %v2132
    %2197 = vst.msk [vmem:[#allocation2 + $0x1d8] sm:$0xff] %vm843, %v2133
    %2198 = vst.msk [vmem:[#allocation2 + $0x1e0] sm:$0xff] %vm843, %v2134
    %2199 = vst.msk [vmem:[#allocation2 + $0x1e8] sm:$0xff] %vm843, %v2135
    %2200 = vst.msk [vmem:[#allocation2 + $0x1f0] sm:$0xff] %vm843, %v2136
    %2201 = vst.msk [vmem:[#allocation2 + $0x1f8] sm:$0xff] %vm843, %v2137
    // Predicated region
    $region42: #{_lambda_.9} parent=1 // pred_check
      _
    $region43: #{_lambda_.9} parent=1 // pred_check_branch
      %2203 = sbr.rel (0) target = $region45
    $region44: #{_lambda_.9} parent=1 // pred_region
      %s2205 = ssub.s32 8192, 8192
      %2206 = vsyncadd [#allocation3], %s2205
      %s2207 = sshll.u32 [#allocation2], 4
      %s2208 = int_to_ptr.vmem [resolvable:$true] %s2207
      %2213 = dma.vmem_to_hbm [thread:$0]  %s2208, 8192, %s10, [#allocation3], 128, 128, 8
    $region45: #{_lambda_.9} parent=1 // pred_fallthru
      _
    // Predicated region
    $region46: #{_lambda_.9} parent=1 // pred_check
      _
    $region47: #{_lambda_.9} parent=1 // pred_check_branch
      %2215 = sbr.rel (0) target = $region49
    $region48: #{_lambda_.9} parent=1 // pred_region
      %2216 = dma.done [#allocation3], 8192
    $region49: #{_lambda_.9} parent=1 // pred_fallthru
      _
    %2217 = vsyncpa [#allocation3], 1

</llo_original>
